<compile_context>
chip_gen: v7x
topology: tpu7x:2x2x1
jax: 0.10.0
libtpu: 0.0.40
codegen_flags: <defaults>
</compile_context>

<pallas_src>
import functools

import jax
import jax.numpy as jnp
from jax import lax
from jax.experimental import pallas as pl
from jax.experimental.pallas import tpu as pltpu

BN_EPS = 1e-5
NEG_BIG = -1e30      # f32-safe "-inf" for masked max          (plain Python float!)
DIST_BIG = 3e38      # f32-safe "+inf" for excluded distances  (plain Python float!)
VALID_CUT = 1e37     # any distance >= this is a masked (invalid) pair


def _round_up(v, m):
    return (v + m - 1) // m * m


def _pick_tiles(n, f_max, h, temp_cap=8 << 20):
    """Row tiles: tile_big for O(T*k)/O(T*N)-score kernels, tile_ec (<= tile_big,
    VMEM-capped) for the dense static edge conv.  Both divide n_pad; keep >=2 grid
    steps so both v7x TensorCores get work."""
    base = _round_up(n, 8)
    tile_big = 8
    for t in (128, 64, 32, 16):
        if base >= 2 * t:
            tile_big = t
            break
    n_pad = _round_up(n, tile_big)
    tile_ec = tile_big
    # diff + act + msg + masked temporaries of the dense edge conv
    while tile_ec > 8 and tile_ec * n_pad * (2 * f_max + 2 * h) * 4 > temp_cap:
        tile_ec //= 2
    return tile_big, tile_ec, n_pad


# --------------------- fused dim reduction (audio/visual) ------------------- #

def _dimred_kernel(x_ref, am_ref, w_ref, b_ref, o_ref):
    # One (T,Fin)@(Fin,2H) matmul for both projections, then per-row select.
    h = o_ref.shape[1]
    y = jnp.dot(x_ref[...], w_ref[...],
                preferred_element_type=jnp.float32) + b_ref[...]        # (T, 2H)
    o_ref[...] = jnp.where(am_ref[...] > 0.0, y[:, :h], y[:, h:])


def fused_dim_reduction(x, audio_mask, w, b, hidden, tile):
    n, fin = x.shape
    return pl.pallas_call(
        _dimred_kernel,
        out_shape=jax.ShapeDtypeStruct((n, hidden), jnp.float32),
        grid=(n // tile,),
        in_specs=[
            pl.BlockSpec((tile, fin), lambda i: (i, 0)),
            pl.BlockSpec((tile, 1), lambda i: (i, 0)),
            pl.BlockSpec((fin, 2 * hidden), lambda i: (0, 0)),
            pl.BlockSpec((1, 2 * hidden), lambda i: (0, 0)),
        ],
        out_specs=pl.BlockSpec((tile, hidden), lambda i: (i, 0)),
        compiler_params=pltpu.CompilerParams(
            dimension_semantics=("parallel",)),
    )(x, audio_mask, w, b)


# ------------------------- kNN (top-k fused in-kernel) ----------------------- #

def _knn_kernel(xt_ref, xs_ref, sqn_ref, bt_ref, bs_ref, idx_ref):
    # Per-pair score whose within-row ordering equals squared euclidean distance:
    # d[t,j] = ||x_j||^2 - 2<x_t,x_j>  (the per-row ||x_t||^2 term is a constant).
    # Cross-graph pairs -> +BIG; the self column -> -BIG so the k-NN set always
    # contains the node itself (matches torch_cluster knn(x, x)).
    t = xt_ref.shape[0]
    n = xs_ref.shape[0]
    k = idx_ref.shape[1]
    g = lax.dot_general(xt_ref[...], xs_ref[...], (((1,), (1,)), ((), ())),
                        preferred_element_type=jnp.float32)             # (T, N)
    d = sqn_ref[...] - 2.0 * g
    same = bt_ref[...] == bs_ref[...]                                    # (T, N)
    rows = pl.program_id(0) * t + lax.broadcasted_iota(jnp.int32, (t, n), 0)
    cols = lax.broadcasted_iota(jnp.int32, (t, n), 1)
    d = jnp.where(same, d, DIST_BIG)
    d = jnp.where(rows == cols, -DIST_BIG, d)
    row_id = pl.program_id(0) * t + lax.broadcasted_iota(jnp.int32, (t, 1), 0)

    # iterative k-min (k is tiny and static); emit int32 neighbour indices.
    sels = []
    for _ in range(k):
        m = jnp.min(d, axis=1, keepdims=True)                            # (T, 1)
        cand = jnp.where(d == m, cols, n)                                # tie-break: lowest col
        sel = jnp.min(cand, axis=1, keepdims=True)                       # (T, 1) int32
        # graphs with < k nodes: pad with the self index (max over a duplicated
        # self message is a no-op, so aggregation stays correct)
        sel = jnp.where(m < VALID_CUT, sel, row_id)
        sels.append(sel)
        d = jnp.where(cols == sel, DIST_BIG, d)
    idx_ref[...] = jnp.concatenate(sels, axis=1)                         # (T, k)


def knn_indices(x, sqn, b_col, b_row, k, tile):
    n, f = x.shape
    return pl.pallas_call(
        _knn_kernel,
        out_shape=jax.ShapeDtypeStruct((n, k), jnp.int32),
        grid=(n // tile,),
        in_specs=[
            pl.BlockSpec((tile, f), lambda i: (i, 0)),
            pl.BlockSpec((n, f), lambda i: (0, 0)),
            pl.BlockSpec((1, n), lambda i: (0, 0)),
            pl.BlockSpec((tile, 1), lambda i: (i, 0)),
            pl.BlockSpec((1, n), lambda i: (0, 0)),
        ],
        out_specs=pl.BlockSpec((tile, k), lambda i: (i, 0)),
        compiler_params=pltpu.CompilerParams(
            dimension_semantics=("parallel",)),
    )(x, x, sqn, b_col, b_row)


# ------------------------ dynamic edge conv (k neighbours) ------------------- #

def _dyn_edge_conv_kernel(xt_ref, nbr_ref, sci_ref, shi_ref, scd_ref, shd_ref,
                          wi_ref, wd_ref, o_ref):
    # xt : (T, F) targets; nbr : (T*k, F) gathered neighbour rows (target-major).
    t, f = xt_ref.shape
    tk = nbr_ref.shape[0]
    k = tk // t
    h = wi_ref.shape[1]
    xt = xt_ref[...]

    a = jnp.maximum(xt * sci_ref[...] + shi_ref[...], 0.0)
    self_term = jnp.dot(a, wi_ref[...], preferred_element_type=jnp.float32)   # (T, H)

    nbr = nbr_ref[...].reshape(t, k, f)
    diff = nbr - xt[:, None, :]                                               # (T, k, F)
    act = jnp.maximum(diff * scd_ref[...].reshape(1, 1, f)
                      + shd_ref[...].reshape(1, 1, f), 0.0)
    msg = jnp.dot(act.reshape(tk, f), wd_ref[...],
                  preferred_element_type=jnp.float32).reshape(t, k, h)        # (T, k, H)
    agg = jnp.max(msg, axis=1)                                                # (T, H)
    o_ref[...] = agg + self_term


def dyn_edge_conv(x, nbr, p, tile):
    n, f = x.shape
    h = p["wi"].shape[1]
    k = nbr.shape[0] // n
    return pl.pallas_call(
        _dyn_edge_conv_kernel,
        out_shape=jax.ShapeDtypeStruct((n, h), jnp.float32),
        grid=(n // tile,),
        in_specs=[
            pl.BlockSpec((tile, f), lambda i: (i, 0)),
            pl.BlockSpec((tile * k, f), lambda i: (i, 0)),
            pl.BlockSpec((1, f), lambda i: (0, 0)),
            pl.BlockSpec((1, f), lambda i: (0, 0)),
            pl.BlockSpec((1, f), lambda i: (0, 0)),
            pl.BlockSpec((1, f), lambda i: (0, 0)),
            pl.BlockSpec((f, h), lambda i: (0, 0)),
            pl.BlockSpec((f, h), lambda i: (0, 0)),
        ],
        out_specs=pl.BlockSpec((tile, h), lambda i: (i, 0)),
        compiler_params=pltpu.CompilerParams(
            dimension_semantics=("parallel",)),
    )(x, nbr, p["sc_i"], p["sh_i"], p["sc_d"], p["sh_d"], p["wi"], p["wd"])


# --------------------------- static edge conv (dense adj) -------------------- #

def _edge_conv_core(xt_ref, adj_ref, xs_ref, sci_ref, shi_ref, scd_ref, shd_ref,
                    wi_ref, wd_ref):
    """Vectorized EdgeConv (max aggregation) for a tile of T targets vs all N sources."""
    t, f = xt_ref.shape
    n = xs_ref.shape[0]
    h = wi_ref.shape[1]
    xt = xt_ref[...]
    xs = xs_ref[...]

    # Self term (constant over the source index) -> added after the max.
    a = jnp.maximum(xt * sci_ref[...] + shi_ref[...], 0.0)
    self_term = jnp.dot(a, wi_ref[...], preferred_element_type=jnp.float32)   # (T, H)

    # One broadcasted difference + ONE (T*N,F)@(F,H) MXU matmul for all messages.
    diff = xs[None, :, :] - xt[:, None, :]                                    # (T, N, F)
    act = jnp.maximum(diff * scd_ref[...].reshape(1, 1, f)
                      + shd_ref[...].reshape(1, 1, f), 0.0)
    msg = jnp.dot(act.reshape(t * n, f), wd_ref[...],
                  preferred_element_type=jnp.float32).reshape(t, n, h)        # (T, N, H)

    adj = adj_ref[...]                                                        # (T, N)
    masked = jnp.where(adj[:, :, None] > 0.0, msg, NEG_BIG)
    agg = jnp.max(masked, axis=1)                                             # (T, H)
    has = jnp.max(adj, axis=1, keepdims=True) > 0.0
    return jnp.where(has, agg + self_term, 0.0)


def _edge_conv_cat_kernel(xt_ref, adj_ref, xs_ref, xdyn_ref, sci_ref, shi_ref,
                          scd_ref, shd_ref, wi_ref, wd_ref, o_ref):
    res = _edge_conv_core(xt_ref, adj_ref, xs_ref, sci_ref, shi_ref,
                          scd_ref, shd_ref, wi_ref, wd_ref)
    # Fused concat [x_dyn, x_static] -> lane-denser (T, 2H) store.
    o_ref[...] = jnp.concatenate([xdyn_ref[...], res], axis=1)


def _edge_conv_fc_kernel(xt_ref, adj_ref, xs_ref, xdyn_ref, sci_ref, shi_ref,
                         scd_ref, shd_ref, wi_ref, wd_ref, fcw_ref, fcb_ref, o_ref):
    res = _edge_conv_core(xt_ref, adj_ref, xs_ref, sci_ref, shi_ref,
                          scd_ref, shd_ref, wi_ref, wd_ref)
    cat = jnp.concatenate([xdyn_ref[...], res], axis=1)                       # (T, 2H)
    o_ref[...] = jnp.dot(cat, fcw_ref[...],
                         preferred_element_type=jnp.float32) + fcb_ref[...]


def _edge_conv_specs(tile, n, f, h):
    return [
        pl.BlockSpec((tile, f), lambda i: (i, 0)),        # target tile
        pl.BlockSpec((tile, n), lambda i: (i, 0)),        # lane-dense adjacency rows
        pl.BlockSpec((n, f), lambda i: (0, 0)),           # all sources
        pl.BlockSpec((tile, h), lambda i: (i, 0)),        # dyn half to concatenate
        pl.BlockSpec((1, f), lambda i: (0, 0)),
        pl.BlockSpec((1, f), lambda i: (0, 0)),
        pl.BlockSpec((1, f), lambda i: (0, 0)),
        pl.BlockSpec((1, f), lambda i: (0, 0)),
        pl.BlockSpec((f, h), lambda i: (0, 0)),
        pl.BlockSpec((f, h), lambda i: (0, 0)),
    ]


def edge_conv_cat(x, adj, x_dyn, p, tile):
    """adj: (N, N) dense target-major adjacency, adj[target, source] = 1.0."""
    n, f = x.shape
    h = p["wi"].shape[1]
    return pl.pallas_call(
        _edge_conv_cat_kernel,
        out_shape=jax.ShapeDtypeStruct((n, 2 * h), jnp.float32),
        grid=(n // tile,),
        in_specs=_edge_conv_specs(tile, n, f, h),
        out_specs=pl.BlockSpec((tile, 2 * h), lambda i: (i, 0)),
        compiler_params=pltpu.CompilerParams(
            dimension_semantics=("parallel",)),
    )(x, adj, x, x_dyn, p["sc_i"], p["sh_i"], p["sc_d"], p["sh_d"], p["wi"], p["wd"])


def edge_conv_fc(x, adj, x_dyn, p, fc_w, fc_b, tile):
    n, f = x.shape
    h = p["wi"].shape[1]
    fout = fc_w.shape[1]
    specs = _edge_conv_specs(tile, n, f, h) + [
        pl.BlockSpec((2 * h, fout), lambda i: (0, 0)),
        pl.BlockSpec((1, fout), lambda i: (0, 0)),
    ]
    return pl.pallas_call(
        _edge_conv_fc_kernel,
        out_shape=jax.ShapeDtypeStruct((n, fout), jnp.float32),
        grid=(n // tile,),
        in_specs=specs,
        out_specs=pl.BlockSpec((tile, fout), lambda i: (i, 0)),
        compiler_params=pltpu.CompilerParams(
            dimension_semantics=("parallel",)),
    )(x, adj, x, x_dyn, p["sc_i"], p["sh_i"], p["sc_d"], p["sh_d"],
      p["wi"], p["wd"], fc_w, fc_b)


# --------------------------- parameters / glue ------------------------------ #

def make_lpp_params(key, in_channels, hidden):
    """LinearPathPreact: BN(in_channels) -> ReLU -> Linear(in, hidden, bias=False).

    BN (eval mode, default running stats) folded into per-feature scale/shift; the
    2F message features split into the x_i half and the (x_j - x_i) half.
    """
    f = in_channels // 2
    w = (jax.random.normal(key, (in_channels, hidden), jnp.float32)
         / jnp.sqrt(jnp.float32(in_channels)))
    scale = jnp.full((1, in_channels), 1.0 / jnp.sqrt(1.0 + BN_EPS), jnp.float32)
    shift = jnp.zeros((1, in_channels), jnp.float32)
    return {
        "sc_i": scale[:, :f], "sh_i": shift[:, :f],
        "sc_d": scale[:, f:], "sh_d": shift[:, f:],
        "wi": w[:f, :], "wd": w[f:, :],
    }


def maas_forward(x, edge_index, batch, params, k):
    n = x.shape[0]
    hidden = params["red_a_w"].shape[1]
    tile_big, tile_ec, n_pad = _pick_tiles(n, 2 * hidden, hidden)
    pad = n_pad - n

    xp = jnp.pad(x, ((0, pad), (0, 0)))
    batch_p = jnp.concatenate(
        [batch.astype(jnp.int32), jnp.full((pad,), -1, jnp.int32)])
    b_col = batch_p[:, None]                           # (n_pad, 1) int32
    b_row = batch_p[None, :]                           # (1, n_pad) int32
    # x0[0::5] = x0_a[0::5]  -> every 5th global row takes the audio branch
    audio_mask = ((jnp.arange(n_pad) % 5) == 0).astype(jnp.float32)[:, None]

    # dense target-major static adjacency: adj[dst, src] = 1  (padded rows/cols = 0)
    src, dst = edge_index[0], edge_index[1]
    adj_static = jnp.zeros((n_pad, n_pad), jnp.float32).at[dst, src].set(1.0)

    # merged [audio | visual] projection weights
    w_red = jnp.concatenate([params["red_a_w"], params["red_v_w"]], axis=1)   # (Fin, 2H)
    b_red = jnp.concatenate([params["red_a_b"], params["red_v_b"]])[None, :]  # (1, 2H)

    x0 = fused_dim_reduction(xp, audio_mask, w_red, b_red, hidden, tile_big)

    def dyn_layer(xin, p):
        sqn = jnp.sum(xin * xin, axis=1)[None, :]                  # (1, n_pad)
        idx = knn_indices(xin, sqn, b_col, b_row, k, tile_big)     # (n_pad, k) int32
        # TODO(synk): neighbour-row gather stays in XLA (O(N*k*F)); could move
        # in-kernel via scalar-prefetched indices for very large N.
        nbr = jnp.take(xin, idx.reshape(-1), axis=0)               # (n_pad*k, F)
        return dyn_edge_conv(xin, nbr, p, tile_big)

    x1_dyn = dyn_layer(x0, params["dyn1"])
    x2_dyn = dyn_layer(x1_dyn, params["dyn2"])
    x3_dyn = dyn_layer(x2_dyn, params["dyn3"])
    x4_dyn = dyn_layer(x3_dyn, params["dyn4"])

    # static layers with the dyn/static concat fused into the kernel epilogue;
    # the final fc is folded into the last edge conv.
    x1_cat = edge_conv_cat(x0, adj_static, x1_dyn, params["next1"], tile_ec)
    x2_cat = edge_conv_cat(x1_cat, adj_static, x2_dyn, params["next2"], tile_ec)
    x3_cat = edge_conv_cat(x2_cat, adj_static, x3_dyn, params["next3"], tile_ec)
    out = edge_conv_fc(x3_cat, adj_static, x4_dyn, params["next4"],
                       params["fc_w"], params["fc_b"].reshape(1, -1), tile_ec)
    return out[:n]


# --------------------------------- main ------------------------------------- #

if __name__ == "__main__":
    in_feats, hidden, k = 32, 16, 3
    graphs, per_graph = 2, 5
    n = graphs * per_graph

    key = jax.random.PRNGKey(0)
    keys = jax.random.split(key, 16)

    params = {
        "red_a_w": jax.random.normal(keys[0], (in_feats, hidden)) / jnp.sqrt(float(in_feats)),
        "red_a_b": jax.random.normal(keys[1], (hidden,)) * 0.1,
        "red_v_w": jax.random.normal(keys[2], (in_feats, hidden)) / jnp.sqrt(float(in_feats)),
        "red_v_b": jax.random.normal(keys[3], (hidden,)) * 0.1,
        "next1": make_lpp_params(keys[4], hidden * 2, hidden),
        "next2": make_lpp_params(keys[5], hidden * 2 * 2, hidden),
        "next3": make_lpp_params(keys[6], hidden * 2 * 2, hidden),
        "next4": make_lpp_params(keys[7], hidden * 2 * 2, hidden),
        "dyn1": make_lpp_params(keys[8], hidden * 2, hidden),
        "dyn2": make_lpp_params(keys[9], hidden * 2, hidden),
        "dyn3": make_lpp_params(keys[10], hidden * 2, hidden),
        "dyn4": make_lpp_params(keys[11], hidden * 2, hidden),
        "fc_w": jax.random.normal(keys[12], (hidden * 2, 2)) / jnp.sqrt(float(hidden * 2)),
        "fc_b": jax.random.normal(keys[13], (2,)) * 0.1,
    }
    params = jax.tree_util.tree_map(lambda a: a.astype(jnp.float32), params)

    x = jax.random.normal(keys[14], (n, in_feats), jnp.float32)
    batch = jnp.repeat(jnp.arange(graphs, dtype=jnp.int32), per_graph)

    # deterministic edge_index: fully connected within each graph, no self loops
    src_l, dst_l = [], []
    for g in range(graphs):
        for i in range(per_graph):
            for j in range(per_graph):
                if i != j:
                    src_l.append(g * per_graph + j)
                    dst_l.append(g * per_graph + i)
    edge_index = jnp.stack([jnp.array(src_l, jnp.int32),
                            jnp.array(dst_l, jnp.int32)])      # (2, E)

    fwd = jax.jit(functools.partial(maas_forward, k=k))
    out = fwd(x, edge_index, batch, params)
    out = jax.block_until_ready(out)
    assert out.shape == (n, 2) and out.dtype == jnp.float32
    assert bool(jnp.all(jnp.isfinite(out)))
    print("KERNEL_OK")
</pallas_src>

<mosaic_0001>
module attributes {stable_mosaic.version = 11 : i64} {
  func.func @_dimred_kernel(%arg0: i32, %arg1: memref<8x32xf32, #tpu.memory_space<vmem>>, %arg2: memref<8x1xf32, #tpu.memory_space<vmem>>, %arg3: memref<32x32xf32, #tpu.memory_space<vmem>>, %arg4: memref<1x32xf32, #tpu.memory_space<vmem>>, %arg5: memref<8x16xf32, #tpu.memory_space<vmem>>) attributes {dimension_semantics = [#tpu.dimension_semantics<parallel>], iteration_bounds = array<i64: 2>, scalar_prefetch = 0 : i64, scratch_operands = 0 : i64, tpu.core_type = #tpu.core_type<tc>, window_params = [{transform_indices = @transform_0, window_bounds = array<i64: 8, 32>}, {transform_indices = @transform_1, window_bounds = array<i64: 8, 1>}, {pipeline_mode = #tpu.pipeline_mode<synchronous>, transform_indices = @transform_2, window_bounds = array<i64: 32, 32>}, {pipeline_mode = #tpu.pipeline_mode<synchronous>, transform_indices = @transform_3, window_bounds = array<i64: 1, 32>}, {transform_indices = @transform_4, window_bounds = array<i64: 8, 16>}]} {
    %c0 = arith.constant 0 : index
    %c0_0 = arith.constant 0 : index
    %0 = vector.load %arg1[%c0, %c0_0] : memref<8x32xf32, #tpu.memory_space<vmem>>, vector<8x32xf32>
    %c0_1 = arith.constant 0 : index
    %c0_2 = arith.constant 0 : index
    %1 = vector.load %arg3[%c0_1, %c0_2] : memref<32x32xf32, #tpu.memory_space<vmem>>, vector<32x32xf32>
    %cst = arith.constant dense<0.000000e+00> : vector<8x32xf32>
    %2 = tpu.matmul %0, %1, %cst {dimension_numbers = #tpu.dot_dimension_numbers<[1], [0], [0], [1], [0, 0, 1, 1], [], []>} : vector<8x32xf32>, vector<32x32xf32>, vector<8x32xf32> -> vector<8x32xf32>
    %c0_3 = arith.constant 0 : index
    %c0_4 = arith.constant 0 : index
    %3 = vector.load %arg4[%c0_3, %c0_4] : memref<1x32xf32, #tpu.memory_space<vmem>>, vector<1x32xf32>
    %4 = vector.broadcast %3 : vector<1x32xf32> to vector<8x32xf32>
    %5 = arith.addf %2, %4 : vector<8x32xf32>
    %c0_5 = arith.constant 0 : index
    %c0_6 = arith.constant 0 : index
    %6 = vector.load %arg2[%c0_5, %c0_6] : memref<8x1xf32, #tpu.memory_space<vmem>>, vector<8x1xf32>
    %cst_7 = arith.constant 0.000000e+00 : f32
    %7 = vector.broadcast %cst_7 : f32 to vector<8x1xf32>
    %8 = arith.cmpf ogt, %6, %7 : vector<8x1xf32>
    %9 = vector.extract_strided_slice %5 {offsets = [0, 0], sizes = [8, 16], strides = [1, 1]} : vector<8x32xf32> to vector<8x16xf32>
    %10 = vector.extract_strided_slice %5 {offsets = [0, 16], sizes = [8, 16], strides = [1, 1]} : vector<8x32xf32> to vector<8x16xf32>
    %11 = vector.shape_cast %8 : vector<8x1xi1> to vector<8x1xi1>
    %12 = vector.broadcast %11 : vector<8x1xi1> to vector<8x16xi1>
    %13 = arith.select %12, %9, %10 : vector<8x16xi1>, vector<8x16xf32>
    %c0_8 = arith.constant 0 : index
    %c0_9 = arith.constant 0 : index
    %14 = vector.load %arg5[%c0_8, %c0_9] : memref<8x16xf32, #tpu.memory_space<vmem>>, vector<8x16xf32>
    tpu.vector_store %arg5[%c0_8, %c0_9], %13 {strides = array<i32>} : memref<8x16xf32, #tpu.memory_space<vmem>>, vector<8x16xf32>,
    return
  }
  func.func @transform_0(%arg0: i32) -> (i32, i32) {
    %c0_i32 = arith.constant 0 : i32
    %c0_i32_0 = arith.constant 0 : i32
    return %arg0, %c0_i32 : i32, i32
  }
  func.func @transform_1(%arg0: i32) -> (i32, i32) {
    %c0_i32 = arith.constant 0 : i32
    %c0_i32_0 = arith.constant 0 : i32
    return %arg0, %c0_i32 : i32, i32
  }
  func.func @transform_2(%arg0: i32) -> (i32, i32) {
    %c0_i32 = arith.constant 0 : i32
    %c0_i32_0 = arith.constant 0 : i32
    %c0_i32_1 = arith.constant 0 : i32
    return %c0_i32, %c0_i32_0 : i32, i32
  }
  func.func @transform_3(%arg0: i32) -> (i32, i32) {
    %c0_i32 = arith.constant 0 : i32
    %c0_i32_0 = arith.constant 0 : i32
    %c0_i32_1 = arith.constant 0 : i32
    return %c0_i32, %c0_i32_0 : i32, i32
  }
  func.func @transform_4(%arg0: i32) -> (i32, i32) {
    %c0_i32 = arith.constant 0 : i32
    %c0_i32_0 = arith.constant 0 : i32
    return %arg0, %c0_i32 : i32, i32
  }
}

module attributes {stable_mosaic.version = 11 : i64} {
  func.func @_knn_kernel(%arg0: i32, %arg1: memref<8x16xf32, #tpu.memory_space<vmem>>, %arg2: memref<16x16xf32, #tpu.memory_space<vmem>>, %arg3: memref<1x16xf32, #tpu.memory_space<vmem>>, %arg4: memref<8x1xi32, #tpu.memory_space<vmem>>, %arg5: memref<1x16xi32, #tpu.memory_space<vmem>>, %arg6: memref<8x3xi32, #tpu.memory_space<vmem>>) attributes {dimension_semantics = [#tpu.dimension_semantics<parallel>], iteration_bounds = array<i64: 2>, scalar_prefetch = 0 : i64, scratch_operands = 0 : i64, tpu.core_type = #tpu.core_type<tc>, window_params = [{transform_indices = @transform_0, window_bounds = array<i64: 8, 16>}, {pipeline_mode = #tpu.pipeline_mode<synchronous>, transform_indices = @transform_1, window_bounds = array<i64: 16, 16>}, {pipeline_mode = #tpu.pipeline_mode<synchronous>, transform_indices = @transform_2, window_bounds = array<i64: 1, 16>}, {transform_indices = @transform_3, window_bounds = array<i64: 8, 1>}, {pipeline_mode = #tpu.pipeline_mode<synchronous>, transform_indices = @transform_4, window_bounds = array<i64: 1, 16>}, {transform_indices = @transform_5, window_bounds = array<i64: 8, 3>}]} {
    %c0 = arith.constant 0 : index
    %c0_0 = arith.constant 0 : index
    %0 = vector.load %arg1[%c0, %c0_0] : memref<8x16xf32, #tpu.memory_space<vmem>>, vector<8x16xf32>
    %c0_1 = arith.constant 0 : index
    %c0_2 = arith.constant 0 : index
    %1 = vector.load %arg2[%c0_1, %c0_2] : memref<16x16xf32, #tpu.memory_space<vmem>>, vector<16x16xf32>
    %cst = arith.constant dense<0.000000e+00> : vector<8x16xf32>
    %2 = tpu.matmul %0, %1, %cst {dimension_numbers = #tpu.dot_dimension_numbers<[1], [1], [0], [0], [0, 0, 1, 0], [], []>} : vector<8x16xf32>, vector<16x16xf32>, vector<8x16xf32> -> vector<8x16xf32>
    %c0_3 = arith.constant 0 : index
    %c0_4 = arith.constant 0 : index
    %3 = vector.load %arg3[%c0_3, %c0_4] : memref<1x16xf32, #tpu.memory_space<vmem>>, vector<1x16xf32>
    %cst_5 = arith.constant 2.000000e+00 : f32
    %4 = vector.broadcast %cst_5 : f32 to vector<8x16xf32>
    %5 = arith.mulf %4, %2 : vector<8x16xf32>
    %6 = vector.broadcast %3 : vector<1x16xf32> to vector<8x16xf32>
    %7 = arith.subf %6, %5 : vector<8x16xf32>
    %c0_6 = arith.constant 0 : index
    %c0_7 = arith.constant 0 : index
    %8 = vector.load %arg4[%c0_6, %c0_7] : memref<8x1xi32, #tpu.memory_space<vmem>>, vector<8x1xi32>
    %c0_8 = arith.constant 0 : index
    %c0_9 = arith.constant 0 : index
    %9 = vector.load %arg5[%c0_8, %c0_9] : memref<1x16xi32, #tpu.memory_space<vmem>>, vector<1x16xi32>
    %10 = vector.broadcast %8 : vector<8x1xi32> to vector<8x16xi32>
    %11 = vector.broadcast %9 : vector<1x16xi32> to vector<8x16xi32>
    %12 = arith.cmpi eq, %10, %11 : vector<8x16xi32>
    %c8_i32 = arith.constant 8 : i32
    %13 = arith.muli %arg0, %c8_i32 : i32
    %14 = tpu.iota {dimensions = array<i32: 0>} : vector<8x16xi32>
    %15 = vector.broadcast %13 : i32 to vector<8x16xi32>
    %16 = arith.addi %15, %14 : vector<8x16xi32>
    %17 = tpu.iota {dimensions = array<i32: 1>} : vector<8x16xi32>
    %cst_10 = arith.constant 3.000000e+38 : f32
    %18 = vector.broadcast %cst_10 : f32 to vector<8x16xf32>
    %19 = arith.select %12, %7, %18 : vector<8x16xi1>, vector<8x16xf32>
    %20 = arith.cmpi eq, %16, %17 : vector<8x16xi32>
    %cst_11 = arith.constant -3.000000e+38 : f32
    %21 = vector.broadcast %cst_11 : f32 to vector<8x16xf32>
    %22 = arith.select %20, %21, %19 : vector<8x16xi1>, vector<8x16xf32>
    %c8_i32_12 = arith.constant 8 : i32
    %23 = arith.muli %arg0, %c8_i32_12 : i32
    %24 = tpu.iota {dimensions = array<i32: 0>} : vector<8x1xi32>
    %25 = vector.broadcast %23 : i32 to vector<8x1xi32>
    %26 = arith.addi %25, %24 : vector<8x1xi32>
    %cst_13 = arith.constant dense<0x7F800000> : vector<8xf32>
    %27 = vector.multi_reduction <minimumf>, %22, %cst_13 [1] : vector<8x16xf32> to vector<8xf32>
    %28 = vector.shape_cast %27 : vector<8xf32> to vector<8x1xf32>
    %29 = vector.broadcast %28 : vector<8x1xf32> to vector<8x16xf32>
    %30 = arith.cmpf oeq, %22, %29 : vector<8x16xf32>
    %c16_i32 = arith.constant 16 : i32
    %31 = vector.broadcast %c16_i32 : i32 to vector<8x16xi32>
    %32 = arith.select %30, %17, %31 : vector<8x16xi1>, vector<8x16xi32>
    %cst_14 = arith.constant dense<2147483647> : vector<8xi32>
    %33 = vector.multi_reduction <minsi>, %32, %cst_14 [1] : vector<8x16xi32> to vector<8xi32>
    %34 = vector.shape_cast %33 : vector<8xi32> to vector<8x1xi32>
    %cst_15 = arith.constant 9.99999993E+36 : f32
    %35 = vector.broadcast %cst_15 : f32 to vector<8x1xf32>
    %36 = arith.cmpf olt, %28, %35 : vector<8x1xf32>
    %37 = arith.select %36, %34, %26 : vector<8x1xi1>, vector<8x1xi32>
    %38 = vector.broadcast %37 : vector<8x1xi32> to vector<8x16xi32>
    %39 = arith.cmpi eq, %17, %38 : vector<8x16xi32>
    %cst_16 = arith.constant 3.000000e+38 : f32
    %40 = vector.broadcast %cst_16 : f32 to vector<8x16xf32>
    %41 = arith.select %39, %40, %22 : vector<8x16xi1>, vector<8x16xf32>
    %cst_17 = arith.constant dense<0x7F800000> : vector<8xf32>
    %42 = vector.multi_reduction <minimumf>, %41, %cst_17 [1] : vector<8x16xf32> to vector<8xf32>
    %43 = vector.shape_cast %42 : vector<8xf32> to vector<8x1xf32>
    %44 = vector.broadcast %43 : vector<8x1xf32> to vector<8x16xf32>
    %45 = arith.cmpf oeq, %41, %44 : vector<8x16xf32>
    %c16_i32_18 = arith.constant 16 : i32
    %46 = vector.broadcast %c16_i32_18 : i32 to vector<8x16xi32>
    %47 = arith.select %45, %17, %46 : vector<8x16xi1>, vector<8x16xi32>
    %cst_19 = arith.constant dense<2147483647> : vector<8xi32>
    %48 = vector.multi_reduction <minsi>, %47, %cst_19 [1] : vector<8x16xi32> to vector<8xi32>
    %49 = vector.shape_cast %48 : vector<8xi32> to vector<8x1xi32>
    %cst_20 = arith.constant 9.99999993E+36 : f32
    %50 = vector.broadcast %cst_20 : f32 to vector<8x1xf32>
    %51 = arith.cmpf olt, %43, %50 : vector<8x1xf32>
    %52 = arith.select %51, %49, %26 : vector<8x1xi1>, vector<8x1xi32>
    %53 = vector.broadcast %52 : vector<8x1xi32> to vector<8x16xi32>
    %54 = arith.cmpi eq, %17, %53 : vector<8x16xi32>
    %cst_21 = arith.constant 3.000000e+38 : f32
    %55 = vector.broadcast %cst_21 : f32 to vector<8x16xf32>
    %56 = arith.select %54, %55, %41 : vector<8x16xi1>, vector<8x16xf32>
    %cst_22 = arith.constant dense<0x7F800000> : vector<8xf32>
    %57 = vector.multi_reduction <minimumf>, %56, %cst_22 [1] : vector<8x16xf32> to vector<8xf32>
    %58 = vector.shape_cast %57 : vector<8xf32> to vector<8x1xf32>
    %59 = vector.broadcast %58 : vector<8x1xf32> to vector<8x16xf32>
    %60 = arith.cmpf oeq, %56, %59 : vector<8x16xf32>
    %c16_i32_23 = arith.constant 16 : i32
    %61 = vector.broadcast %c16_i32_23 : i32 to vector<8x16xi32>
    %62 = arith.select %60, %17, %61 : vector<8x16xi1>, vector<8x16xi32>
    %cst_24 = arith.constant dense<2147483647> : vector<8xi32>
    %63 = vector.multi_reduction <minsi>, %62, %cst_24 [1] : vector<8x16xi32> to vector<8xi32>
    %64 = vector.shape_cast %63 : vector<8xi32> to vector<8x1xi32>
    %cst_25 = arith.constant 9.99999993E+36 : f32
    %65 = vector.broadcast %cst_25 : f32 to vector<8x1xf32>
    %66 = arith.cmpf olt, %58, %65 : vector<8x1xf32>
    %67 = arith.select %66, %64, %26 : vector<8x1xi1>, vector<8x1xi32>
    %68 = tpu.concatenate %37, %52, %67 in 1 : vector<8x1xi32>, vector<8x1xi32>, vector<8x1xi32> -> vector<8x3xi32>
    %c0_26 = arith.constant 0 : index
    %c0_27 = arith.constant 0 : index
    %69 = vector.load %arg6[%c0_26, %c0_27] : memref<8x3xi32, #tpu.memory_space<vmem>>, vector<8x3xi32>
    tpu.vector_store %arg6[%c0_26, %c0_27], %68 {strides = array<i32>} : memref<8x3xi32, #tpu.memory_space<vmem>>, vector<8x3xi32>,
    return
  }
  func.func @transform_0(%arg0: i32) -> (i32, i32) {
    %c0_i32 = arith.constant 0 : i32
    %c0_i32_0 = arith.constant 0 : i32
    return %arg0, %c0_i32 : i32, i32
  }
  func.func @transform_1(%arg0: i32) -> (i32, i32) {
    %c0_i32 = arith.constant 0 : i32
    %c0_i32_0 = arith.constant 0 : i32
    %c0_i32_1 = arith.constant 0 : i32
    return %c0_i32, %c0_i32_0 : i32, i32
  }
  func.func @transform_2(%arg0: i32) -> (i32, i32) {
    %c0_i32 = arith.constant 0 : i32
    %c0_i32_0 = arith.constant 0 : i32
    %c0_i32_1 = arith.constant 0 : i32
    return %c0_i32, %c0_i32_0 : i32, i32
  }
  func.func @transform_3(%arg0: i32) -> (i32, i32) {
    %c0_i32 = arith.constant 0 : i32
    %c0_i32_0 = arith.constant 0 : i32
    return %arg0, %c0_i32 : i32, i32
  }
  func.func @transform_4(%arg0: i32) -> (i32, i32) {
    %c0_i32 = arith.constant 0 : i32
    %c0_i32_0 = arith.constant 0 : i32
    %c0_i32_1 = arith.constant 0 : i32
    return %c0_i32, %c0_i32_0 : i32, i32
  }
  func.func @transform_5(%arg0: i32) -> (i32, i32) {
    %c0_i32 = arith.constant 0 : i32
    %c0_i32_0 = arith.constant 0 : i32
    return %arg0, %c0_i32 : i32, i32
  }
}

module attributes {stable_mosaic.version = 11 : i64} {
  func.func @_dyn_edge_conv_kernel(%arg0: i32, %arg1: memref<8x16xf32, #tpu.memory_space<vmem>>, %arg2: memref<24x16xf32, #tpu.memory_space<vmem>>, %arg3: memref<1x16xf32, #tpu.memory_space<vmem>>, %arg4: memref<1x16xf32, #tpu.memory_space<vmem>>, %arg5: memref<1x16xf32, #tpu.memory_space<vmem>>, %arg6: memref<1x16xf32, #tpu.memory_space<vmem>>, %arg7: memref<16x16xf32, #tpu.memory_space<vmem>>, %arg8: memref<16x16xf32, #tpu.memory_space<vmem>>, %arg9: memref<8x16xf32, #tpu.memory_space<vmem>>) attributes {dimension_semantics = [#tpu.dimension_semantics<parallel>], iteration_bounds = array<i64: 2>, scalar_prefetch = 0 : i64, scratch_operands = 0 : i64, tpu.core_type = #tpu.core_type<tc>, window_params = [{transform_indices = @transform_0, window_bounds = array<i64: 8, 16>}, {transform_indices = @transform_1, window_bounds = array<i64: 24, 16>}, {pipeline_mode = #tpu.pipeline_mode<synchronous>, transform_indices = @transform_2, window_bounds = array<i64: 1, 16>}, {pipeline_mode = #tpu.pipeline_mode<synchronous>, transform_indices = @transform_3, window_bounds = array<i64: 1, 16>}, {pipeline_mode = #tpu.pipeline_mode<synchronous>, transform_indices = @transform_4, window_bounds = array<i64: 1, 16>}, {pipeline_mode = #tpu.pipeline_mode<synchronous>, transform_indices = @transform_5, window_bounds = array<i64: 1, 16>}, {pipeline_mode = #tpu.pipeline_mode<synchronous>, transform_indices = @transform_6, window_bounds = array<i64: 16, 16>}, {pipeline_mode = #tpu.pipeline_mode<synchronous>, transform_indices = @transform_7, window_bounds = array<i64: 16, 16>}, {transform_indices = @transform_8, window_bounds = array<i64: 8, 16>}]} {
    %c0 = arith.constant 0 : index
    %c0_0 = arith.constant 0 : index
    %0 = vector.load %arg1[%c0, %c0_0] : memref<8x16xf32, #tpu.memory_space<vmem>>, vector<8x16xf32>
    %c0_1 = arith.constant 0 : index
    %c0_2 = arith.constant 0 : index
    %1 = vector.load %arg3[%c0_1, %c0_2] : memref<1x16xf32, #tpu.memory_space<vmem>>, vector<1x16xf32>
    %2 = vector.broadcast %1 : vector<1x16xf32> to vector<8x16xf32>
    %3 = arith.mulf %0, %2 : vector<8x16xf32>
    %c0_3 = arith.constant 0 : index
    %c0_4 = arith.constant 0 : index
    %4 = vector.load %arg4[%c0_3, %c0_4] : memref<1x16xf32, #tpu.memory_space<vmem>>, vector<1x16xf32>
    %5 = vector.broadcast %4 : vector<1x16xf32> to vector<8x16xf32>
    %6 = arith.addf %3, %5 : vector<8x16xf32>
    %cst = arith.constant 0.000000e+00 : f32
    %7 = vector.broadcast %cst : f32 to vector<8x16xf32>
    %8 = arith.maximumf %6, %7 : vector<8x16xf32>
    %c0_5 = arith.constant 0 : index
    %c0_6 = arith.constant 0 : index
    %9 = vector.load %arg7[%c0_5, %c0_6] : memref<16x16xf32, #tpu.memory_space<vmem>>, vector<16x16xf32>
    %cst_7 = arith.constant dense<0.000000e+00> : vector<8x16xf32>
    %10 = tpu.matmul %8, %9, %cst_7 {dimension_numbers = #tpu.dot_dimension_numbers<[1], [0], [0], [1], [0, 0, 1, 1], [], []>} : vector<8x16xf32>, vector<16x16xf32>, vector<8x16xf32> -> vector<8x16xf32>
    %c0_8 = arith.constant 0 : index
    %c0_9 = arith.constant 0 : index
    %11 = vector.load %arg2[%c0_8, %c0_9] : memref<24x16xf32, #tpu.memory_space<vmem>>, vector<24x16xf32>
    %12 = vector.shape_cast %11 : vector<24x16xf32> to vector<8x3x16xf32>
    %13 = vector.shape_cast %0 : vector<8x16xf32> to vector<8x1x16xf32>
    %14 = vector.broadcast %13 : vector<8x1x16xf32> to vector<8x3x16xf32>
    %15 = arith.subf %12, %14 : vector<8x3x16xf32>
    %c0_10 = arith.constant 0 : index
    %c0_11 = arith.constant 0 : index
    %16 = vector.load %arg5[%c0_10, %c0_11] : memref<1x16xf32, #tpu.memory_space<vmem>>, vector<1x16xf32>
    %17 = vector.shape_cast %16 : vector<1x16xf32> to vector<1x1x16xf32>
    %18 = vector.broadcast %17 : vector<1x1x16xf32> to vector<8x3x16xf32>
    %19 = arith.mulf %15, %18 : vector<8x3x16xf32>
    %c0_12 = arith.constant 0 : index
    %c0_13 = arith.constant 0 : index
    %20 = vector.load %arg6[%c0_12, %c0_13] : memref<1x16xf32, #tpu.memory_space<vmem>>, vector<1x16xf32>
    %21 = vector.shape_cast %20 : vector<1x16xf32> to vector<1x1x16xf32>
    %22 = vector.broadcast %21 : vector<1x1x16xf32> to vector<8x3x16xf32>
    %23 = arith.addf %19, %22 : vector<8x3x16xf32>
    %cst_14 = arith.constant 0.000000e+00 : f32
    %24 = vector.broadcast %cst_14 : f32 to vector<8x3x16xf32>
    %25 = arith.maximumf %23, %24 : vector<8x3x16xf32>
    %26 = vector.shape_cast %25 : vector<8x3x16xf32> to vector<24x16xf32>
    %c0_15 = arith.constant 0 : index
    %c0_16 = arith.constant 0 : index
    %27 = vector.load %arg8[%c0_15, %c0_16] : memref<16x16xf32, #tpu.memory_space<vmem>>, vector<16x16xf32>
    %cst_17 = arith.constant dense<0.000000e+00> : vector<24x16xf32>
    %28 = tpu.matmul %26, %27, %cst_17 {dimension_numbers = #tpu.dot_dimension_numbers<[1], [0], [0], [1], [0, 0, 1, 1], [], []>} : vector<24x16xf32>, vector<16x16xf32>, vector<24x16xf32> -> vector<24x16xf32>
    %29 = vector.shape_cast %28 : vector<24x16xf32> to vector<8x3x16xf32>
    %cst_18 = arith.constant dense<0xFF800000> : vector<8x16xf32>
    %30 = vector.multi_reduction <maximumf>, %29, %cst_18 [1] : vector<8x3x16xf32> to vector<8x16xf32>
    %31 = arith.addf %30, %10 : vector<8x16xf32>
    %c0_19 = arith.constant 0 : index
    %c0_20 = arith.constant 0 : index
    %32 = vector.load %arg9[%c0_19, %c0_20] : memref<8x16xf32, #tpu.memory_space<vmem>>, vector<8x16xf32>
    tpu.vector_store %arg9[%c0_19, %c0_20], %31 {strides = array<i32>} : memref<8x16xf32, #tpu.memory_space<vmem>>, vector<8x16xf32>,
    return
  }
  func.func @transform_0(%arg0: i32) -> (i32, i32) {
    %c0_i32 = arith.constant 0 : i32
    %c0_i32_0 = arith.constant 0 : i32
    return %arg0, %c0_i32 : i32, i32
  }
  func.func @transform_1(%arg0: i32) -> (i32, i32) {
    %c0_i32 = arith.constant 0 : i32
    %c0_i32_0 = arith.constant 0 : i32
    return %arg0, %c0_i32 : i32, i32
  }
  func.func @transform_2(%arg0: i32) -> (i32, i32) {
    %c0_i32 = arith.constant 0 : i32
    %c0_i32_0 = arith.constant 0 : i32
    %c0_i32_1 = arith.constant 0 : i32
    return %c0_i32, %c0_i32_0 : i32, i32
  }
  func.func @transform_3(%arg0: i32) -> (i32, i32) {
    %c0_i32 = arith.constant 0 : i32
    %c0_i32_0 = arith.constant 0 : i32
    %c0_i32_1 = arith.constant 0 : i32
    return %c0_i32, %c0_i32_0 : i32, i32
  }
  func.func @transform_4(%arg0: i32) -> (i32, i32) {
    %c0_i32 = arith.constant 0 : i32
    %c0_i32_0 = arith.constant 0 : i32
    %c0_i32_1 = arith.constant 0 : i32
    return %c0_i32, %c0_i32_0 : i32, i32
  }
  func.func @transform_5(%arg0: i32) -> (i32, i32) {
    %c0_i32 = arith.constant 0 : i32
    %c0_i32_0 = arith.constant 0 : i32
    %c0_i32_1 = arith.constant 0 : i32
    return %c0_i32, %c0_i32_0 : i32, i32
  }
  func.func @transform_6(%arg0: i32) -> (i32, i32) {
    %c0_i32 = arith.constant 0 : i32
    %c0_i32_0 = arith.constant 0 : i32
    %c0_i32_1 = arith.constant 0 : i32
    return %c0_i32, %c0_i32_0 : i32, i32
  }
  func.func @transform_7(%arg0: i32) -> (i32, i32) {
    %c0_i32 = arith.constant 0 : i32
    %c0_i32_0 = arith.constant 0 : i32
    %c0_i32_1 = arith.constant 0 : i32
    return %c0_i32, %c0_i32_0 : i32, i32
  }
  func.func @transform_8(%arg0: i32) -> (i32, i32) {
    %c0_i32 = arith.constant 0 : i32
    %c0_i32_0 = arith.constant 0 : i32
    return %arg0, %c0_i32 : i32, i32
  }
}

module attributes {stable_mosaic.version = 11 : i64} {
  func.func @_edge_conv_cat_kernel(%arg0: i32, %arg1: memref<8x16xf32, #tpu.memory_space<vmem>>, %arg2: memref<8x16xf32, #tpu.memory_space<vmem>>, %arg3: memref<16x16xf32, #tpu.memory_space<vmem>>, %arg4: memref<8x16xf32, #tpu.memory_space<vmem>>, %arg5: memref<1x16xf32, #tpu.memory_space<vmem>>, %arg6: memref<1x16xf32, #tpu.memory_space<vmem>>, %arg7: memref<1x16xf32, #tpu.memory_space<vmem>>, %arg8: memref<1x16xf32, #tpu.memory_space<vmem>>, %arg9: memref<16x16xf32, #tpu.memory_space<vmem>>, %arg10: memref<16x16xf32, #tpu.memory_space<vmem>>, %arg11: memref<8x32xf32, #tpu.memory_space<vmem>>) attributes {dimension_semantics = [#tpu.dimension_semantics<parallel>], iteration_bounds = array<i64: 2>, scalar_prefetch = 0 : i64, scratch_operands = 0 : i64, tpu.core_type = #tpu.core_type<tc>, window_params = [{transform_indices = @transform_0, window_bounds = array<i64: 8, 16>}, {transform_indices = @transform_1, window_bounds = array<i64: 8, 16>}, {pipeline_mode = #tpu.pipeline_mode<synchronous>, transform_indices = @transform_2, window_bounds = array<i64: 16, 16>}, {transform_indices = @transform_3, window_bounds = array<i64: 8, 16>}, {pipeline_mode = #tpu.pipeline_mode<synchronous>, transform_indices = @transform_4, window_bounds = array<i64: 1, 16>}, {pipeline_mode = #tpu.pipeline_mode<synchronous>, transform_indices = @transform_5, window_bounds = array<i64: 1, 16>}, {pipeline_mode = #tpu.pipeline_mode<synchronous>, transform_indices = @transform_6, window_bounds = array<i64: 1, 16>}, {pipeline_mode = #tpu.pipeline_mode<synchronous>, transform_indices = @transform_7, window_bounds = array<i64: 1, 16>}, {pipeline_mode = #tpu.pipeline_mode<synchronous>, transform_indices = @transform_8, window_bounds = array<i64: 16, 16>}, {pipeline_mode = #tpu.pipeline_mode<synchronous>, transform_indices = @transform_9, window_bounds = array<i64: 16, 16>}, {transform_indices = @transform_10, window_bounds = array<i64: 8, 32>}]} {
    %c0 = arith.constant 0 : index
    %c0_0 = arith.constant 0 : index
    %0 = vector.load %arg1[%c0, %c0_0] : memref<8x16xf32, #tpu.memory_space<vmem>>, vector<8x16xf32>
    %c0_1 = arith.constant 0 : index
    %c0_2 = arith.constant 0 : index
    %1 = vector.load %arg3[%c0_1, %c0_2] : memref<16x16xf32, #tpu.memory_space<vmem>>, vector<16x16xf32>
    %c0_3 = arith.constant 0 : index
    %c0_4 = arith.constant 0 : index
    %2 = vector.load %arg5[%c0_3, %c0_4] : memref<1x16xf32, #tpu.memory_space<vmem>>, vector<1x16xf32>
    %3 = vector.broadcast %2 : vector<1x16xf32> to vector<8x16xf32>
    %4 = arith.mulf %0, %3 : vector<8x16xf32>
    %c0_5 = arith.constant 0 : index
    %c0_6 = arith.constant 0 : index
    %5 = vector.load %arg6[%c0_5, %c0_6] : memref<1x16xf32, #tpu.memory_space<vmem>>, vector<1x16xf32>
    %6 = vector.broadcast %5 : vector<1x16xf32> to vector<8x16xf32>
    %7 = arith.addf %4, %6 : vector<8x16xf32>
    %cst = arith.constant 0.000000e+00 : f32
    %8 = vector.broadcast %cst : f32 to vector<8x16xf32>
    %9 = arith.maximumf %7, %8 : vector<8x16xf32>
    %c0_7 = arith.constant 0 : index
    %c0_8 = arith.constant 0 : index
    %10 = vector.load %arg9[%c0_7, %c0_8] : memref<16x16xf32, #tpu.memory_space<vmem>>, vector<16x16xf32>
    %cst_9 = arith.constant dense<0.000000e+00> : vector<8x16xf32>
    %11 = tpu.matmul %9, %10, %cst_9 {dimension_numbers = #tpu.dot_dimension_numbers<[1], [0], [0], [1], [0, 0, 1, 1], [], []>} : vector<8x16xf32>, vector<16x16xf32>, vector<8x16xf32> -> vector<8x16xf32>
    %12 = vector.shape_cast %1 : vector<16x16xf32> to vector<1x16x16xf32>
    %13 = vector.shape_cast %0 : vector<8x16xf32> to vector<8x1x16xf32>
    %14 = vector.broadcast %12 : vector<1x16x16xf32> to vector<8x16x16xf32>
    %15 = vector.broadcast %13 : vector<8x1x16xf32> to vector<8x16x16xf32>
    %16 = arith.subf %14, %15 : vector<8x16x16xf32>
    %c0_10 = arith.constant 0 : index
    %c0_11 = arith.constant 0 : index
    %17 = vector.load %arg7[%c0_10, %c0_11] : memref<1x16xf32, #tpu.memory_space<vmem>>, vector<1x16xf32>
    %18 = vector.shape_cast %17 : vector<1x16xf32> to vector<1x1x16xf32>
    %19 = vector.broadcast %18 : vector<1x1x16xf32> to vector<8x16x16xf32>
    %20 = arith.mulf %16, %19 : vector<8x16x16xf32>
    %c0_12 = arith.constant 0 : index
    %c0_13 = arith.constant 0 : index
    %21 = vector.load %arg8[%c0_12, %c0_13] : memref<1x16xf32, #tpu.memory_space<vmem>>, vector<1x16xf32>
    %22 = vector.shape_cast %21 : vector<1x16xf32> to vector<1x1x16xf32>
    %23 = vector.broadcast %22 : vector<1x1x16xf32> to vector<8x16x16xf32>
    %24 = arith.addf %20, %23 : vector<8x16x16xf32>
    %cst_14 = arith.constant 0.000000e+00 : f32
    %25 = vector.broadcast %cst_14 : f32 to vector<8x16x16xf32>
    %26 = arith.maximumf %24, %25 : vector<8x16x16xf32>
    %27 = vector.shape_cast %26 : vector<8x16x16xf32> to vector<128x16xf32>
    %c0_15 = arith.constant 0 : index
    %c0_16 = arith.constant 0 : index
    %28 = vector.load %arg10[%c0_15, %c0_16] : memref<16x16xf32, #tpu.memory_space<vmem>>, vector<16x16xf32>
    %cst_17 = arith.constant dense<0.000000e+00> : vector<128x16xf32>
    %29 = tpu.matmul %27, %28, %cst_17 {dimension_numbers = #tpu.dot_dimension_numbers<[1], [0], [0], [1], [0, 0, 1, 1], [], []>} : vector<128x16xf32>, vector<16x16xf32>, vector<128x16xf32> -> vector<128x16xf32>
    %30 = vector.shape_cast %29 : vector<128x16xf32> to vector<8x16x16xf32>
    %c0_18 = arith.constant 0 : index
    %c0_19 = arith.constant 0 : index
    %31 = vector.load %arg2[%c0_18, %c0_19] : memref<8x16xf32, #tpu.memory_space<vmem>>, vector<8x16xf32>
    %32 = vector.shape_cast %31 : vector<8x16xf32> to vector<8x16x1xf32>
    %cst_20 = arith.constant 0.000000e+00 : f32
    %33 = vector.broadcast %cst_20 : f32 to vector<8x16x1xf32>
    %34 = arith.cmpf ogt, %32, %33 : vector<8x16x1xf32>
    %cst_21 = arith.constant -1.000000e+30 : f32
    %35 = vector.shape_cast %34 : vector<8x16x1xi1> to vector<8x16x1xi1>
    %36 = vector.broadcast %35 : vector<8x16x1xi1> to vector<8x16x16xi1>
    %37 = vector.broadcast %cst_21 : f32 to vector<8x16x16xf32>
    %38 = arith.select %36, %30, %37 : vector<8x16x16xi1>, vector<8x16x16xf32>
    %cst_22 = arith.constant dense<0xFF800000> : vector<8x16xf32>
    %39 = vector.multi_reduction <maximumf>, %38, %cst_22 [1] : vector<8x16x16xf32> to vector<8x16xf32>
    %cst_23 = arith.constant dense<0xFF800000> : vector<8xf32>
    %40 = vector.multi_reduction <maximumf>, %31, %cst_23 [1] : vector<8x16xf32> to vector<8xf32>
    %41 = vector.shape_cast %40 : vector<8xf32> to vector<8x1xf32>
    %cst_24 = arith.constant 0.000000e+00 : f32
    %42 = vector.broadcast %cst_24 : f32 to vector<8x1xf32>
    %43 = arith.cmpf ogt, %41, %42 : vector<8x1xf32>
    %44 = arith.addf %39, %11 : vector<8x16xf32>
    %cst_25 = arith.constant 0.000000e+00 : f32
    %45 = vector.shape_cast %43 : vector<8x1xi1> to vector<8x1xi1>
    %46 = vector.broadcast %45 : vector<8x1xi1> to vector<8x16xi1>
    %47 = vector.broadcast %cst_25 : f32 to vector<8x16xf32>
    %48 = arith.select %46, %44, %47 : vector<8x16xi1>, vector<8x16xf32>
    %c0_26 = arith.constant 0 : index
    %c0_27 = arith.constant 0 : index
    %49 = vector.load %arg4[%c0_26, %c0_27] : memref<8x16xf32, #tpu.memory_space<vmem>>, vector<8x16xf32>
    %50 = tpu.concatenate %49, %48 in 1 : vector<8x16xf32>, vector<8x16xf32> -> vector<8x32xf32>
    %c0_28 = arith.constant 0 : index
    %c0_29 = arith.constant 0 : index
    %51 = vector.load %arg11[%c0_28, %c0_29] : memref<8x32xf32, #tpu.memory_space<vmem>>, vector<8x32xf32>
    tpu.vector_store %arg11[%c0_28, %c0_29], %50 {strides = array<i32>} : memref<8x32xf32, #tpu.memory_space<vmem>>, vector<8x32xf32>,
    return
  }
  func.func @transform_0(%arg0: i32) -> (i32, i32) {
    %c0_i32 = arith.constant 0 : i32
    %c0_i32_0 = arith.constant 0 : i32
    return %arg0, %c0_i32 : i32, i32
  }
  func.func @transform_1(%arg0: i32) -> (i32, i32) {
    %c0_i32 = arith.constant 0 : i32
    %c0_i32_0 = arith.constant 0 : i32
    return %arg0, %c0_i32 : i32, i32
  }
  func.func @transform_2(%arg0: i32) -> (i32, i32) {
    %c0_i32 = arith.constant 0 : i32
    %c0_i32_0 = arith.constant 0 : i32
    %c0_i32_1 = arith.constant 0 : i32
    return %c0_i32, %c0_i32_0 : i32, i32
  }
  func.func @transform_3(%arg0: i32) -> (i32, i32) {
    %c0_i32 = arith.constant 0 : i32
    %c0_i32_0 = arith.constant 0 : i32
    return %arg0, %c0_i32 : i32, i32
  }
  func.func @transform_4(%arg0: i32) -> (i32, i32) {
    %c0_i32 = arith.constant 0 : i32
    %c0_i32_0 = arith.constant 0 : i32
    %c0_i32_1 = arith.constant 0 : i32
    return %c0_i32, %c0_i32_0 : i32, i32
  }
  func.func @transform_5(%arg0: i32) -> (i32, i32) {
    %c0_i32 = arith.constant 0 : i32
    %c0_i32_0 = arith.constant 0 : i32
    %c0_i32_1 = arith.constant 0 : i32
    return %c0_i32, %c0_i32_0 : i32, i32
  }
  func.func @transform_6(%arg0: i32) -> (i32, i32) {
    %c0_i32 = arith.constant 0 : i32
    %c0_i32_0 = arith.constant 0 : i32
    %c0_i32_1 = arith.constant 0 : i32
    return %c0_i32, %c0_i32_0 : i32, i32
  }
  func.func @transform_7(%arg0: i32) -> (i32, i32) {
    %c0_i32 = arith.constant 0 : i32
    %c0_i32_0 = arith.constant 0 : i32
    %c0_i32_1 = arith.constant 0 : i32
    return %c0_i32, %c0_i32_0 : i32, i32
  }
  func.func @transform_8(%arg0: i32) -> (i32, i32) {
    %c0_i32 = arith.constant 0 : i32
    %c0_i32_0 = arith.constant 0 : i32
    %c0_i32_1 = arith.constant 0 : i32
    return %c0_i32, %c0_i32_0 : i32, i32
  }
  func.func @transform_9(%arg0: i32) -> (i32, i32) {
    %c0_i32 = arith.constant 0 : i32
    %c0_i32_0 = arith.constant 0 : i32
    %c0_i32_1 = arith.constant 0 : i32
    return %c0_i32, %c0_i32_0 : i32, i32
  }
  func.func @transform_10(%arg0: i32) -> (i32, i32) {
    %c0_i32 = arith.constant 0 : i32
    %c0_i32_0 = arith.constant 0 : i32
    return %arg0, %c0_i32 : i32, i32
  }
}

module attributes {stable_mosaic.version = 11 : i64} {
  func.func @_edge_conv_cat_kernel(%arg0: i32, %arg1: memref<8x32xf32, #tpu.memory_space<vmem>>, %arg2: memref<8x16xf32, #tpu.memory_space<vmem>>, %arg3: memref<16x32xf32, #tpu.memory_space<vmem>>, %arg4: memref<8x16xf32, #tpu.memory_space<vmem>>, %arg5: memref<1x32xf32, #tpu.memory_space<vmem>>, %arg6: memref<1x32xf32, #tpu.memory_space<vmem>>, %arg7: memref<1x32xf32, #tpu.memory_space<vmem>>, %arg8: memref<1x32xf32, #tpu.memory_space<vmem>>, %arg9: memref<32x16xf32, #tpu.memory_space<vmem>>, %arg10: memref<32x16xf32, #tpu.memory_space<vmem>>, %arg11: memref<8x32xf32, #tpu.memory_space<vmem>>) attributes {dimension_semantics = [#tpu.dimension_semantics<parallel>], iteration_bounds = array<i64: 2>, scalar_prefetch = 0 : i64, scratch_operands = 0 : i64, tpu.core_type = #tpu.core_type<tc>, window_params = [{transform_indices = @transform_0, window_bounds = array<i64: 8, 32>}, {transform_indices = @transform_1, window_bounds = array<i64: 8, 16>}, {pipeline_mode = #tpu.pipeline_mode<synchronous>, transform_indices = @transform_2, window_bounds = array<i64: 16, 32>}, {transform_indices = @transform_3, window_bounds = array<i64: 8, 16>}, {pipeline_mode = #tpu.pipeline_mode<synchronous>, transform_indices = @transform_4, window_bounds = array<i64: 1, 32>}, {pipeline_mode = #tpu.pipeline_mode<synchronous>, transform_indices = @transform_5, window_bounds = array<i64: 1, 32>}, {pipeline_mode = #tpu.pipeline_mode<synchronous>, transform_indices = @transform_6, window_bounds = array<i64: 1, 32>}, {pipeline_mode = #tpu.pipeline_mode<synchronous>, transform_indices = @transform_7, window_bounds = array<i64: 1, 32>}, {pipeline_mode = #tpu.pipeline_mode<synchronous>, transform_indices = @transform_8, window_bounds = array<i64: 32, 16>}, {pipeline_mode = #tpu.pipeline_mode<synchronous>, transform_indices = @transform_9, window_bounds = array<i64: 32, 16>}, {transform_indices = @transform_10, window_bounds = array<i64: 8, 32>}]} {
    %c0 = arith.constant 0 : index
    %c0_0 = arith.constant 0 : index
    %0 = vector.load %arg1[%c0, %c0_0] : memref<8x32xf32, #tpu.memory_space<vmem>>, vector<8x32xf32>
    %c0_1 = arith.constant 0 : index
    %c0_2 = arith.constant 0 : index
    %1 = vector.load %arg3[%c0_1, %c0_2] : memref<16x32xf32, #tpu.memory_space<vmem>>, vector<16x32xf32>
    %c0_3 = arith.constant 0 : index
    %c0_4 = arith.constant 0 : index
    %2 = vector.load %arg5[%c0_3, %c0_4] : memref<1x32xf32, #tpu.memory_space<vmem>>, vector<1x32xf32>
    %3 = vector.broadcast %2 : vector<1x32xf32> to vector<8x32xf32>
    %4 = arith.mulf %0, %3 : vector<8x32xf32>
    %c0_5 = arith.constant 0 : index
    %c0_6 = arith.constant 0 : index
    %5 = vector.load %arg6[%c0_5, %c0_6] : memref<1x32xf32, #tpu.memory_space<vmem>>, vector<1x32xf32>
    %6 = vector.broadcast %5 : vector<1x32xf32> to vector<8x32xf32>
    %7 = arith.addf %4, %6 : vector<8x32xf32>
    %cst = arith.constant 0.000000e+00 : f32
    %8 = vector.broadcast %cst : f32 to vector<8x32xf32>
    %9 = arith.maximumf %7, %8 : vector<8x32xf32>
    %c0_7 = arith.constant 0 : index
    %c0_8 = arith.constant 0 : index
    %10 = vector.load %arg9[%c0_7, %c0_8] : memref<32x16xf32, #tpu.memory_space<vmem>>, vector<32x16xf32>
    %cst_9 = arith.constant dense<0.000000e+00> : vector<8x16xf32>
    %11 = tpu.matmul %9, %10, %cst_9 {dimension_numbers = #tpu.dot_dimension_numbers<[1], [0], [0], [1], [0, 0, 1, 1], [], []>} : vector<8x32xf32>, vector<32x16xf32>, vector<8x16xf32> -> vector<8x16xf32>
    %12 = vector.shape_cast %1 : vector<16x32xf32> to vector<1x16x32xf32>
    %13 = vector.shape_cast %0 : vector<8x32xf32> to vector<8x1x32xf32>
    %14 = vector.broadcast %12 : vector<1x16x32xf32> to vector<8x16x32xf32>
    %15 = vector.broadcast %13 : vector<8x1x32xf32> to vector<8x16x32xf32>
    %16 = arith.subf %14, %15 : vector<8x16x32xf32>
    %c0_10 = arith.constant 0 : index
    %c0_11 = arith.constant 0 : index
    %17 = vector.load %arg7[%c0_10, %c0_11] : memref<1x32xf32, #tpu.memory_space<vmem>>, vector<1x32xf32>
    %18 = vector.shape_cast %17 : vector<1x32xf32> to vector<1x1x32xf32>
    %19 = vector.broadcast %18 : vector<1x1x32xf32> to vector<8x16x32xf32>
    %20 = arith.mulf %16, %19 : vector<8x16x32xf32>
    %c0_12 = arith.constant 0 : index
    %c0_13 = arith.constant 0 : index
    %21 = vector.load %arg8[%c0_12, %c0_13] : memref<1x32xf32, #tpu.memory_space<vmem>>, vector<1x32xf32>
    %22 = vector.shape_cast %21 : vector<1x32xf32> to vector<1x1x32xf32>
    %23 = vector.broadcast %22 : vector<1x1x32xf32> to vector<8x16x32xf32>
    %24 = arith.addf %20, %23 : vector<8x16x32xf32>
    %cst_14 = arith.constant 0.000000e+00 : f32
    %25 = vector.broadcast %cst_14 : f32 to vector<8x16x32xf32>
    %26 = arith.maximumf %24, %25 : vector<8x16x32xf32>
    %27 = vector.shape_cast %26 : vector<8x16x32xf32> to vector<128x32xf32>
    %c0_15 = arith.constant 0 : index
    %c0_16 = arith.constant 0 : index
    %28 = vector.load %arg10[%c0_15, %c0_16] : memref<32x16xf32, #tpu.memory_space<vmem>>, vector<32x16xf32>
    %cst_17 = arith.constant dense<0.000000e+00> : vector<128x16xf32>
    %29 = tpu.matmul %27, %28, %cst_17 {dimension_numbers = #tpu.dot_dimension_numbers<[1], [0], [0], [1], [0, 0, 1, 1], [], []>} : vector<128x32xf32>, vector<32x16xf32>, vector<128x16xf32> -> vector<128x16xf32>
    %30 = vector.shape_cast %29 : vector<128x16xf32> to vector<8x16x16xf32>
    %c0_18 = arith.constant 0 : index
    %c0_19 = arith.constant 0 : index
    %31 = vector.load %arg2[%c0_18, %c0_19] : memref<8x16xf32, #tpu.memory_space<vmem>>, vector<8x16xf32>
    %32 = vector.shape_cast %31 : vector<8x16xf32> to vector<8x16x1xf32>
    %cst_20 = arith.constant 0.000000e+00 : f32
    %33 = vector.broadcast %cst_20 : f32 to vector<8x16x1xf32>
    %34 = arith.cmpf ogt, %32, %33 : vector<8x16x1xf32>
    %cst_21 = arith.constant -1.000000e+30 : f32
    %35 = vector.shape_cast %34 : vector<8x16x1xi1> to vector<8x16x1xi1>
    %36 = vector.broadcast %35 : vector<8x16x1xi1> to vector<8x16x16xi1>
    %37 = vector.broadcast %cst_21 : f32 to vector<8x16x16xf32>
    %38 = arith.select %36, %30, %37 : vector<8x16x16xi1>, vector<8x16x16xf32>
    %cst_22 = arith.constant dense<0xFF800000> : vector<8x16xf32>
    %39 = vector.multi_reduction <maximumf>, %38, %cst_22 [1] : vector<8x16x16xf32> to vector<8x16xf32>
    %cst_23 = arith.constant dense<0xFF800000> : vector<8xf32>
    %40 = vector.multi_reduction <maximumf>, %31, %cst_23 [1] : vector<8x16xf32> to vector<8xf32>
    %41 = vector.shape_cast %40 : vector<8xf32> to vector<8x1xf32>
    %cst_24 = arith.constant 0.000000e+00 : f32
    %42 = vector.broadcast %cst_24 : f32 to vector<8x1xf32>
    %43 = arith.cmpf ogt, %41, %42 : vector<8x1xf32>
    %44 = arith.addf %39, %11 : vector<8x16xf32>
    %cst_25 = arith.constant 0.000000e+00 : f32
    %45 = vector.shape_cast %43 : vector<8x1xi1> to vector<8x1xi1>
    %46 = vector.broadcast %45 : vector<8x1xi1> to vector<8x16xi1>
    %47 = vector.broadcast %cst_25 : f32 to vector<8x16xf32>
    %48 = arith.select %46, %44, %47 : vector<8x16xi1>, vector<8x16xf32>
    %c0_26 = arith.constant 0 : index
    %c0_27 = arith.constant 0 : index
    %49 = vector.load %arg4[%c0_26, %c0_27] : memref<8x16xf32, #tpu.memory_space<vmem>>, vector<8x16xf32>
    %50 = tpu.concatenate %49, %48 in 1 : vector<8x16xf32>, vector<8x16xf32> -> vector<8x32xf32>
    %c0_28 = arith.constant 0 : index
    %c0_29 = arith.constant 0 : index
    %51 = vector.load %arg11[%c0_28, %c0_29] : memref<8x32xf32, #tpu.memory_space<vmem>>, vector<8x32xf32>
    tpu.vector_store %arg11[%c0_28, %c0_29], %50 {strides = array<i32>} : memref<8x32xf32, #tpu.memory_space<vmem>>, vector<8x32xf32>,
    return
  }
  func.func @transform_0(%arg0: i32) -> (i32, i32) {
    %c0_i32 = arith.constant 0 : i32
    %c0_i32_0 = arith.constant 0 : i32
    return %arg0, %c0_i32 : i32, i32
  }
  func.func @transform_1(%arg0: i32) -> (i32, i32) {
    %c0_i32 = arith.constant 0 : i32
    %c0_i32_0 = arith.constant 0 : i32
    return %arg0, %c0_i32 : i32, i32
  }
  func.func @transform_2(%arg0: i32) -> (i32, i32) {
    %c0_i32 = arith.constant 0 : i32
    %c0_i32_0 = arith.constant 0 : i32
    %c0_i32_1 = arith.constant 0 : i32
    return %c0_i32, %c0_i32_0 : i32, i32
  }
  func.func @transform_3(%arg0: i32) -> (i32, i32) {
    %c0_i32 = arith.constant 0 : i32
    %c0_i32_0 = arith.constant 0 : i32
    return %arg0, %c0_i32 : i32, i32
  }
  func.func @transform_4(%arg0: i32) -> (i32, i32) {
    %c0_i32 = arith.constant 0 : i32
    %c0_i32_0 = arith.constant 0 : i32
    %c0_i32_1 = arith.constant 0 : i32
    return %c0_i32, %c0_i32_0 : i32, i32
  }
  func.func @transform_5(%arg0: i32) -> (i32, i32) {
    %c0_i32 = arith.constant 0 : i32
    %c0_i32_0 = arith.constant 0 : i32
    %c0_i32_1 = arith.constant 0 : i32
    return %c0_i32, %c0_i32_0 : i32, i32
  }
  func.func @transform_6(%arg0: i32) -> (i32, i32) {
    %c0_i32 = arith.constant 0 : i32
    %c0_i32_0 = arith.constant 0 : i32
    %c0_i32_1 = arith.constant 0 : i32
    return %c0_i32, %c0_i32_0 : i32, i32
  }
  func.func @transform_7(%arg0: i32) -> (i32, i32) {
    %c0_i32 = arith.constant 0 : i32
    %c0_i32_0 = arith.constant 0 : i32
    %c0_i32_1 = arith.constant 0 : i32
    return %c0_i32, %c0_i32_0 : i32, i32
  }
  func.func @transform_8(%arg0: i32) -> (i32, i32) {
    %c0_i32 = arith.constant 0 : i32
    %c0_i32_0 = arith.constant 0 : i32
    %c0_i32_1 = arith.constant 0 : i32
    return %c0_i32, %c0_i32_0 : i32, i32
  }
  func.func @transform_9(%arg0: i32) -> (i32, i32) {
    %c0_i32 = arith.constant 0 : i32
    %c0_i32_0 = arith.constant 0 : i32
    %c0_i32_1 = arith.constant 0 : i32
    return %c0_i32, %c0_i32_0 : i32, i32
  }
  func.func @transform_10(%arg0: i32) -> (i32, i32) {
    %c0_i32 = arith.constant 0 : i32
    %c0_i32_0 = arith.constant 0 : i32
    return %arg0, %c0_i32 : i32, i32
  }
}

module attributes {stable_mosaic.version = 11 : i64} {
  func.func @_edge_conv_fc_kernel(%arg0: i32, %arg1: memref<8x32xf32, #tpu.memory_space<vmem>>, %arg2: memref<8x16xf32, #tpu.memory_space<vmem>>, %arg3: memref<16x32xf32, #tpu.memory_space<vmem>>, %arg4: memref<8x16xf32, #tpu.memory_space<vmem>>, %arg5: memref<1x32xf32, #tpu.memory_space<vmem>>, %arg6: memref<1x32xf32, #tpu.memory_space<vmem>>, %arg7: memref<1x32xf32, #tpu.memory_space<vmem>>, %arg8: memref<1x32xf32, #tpu.memory_space<vmem>>, %arg9: memref<32x16xf32, #tpu.memory_space<vmem>>, %arg10: memref<32x16xf32, #tpu.memory_space<vmem>>, %arg11: memref<32x2xf32, #tpu.memory_space<vmem>>, %arg12: memref<1x2xf32, #tpu.memory_space<vmem>>, %arg13: memref<8x2xf32, #tpu.memory_space<vmem>>) attributes {dimension_semantics = [#tpu.dimension_semantics<parallel>], iteration_bounds = array<i64: 2>, scalar_prefetch = 0 : i64, scratch_operands = 0 : i64, tpu.core_type = #tpu.core_type<tc>, window_params = [{transform_indices = @transform_0, window_bounds = array<i64: 8, 32>}, {transform_indices = @transform_1, window_bounds = array<i64: 8, 16>}, {pipeline_mode = #tpu.pipeline_mode<synchronous>, transform_indices = @transform_2, window_bounds = array<i64: 16, 32>}, {transform_indices = @transform_3, window_bounds = array<i64: 8, 16>}, {pipeline_mode = #tpu.pipeline_mode<synchronous>, transform_indices = @transform_4, window_bounds = array<i64: 1, 32>}, {pipeline_mode = #tpu.pipeline_mode<synchronous>, transform_indices = @transform_5, window_bounds = array<i64: 1, 32>}, {pipeline_mode = #tpu.pipeline_mode<synchronous>, transform_indices = @transform_6, window_bounds = array<i64: 1, 32>}, {pipeline_mode = #tpu.pipeline_mode<synchronous>, transform_indices = @transform_7, window_bounds = array<i64: 1, 32>}, {pipeline_mode = #tpu.pipeline_mode<synchronous>, transform_indices = @transform_8, window_bounds = array<i64: 32, 16>}, {pipeline_mode = #tpu.pipeline_mode<synchronous>, transform_indices = @transform_9, window_bounds = array<i64: 32, 16>}, {pipeline_mode = #tpu.pipeline_mode<synchronous>, transform_indices = @transform_10, window_bounds = array<i64: 32, 2>}, {pipeline_mode = #tpu.pipeline_mode<synchronous>, transform_indices = @transform_11, window_bounds = array<i64: 1, 2>}, {transform_indices = @transform_12, window_bounds = array<i64: 8, 2>}]} {
    %c0 = arith.constant 0 : index
    %c0_0 = arith.constant 0 : index
    %0 = vector.load %arg1[%c0, %c0_0] : memref<8x32xf32, #tpu.memory_space<vmem>>, vector<8x32xf32>
    %c0_1 = arith.constant 0 : index
    %c0_2 = arith.constant 0 : index
    %1 = vector.load %arg3[%c0_1, %c0_2] : memref<16x32xf32, #tpu.memory_space<vmem>>, vector<16x32xf32>
    %c0_3 = arith.constant 0 : index
    %c0_4 = arith.constant 0 : index
    %2 = vector.load %arg5[%c0_3, %c0_4] : memref<1x32xf32, #tpu.memory_space<vmem>>, vector<1x32xf32>
    %3 = vector.broadcast %2 : vector<1x32xf32> to vector<8x32xf32>
    %4 = arith.mulf %0, %3 : vector<8x32xf32>
    %c0_5 = arith.constant 0 : index
    %c0_6 = arith.constant 0 : index
    %5 = vector.load %arg6[%c0_5, %c0_6] : memref<1x32xf32, #tpu.memory_space<vmem>>, vector<1x32xf32>
    %6 = vector.broadcast %5 : vector<1x32xf32> to vector<8x32xf32>
    %7 = arith.addf %4, %6 : vector<8x32xf32>
    %cst = arith.constant 0.000000e+00 : f32
    %8 = vector.broadcast %cst : f32 to vector<8x32xf32>
    %9 = arith.maximumf %7, %8 : vector<8x32xf32>
    %c0_7 = arith.constant 0 : index
    %c0_8 = arith.constant 0 : index
    %10 = vector.load %arg9[%c0_7, %c0_8] : memref<32x16xf32, #tpu.memory_space<vmem>>, vector<32x16xf32>
    %cst_9 = arith.constant dense<0.000000e+00> : vector<8x16xf32>
    %11 = tpu.matmul %9, %10, %cst_9 {dimension_numbers = #tpu.dot_dimension_numbers<[1], [0], [0], [1], [0, 0, 1, 1], [], []>} : vector<8x32xf32>, vector<32x16xf32>, vector<8x16xf32> -> vector<8x16xf32>
    %12 = vector.shape_cast %1 : vector<16x32xf32> to vector<1x16x32xf32>
    %13 = vector.shape_cast %0 : vector<8x32xf32> to vector<8x1x32xf32>
    %14 = vector.broadcast %12 : vector<1x16x32xf32> to vector<8x16x32xf32>
    %15 = vector.broadcast %13 : vector<8x1x32xf32> to vector<8x16x32xf32>
    %16 = arith.subf %14, %15 : vector<8x16x32xf32>
    %c0_10 = arith.constant 0 : index
    %c0_11 = arith.constant 0 : index
    %17 = vector.load %arg7[%c0_10, %c0_11] : memref<1x32xf32, #tpu.memory_space<vmem>>, vector<1x32xf32>
    %18 = vector.shape_cast %17 : vector<1x32xf32> to vector<1x1x32xf32>
    %19 = vector.broadcast %18 : vector<1x1x32xf32> to vector<8x16x32xf32>
    %20 = arith.mulf %16, %19 : vector<8x16x32xf32>
    %c0_12 = arith.constant 0 : index
    %c0_13 = arith.constant 0 : index
    %21 = vector.load %arg8[%c0_12, %c0_13] : memref<1x32xf32, #tpu.memory_space<vmem>>, vector<1x32xf32>
    %22 = vector.shape_cast %21 : vector<1x32xf32> to vector<1x1x32xf32>
    %23 = vector.broadcast %22 : vector<1x1x32xf32> to vector<8x16x32xf32>
    %24 = arith.addf %20, %23 : vector<8x16x32xf32>
    %cst_14 = arith.constant 0.000000e+00 : f32
    %25 = vector.broadcast %cst_14 : f32 to vector<8x16x32xf32>
    %26 = arith.maximumf %24, %25 : vector<8x16x32xf32>
    %27 = vector.shape_cast %26 : vector<8x16x32xf32> to vector<128x32xf32>
    %c0_15 = arith.constant 0 : index
    %c0_16 = arith.constant 0 : index
    %28 = vector.load %arg10[%c0_15, %c0_16] : memref<32x16xf32, #tpu.memory_space<vmem>>, vector<32x16xf32>
    %cst_17 = arith.constant dense<0.000000e+00> : vector<128x16xf32>
    %29 = tpu.matmul %27, %28, %cst_17 {dimension_numbers = #tpu.dot_dimension_numbers<[1], [0], [0], [1], [0, 0, 1, 1], [], []>} : vector<128x32xf32>, vector<32x16xf32>, vector<128x16xf32> -> vector<128x16xf32>
    %30 = vector.shape_cast %29 : vector<128x16xf32> to vector<8x16x16xf32>
    %c0_18 = arith.constant 0 : index
    %c0_19 = arith.constant 0 : index
    %31 = vector.load %arg2[%c0_18, %c0_19] : memref<8x16xf32, #tpu.memory_space<vmem>>, vector<8x16xf32>
    %32 = vector.shape_cast %31 : vector<8x16xf32> to vector<8x16x1xf32>
    %cst_20 = arith.constant 0.000000e+00 : f32
    %33 = vector.broadcast %cst_20 : f32 to vector<8x16x1xf32>
    %34 = arith.cmpf ogt, %32, %33 : vector<8x16x1xf32>
    %cst_21 = arith.constant -1.000000e+30 : f32
    %35 = vector.shape_cast %34 : vector<8x16x1xi1> to vector<8x16x1xi1>
    %36 = vector.broadcast %35 : vector<8x16x1xi1> to vector<8x16x16xi1>
    %37 = vector.broadcast %cst_21 : f32 to vector<8x16x16xf32>
    %38 = arith.select %36, %30, %37 : vector<8x16x16xi1>, vector<8x16x16xf32>
    %cst_22 = arith.constant dense<0xFF800000> : vector<8x16xf32>
    %39 = vector.multi_reduction <maximumf>, %38, %cst_22 [1] : vector<8x16x16xf32> to vector<8x16xf32>
    %cst_23 = arith.constant dense<0xFF800000> : vector<8xf32>
    %40 = vector.multi_reduction <maximumf>, %31, %cst_23 [1] : vector<8x16xf32> to vector<8xf32>
    %41 = vector.shape_cast %40 : vector<8xf32> to vector<8x1xf32>
    %cst_24 = arith.constant 0.000000e+00 : f32
    %42 = vector.broadcast %cst_24 : f32 to vector<8x1xf32>
    %43 = arith.cmpf ogt, %41, %42 : vector<8x1xf32>
    %44 = arith.addf %39, %11 : vector<8x16xf32>
    %cst_25 = arith.constant 0.000000e+00 : f32
    %45 = vector.shape_cast %43 : vector<8x1xi1> to vector<8x1xi1>
    %46 = vector.broadcast %45 : vector<8x1xi1> to vector<8x16xi1>
    %47 = vector.broadcast %cst_25 : f32 to vector<8x16xf32>
    %48 = arith.select %46, %44, %47 : vector<8x16xi1>, vector<8x16xf32>
    %c0_26 = arith.constant 0 : index
    %c0_27 = arith.constant 0 : index
    %49 = vector.load %arg4[%c0_26, %c0_27] : memref<8x16xf32, #tpu.memory_space<vmem>>, vector<8x16xf32>
    %50 = tpu.concatenate %49, %48 in 1 : vector<8x16xf32>, vector<8x16xf32> -> vector<8x32xf32>
    %c0_28 = arith.constant 0 : index
    %c0_29 = arith.constant 0 : index
    %51 = vector.load %arg11[%c0_28, %c0_29] : memref<32x2xf32, #tpu.memory_space<vmem>>, vector<32x2xf32>
    %cst_30 = arith.constant dense<0.000000e+00> : vector<8x2xf32>
    %52 = tpu.matmul %50, %51, %cst_30 {dimension_numbers = #tpu.dot_dimension_numbers<[1], [0], [0], [1], [0, 0, 1, 1], [], []>} : vector<8x32xf32>, vector<32x2xf32>, vector<8x2xf32> -> vector<8x2xf32>
    %c0_31 = arith.constant 0 : index
    %c0_32 = arith.constant 0 : index
    %53 = vector.load %arg12[%c0_31, %c0_32] : memref<1x2xf32, #tpu.memory_space<vmem>>, vector<1x2xf32>
    %54 = vector.broadcast %53 : vector<1x2xf32> to vector<8x2xf32>
    %55 = arith.addf %52, %54 : vector<8x2xf32>
    %c0_33 = arith.constant 0 : index
    %c0_34 = arith.constant 0 : index
    %56 = vector.load %arg13[%c0_33, %c0_34] : memref<8x2xf32, #tpu.memory_space<vmem>>, vector<8x2xf32>
    tpu.vector_store %arg13[%c0_33, %c0_34], %55 {strides = array<i32>} : memref<8x2xf32, #tpu.memory_space<vmem>>, vector<8x2xf32>,
    return
  }
  func.func @transform_0(%arg0: i32) -> (i32, i32) {
    %c0_i32 = arith.constant 0 : i32
    %c0_i32_0 = arith.constant 0 : i32
    return %arg0, %c0_i32 : i32, i32
  }
  func.func @transform_1(%arg0: i32) -> (i32, i32) {
    %c0_i32 = arith.constant 0 : i32
    %c0_i32_0 = arith.constant 0 : i32
    return %arg0, %c0_i32 : i32, i32
  }
  func.func @transform_2(%arg0: i32) -> (i32, i32) {
    %c0_i32 = arith.constant 0 : i32
    %c0_i32_0 = arith.constant 0 : i32
    %c0_i32_1 = arith.constant 0 : i32
    return %c0_i32, %c0_i32_0 : i32, i32
  }
  func.func @transform_3(%arg0: i32) -> (i32, i32) {
    %c0_i32 = arith.constant 0 : i32
    %c0_i32_0 = arith.constant 0 : i32
    return %arg0, %c0_i32 : i32, i32
  }
  func.func @transform_4(%arg0: i32) -> (i32, i32) {
    %c0_i32 = arith.constant 0 : i32
    %c0_i32_0 = arith.constant 0 : i32
    %c0_i32_1 = arith.constant 0 : i32
    return %c0_i32, %c0_i32_0 : i32, i32
  }
  func.func @transform_5(%arg0: i32) -> (i32, i32) {
    %c0_i32 = arith.constant 0 : i32
    %c0_i32_0 = arith.constant 0 : i32
    %c0_i32_1 = arith.constant 0 : i32
    return %c0_i32, %c0_i32_0 : i32, i32
  }
  func.func @transform_6(%arg0: i32) -> (i32, i32) {
    %c0_i32 = arith.constant 0 : i32
    %c0_i32_0 = arith.constant 0 : i32
    %c0_i32_1 = arith.constant 0 : i32
    return %c0_i32, %c0_i32_0 : i32, i32
  }
  func.func @transform_7(%arg0: i32) -> (i32, i32) {
    %c0_i32 = arith.constant 0 : i32
    %c0_i32_0 = arith.constant 0 : i32
    %c0_i32_1 = arith.constant 0 : i32
    return %c0_i32, %c0_i32_0 : i32, i32
  }
  func.func @transform_8(%arg0: i32) -> (i32, i32) {
    %c0_i32 = arith.constant 0 : i32
    %c0_i32_0 = arith.constant 0 : i32
    %c0_i32_1 = arith.constant 0 : i32
    return %c0_i32, %c0_i32_0 : i32, i32
  }
  func.func @transform_9(%arg0: i32) -> (i32, i32) {
    %c0_i32 = arith.constant 0 : i32
    %c0_i32_0 = arith.constant 0 : i32
    %c0_i32_1 = arith.constant 0 : i32
    return %c0_i32, %c0_i32_0 : i32, i32
  }
  func.func @transform_10(%arg0: i32) -> (i32, i32) {
    %c0_i32 = arith.constant 0 : i32
    %c0_i32_0 = arith.constant 0 : i32
    %c0_i32_1 = arith.constant 0 : i32
    return %c0_i32, %c0_i32_0 : i32, i32
  }
  func.func @transform_11(%arg0: i32) -> (i32, i32) {
    %c0_i32 = arith.constant 0 : i32
    %c0_i32_0 = arith.constant 0 : i32
    %c0_i32_1 = arith.constant 0 : i32
    return %c0_i32, %c0_i32_0 : i32, i32
  }
  func.func @transform_12(%arg0: i32) -> (i32, i32) {
    %c0_i32 = arith.constant 0 : i32
    %c0_i32_0 = arith.constant 0 : i32
    return %arg0, %c0_i32 : i32, i32
  }
}

</mosaic_0001>

<llo_original>
// kernel: maas_forward.13
$region0: #{maas_forward.13}
  #allocation0 [shape = 'u32[]', space=smem, size = 0x4, offset = 0x4, fixed_abs, tag = 'smem constant byte address 0x4 - core index']
  #allocation1 [shape = 'u32[144,128]{1,0:T(1,128)}', space=vmem, size = 0x12000, scoped, tag = 'internal scratch']
  %s0 = inlined_call_operand.vmem [shape: f32[16,32], index: 0, kind: input, shape index: {}]
  %s1 = inlined_call_operand.vmem [shape: f32[16,1], index: 1, kind: input, shape index: {}]
  %s2 = inlined_call_operand.vmem [shape: f32[32,32], index: 2, kind: input, shape index: {}]
  %s3 = inlined_call_operand.vmem [shape: f32[1,32], index: 3, kind: input, shape index: {}]
  %s4 = inlined_call_operand.vmem [shape: f32[16,16], index: 4, kind: output, shape index: {}]
  %s5 = sld [smem:[#allocation0]]
  $region49: #{maas_forward.13} parent=0
    _
  %s7 = ssub.s32 1, %s5
  %s8 = scalar_select 0, %s7, %s5
  loop: start=0, step=1, limit=4
  $region2: #{maas_forward.13} parent=0 // loop_pre_header
    _
  $region3: #{maas_forward.13} parent=0 // loop_header
    %s10 = sphi 0, %s14
    %p11 = scmp.ge.s32.totalorder %s10, 4
    %s20 = sphi 0, %s22
    %s23 = sphi 0, %s20
    %s24 = sphi 0, %s23
    %s40 = sphi 0, %s24
    %s46 = sphi 0, %s48
    %s49 = sphi 0, %s46
    %s50 = sphi 0, %s49
    %s66 = sphi 0, %s50
    %s70 = sphi 0, %s70
    %s72 = sphi 0, %s70
    %s73 = sphi 0, %s72
    %s87 = sphi 0, %s73
    %s91 = sphi 0, %s91
    %s93 = sphi 0, %s91
    %s94 = sphi 0, %s93
    %s108 = sphi 0, %s94
    %s114 = sphi 0, %s116
    %s117 = sphi 0, %s114
    %s118 = sphi 0, %s117
    %s134 = sphi 0, %s118
  $region4: #{maas_forward.13} parent=0 // loop_header_branch
    %13 = sbr.rel (%p11) target = $region8
  $region5: #{maas_forward.13} parent=0 // loop_body
    %s15 = ssub.s32 %s10, 1
    %s16 = ssub.s32 %s10, 2
    %s17 = sadd.s32 %s10, 1
    %s18 = ssub.s32 %s10, %s17
    %p19 = scmp.eq.s32.totalorder %s18, 0
    %s21 = sadd.s32 %s20, 1
    %s22 = scalar_select %p19, %s20, %s21
    %p25 = pneg %p19
    %p26 = scmp.eq.s32.totalorder %s10, 1
    %p27 = por %p25, %p26
    %p28 = scmp.ne.s32.totalorder %s20, %s23
    %p29 = scmp.eq.s32.totalorder %s10, 0
    %p30 = por %p28, %p29
    %p31 = scmp.ne.s32.totalorder %s20, %s23
    %p32 = scmp.eq.s32.totalorder %s15, 1
    %p33 = por %p31, %p32
    %p34 = scmp.ne.s32.totalorder %s23, %s24
    %p35 = scmp.eq.s32.totalorder %s15, 0
    %p36 = por %p34, %p35
    %p37 = scmp.ne.s32.totalorder %s23, %s24
    %p38 = scmp.eq.s32.totalorder %s16, 1
    %p39 = por %p37, %p38
    %p41 = scmp.ne.s32.totalorder %s24, %s40
    %p42 = scmp.eq.s32.totalorder %s16, 0
    %p43 = por %p41, %p42
    %s44 = ssub.s32 %s10, %s17
    %p45 = scmp.eq.s32.totalorder %s44, 0
    %s47 = sadd.s32 %s46, 1
    %s48 = scalar_select %p45, %s46, %s47
    %p51 = pneg %p45
    %p52 = scmp.eq.s32.totalorder %s10, 1
    %p53 = por %p51, %p52
    %p54 = scmp.ne.s32.totalorder %s46, %s49
    %p55 = scmp.eq.s32.totalorder %s10, 0
    %p56 = por %p54, %p55
    %p57 = scmp.ne.s32.totalorder %s46, %s49
    %p58 = scmp.eq.s32.totalorder %s15, 1
    %p59 = por %p57, %p58
    %p60 = scmp.ne.s32.totalorder %s49, %s50
    %p61 = scmp.eq.s32.totalorder %s15, 0
    %p62 = por %p60, %p61
    %p63 = scmp.ne.s32.totalorder %s49, %s50
    %p64 = scmp.eq.s32.totalorder %s16, 1
    %p65 = por %p63, %p64
    %p67 = scmp.ne.s32.totalorder %s50, %s66
    %p68 = scmp.eq.s32.totalorder %s16, 0
    %p69 = por %p67, %p68
    %s71 = sadd.s32 %s70, 1
    %p74 = scmp.eq.s32.totalorder %s10, 1
    %p75 = scmp.ne.s32.totalorder %s70, %s72
    %p76 = scmp.eq.s32.totalorder %s10, 0
    %p77 = por %p75, %p76
    %p78 = scmp.ne.s32.totalorder %s70, %s72
    %p79 = scmp.eq.s32.totalorder %s15, 1
    %p80 = por %p78, %p79
    %p81 = scmp.ne.s32.totalorder %s72, %s73
    %p82 = scmp.eq.s32.totalorder %s15, 0
    %p83 = por %p81, %p82
    %p84 = scmp.ne.s32.totalorder %s72, %s73
    %p85 = scmp.eq.s32.totalorder %s16, 1
    %p86 = por %p84, %p85
    %p88 = scmp.ne.s32.totalorder %s73, %s87
    %p89 = scmp.eq.s32.totalorder %s16, 0
    %p90 = por %p88, %p89
    %s92 = sadd.s32 %s91, 1
    %p95 = scmp.eq.s32.totalorder %s10, 1
    %p96 = scmp.ne.s32.totalorder %s91, %s93
    %p97 = scmp.eq.s32.totalorder %s10, 0
    %p98 = por %p96, %p97
    %p99 = scmp.ne.s32.totalorder %s91, %s93
    %p100 = scmp.eq.s32.totalorder %s15, 1
    %p101 = por %p99, %p100
    %p102 = scmp.ne.s32.totalorder %s93, %s94
    %p103 = scmp.eq.s32.totalorder %s15, 0
    %p104 = por %p102, %p103
    %p105 = scmp.ne.s32.totalorder %s93, %s94
    %p106 = scmp.eq.s32.totalorder %s16, 1
    %p107 = por %p105, %p106
    %p109 = scmp.ne.s32.totalorder %s94, %s108
    %p110 = scmp.eq.s32.totalorder %s16, 0
    %p111 = por %p109, %p110
    %s112 = ssub.s32 %s10, %s17
    %p113 = scmp.eq.s32.totalorder %s112, 0
    %s115 = sadd.s32 %s114, 1
    %s116 = scalar_select %p113, %s114, %s115
    %p119 = pneg %p113
    %p120 = scmp.eq.s32.totalorder %s10, 1
    %p121 = por %p119, %p120
    %p122 = scmp.ne.s32.totalorder %s114, %s117
    %p123 = scmp.eq.s32.totalorder %s10, 0
    %p124 = por %p122, %p123
    %p125 = scmp.ne.s32.totalorder %s114, %s117
    %p126 = scmp.eq.s32.totalorder %s15, 1
    %p127 = por %p125, %p126
    %p128 = scmp.ne.s32.totalorder %s117, %s118
    %p129 = scmp.eq.s32.totalorder %s15, 0
    %p130 = por %p128, %p129
    %p131 = scmp.ne.s32.totalorder %s117, %s118
    %p132 = scmp.eq.s32.totalorder %s16, 1
    %p133 = por %p131, %p132
    %p135 = scmp.ne.s32.totalorder %s118, %s134
    %p136 = scmp.eq.s32.totalorder %s16, 0
    %p137 = por %p135, %p136
    %p138 = scmp.le.s32.totalorder 1, %s10
    %p139 = scmp.lt.s32.totalorder %s10, 3
    %p140 = pnand %p138, %p139
    %p141 = pneg %p140
    // Predicated region
    $region9: #{maas_forward.13} parent=5 // pred_check
      _
    $region10: #{maas_forward.13} parent=5 // pred_check_branch
      %143 = sbr.rel (%p140) target = $region12
    $region11: #{maas_forward.13} parent=5 // pred_region
      %s144 = ssub.s32 %s10, 1
      // Predicated region
      $region13: #{maas_forward.13} parent=11 // pred_check
        %p145 = pneg %p83
      $region14: #{maas_forward.13} parent=11 // pred_check_branch
        %147 = sbr.rel (%p145) target = $region16
      $region15: #{maas_forward.13} parent=11 // pred_region
        _
      $region16: #{maas_forward.13} parent=11 // pred_fallthru
        _
      // Predicated region
      $region17: #{maas_forward.13} parent=11 // pred_check
        %p148 = pneg %p104
      $region18: #{maas_forward.13} parent=11 // pred_check_branch
        %150 = sbr.rel (%p148) target = $region20
      $region19: #{maas_forward.13} parent=11 // pred_region
        _
      $region20: #{maas_forward.13} parent=11 // pred_fallthru
        _
    $region12: #{maas_forward.13} parent=5 // pred_fallthru
      _
    %p151 = scmp.lt.s32.totalorder %s10, 2
    // Predicated region
    $region21: #{maas_forward.13} parent=5 // pred_check
      %p152 = pneg %p151
    $region22: #{maas_forward.13} parent=5 // pred_check_branch
      %154 = sbr.rel (%p152) target = $region24
    $region23: #{maas_forward.13} parent=5 // pred_region
      // Predicated region
      $region25: #{maas_forward.13} parent=23 // pred_check
        %p155 = pneg %p30
      $region26: #{maas_forward.13} parent=23 // pred_check_branch
        %157 = sbr.rel (%p155) target = $region28
      $region27: #{maas_forward.13} parent=23 // pred_region
        %p158 = scmp.lt.s32.totalorder %s10, 1
        %s159 = scalar_select %p158, %s10, 1
        %s160 = smul.addr %s159, 8
        %s161 = scalar_lea.vmem %s0, %s160
      $region28: #{maas_forward.13} parent=23 // pred_fallthru
        _
      // Predicated region
      $region29: #{maas_forward.13} parent=23 // pred_check
        %p162 = pneg %p56
      $region30: #{maas_forward.13} parent=23 // pred_check_branch
        %164 = sbr.rel (%p162) target = $region32
      $region31: #{maas_forward.13} parent=23 // pred_region
        %p165 = scmp.lt.s32.totalorder %s10, 1
        %s166 = scalar_select %p165, %s10, 1
        %s167 = smul.addr %s166, 8
        %s168 = scalar_lea.vmem %s1, %s167
      $region32: #{maas_forward.13} parent=23 // pred_fallthru
        _
    $region24: #{maas_forward.13} parent=5 // pred_fallthru
      _
    %p169 = scmp.le.s32.totalorder 1, %s10
    %p170 = scmp.lt.s32.totalorder %s10, 3
    %p171 = pnand %p169, %p170
    %p172 = pneg %p171
    // Predicated region
    $region33: #{maas_forward.13} parent=5 // pred_check
      _
    $region34: #{maas_forward.13} parent=5 // pred_check_branch
      %174 = sbr.rel (%p171) target = $region36
    $region35: #{maas_forward.13} parent=5 // pred_region
      %s175 = ssub.s32 %s10, 1
      %p176 = scmp.lt.s32.totalorder %s15, 1
      %s177 = scalar_select %p176, %s15, 1
      %s178 = smul.addr %s177, 8
      %s179 = scalar_lea.vmem %s0, %s178
      %p180 = pneg %p36
      %p181 = pneg %p33
      %p182 = scmp.lt.s32.totalorder %s15, 1
      %s183 = scalar_select %p182, %s15, 1
      %s184 = smul.addr %s183, 8
      %s185 = scalar_lea.vmem %s1, %s184
      %p186 = pneg %p62
      %p187 = pneg %p59
      %p188 = pneg %p83
      %p189 = pneg %p80
      %p190 = pneg %p104
      %p191 = pneg %p101
      %p192 = pneg %p130
      %p193 = pneg %p127
      %p194 = scmp.lt.s32.totalorder %s15, 1
      %s195 = scalar_select %p194, %s15, 1
      %s196 = smul.addr %s195, 8
      %s197 = scalar_lea.vmem %s4, %s196
      %p198 = scmp.lt.s32.totalorder %s15, 1
      %s199 = scalar_select %p198, %s15, 1
      %s200 = smul.addr %s199, 8
      %s201 = scalar_lea.vmem %s0, %s200
      %p202 = scmp.lt.s32.totalorder %s15, 1
      %s203 = scalar_select %p202, %s15, 1
      %s204 = smul.addr %s203, 8
      %s205 = scalar_lea.vmem %s1, %s204
      %p206 = scmp.lt.s32.totalorder %s15, 1
      %s207 = scalar_select %p206, %s15, 1
      %s208 = smul.addr %s207, 8
      %s209 = scalar_lea.vmem %s4, %s208
      %v210 = vld [vmem:[%s201] sm:$0xff]
      %v211 = vld [vmem:[%s2] sm:$0xff]
      %v212 = vld [vmem:[%s2 + $0x8] sm:$0xff]
      %v213 = vld [vmem:[%s2 + $0x10] sm:$0xff]
      %v214 = vld [vmem:[%s2 + $0x18] sm:$0xff]
      %v215 = vld [vmem:[%s3] sm:$0x1]
      %v217 = vlaneseq
      %v218 = vshrl.u32 %v217, 7
      %v219 = vsub.s32 0, %v218
      %v220 = vrot.slane %v215, %v219
      %vm222 = vcmask 261120
      %v224 = vsel %vm222, %v210, 0
      %226 = vmatprep.subr.mxu0 0.0
      %227 = vmatpush1.msra.mxu0 %v211
      %228 = vmatprep.subr.mxu0 0.0
      %229 = vmatpush1.msra.mxu0 %v212
      %230 = vmatprep.subr.mxu0 0.0
      %231 = vmatpush1.msra.mxu0 %v213
      %232 = vmatprep.subr.mxu0 0.0
      %233 = vmatpush1.msra.mxu0 %v214
      %234 = vmatprep.subr.mxu0 0.0
      %235 = vmatpush1.msra.mxu0 0.0
      %236 = vmatprep.subr.mxu0 0.0
      %237 = vmatpush1.msra.mxu0 0.0
      %238 = vmatprep.subr.mxu0 0.0
      %239 = vmatpush1.msra.mxu0 0.0
      %240 = vmatprep.subr.mxu0 0.0
      %241 = vmatpush1.msra.mxu0 0.0
      %242 = vmatprep.subr.mxu0 0.0
      %243 = vmatpush1.msra.mxu0 0.0
      %244 = vmatprep.subr.mxu0 0.0
      %245 = vmatpush1.msra.mxu0 0.0
      %246 = vmatprep.subr.mxu0 0.0
      %247 = vmatpush1.msra.mxu0 0.0
      %248 = vmatprep.subr.mxu0 0.0
      %249 = vmatpush1.msra.mxu0 0.0
      %250 = vmatprep.subr.mxu0 0.0
      %251 = vmatpush1.msra.mxu0 0.0
      %252 = vmatprep.subr.mxu0 0.0
      %253 = vmatpush1.msra.mxu0 0.0
      %254 = vmatprep.subr.mxu0 0.0
      %255 = vmatpush1.msra.mxu0 0.0
      %256 = vmatprep.subr.mxu0 0.0
      %257 = vmatpush1.msra.mxu0 0.0
      %258 = vmatprep.subr.mxu0 0.0
      %259 = vmatpush1.msra.mxu0 0.0
      %260 = vmatprep.subr.mxu0 0.0
      %261 = vmatpush1.msra.mxu0 0.0
      %262 = vmatprep.subr.mxu0 0.0
      %263 = vmatpush1.msra.mxu0 0.0
      %264 = vmatprep.subr.mxu0 0.0
      %265 = vmatpush1.msra.mxu0 0.0
      %266 = vmatprep.subr.mxu0 0.0
      %267 = vmatpush1.msra.mxu0 0.0
      %268 = vmatprep.subr.mxu0 0.0
      %269 = vmatpush1.msra.mxu0 0.0
      %270 = vmatprep.subr.mxu0 0.0
      %271 = vmatpush1.msra.mxu0 0.0
      %272 = vmatprep.subr.mxu0 0.0
      %273 = vmatpush1.msra.mxu0 0.0
      %274 = vmatprep.subr.mxu0 0.0
      %275 = vmatpush1.msra.mxu0 0.0
      %276 = vmatprep.subr.mxu0 0.0
      %277 = vmatpush1.msra.mxu0 0.0
      %278 = vmatprep.subr.mxu0 0.0
      %279 = vmatpush1.msra.mxu0 0.0
      %280 = vmatprep.subr.mxu0 0.0
      %281 = vmatpush1.msra.mxu0 0.0
      %282 = vmatprep.subr.mxu0 0.0
      %283 = vmatpush1.msra.mxu0 0.0
      %284 = vmatprep.subr.mxu0 0.0
      %285 = vmatpush1.msra.mxu0 0.0
      %286 = vmatprep.subr.mxu0 0.0
      %287 = vmatpush1.msra.mxu0 0.0
      %288 = vmatprep.subr.mxu0 0.0
      %289 = vmatpush1.msra.mxu0 0.0
      %290 = vmatprep.mubr.f32.mxu0 0.0
      %291 = vmatmul.mubr.f32.gmra.mrb[0].mxu0 %v224
      %v292 = vpop.f32.mrb[0].mxu0
      %v293 = vadd.f32 %v220, %v292
      %v294 = vpop.f32.mrb[0].mxu0
      %295 = vdwg.mxu0
      %v296 = vld [vmem:[%s205] sm:$0xff]
      %vm297 = vcmp.gt.f32.partialorder %v296, 0.0
      %v298 = vsel %vm297, 1, 0
      %299 = vset.pattern.permute.xlu0 0
      %300 = vperm.xlu0 %299, %v298
      %v301 = vpop.permute.xlu0 %300
      %vm302 = vcmp.eq.s32.totalorder %v301, 1
      %304 = vrot.lane.b32.xlu0 %v293, 112
      %v305 = vpop.permute.xlu0 %304
      %v307 = vsel %vm302, %v293, %v305
      %vm308 = vcmask 130048
      %309 = vst.msk [vmem:[%s209] sm:$0xff] %vm308, %v307
      %p310 = scmp.lt.s32.totalorder %s15, 1
      %s311 = scalar_select %p310, %s15, 1
      %s312 = smul.addr %s311, 8
      %s313 = scalar_lea.vmem %s4, %s312
      // Predicated region
      $region37: #{maas_forward.13} parent=35 // pred_check
        %p314 = pneg %p127
      $region38: #{maas_forward.13} parent=35 // pred_check_branch
        %316 = sbr.rel (%p314) target = $region40
      $region39: #{maas_forward.13} parent=35 // pred_region
        _
      $region40: #{maas_forward.13} parent=35 // pred_fallthru
        _
    $region36: #{maas_forward.13} parent=5 // pred_fallthru
      _
    %p317 = scmp.le.s32.totalorder 2, %s10
    // Predicated region
    $region41: #{maas_forward.13} parent=5 // pred_check
      %p318 = pneg %p317
    $region42: #{maas_forward.13} parent=5 // pred_check_branch
      %320 = sbr.rel (%p318) target = $region44
    $region43: #{maas_forward.13} parent=5 // pred_region
      %s321 = ssub.s32 %s10, 2
      // Predicated region
      $region45: #{maas_forward.13} parent=43 // pred_check
        %p322 = pneg %p133
      $region46: #{maas_forward.13} parent=43 // pred_check_branch
        %324 = sbr.rel (%p322) target = $region48
      $region47: #{maas_forward.13} parent=43 // pred_region
        %p325 = scmp.lt.s32.totalorder %s16, 1
        %s326 = scalar_select %p325, %s16, 1
        %s327 = smul.addr %s326, 8
        %s328 = scalar_lea.vmem %s4, %s327
      $region48: #{maas_forward.13} parent=43 // pred_fallthru
        _
    $region44: #{maas_forward.13} parent=5 // pred_fallthru
      _
  $region6: #{maas_forward.13} parent=0 // loop_footer
    %s14 = sadd.s32 1, %s10
  $region7: #{maas_forward.13} parent=0 // loop_footer_branch
    %9 = sbr.rel target = $region3
  $region8: #{maas_forward.13} parent=0 // loop_exit
    _

// kernel: maas_forward.14
$region0: #{maas_forward.14}
  #allocation0 [shape = 'u32[]', space=smem, size = 0x4, offset = 0x4, fixed_abs, tag = 'smem constant byte address 0x4 - core index']
  #allocation1 [shape = 'u32[144,128]{1,0:T(1,128)}', space=vmem, size = 0x12000, scoped, tag = 'internal scratch']
  %s0 = inlined_call_operand.vmem [shape: f32[16,16], index: 0, kind: input, shape index: {}, may-alias: {0,1}]
  %s1 = inlined_call_operand.vmem [shape: f32[16,16], index: 1, kind: input, shape index: {}, may-alias: {0,1}]
  %s2 = inlined_call_operand.vmem [shape: f32[1,16], index: 2, kind: input, shape index: {}]
  %s3 = inlined_call_operand.vmem [shape: s32[16,1], index: 3, kind: input, shape index: {}]
  %s4 = inlined_call_operand.vmem [shape: s32[1,16], index: 4, kind: input, shape index: {}]
  %s5 = inlined_call_operand.vmem [shape: s32[16,3], index: 5, kind: output, shape index: {}]
  %s6 = sld [smem:[#allocation0]]
  $region53: #{maas_forward.14} parent=0
    _
  %s8 = ssub.s32 1, %s6
  %s9 = scalar_select 0, %s8, %s6
  loop: start=0, step=1, limit=4
  $region2: #{maas_forward.14} parent=0 // loop_pre_header
    _
  $region3: #{maas_forward.14} parent=0 // loop_header
    %s11 = sphi 0, %s15
    %p12 = scmp.ge.s32.totalorder %s11, 4
    %s21 = sphi 0, %s23
    %s24 = sphi 0, %s21
    %s25 = sphi 0, %s24
    %s41 = sphi 0, %s25
    %s45 = sphi 0, %s45
    %s47 = sphi 0, %s45
    %s48 = sphi 0, %s47
    %s62 = sphi 0, %s48
    %s66 = sphi 0, %s66
    %s68 = sphi 0, %s66
    %s69 = sphi 0, %s68
    %s83 = sphi 0, %s69
    %s89 = sphi 0, %s91
    %s92 = sphi 0, %s89
    %s93 = sphi 0, %s92
    %s109 = sphi 0, %s93
    %s113 = sphi 0, %s113
    %s115 = sphi 0, %s113
    %s116 = sphi 0, %s115
    %s130 = sphi 0, %s116
    %s136 = sphi 0, %s138
    %s139 = sphi 0, %s136
    %s140 = sphi 0, %s139
    %s156 = sphi 0, %s140
  $region4: #{maas_forward.14} parent=0 // loop_header_branch
    %14 = sbr.rel (%p12) target = $region8
  $region5: #{maas_forward.14} parent=0 // loop_body
    %s16 = ssub.s32 %s11, 1
    %s17 = ssub.s32 %s11, 2
    %s18 = sadd.s32 %s11, 1
    %s19 = ssub.s32 %s11, %s18
    %p20 = scmp.eq.s32.totalorder %s19, 0
    %s22 = sadd.s32 %s21, 1
    %s23 = scalar_select %p20, %s21, %s22
    %p26 = pneg %p20
    %p27 = scmp.eq.s32.totalorder %s11, 1
    %p28 = por %p26, %p27
    %p29 = scmp.ne.s32.totalorder %s21, %s24
    %p30 = scmp.eq.s32.totalorder %s11, 0
    %p31 = por %p29, %p30
    %p32 = scmp.ne.s32.totalorder %s21, %s24
    %p33 = scmp.eq.s32.totalorder %s16, 1
    %p34 = por %p32, %p33
    %p35 = scmp.ne.s32.totalorder %s24, %s25
    %p36 = scmp.eq.s32.totalorder %s16, 0
    %p37 = por %p35, %p36
    %p38 = scmp.ne.s32.totalorder %s24, %s25
    %p39 = scmp.eq.s32.totalorder %s17, 1
    %p40 = por %p38, %p39
    %p42 = scmp.ne.s32.totalorder %s25, %s41
    %p43 = scmp.eq.s32.totalorder %s17, 0
    %p44 = por %p42, %p43
    %s46 = sadd.s32 %s45, 1
    %p49 = scmp.eq.s32.totalorder %s11, 1
    %p50 = scmp.ne.s32.totalorder %s45, %s47
    %p51 = scmp.eq.s32.totalorder %s11, 0
    %p52 = por %p50, %p51
    %p53 = scmp.ne.s32.totalorder %s45, %s47
    %p54 = scmp.eq.s32.totalorder %s16, 1
    %p55 = por %p53, %p54
    %p56 = scmp.ne.s32.totalorder %s47, %s48
    %p57 = scmp.eq.s32.totalorder %s16, 0
    %p58 = por %p56, %p57
    %p59 = scmp.ne.s32.totalorder %s47, %s48
    %p60 = scmp.eq.s32.totalorder %s17, 1
    %p61 = por %p59, %p60
    %p63 = scmp.ne.s32.totalorder %s48, %s62
    %p64 = scmp.eq.s32.totalorder %s17, 0
    %p65 = por %p63, %p64
    %s67 = sadd.s32 %s66, 1
    %p70 = scmp.eq.s32.totalorder %s11, 1
    %p71 = scmp.ne.s32.totalorder %s66, %s68
    %p72 = scmp.eq.s32.totalorder %s11, 0
    %p73 = por %p71, %p72
    %p74 = scmp.ne.s32.totalorder %s66, %s68
    %p75 = scmp.eq.s32.totalorder %s16, 1
    %p76 = por %p74, %p75
    %p77 = scmp.ne.s32.totalorder %s68, %s69
    %p78 = scmp.eq.s32.totalorder %s16, 0
    %p79 = por %p77, %p78
    %p80 = scmp.ne.s32.totalorder %s68, %s69
    %p81 = scmp.eq.s32.totalorder %s17, 1
    %p82 = por %p80, %p81
    %p84 = scmp.ne.s32.totalorder %s69, %s83
    %p85 = scmp.eq.s32.totalorder %s17, 0
    %p86 = por %p84, %p85
    %s87 = ssub.s32 %s11, %s18
    %p88 = scmp.eq.s32.totalorder %s87, 0
    %s90 = sadd.s32 %s89, 1
    %s91 = scalar_select %p88, %s89, %s90
    %p94 = pneg %p88
    %p95 = scmp.eq.s32.totalorder %s11, 1
    %p96 = por %p94, %p95
    %p97 = scmp.ne.s32.totalorder %s89, %s92
    %p98 = scmp.eq.s32.totalorder %s11, 0
    %p99 = por %p97, %p98
    %p100 = scmp.ne.s32.totalorder %s89, %s92
    %p101 = scmp.eq.s32.totalorder %s16, 1
    %p102 = por %p100, %p101
    %p103 = scmp.ne.s32.totalorder %s92, %s93
    %p104 = scmp.eq.s32.totalorder %s16, 0
    %p105 = por %p103, %p104
    %p106 = scmp.ne.s32.totalorder %s92, %s93
    %p107 = scmp.eq.s32.totalorder %s17, 1
    %p108 = por %p106, %p107
    %p110 = scmp.ne.s32.totalorder %s93, %s109
    %p111 = scmp.eq.s32.totalorder %s17, 0
    %p112 = por %p110, %p111
    %s114 = sadd.s32 %s113, 1
    %p117 = scmp.eq.s32.totalorder %s11, 1
    %p118 = scmp.ne.s32.totalorder %s113, %s115
    %p119 = scmp.eq.s32.totalorder %s11, 0
    %p120 = por %p118, %p119
    %p121 = scmp.ne.s32.totalorder %s113, %s115
    %p122 = scmp.eq.s32.totalorder %s16, 1
    %p123 = por %p121, %p122
    %p124 = scmp.ne.s32.totalorder %s115, %s116
    %p125 = scmp.eq.s32.totalorder %s16, 0
    %p126 = por %p124, %p125
    %p127 = scmp.ne.s32.totalorder %s115, %s116
    %p128 = scmp.eq.s32.totalorder %s17, 1
    %p129 = por %p127, %p128
    %p131 = scmp.ne.s32.totalorder %s116, %s130
    %p132 = scmp.eq.s32.totalorder %s17, 0
    %p133 = por %p131, %p132
    %s134 = ssub.s32 %s11, %s18
    %p135 = scmp.eq.s32.totalorder %s134, 0
    %s137 = sadd.s32 %s136, 1
    %s138 = scalar_select %p135, %s136, %s137
    %p141 = pneg %p135
    %p142 = scmp.eq.s32.totalorder %s11, 1
    %p143 = por %p141, %p142
    %p144 = scmp.ne.s32.totalorder %s136, %s139
    %p145 = scmp.eq.s32.totalorder %s11, 0
    %p146 = por %p144, %p145
    %p147 = scmp.ne.s32.totalorder %s136, %s139
    %p148 = scmp.eq.s32.totalorder %s16, 1
    %p149 = por %p147, %p148
    %p150 = scmp.ne.s32.totalorder %s139, %s140
    %p151 = scmp.eq.s32.totalorder %s16, 0
    %p152 = por %p150, %p151
    %p153 = scmp.ne.s32.totalorder %s139, %s140
    %p154 = scmp.eq.s32.totalorder %s17, 1
    %p155 = por %p153, %p154
    %p157 = scmp.ne.s32.totalorder %s140, %s156
    %p158 = scmp.eq.s32.totalorder %s17, 0
    %p159 = por %p157, %p158
    %p160 = scmp.le.s32.totalorder 1, %s11
    %p161 = scmp.lt.s32.totalorder %s11, 3
    %p162 = pnand %p160, %p161
    %p163 = pneg %p162
    // Predicated region
    $region9: #{maas_forward.14} parent=5 // pred_check
      _
    $region10: #{maas_forward.14} parent=5 // pred_check_branch
      %165 = sbr.rel (%p162) target = $region12
    $region11: #{maas_forward.14} parent=5 // pred_region
      %s166 = ssub.s32 %s11, 1
      // Predicated region
      $region13: #{maas_forward.14} parent=11 // pred_check
        %p167 = pneg %p58
      $region14: #{maas_forward.14} parent=11 // pred_check_branch
        %169 = sbr.rel (%p167) target = $region16
      $region15: #{maas_forward.14} parent=11 // pred_region
        _
      $region16: #{maas_forward.14} parent=11 // pred_fallthru
        _
      // Predicated region
      $region17: #{maas_forward.14} parent=11 // pred_check
        %p170 = pneg %p79
      $region18: #{maas_forward.14} parent=11 // pred_check_branch
        %172 = sbr.rel (%p170) target = $region20
      $region19: #{maas_forward.14} parent=11 // pred_region
        _
      $region20: #{maas_forward.14} parent=11 // pred_fallthru
        _
      // Predicated region
      $region21: #{maas_forward.14} parent=11 // pred_check
        %p173 = pneg %p126
      $region22: #{maas_forward.14} parent=11 // pred_check_branch
        %175 = sbr.rel (%p173) target = $region24
      $region23: #{maas_forward.14} parent=11 // pred_region
        _
      $region24: #{maas_forward.14} parent=11 // pred_fallthru
        _
    $region12: #{maas_forward.14} parent=5 // pred_fallthru
      _
    %p176 = scmp.lt.s32.totalorder %s11, 2
    // Predicated region
    $region25: #{maas_forward.14} parent=5 // pred_check
      %p177 = pneg %p176
    $region26: #{maas_forward.14} parent=5 // pred_check_branch
      %179 = sbr.rel (%p177) target = $region28
    $region27: #{maas_forward.14} parent=5 // pred_region
      // Predicated region
      $region29: #{maas_forward.14} parent=27 // pred_check
        %p180 = pneg %p31
      $region30: #{maas_forward.14} parent=27 // pred_check_branch
        %182 = sbr.rel (%p180) target = $region32
      $region31: #{maas_forward.14} parent=27 // pred_region
        %p183 = scmp.lt.s32.totalorder %s11, 1
        %s184 = scalar_select %p183, %s11, 1
        %s185 = smul.addr %s184, 8
        %s186 = scalar_lea.vmem %s0, %s185
      $region32: #{maas_forward.14} parent=27 // pred_fallthru
        _
      // Predicated region
      $region33: #{maas_forward.14} parent=27 // pred_check
        %p187 = pneg %p99
      $region34: #{maas_forward.14} parent=27 // pred_check_branch
        %189 = sbr.rel (%p187) target = $region36
      $region35: #{maas_forward.14} parent=27 // pred_region
        %p190 = scmp.lt.s32.totalorder %s11, 1
        %s191 = scalar_select %p190, %s11, 1
        %s192 = smul.addr %s191, 8
        %s193 = scalar_lea.vmem %s3, %s192
      $region36: #{maas_forward.14} parent=27 // pred_fallthru
        _
    $region28: #{maas_forward.14} parent=5 // pred_fallthru
      _
    %p194 = scmp.le.s32.totalorder 1, %s11
    %p195 = scmp.lt.s32.totalorder %s11, 3
    %p196 = pnand %p194, %p195
    %p197 = pneg %p196
    // Predicated region
    $region37: #{maas_forward.14} parent=5 // pred_check
      _
    $region38: #{maas_forward.14} parent=5 // pred_check_branch
      %199 = sbr.rel (%p196) target = $region40
    $region39: #{maas_forward.14} parent=5 // pred_region
      %s200 = ssub.s32 %s11, 1
      %p201 = scmp.lt.s32.totalorder %s16, 1
      %s202 = scalar_select %p201, %s16, 1
      %s203 = smul.addr %s202, 8
      %s204 = scalar_lea.vmem %s0, %s203
      %p205 = pneg %p37
      %p206 = pneg %p34
      %p207 = pneg %p58
      %p208 = pneg %p55
      %p209 = pneg %p79
      %p210 = pneg %p76
      %p211 = scmp.lt.s32.totalorder %s16, 1
      %s212 = scalar_select %p211, %s16, 1
      %s213 = smul.addr %s212, 8
      %s214 = scalar_lea.vmem %s3, %s213
      %p215 = pneg %p105
      %p216 = pneg %p102
      %p217 = pneg %p126
      %p218 = pneg %p123
      %p219 = pneg %p152
      %p220 = pneg %p149
      %p221 = scmp.lt.s32.totalorder %s16, 1
      %s222 = scalar_select %p221, %s16, 1
      %s223 = smul.addr %s222, 8
      %s224 = scalar_lea.vmem %s5, %s223
      %p225 = scmp.lt.s32.totalorder %s16, 1
      %s226 = scalar_select %p225, %s16, 1
      %s227 = smul.addr %s226, 8
      %s228 = scalar_lea.vmem %s0, %s227
      %p229 = scmp.lt.s32.totalorder %s16, 1
      %s230 = scalar_select %p229, %s16, 1
      %s231 = smul.addr %s230, 8
      %s232 = scalar_lea.vmem %s3, %s231
      %p233 = scmp.lt.s32.totalorder %s16, 1
      %s234 = scalar_select %p233, %s16, 1
      %s235 = smul.addr %s234, 8
      %s236 = scalar_lea.vmem %s5, %s235
      %v237 = vld [vmem:[%s228] sm:$0xff]
      %v238 = vld [vmem:[%s1] sm:$0xff]
      %v239 = vld [vmem:[%s1 + $0x8] sm:$0xff]
      %vm240 = vcmask 130048
      %v242 = vsel %vm240, %v237, 0
      %v245 = vsel %vm240, %v238, 0
      %v248 = vsel %vm240, %v239, 0
      %250 = vmatprep.subr.mxu0 0.0
      %251 = vmatpush1.xpose.msra.mxu0 %v245
      %252 = vmatprep.subr.mxu0 0.0
      %253 = vmatpush1.xpose.msra.mxu0 %v248
      %254 = vmatprep.subr.mxu0 0.0
      %255 = vmatpush1.xpose.msra.mxu0 0.0
      %256 = vmatprep.subr.mxu0 0.0
      %257 = vmatpush1.xpose.msra.mxu0 0.0
      %258 = vmatprep.subr.mxu0 0.0
      %259 = vmatpush1.xpose.msra.mxu0 0.0
      %260 = vmatprep.subr.mxu0 0.0
      %261 = vmatpush1.xpose.msra.mxu0 0.0
      %262 = vmatprep.subr.mxu0 0.0
      %263 = vmatpush1.xpose.msra.mxu0 0.0
      %264 = vmatprep.subr.mxu0 0.0
      %265 = vmatpush1.xpose.msra.mxu0 0.0
      %266 = vmatprep.subr.mxu0 0.0
      %267 = vmatpush1.xpose.msra.mxu0 0.0
      %268 = vmatprep.subr.mxu0 0.0
      %269 = vmatpush1.xpose.msra.mxu0 0.0
      %270 = vmatprep.subr.mxu0 0.0
      %271 = vmatpush1.xpose.msra.mxu0 0.0
      %272 = vmatprep.subr.mxu0 0.0
      %273 = vmatpush1.xpose.msra.mxu0 0.0
      %274 = vmatprep.subr.mxu0 0.0
      %275 = vmatpush1.xpose.msra.mxu0 0.0
      %276 = vmatprep.subr.mxu0 0.0
      %277 = vmatpush1.xpose.msra.mxu0 0.0
      %278 = vmatprep.subr.mxu0 0.0
      %279 = vmatpush1.xpose.msra.mxu0 0.0
      %280 = vmatprep.subr.mxu0 0.0
      %281 = vmatpush1.xpose.msra.mxu0 0.0
      %282 = vmatprep.subr.mxu0 0.0
      %283 = vmatpush1.xpose.msra.mxu0 0.0
      %284 = vmatprep.subr.mxu0 0.0
      %285 = vmatpush1.xpose.msra.mxu0 0.0
      %286 = vmatprep.subr.mxu0 0.0
      %287 = vmatpush1.xpose.msra.mxu0 0.0
      %288 = vmatprep.subr.mxu0 0.0
      %289 = vmatpush1.xpose.msra.mxu0 0.0
      %290 = vmatprep.subr.mxu0 0.0
      %291 = vmatpush1.xpose.msra.mxu0 0.0
      %292 = vmatprep.subr.mxu0 0.0
      %293 = vmatpush1.xpose.msra.mxu0 0.0
      %294 = vmatprep.subr.mxu0 0.0
      %295 = vmatpush1.xpose.msra.mxu0 0.0
      %296 = vmatprep.subr.mxu0 0.0
      %297 = vmatpush1.xpose.msra.mxu0 0.0
      %298 = vmatprep.subr.mxu0 0.0
      %299 = vmatpush1.xpose.msra.mxu0 0.0
      %300 = vmatprep.subr.mxu0 0.0
      %301 = vmatpush1.xpose.msra.mxu0 0.0
      %302 = vmatprep.subr.mxu0 0.0
      %303 = vmatpush1.xpose.msra.mxu0 0.0
      %304 = vmatprep.subr.mxu0 0.0
      %305 = vmatpush1.xpose.msra.mxu0 0.0
      %306 = vmatprep.subr.mxu0 0.0
      %307 = vmatpush1.xpose.msra.mxu0 0.0
      %308 = vmatprep.subr.mxu0 0.0
      %309 = vmatpush1.xpose.msra.mxu0 0.0
      %310 = vmatprep.subr.mxu0 0.0
      %311 = vmatpush1.xpose.msra.mxu0 0.0
      %312 = vmatprep.subr.mxu0 0.0
      %313 = vmatpush1.xpose.msra.mxu0 0.0
      %314 = vmatprep.mubr.f32.mxu0 0.0
      %315 = vmatmul.mubr.f32.gmra.mrb[0].mxu0 %v242
      %v316 = vpop.f32.mrb[0].mxu0
      %v317 = vadd.f32 0.0, %v316
      %v318 = vpop.f32.mrb[0].mxu0
      %319 = vdwg.mxu0
      %v320 = vld [vmem:[%s2] sm:$0x1]
      %v321 = vmul.f32 %v317, 2.0
      %v323 = vlaneseq
      %v324 = vshrl.u32 %v323, 7
      %v325 = vsub.s32 0, %v324
      %v326 = vrot.slane %v320, %v325
      %v328 = vsub.f32 %v326, %v321
      %v329 = vld [vmem:[%s232] sm:$0xff]
      %v330 = vld [vmem:[%s4] sm:$0x1]
      %331 = vset.pattern.permute.xlu0 0
      %332 = vperm.xlu0 %331, %v329
      %v333 = vpop.permute.xlu0 %332
      %v334 = vlaneseq
      %v335 = vshrl.u32 %v334, 7
      %v336 = vsub.s32 0, %v335
      %v337 = vrot.slane %v330, %v336
      %vm338 = vcmp.eq.s32.totalorder %v333, %v337
      %s339 = smul.u32 %s16, 8
      %v340 = vlaneseq
      %v341 = vshrl.u32 %v340, 7
      %v342 = vstv %s339
      %v343 = vadd.s32 %v342, %v341
      %v344 = vlaneseq
      %v345 = vand.u32 %v344, 127
      %v346 = vsel %vm338, %v328, 3e+38
      %vm347 = vcmp.eq.s32.totalorder %v343, %v345
      %v348 = vsel %vm347, -3e+38, %v346
      %v349 = vsel %vm240, %v348, inf
      %350 = vmin.xlane.f32.xlu0 %v349
      %v351 = vpop.xlane.xlu0 %350
      %vm352 = vcmp.eq.f32.partialorder %v348, %v351
      %v353 = vsel %vm352, %v345, 16
      %v354 = vsel %vm240, %v353, 2147483647
      %v355 = vand.u32 %v354, 65535
      %v356 = vshra.s32 %v354, 16
      %v357 = vcvt.s32.f32 %v355
      %v358 = vcvt.s32.f32 %v356
      %359 = vmin.xlane.f32.xlu0 %v358
      %v360 = vpop.xlane.xlu0 %359
      %vm361 = vcmp.eq.f32.partialorder %v358, %v360
      %v362 = vsel %vm361, %v357, inf
      %363 = vmin.xlane.f32.xlu0 %v362
      %v364 = vpop.xlane.xlu0 %363
      %v365 = vcvt.f32.s32 %v364
      %v366 = vcvt.f32.s32 %v360
      %v367 = vshll.u32 %v366, 16
      %v368 = vadd.s32 %v367, %v365
      %vm369 = vcmp.lt.f32.partialorder %v351, 1e+37
      %v370 = vsel %vm369, %v368, %v343
      %vm371 = vcmp.eq.s32.totalorder %v345, %v370
      %v372 = vsel %vm371, 3e+38, %v348
      %v373 = vsel %vm240, %v372, inf
      %374 = vmin.xlane.f32.xlu0 %v373
      %v375 = vpop.xlane.xlu0 %374
      %vm376 = vcmp.eq.f32.partialorder %v372, %v375
      %v377 = vsel %vm376, %v345, 16
      %v378 = vsel %vm240, %v377, 2147483647
      %v379 = vand.u32 %v378, 65535
      %v380 = vshra.s32 %v378, 16
      %v381 = vcvt.s32.f32 %v379
      %v382 = vcvt.s32.f32 %v380
      %383 = vmin.xlane.f32.xlu0 %v382
      %v384 = vpop.xlane.xlu0 %383
      %vm385 = vcmp.eq.f32.partialorder %v382, %v384
      %v386 = vsel %vm385, %v381, inf
      %387 = vmin.xlane.f32.xlu0 %v386
      %v388 = vpop.xlane.xlu0 %387
      %v389 = vcvt.f32.s32 %v388
      %v390 = vcvt.f32.s32 %v384
      %v391 = vshll.u32 %v390, 16
      %v392 = vadd.s32 %v391, %v389
      %vm393 = vcmp.lt.f32.partialorder %v375, 1e+37
      %v394 = vsel %vm393, %v392, %v343
      %vm395 = vcmp.eq.s32.totalorder %v345, %v394
      %v396 = vsel %vm395, 3e+38, %v372
      %v397 = vsel %vm240, %v396, inf
      %398 = vmin.xlane.f32.xlu0 %v397
      %v399 = vpop.xlane.xlu0 %398
      %vm400 = vcmp.eq.f32.partialorder %v396, %v399
      %v401 = vsel %vm400, %v345, 16
      %v402 = vsel %vm240, %v401, 2147483647
      %v403 = vand.u32 %v402, 65535
      %v404 = vshra.s32 %v402, 16
      %v405 = vcvt.s32.f32 %v403
      %v406 = vcvt.s32.f32 %v404
      %407 = vmin.xlane.f32.xlu0 %v406
      %v408 = vpop.xlane.xlu0 %407
      %vm409 = vcmp.eq.f32.partialorder %v406, %v408
      %v410 = vsel %vm409, %v405, inf
      %411 = vmin.xlane.f32.xlu0 %v410
      %v412 = vpop.xlane.xlu0 %411
      %v413 = vcvt.f32.s32 %v412
      %v414 = vcvt.f32.s32 %v408
      %v415 = vshll.u32 %v414, 16
      %v416 = vadd.s32 %v415, %v413
      %vm417 = vcmp.lt.f32.partialorder %v399, 1e+37
      %v418 = vsel %vm417, %v416, %v343
      %vm419 = vcmask 7168
      %v420 = vsel %vm419, %v370, %v394
      %vm421 = vcmask 15360
      %v422 = vsel %vm421, %v420, %v418
      %vm423 = vcmask 23552
      %424 = vst.msk [vmem:[%s236] sm:$0xff] %vm423, %v422
      %p425 = scmp.lt.s32.totalorder %s16, 1
      %s426 = scalar_select %p425, %s16, 1
      %s427 = smul.addr %s426, 8
      %s428 = scalar_lea.vmem %s5, %s427
      // Predicated region
      $region41: #{maas_forward.14} parent=39 // pred_check
        %p429 = pneg %p149
      $region42: #{maas_forward.14} parent=39 // pred_check_branch
        %431 = sbr.rel (%p429) target = $region44
      $region43: #{maas_forward.14} parent=39 // pred_region
        _
      $region44: #{maas_forward.14} parent=39 // pred_fallthru
        _
    $region40: #{maas_forward.14} parent=5 // pred_fallthru
      _
    %p432 = scmp.le.s32.totalorder 2, %s11
    // Predicated region
    $region45: #{maas_forward.14} parent=5 // pred_check
      %p433 = pneg %p432
    $region46: #{maas_forward.14} parent=5 // pred_check_branch
      %435 = sbr.rel (%p433) target = $region48
    $region47: #{maas_forward.14} parent=5 // pred_region
      %s436 = ssub.s32 %s11, 2
      // Predicated region
      $region49: #{maas_forward.14} parent=47 // pred_check
        %p437 = pneg %p155
      $region50: #{maas_forward.14} parent=47 // pred_check_branch
        %439 = sbr.rel (%p437) target = $region52
      $region51: #{maas_forward.14} parent=47 // pred_region
        %p440 = scmp.lt.s32.totalorder %s17, 1
        %s441 = scalar_select %p440, %s17, 1
        %s442 = smul.addr %s441, 8
        %s443 = scalar_lea.vmem %s5, %s442
      $region52: #{maas_forward.14} parent=47 // pred_fallthru
        _
    $region48: #{maas_forward.14} parent=5 // pred_fallthru
      _
  $region6: #{maas_forward.14} parent=0 // loop_footer
    %s15 = sadd.s32 1, %s11
  $region7: #{maas_forward.14} parent=0 // loop_footer_branch
    %10 = sbr.rel target = $region3
  $region8: #{maas_forward.14} parent=0 // loop_exit
    _

// kernel: maas_forward.15
$region0: #{maas_forward.15}
  #allocation0 [shape = 'u32[]', space=smem, size = 0x4, offset = 0x4, fixed_abs, tag = 'smem constant byte address 0x4 - core index']
  #allocation1 [shape = 'u32[144,128]{1,0:T(1,128)}', space=vmem, size = 0x12000, scoped, tag = 'internal scratch']
  %s0 = inlined_call_operand.vmem [shape: f32[16,16], index: 0, kind: input, shape index: {}]
  %s1 = inlined_call_operand.vmem [shape: f32[48,16], index: 1, kind: input, shape index: {}]
  %s2 = inlined_call_operand.vmem [shape: f32[1,16], index: 2, kind: input, shape index: {}]
  %s3 = inlined_call_operand.vmem [shape: f32[1,16], index: 3, kind: input, shape index: {}]
  %s4 = inlined_call_operand.vmem [shape: f32[1,16], index: 4, kind: input, shape index: {}]
  %s5 = inlined_call_operand.vmem [shape: f32[1,16], index: 5, kind: input, shape index: {}]
  %s6 = inlined_call_operand.vmem [shape: f32[16,16], index: 6, kind: input, shape index: {}]
  %s7 = inlined_call_operand.vmem [shape: f32[16,16], index: 7, kind: input, shape index: {}]
  %s8 = inlined_call_operand.vmem [shape: f32[16,16], index: 8, kind: output, shape index: {}]
  %s9 = sld [smem:[#allocation0]]
  $region65: #{maas_forward.15} parent=0
    _
  %s11 = ssub.s32 1, %s9
  %s12 = scalar_select 0, %s11, %s9
  loop: start=0, step=1, limit=4
  $region2: #{maas_forward.15} parent=0 // loop_pre_header
    _
  $region3: #{maas_forward.15} parent=0 // loop_header
    %s14 = sphi 0, %s18
    %p15 = scmp.ge.s32.totalorder %s14, 4
    %s24 = sphi 0, %s26
    %s27 = sphi 0, %s24
    %s28 = sphi 0, %s27
    %s44 = sphi 0, %s28
    %s50 = sphi 0, %s52
    %s53 = sphi 0, %s50
    %s54 = sphi 0, %s53
    %s70 = sphi 0, %s54
    %s74 = sphi 0, %s74
    %s76 = sphi 0, %s74
    %s77 = sphi 0, %s76
    %s91 = sphi 0, %s77
    %s95 = sphi 0, %s95
    %s97 = sphi 0, %s95
    %s98 = sphi 0, %s97
    %s112 = sphi 0, %s98
    %s116 = sphi 0, %s116
    %s118 = sphi 0, %s116
    %s119 = sphi 0, %s118
    %s133 = sphi 0, %s119
    %s137 = sphi 0, %s137
    %s139 = sphi 0, %s137
    %s140 = sphi 0, %s139
    %s154 = sphi 0, %s140
    %s158 = sphi 0, %s158
    %s160 = sphi 0, %s158
    %s161 = sphi 0, %s160
    %s175 = sphi 0, %s161
    %s179 = sphi 0, %s179
    %s181 = sphi 0, %s179
    %s182 = sphi 0, %s181
    %s196 = sphi 0, %s182
    %s202 = sphi 0, %s204
    %s205 = sphi 0, %s202
    %s206 = sphi 0, %s205
    %s222 = sphi 0, %s206
  $region4: #{maas_forward.15} parent=0 // loop_header_branch
    %17 = sbr.rel (%p15) target = $region8
  $region5: #{maas_forward.15} parent=0 // loop_body
    %s19 = ssub.s32 %s14, 1
    %s20 = ssub.s32 %s14, 2
    %s21 = sadd.s32 %s14, 1
    %s22 = ssub.s32 %s14, %s21
    %p23 = scmp.eq.s32.totalorder %s22, 0
    %s25 = sadd.s32 %s24, 1
    %s26 = scalar_select %p23, %s24, %s25
    %p29 = pneg %p23
    %p30 = scmp.eq.s32.totalorder %s14, 1
    %p31 = por %p29, %p30
    %p32 = scmp.ne.s32.totalorder %s24, %s27
    %p33 = scmp.eq.s32.totalorder %s14, 0
    %p34 = por %p32, %p33
    %p35 = scmp.ne.s32.totalorder %s24, %s27
    %p36 = scmp.eq.s32.totalorder %s19, 1
    %p37 = por %p35, %p36
    %p38 = scmp.ne.s32.totalorder %s27, %s28
    %p39 = scmp.eq.s32.totalorder %s19, 0
    %p40 = por %p38, %p39
    %p41 = scmp.ne.s32.totalorder %s27, %s28
    %p42 = scmp.eq.s32.totalorder %s20, 1
    %p43 = por %p41, %p42
    %p45 = scmp.ne.s32.totalorder %s28, %s44
    %p46 = scmp.eq.s32.totalorder %s20, 0
    %p47 = por %p45, %p46
    %s48 = ssub.s32 %s14, %s21
    %p49 = scmp.eq.s32.totalorder %s48, 0
    %s51 = sadd.s32 %s50, 1
    %s52 = scalar_select %p49, %s50, %s51
    %p55 = pneg %p49
    %p56 = scmp.eq.s32.totalorder %s14, 1
    %p57 = por %p55, %p56
    %p58 = scmp.ne.s32.totalorder %s50, %s53
    %p59 = scmp.eq.s32.totalorder %s14, 0
    %p60 = por %p58, %p59
    %p61 = scmp.ne.s32.totalorder %s50, %s53
    %p62 = scmp.eq.s32.totalorder %s19, 1
    %p63 = por %p61, %p62
    %p64 = scmp.ne.s32.totalorder %s53, %s54
    %p65 = scmp.eq.s32.totalorder %s19, 0
    %p66 = por %p64, %p65
    %p67 = scmp.ne.s32.totalorder %s53, %s54
    %p68 = scmp.eq.s32.totalorder %s20, 1
    %p69 = por %p67, %p68
    %p71 = scmp.ne.s32.totalorder %s54, %s70
    %p72 = scmp.eq.s32.totalorder %s20, 0
    %p73 = por %p71, %p72
    %s75 = sadd.s32 %s74, 1
    %p78 = scmp.eq.s32.totalorder %s14, 1
    %p79 = scmp.ne.s32.totalorder %s74, %s76
    %p80 = scmp.eq.s32.totalorder %s14, 0
    %p81 = por %p79, %p80
    %p82 = scmp.ne.s32.totalorder %s74, %s76
    %p83 = scmp.eq.s32.totalorder %s19, 1
    %p84 = por %p82, %p83
    %p85 = scmp.ne.s32.totalorder %s76, %s77
    %p86 = scmp.eq.s32.totalorder %s19, 0
    %p87 = por %p85, %p86
    %p88 = scmp.ne.s32.totalorder %s76, %s77
    %p89 = scmp.eq.s32.totalorder %s20, 1
    %p90 = por %p88, %p89
    %p92 = scmp.ne.s32.totalorder %s77, %s91
    %p93 = scmp.eq.s32.totalorder %s20, 0
    %p94 = por %p92, %p93
    %s96 = sadd.s32 %s95, 1
    %p99 = scmp.eq.s32.totalorder %s14, 1
    %p100 = scmp.ne.s32.totalorder %s95, %s97
    %p101 = scmp.eq.s32.totalorder %s14, 0
    %p102 = por %p100, %p101
    %p103 = scmp.ne.s32.totalorder %s95, %s97
    %p104 = scmp.eq.s32.totalorder %s19, 1
    %p105 = por %p103, %p104
    %p106 = scmp.ne.s32.totalorder %s97, %s98
    %p107 = scmp.eq.s32.totalorder %s19, 0
    %p108 = por %p106, %p107
    %p109 = scmp.ne.s32.totalorder %s97, %s98
    %p110 = scmp.eq.s32.totalorder %s20, 1
    %p111 = por %p109, %p110
    %p113 = scmp.ne.s32.totalorder %s98, %s112
    %p114 = scmp.eq.s32.totalorder %s20, 0
    %p115 = por %p113, %p114
    %s117 = sadd.s32 %s116, 1
    %p120 = scmp.eq.s32.totalorder %s14, 1
    %p121 = scmp.ne.s32.totalorder %s116, %s118
    %p122 = scmp.eq.s32.totalorder %s14, 0
    %p123 = por %p121, %p122
    %p124 = scmp.ne.s32.totalorder %s116, %s118
    %p125 = scmp.eq.s32.totalorder %s19, 1
    %p126 = por %p124, %p125
    %p127 = scmp.ne.s32.totalorder %s118, %s119
    %p128 = scmp.eq.s32.totalorder %s19, 0
    %p129 = por %p127, %p128
    %p130 = scmp.ne.s32.totalorder %s118, %s119
    %p131 = scmp.eq.s32.totalorder %s20, 1
    %p132 = por %p130, %p131
    %p134 = scmp.ne.s32.totalorder %s119, %s133
    %p135 = scmp.eq.s32.totalorder %s20, 0
    %p136 = por %p134, %p135
    %s138 = sadd.s32 %s137, 1
    %p141 = scmp.eq.s32.totalorder %s14, 1
    %p142 = scmp.ne.s32.totalorder %s137, %s139
    %p143 = scmp.eq.s32.totalorder %s14, 0
    %p144 = por %p142, %p143
    %p145 = scmp.ne.s32.totalorder %s137, %s139
    %p146 = scmp.eq.s32.totalorder %s19, 1
    %p147 = por %p145, %p146
    %p148 = scmp.ne.s32.totalorder %s139, %s140
    %p149 = scmp.eq.s32.totalorder %s19, 0
    %p150 = por %p148, %p149
    %p151 = scmp.ne.s32.totalorder %s139, %s140
    %p152 = scmp.eq.s32.totalorder %s20, 1
    %p153 = por %p151, %p152
    %p155 = scmp.ne.s32.totalorder %s140, %s154
    %p156 = scmp.eq.s32.totalorder %s20, 0
    %p157 = por %p155, %p156
    %s159 = sadd.s32 %s158, 1
    %p162 = scmp.eq.s32.totalorder %s14, 1
    %p163 = scmp.ne.s32.totalorder %s158, %s160
    %p164 = scmp.eq.s32.totalorder %s14, 0
    %p165 = por %p163, %p164
    %p166 = scmp.ne.s32.totalorder %s158, %s160
    %p167 = scmp.eq.s32.totalorder %s19, 1
    %p168 = por %p166, %p167
    %p169 = scmp.ne.s32.totalorder %s160, %s161
    %p170 = scmp.eq.s32.totalorder %s19, 0
    %p171 = por %p169, %p170
    %p172 = scmp.ne.s32.totalorder %s160, %s161
    %p173 = scmp.eq.s32.totalorder %s20, 1
    %p174 = por %p172, %p173
    %p176 = scmp.ne.s32.totalorder %s161, %s175
    %p177 = scmp.eq.s32.totalorder %s20, 0
    %p178 = por %p176, %p177
    %s180 = sadd.s32 %s179, 1
    %p183 = scmp.eq.s32.totalorder %s14, 1
    %p184 = scmp.ne.s32.totalorder %s179, %s181
    %p185 = scmp.eq.s32.totalorder %s14, 0
    %p186 = por %p184, %p185
    %p187 = scmp.ne.s32.totalorder %s179, %s181
    %p188 = scmp.eq.s32.totalorder %s19, 1
    %p189 = por %p187, %p188
    %p190 = scmp.ne.s32.totalorder %s181, %s182
    %p191 = scmp.eq.s32.totalorder %s19, 0
    %p192 = por %p190, %p191
    %p193 = scmp.ne.s32.totalorder %s181, %s182
    %p194 = scmp.eq.s32.totalorder %s20, 1
    %p195 = por %p193, %p194
    %p197 = scmp.ne.s32.totalorder %s182, %s196
    %p198 = scmp.eq.s32.totalorder %s20, 0
    %p199 = por %p197, %p198
    %s200 = ssub.s32 %s14, %s21
    %p201 = scmp.eq.s32.totalorder %s200, 0
    %s203 = sadd.s32 %s202, 1
    %s204 = scalar_select %p201, %s202, %s203
    %p207 = pneg %p201
    %p208 = scmp.eq.s32.totalorder %s14, 1
    %p209 = por %p207, %p208
    %p210 = scmp.ne.s32.totalorder %s202, %s205
    %p211 = scmp.eq.s32.totalorder %s14, 0
    %p212 = por %p210, %p211
    %p213 = scmp.ne.s32.totalorder %s202, %s205
    %p214 = scmp.eq.s32.totalorder %s19, 1
    %p215 = por %p213, %p214
    %p216 = scmp.ne.s32.totalorder %s205, %s206
    %p217 = scmp.eq.s32.totalorder %s19, 0
    %p218 = por %p216, %p217
    %p219 = scmp.ne.s32.totalorder %s205, %s206
    %p220 = scmp.eq.s32.totalorder %s20, 1
    %p221 = por %p219, %p220
    %p223 = scmp.ne.s32.totalorder %s206, %s222
    %p224 = scmp.eq.s32.totalorder %s20, 0
    %p225 = por %p223, %p224
    %p226 = scmp.le.s32.totalorder 1, %s14
    %p227 = scmp.lt.s32.totalorder %s14, 3
    %p228 = pnand %p226, %p227
    %p229 = pneg %p228
    // Predicated region
    $region9: #{maas_forward.15} parent=5 // pred_check
      _
    $region10: #{maas_forward.15} parent=5 // pred_check_branch
      %231 = sbr.rel (%p228) target = $region12
    $region11: #{maas_forward.15} parent=5 // pred_region
      %s232 = ssub.s32 %s14, 1
      // Predicated region
      $region13: #{maas_forward.15} parent=11 // pred_check
        %p233 = pneg %p87
      $region14: #{maas_forward.15} parent=11 // pred_check_branch
        %235 = sbr.rel (%p233) target = $region16
      $region15: #{maas_forward.15} parent=11 // pred_region
        _
      $region16: #{maas_forward.15} parent=11 // pred_fallthru
        _
      // Predicated region
      $region17: #{maas_forward.15} parent=11 // pred_check
        %p236 = pneg %p108
      $region18: #{maas_forward.15} parent=11 // pred_check_branch
        %238 = sbr.rel (%p236) target = $region20
      $region19: #{maas_forward.15} parent=11 // pred_region
        _
      $region20: #{maas_forward.15} parent=11 // pred_fallthru
        _
      // Predicated region
      $region21: #{maas_forward.15} parent=11 // pred_check
        %p239 = pneg %p129
      $region22: #{maas_forward.15} parent=11 // pred_check_branch
        %241 = sbr.rel (%p239) target = $region24
      $region23: #{maas_forward.15} parent=11 // pred_region
        _
      $region24: #{maas_forward.15} parent=11 // pred_fallthru
        _
      // Predicated region
      $region25: #{maas_forward.15} parent=11 // pred_check
        %p242 = pneg %p150
      $region26: #{maas_forward.15} parent=11 // pred_check_branch
        %244 = sbr.rel (%p242) target = $region28
      $region27: #{maas_forward.15} parent=11 // pred_region
        _
      $region28: #{maas_forward.15} parent=11 // pred_fallthru
        _
      // Predicated region
      $region29: #{maas_forward.15} parent=11 // pred_check
        %p245 = pneg %p171
      $region30: #{maas_forward.15} parent=11 // pred_check_branch
        %247 = sbr.rel (%p245) target = $region32
      $region31: #{maas_forward.15} parent=11 // pred_region
        _
      $region32: #{maas_forward.15} parent=11 // pred_fallthru
        _
      // Predicated region
      $region33: #{maas_forward.15} parent=11 // pred_check
        %p248 = pneg %p192
      $region34: #{maas_forward.15} parent=11 // pred_check_branch
        %250 = sbr.rel (%p248) target = $region36
      $region35: #{maas_forward.15} parent=11 // pred_region
        _
      $region36: #{maas_forward.15} parent=11 // pred_fallthru
        _
    $region12: #{maas_forward.15} parent=5 // pred_fallthru
      _
    %p251 = scmp.lt.s32.totalorder %s14, 2
    // Predicated region
    $region37: #{maas_forward.15} parent=5 // pred_check
      %p252 = pneg %p251
    $region38: #{maas_forward.15} parent=5 // pred_check_branch
      %254 = sbr.rel (%p252) target = $region40
    $region39: #{maas_forward.15} parent=5 // pred_region
      // Predicated region
      $region41: #{maas_forward.15} parent=39 // pred_check
        %p255 = pneg %p34
      $region42: #{maas_forward.15} parent=39 // pred_check_branch
        %257 = sbr.rel (%p255) target = $region44
      $region43: #{maas_forward.15} parent=39 // pred_region
        %p258 = scmp.lt.s32.totalorder %s14, 1
        %s259 = scalar_select %p258, %s14, 1
        %s260 = smul.addr %s259, 8
        %s261 = scalar_lea.vmem %s0, %s260
      $region44: #{maas_forward.15} parent=39 // pred_fallthru
        _
      // Predicated region
      $region45: #{maas_forward.15} parent=39 // pred_check
        %p262 = pneg %p60
      $region46: #{maas_forward.15} parent=39 // pred_check_branch
        %264 = sbr.rel (%p262) target = $region48
      $region47: #{maas_forward.15} parent=39 // pred_region
        %s265 = smul.u32 3, %s14
        %p266 = scmp.lt.s32.totalorder %s265, 5
        %s267 = scalar_select %p266, %s265, 5
        %s268 = smul.addr %s267, 8
        %s269 = scalar_lea.vmem %s1, %s268
        %s270 = smul.u32 3, %s14
      $region48: #{maas_forward.15} parent=39 // pred_fallthru
        _
    $region40: #{maas_forward.15} parent=5 // pred_fallthru
      _
    %p271 = scmp.le.s32.totalorder 1, %s14
    %p272 = scmp.lt.s32.totalorder %s14, 3
    %p273 = pnand %p271, %p272
    %p274 = pneg %p273
    // Predicated region
    $region49: #{maas_forward.15} parent=5 // pred_check
      _
    $region50: #{maas_forward.15} parent=5 // pred_check_branch
      %276 = sbr.rel (%p273) target = $region52
    $region51: #{maas_forward.15} parent=5 // pred_region
      %s277 = ssub.s32 %s14, 1
      %p278 = scmp.lt.s32.totalorder %s19, 1
      %s279 = scalar_select %p278, %s19, 1
      %s280 = smul.addr %s279, 8
      %s281 = scalar_lea.vmem %s0, %s280
      %p282 = pneg %p40
      %p283 = pneg %p37
      %s284 = smul.u32 3, %s19
      %p285 = scmp.lt.s32.totalorder %s284, 5
      %s286 = scalar_select %p285, %s284, 5
      %s287 = smul.addr %s286, 8
      %s288 = scalar_lea.vmem %s1, %s287
      %p289 = pneg %p66
      %p290 = pneg %p63
      %p291 = pneg %p87
      %p292 = pneg %p84
      %p293 = pneg %p108
      %p294 = pneg %p105
      %p295 = pneg %p129
      %p296 = pneg %p126
      %p297 = pneg %p150
      %p298 = pneg %p147
      %p299 = pneg %p171
      %p300 = pneg %p168
      %p301 = pneg %p192
      %p302 = pneg %p189
      %p303 = pneg %p218
      %p304 = pneg %p215
      %p305 = scmp.lt.s32.totalorder %s19, 1
      %s306 = scalar_select %p305, %s19, 1
      %s307 = smul.addr %s306, 8
      %s308 = scalar_lea.vmem %s8, %s307
      %p309 = scmp.lt.s32.totalorder %s19, 1
      %s310 = scalar_select %p309, %s19, 1
      %s311 = smul.addr %s310, 8
      %s312 = scalar_lea.vmem %s0, %s311
      %s313 = smul.u32 3, %s19
      %p314 = scmp.lt.s32.totalorder %s313, 5
      %s315 = scalar_select %p314, %s313, 5
      %s316 = smul.addr %s315, 8
      %s317 = scalar_lea.vmem %s1, %s316
      %s318 = smul.u32 3, %s19
      %p319 = scmp.lt.s32.totalorder %s19, 1
      %s320 = scalar_select %p319, %s19, 1
      %s321 = smul.addr %s320, 8
      %s322 = scalar_lea.vmem %s8, %s321
      %v323 = vld [vmem:[%s312] sm:$0xff]
      %v324 = vld [vmem:[%s2] sm:$0x1]
      %v326 = vlaneseq
      %v327 = vshrl.u32 %v326, 7
      %v328 = vsub.s32 0, %v327
      %v329 = vrot.slane %v324, %v328
      %v331 = vmul.f32 %v323, %v329
      %v332 = vld [vmem:[%s3] sm:$0x1]
      %v334 = vlaneseq
      %v335 = vshrl.u32 %v334, 7
      %v336 = vsub.s32 0, %v335
      %v337 = vrot.slane %v332, %v336
      %v339 = vadd.f32 %v331, %v337
      %v340 = vmax.f32 %v339, 0.0
      %v341 = vld [vmem:[%s6] sm:$0xff]
      %v342 = vld [vmem:[%s6 + $0x8] sm:$0xff]
      %vm343 = vcmask 130048
      %v345 = vsel %vm343, %v340, 0
      %347 = vmatprep.subr.mxu0 0.0
      %348 = vmatpush1.msra.mxu0 %v341
      %349 = vmatprep.subr.mxu0 0.0
      %350 = vmatpush1.msra.mxu0 %v342
      %351 = vmatprep.subr.mxu0 0.0
      %352 = vmatpush1.msra.mxu0 0.0
      %353 = vmatprep.subr.mxu0 0.0
      %354 = vmatpush1.msra.mxu0 0.0
      %355 = vmatprep.subr.mxu0 0.0
      %356 = vmatpush1.msra.mxu0 0.0
      %357 = vmatprep.subr.mxu0 0.0
      %358 = vmatpush1.msra.mxu0 0.0
      %359 = vmatprep.subr.mxu0 0.0
      %360 = vmatpush1.msra.mxu0 0.0
      %361 = vmatprep.subr.mxu0 0.0
      %362 = vmatpush1.msra.mxu0 0.0
      %363 = vmatprep.subr.mxu0 0.0
      %364 = vmatpush1.msra.mxu0 0.0
      %365 = vmatprep.subr.mxu0 0.0
      %366 = vmatpush1.msra.mxu0 0.0
      %367 = vmatprep.subr.mxu0 0.0
      %368 = vmatpush1.msra.mxu0 0.0
      %369 = vmatprep.subr.mxu0 0.0
      %370 = vmatpush1.msra.mxu0 0.0
      %371 = vmatprep.subr.mxu0 0.0
      %372 = vmatpush1.msra.mxu0 0.0
      %373 = vmatprep.subr.mxu0 0.0
      %374 = vmatpush1.msra.mxu0 0.0
      %375 = vmatprep.subr.mxu0 0.0
      %376 = vmatpush1.msra.mxu0 0.0
      %377 = vmatprep.subr.mxu0 0.0
      %378 = vmatpush1.msra.mxu0 0.0
      %379 = vmatprep.subr.mxu0 0.0
      %380 = vmatpush1.msra.mxu0 0.0
      %381 = vmatprep.subr.mxu0 0.0
      %382 = vmatpush1.msra.mxu0 0.0
      %383 = vmatprep.subr.mxu0 0.0
      %384 = vmatpush1.msra.mxu0 0.0
      %385 = vmatprep.subr.mxu0 0.0
      %386 = vmatpush1.msra.mxu0 0.0
      %387 = vmatprep.subr.mxu0 0.0
      %388 = vmatpush1.msra.mxu0 0.0
      %389 = vmatprep.subr.mxu0 0.0
      %390 = vmatpush1.msra.mxu0 0.0
      %391 = vmatprep.subr.mxu0 0.0
      %392 = vmatpush1.msra.mxu0 0.0
      %393 = vmatprep.subr.mxu0 0.0
      %394 = vmatpush1.msra.mxu0 0.0
      %395 = vmatprep.subr.mxu0 0.0
      %396 = vmatpush1.msra.mxu0 0.0
      %397 = vmatprep.subr.mxu0 0.0
      %398 = vmatpush1.msra.mxu0 0.0
      %399 = vmatprep.subr.mxu0 0.0
      %400 = vmatpush1.msra.mxu0 0.0
      %401 = vmatprep.subr.mxu0 0.0
      %402 = vmatpush1.msra.mxu0 0.0
      %403 = vmatprep.subr.mxu0 0.0
      %404 = vmatpush1.msra.mxu0 0.0
      %405 = vmatprep.subr.mxu0 0.0
      %406 = vmatpush1.msra.mxu0 0.0
      %407 = vmatprep.subr.mxu0 0.0
      %408 = vmatpush1.msra.mxu0 0.0
      %409 = vmatprep.subr.mxu0 0.0
      %410 = vmatpush1.msra.mxu0 0.0
      %411 = vmatprep.mubr.f32.mxu0 0.0
      %412 = vmatmul.mubr.f32.gmra.mrb[0].mxu0 %v345
      %v413 = vpop.f32.mrb[0].mxu0
      %v414 = vadd.f32 0.0, %v413
      %v415 = vpop.f32.mrb[0].mxu0
      %416 = vdwg.mxu0
      %v417 = vld [vmem:[%s317] sm:$0xff]
      %v418 = vld [vmem:[%s317 + $0x8] sm:$0xff]
      %v419 = vld [vmem:[%s317 + $0x10] sm:$0xff]
      %v423 = vcombine.high %v417, %v417
      %v425 = vunpack.c.l.s4 1966171168
      %v426 = vunpack.c.0.s8 %v425
      %v427 = vlaneseq
      %v428 = vshrl.u32 %v427, 7
      %v429 = vsub.s32 %v426, %v428
      %v430 = vrot.slane %v417, %v429
      %v432 = vunpack.c.l.s4 1966171168
      %v433 = vunpack.c.0.s8 %v432
      %v434 = vlaneseq
      %v435 = vshrl.u32 %v434, 7
      %v436 = vsub.s32 %v433, %v435
      %v437 = vrot.slane %v423, %v436
      %v438 = vcombine.high %v430, %v430
      %v439 = vcombine.high %v437, %v437
      %v441 = vunpack.c.l.s4 1966171168
      %v442 = vunpack.c.0.s8 %v441
      %v443 = vlaneseq
      %v444 = vshrl.u32 %v443, 7
      %v445 = vsub.s32 %v442, %v444
      %v446 = vrot.slane %v430, %v445
      %v448 = vunpack.c.l.s4 1966171168
      %v449 = vunpack.c.0.s8 %v448
      %v450 = vlaneseq
      %v451 = vshrl.u32 %v450, 7
      %v452 = vsub.s32 %v449, %v451
      %v453 = vrot.slane %v437, %v452
      %v455 = vunpack.c.l.s4 1966171168
      %v456 = vunpack.c.0.s8 %v455
      %v457 = vlaneseq
      %v458 = vshrl.u32 %v457, 7
      %v459 = vsub.s32 %v456, %v458
      %v460 = vrot.slane %v438, %v459
      %v462 = vunpack.c.l.s4 1966171168
      %v463 = vunpack.c.0.s8 %v462
      %v464 = vlaneseq
      %v465 = vshrl.u32 %v464, 7
      %v466 = vsub.s32 %v463, %v465
      %v467 = vrot.slane %v439, %v466
      %v468 = vcombine.high %v446, %v446
      %v469 = vcombine.high %v453, %v453
      %v470 = vcombine.high %v460, %v460
      %v471 = vcombine.high %v467, %v467
      %v472 = vcombine.high %v418, %v418
      %v474 = vunpack.c.l.s4 1966171168
      %v475 = vunpack.c.0.s8 %v474
      %v476 = vlaneseq
      %v477 = vshrl.u32 %v476, 7
      %v478 = vsub.s32 %v475, %v477
      %v479 = vrot.slane %v418, %v478
      %v481 = vunpack.c.l.s4 1966171168
      %v482 = vunpack.c.0.s8 %v481
      %v483 = vlaneseq
      %v484 = vshrl.u32 %v483, 7
      %v485 = vsub.s32 %v482, %v484
      %v486 = vrot.slane %v472, %v485
      %v487 = vcombine.high %v479, %v479
      %v488 = vcombine.high %v486, %v486
      %v490 = vunpack.c.l.s4 1966171168
      %v491 = vunpack.c.0.s8 %v490
      %v492 = vlaneseq
      %v493 = vshrl.u32 %v492, 7
      %v494 = vsub.s32 %v491, %v493
      %v495 = vrot.slane %v479, %v494
      %v497 = vunpack.c.l.s4 1966171168
      %v498 = vunpack.c.0.s8 %v497
      %v499 = vlaneseq
      %v500 = vshrl.u32 %v499, 7
      %v501 = vsub.s32 %v498, %v500
      %v502 = vrot.slane %v486, %v501
      %v504 = vunpack.c.l.s4 1966171168
      %v505 = vunpack.c.0.s8 %v504
      %v506 = vlaneseq
      %v507 = vshrl.u32 %v506, 7
      %v508 = vsub.s32 %v505, %v507
      %v509 = vrot.slane %v487, %v508
      %v511 = vunpack.c.l.s4 1966171168
      %v512 = vunpack.c.0.s8 %v511
      %v513 = vlaneseq
      %v514 = vshrl.u32 %v513, 7
      %v515 = vsub.s32 %v512, %v514
      %v516 = vrot.slane %v488, %v515
      %v517 = vcombine.high %v495, %v495
      %v518 = vcombine.high %v502, %v502
      %v519 = vcombine.high %v509, %v509
      %v520 = vcombine.high %v516, %v516
      %v521 = vcombine.high %v419, %v419
      %v523 = vunpack.c.l.s4 1966171168
      %v524 = vunpack.c.0.s8 %v523
      %v525 = vlaneseq
      %v526 = vshrl.u32 %v525, 7
      %v527 = vsub.s32 %v524, %v526
      %v528 = vrot.slane %v419, %v527
      %v530 = vunpack.c.l.s4 1966171168
      %v531 = vunpack.c.0.s8 %v530
      %v532 = vlaneseq
      %v533 = vshrl.u32 %v532, 7
      %v534 = vsub.s32 %v531, %v533
      %v535 = vrot.slane %v521, %v534
      %v536 = vcombine.high %v528, %v528
      %v537 = vcombine.high %v535, %v535
      %v539 = vunpack.c.l.s4 1966171168
      %v540 = vunpack.c.0.s8 %v539
      %v541 = vlaneseq
      %v542 = vshrl.u32 %v541, 7
      %v543 = vsub.s32 %v540, %v542
      %v544 = vrot.slane %v528, %v543
      %v546 = vunpack.c.l.s4 1966171168
      %v547 = vunpack.c.0.s8 %v546
      %v548 = vlaneseq
      %v549 = vshrl.u32 %v548, 7
      %v550 = vsub.s32 %v547, %v549
      %v551 = vrot.slane %v535, %v550
      %v553 = vunpack.c.l.s4 1966171168
      %v554 = vunpack.c.0.s8 %v553
      %v555 = vlaneseq
      %v556 = vshrl.u32 %v555, 7
      %v557 = vsub.s32 %v554, %v556
      %v558 = vrot.slane %v536, %v557
      %v560 = vunpack.c.l.s4 1966171168
      %v561 = vunpack.c.0.s8 %v560
      %v562 = vlaneseq
      %v563 = vshrl.u32 %v562, 7
      %v564 = vsub.s32 %v561, %v563
      %v565 = vrot.slane %v537, %v564
      %v566 = vcombine.high %v544, %v544
      %v567 = vcombine.high %v551, %v551
      %v568 = vcombine.high %v558, %v558
      %v569 = vcombine.high %v565, %v565
      %v595 = vcombine.high %v323, %v323
      %v597 = vunpack.c.l.s4 1966171168
      %v598 = vunpack.c.0.s8 %v597
      %v599 = vlaneseq
      %v600 = vshrl.u32 %v599, 7
      %v601 = vsub.s32 %v598, %v600
      %v602 = vrot.slane %v323, %v601
      %v604 = vunpack.c.l.s4 1966171168
      %v605 = vunpack.c.0.s8 %v604
      %v606 = vlaneseq
      %v607 = vshrl.u32 %v606, 7
      %v608 = vsub.s32 %v605, %v607
      %v609 = vrot.slane %v595, %v608
      %v610 = vcombine.high %v602, %v602
      %v611 = vcombine.high %v609, %v609
      %v613 = vunpack.c.l.s4 1966171168
      %v614 = vunpack.c.0.s8 %v613
      %v615 = vlaneseq
      %v616 = vshrl.u32 %v615, 7
      %v617 = vsub.s32 %v614, %v616
      %v618 = vrot.slane %v602, %v617
      %v620 = vunpack.c.l.s4 1966171168
      %v621 = vunpack.c.0.s8 %v620
      %v622 = vlaneseq
      %v623 = vshrl.u32 %v622, 7
      %v624 = vsub.s32 %v621, %v623
      %v625 = vrot.slane %v609, %v624
      %v627 = vunpack.c.l.s4 1966171168
      %v628 = vunpack.c.0.s8 %v627
      %v629 = vlaneseq
      %v630 = vshrl.u32 %v629, 7
      %v631 = vsub.s32 %v628, %v630
      %v632 = vrot.slane %v610, %v631
      %v634 = vunpack.c.l.s4 1966171168
      %v635 = vunpack.c.0.s8 %v634
      %v636 = vlaneseq
      %v637 = vshrl.u32 %v636, 7
      %v638 = vsub.s32 %v635, %v637
      %v639 = vrot.slane %v611, %v638
      %v640 = vcombine.high %v618, %v618
      %v641 = vcombine.high %v625, %v625
      %v642 = vcombine.high %v632, %v632
      %v643 = vcombine.high %v639, %v639
      %v644 = vlaneseq
      %v645 = vshrl.u32 %v644, 7
      %v646 = vsub.s32 0, %v645
      %v647 = vrot.slane %v618, %v646
      %v648 = vlaneseq
      %v649 = vshrl.u32 %v648, 7
      %v650 = vsub.s32 0, %v649
      %v651 = vrot.slane %v632, %v650
      %v652 = vlaneseq
      %v653 = vshrl.u32 %v652, 7
      %v654 = vsub.s32 0, %v653
      %v655 = vrot.slane %v640, %v654
      %v656 = vlaneseq
      %v657 = vshrl.u32 %v656, 7
      %v658 = vsub.s32 0, %v657
      %v659 = vrot.slane %v642, %v658
      %v660 = vlaneseq
      %v661 = vshrl.u32 %v660, 7
      %v662 = vsub.s32 0, %v661
      %v663 = vrot.slane %v625, %v662
      %v664 = vlaneseq
      %v665 = vshrl.u32 %v664, 7
      %v666 = vsub.s32 0, %v665
      %v667 = vrot.slane %v639, %v666
      %v668 = vlaneseq
      %v669 = vshrl.u32 %v668, 7
      %v670 = vsub.s32 0, %v669
      %v671 = vrot.slane %v641, %v670
      %v672 = vlaneseq
      %v673 = vshrl.u32 %v672, 7
      %v674 = vsub.s32 0, %v673
      %v675 = vrot.slane %v643, %v674
      %v677 = vunpack.c.l.s4 1966171168
      %v678 = vunpack.c.0.s8 %v677
      %v679 = vlaneseq
      %v680 = vshrl.u32 %v679, 7
      %v681 = vsub.s32 %v678, %v680
      %v682 = vrot.slane %v647, %v681
      %v683 = vcombine.high %v682, %v682
      %v685 = vunpack.c.l.s4 1966171168
      %v686 = vunpack.c.0.s8 %v685
      %v687 = vlaneseq
      %v688 = vshrl.u32 %v687, 7
      %v689 = vsub.s32 %v686, %v688
      %v690 = vrot.slane %v682, %v689
      %v692 = vunpack.c.l.s4 1966171168
      %v693 = vunpack.c.0.s8 %v692
      %v694 = vlaneseq
      %v695 = vshrl.u32 %v694, 7
      %v696 = vsub.s32 %v693, %v695
      %v697 = vrot.slane %v683, %v696
      %v698 = vcombine.high %v690, %v690
      %v700 = vunpack.c.l.s4 1966171168
      %v701 = vunpack.c.0.s8 %v700
      %v702 = vlaneseq
      %v703 = vshrl.u32 %v702, 7
      %v704 = vsub.s32 %v701, %v703
      %v705 = vrot.slane %v651, %v704
      %v706 = vcombine.high %v705, %v705
      %v708 = vunpack.c.l.s4 1966171168
      %v709 = vunpack.c.0.s8 %v708
      %v710 = vlaneseq
      %v711 = vshrl.u32 %v710, 7
      %v712 = vsub.s32 %v709, %v711
      %v713 = vrot.slane %v705, %v712
      %v715 = vunpack.c.l.s4 1966171168
      %v716 = vunpack.c.0.s8 %v715
      %v717 = vlaneseq
      %v718 = vshrl.u32 %v717, 7
      %v719 = vsub.s32 %v716, %v718
      %v720 = vrot.slane %v706, %v719
      %v721 = vcombine.high %v713, %v713
      %v723 = vunpack.c.l.s4 1966171168
      %v724 = vunpack.c.0.s8 %v723
      %v725 = vlaneseq
      %v726 = vshrl.u32 %v725, 7
      %v727 = vsub.s32 %v724, %v726
      %v728 = vrot.slane %v655, %v727
      %v729 = vcombine.high %v728, %v728
      %v731 = vunpack.c.l.s4 1966171168
      %v732 = vunpack.c.0.s8 %v731
      %v733 = vlaneseq
      %v734 = vshrl.u32 %v733, 7
      %v735 = vsub.s32 %v732, %v734
      %v736 = vrot.slane %v728, %v735
      %v738 = vunpack.c.l.s4 1966171168
      %v739 = vunpack.c.0.s8 %v738
      %v740 = vlaneseq
      %v741 = vshrl.u32 %v740, 7
      %v742 = vsub.s32 %v739, %v741
      %v743 = vrot.slane %v729, %v742
      %v744 = vcombine.high %v736, %v736
      %v746 = vunpack.c.l.s4 1966171168
      %v747 = vunpack.c.0.s8 %v746
      %v748 = vlaneseq
      %v749 = vshrl.u32 %v748, 7
      %v750 = vsub.s32 %v747, %v749
      %v751 = vrot.slane %v659, %v750
      %v752 = vcombine.high %v751, %v751
      %v754 = vunpack.c.l.s4 1966171168
      %v755 = vunpack.c.0.s8 %v754
      %v756 = vlaneseq
      %v757 = vshrl.u32 %v756, 7
      %v758 = vsub.s32 %v755, %v757
      %v759 = vrot.slane %v751, %v758
      %v761 = vunpack.c.l.s4 1966171168
      %v762 = vunpack.c.0.s8 %v761
      %v763 = vlaneseq
      %v764 = vshrl.u32 %v763, 7
      %v765 = vsub.s32 %v762, %v764
      %v766 = vrot.slane %v752, %v765
      %v767 = vcombine.high %v759, %v759
      %v769 = vunpack.c.l.s4 1966171168
      %v770 = vunpack.c.0.s8 %v769
      %v771 = vlaneseq
      %v772 = vshrl.u32 %v771, 7
      %v773 = vsub.s32 %v770, %v772
      %v774 = vrot.slane %v663, %v773
      %v775 = vcombine.high %v774, %v774
      %v777 = vunpack.c.l.s4 1966171168
      %v778 = vunpack.c.0.s8 %v777
      %v779 = vlaneseq
      %v780 = vshrl.u32 %v779, 7
      %v781 = vsub.s32 %v778, %v780
      %v782 = vrot.slane %v774, %v781
      %v784 = vunpack.c.l.s4 1966171168
      %v785 = vunpack.c.0.s8 %v784
      %v786 = vlaneseq
      %v787 = vshrl.u32 %v786, 7
      %v788 = vsub.s32 %v785, %v787
      %v789 = vrot.slane %v775, %v788
      %v790 = vcombine.high %v782, %v782
      %v792 = vunpack.c.l.s4 1966171168
      %v793 = vunpack.c.0.s8 %v792
      %v794 = vlaneseq
      %v795 = vshrl.u32 %v794, 7
      %v796 = vsub.s32 %v793, %v795
      %v797 = vrot.slane %v667, %v796
      %v798 = vcombine.high %v797, %v797
      %v800 = vunpack.c.l.s4 1966171168
      %v801 = vunpack.c.0.s8 %v800
      %v802 = vlaneseq
      %v803 = vshrl.u32 %v802, 7
      %v804 = vsub.s32 %v801, %v803
      %v805 = vrot.slane %v797, %v804
      %v807 = vunpack.c.l.s4 1966171168
      %v808 = vunpack.c.0.s8 %v807
      %v809 = vlaneseq
      %v810 = vshrl.u32 %v809, 7
      %v811 = vsub.s32 %v808, %v810
      %v812 = vrot.slane %v798, %v811
      %v813 = vcombine.high %v805, %v805
      %v815 = vunpack.c.l.s4 1966171168
      %v816 = vunpack.c.0.s8 %v815
      %v817 = vlaneseq
      %v818 = vshrl.u32 %v817, 7
      %v819 = vsub.s32 %v816, %v818
      %v820 = vrot.slane %v671, %v819
      %v821 = vcombine.high %v820, %v820
      %v823 = vunpack.c.l.s4 1966171168
      %v824 = vunpack.c.0.s8 %v823
      %v825 = vlaneseq
      %v826 = vshrl.u32 %v825, 7
      %v827 = vsub.s32 %v824, %v826
      %v828 = vrot.slane %v820, %v827
      %v830 = vunpack.c.l.s4 1966171168
      %v831 = vunpack.c.0.s8 %v830
      %v832 = vlaneseq
      %v833 = vshrl.u32 %v832, 7
      %v834 = vsub.s32 %v831, %v833
      %v835 = vrot.slane %v821, %v834
      %v836 = vcombine.high %v828, %v828
      %v838 = vunpack.c.l.s4 1966171168
      %v839 = vunpack.c.0.s8 %v838
      %v840 = vlaneseq
      %v841 = vshrl.u32 %v840, 7
      %v842 = vsub.s32 %v839, %v841
      %v843 = vrot.slane %v675, %v842
      %v844 = vcombine.high %v843, %v843
      %v846 = vunpack.c.l.s4 1966171168
      %v847 = vunpack.c.0.s8 %v846
      %v848 = vlaneseq
      %v849 = vshrl.u32 %v848, 7
      %v850 = vsub.s32 %v847, %v849
      %v851 = vrot.slane %v843, %v850
      %v853 = vunpack.c.l.s4 1966171168
      %v854 = vunpack.c.0.s8 %v853
      %v855 = vlaneseq
      %v856 = vshrl.u32 %v855, 7
      %v857 = vsub.s32 %v854, %v856
      %v858 = vrot.slane %v844, %v857
      %v859 = vcombine.high %v851, %v851
      %v884 = vsub.f32 %v446, %v690
      %v885 = vsub.f32 %v460, %v697
      %v886 = vsub.f32 %v468, %v698
      %v887 = vsub.f32 %v470, %v713
      %v888 = vsub.f32 %v453, %v720
      %v889 = vsub.f32 %v467, %v721
      %v890 = vsub.f32 %v469, %v736
      %v891 = vsub.f32 %v471, %v743
      %v892 = vsub.f32 %v495, %v744
      %v893 = vsub.f32 %v509, %v759
      %v894 = vsub.f32 %v517, %v766
      %v895 = vsub.f32 %v519, %v767
      %v896 = vsub.f32 %v502, %v782
      %v897 = vsub.f32 %v516, %v789
      %v898 = vsub.f32 %v518, %v790
      %v899 = vsub.f32 %v520, %v805
      %v900 = vsub.f32 %v544, %v812
      %v901 = vsub.f32 %v558, %v813
      %v902 = vsub.f32 %v566, %v828
      %v903 = vsub.f32 %v568, %v835
      %v904 = vsub.f32 %v551, %v836
      %v905 = vsub.f32 %v565, %v851
      %v906 = vsub.f32 %v567, %v858
      %v907 = vsub.f32 %v569, %v859
      %v908 = vld [vmem:[%s4] sm:$0x1]
      %v910 = vlaneseq
      %v911 = vshrl.u32 %v910, 7
      %v912 = vsub.s32 0, %v911
      %v913 = vrot.slane %v908, %v912
      %v915 = vunpack.c.l.s4 1966171168
      %v916 = vunpack.c.0.s8 %v915
      %v917 = vlaneseq
      %v918 = vshrl.u32 %v917, 7
      %v919 = vsub.s32 %v916, %v918
      %v920 = vrot.slane %v913, %v919
      %v921 = vcombine.high %v920, %v920
      %v923 = vunpack.c.l.s4 1966171168
      %v924 = vunpack.c.0.s8 %v923
      %v925 = vlaneseq
      %v926 = vshrl.u32 %v925, 7
      %v927 = vsub.s32 %v924, %v926
      %v928 = vrot.slane %v920, %v927
      %v930 = vunpack.c.l.s4 1966171168
      %v931 = vunpack.c.0.s8 %v930
      %v932 = vlaneseq
      %v933 = vshrl.u32 %v932, 7
      %v934 = vsub.s32 %v931, %v933
      %v935 = vrot.slane %v921, %v934
      %v936 = vcombine.high %v928, %v928
      %v940 = vmul.f32 %v884, %v928
      %v941 = vmul.f32 %v885, %v935
      %v942 = vmul.f32 %v886, %v936
      %v943 = vmul.f32 %v887, %v928
      %v944 = vmul.f32 %v888, %v935
      %v945 = vmul.f32 %v889, %v936
      %v946 = vmul.f32 %v890, %v928
      %v947 = vmul.f32 %v891, %v935
      %v948 = vmul.f32 %v892, %v936
      %v949 = vmul.f32 %v893, %v928
      %v950 = vmul.f32 %v894, %v935
      %v951 = vmul.f32 %v895, %v936
      %v952 = vmul.f32 %v896, %v928
      %v953 = vmul.f32 %v897, %v935
      %v954 = vmul.f32 %v898, %v936
      %v955 = vmul.f32 %v899, %v928
      %v956 = vmul.f32 %v900, %v935
      %v957 = vmul.f32 %v901, %v936
      %v958 = vmul.f32 %v902, %v928
      %v959 = vmul.f32 %v903, %v935
      %v960 = vmul.f32 %v904, %v936
      %v961 = vmul.f32 %v905, %v928
      %v962 = vmul.f32 %v906, %v935
      %v963 = vmul.f32 %v907, %v936
      %v964 = vld [vmem:[%s5] sm:$0x1]
      %v966 = vlaneseq
      %v967 = vshrl.u32 %v966, 7
      %v968 = vsub.s32 0, %v967
      %v969 = vrot.slane %v964, %v968
      %v971 = vunpack.c.l.s4 1966171168
      %v972 = vunpack.c.0.s8 %v971
      %v973 = vlaneseq
      %v974 = vshrl.u32 %v973, 7
      %v975 = vsub.s32 %v972, %v974
      %v976 = vrot.slane %v969, %v975
      %v977 = vcombine.high %v976, %v976
      %v979 = vunpack.c.l.s4 1966171168
      %v980 = vunpack.c.0.s8 %v979
      %v981 = vlaneseq
      %v982 = vshrl.u32 %v981, 7
      %v983 = vsub.s32 %v980, %v982
      %v984 = vrot.slane %v976, %v983
      %v986 = vunpack.c.l.s4 1966171168
      %v987 = vunpack.c.0.s8 %v986
      %v988 = vlaneseq
      %v989 = vshrl.u32 %v988, 7
      %v990 = vsub.s32 %v987, %v989
      %v991 = vrot.slane %v977, %v990
      %v992 = vcombine.high %v984, %v984
      %v996 = vadd.f32 %v940, %v984
      %v997 = vadd.f32 %v941, %v991
      %v998 = vadd.f32 %v942, %v992
      %v999 = vadd.f32 %v943, %v984
      %v1000 = vadd.f32 %v944, %v991
      %v1001 = vadd.f32 %v945, %v992
      %v1002 = vadd.f32 %v946, %v984
      %v1003 = vadd.f32 %v947, %v991
      %v1004 = vadd.f32 %v948, %v992
      %v1005 = vadd.f32 %v949, %v984
      %v1006 = vadd.f32 %v950, %v991
      %v1007 = vadd.f32 %v951, %v992
      %v1008 = vadd.f32 %v952, %v984
      %v1009 = vadd.f32 %v953, %v991
      %v1010 = vadd.f32 %v954, %v992
      %v1011 = vadd.f32 %v955, %v984
      %v1012 = vadd.f32 %v956, %v991
      %v1013 = vadd.f32 %v957, %v992
      %v1014 = vadd.f32 %v958, %v984
      %v1015 = vadd.f32 %v959, %v991
      %v1016 = vadd.f32 %v960, %v992
      %v1017 = vadd.f32 %v961, %v984
      %v1018 = vadd.f32 %v962, %v991
      %v1019 = vadd.f32 %v963, %v992
      %v1020 = vmax.f32 %v996, 0.0
      %v1021 = vmax.f32 %v997, 0.0
      %v1022 = vmax.f32 %v998, 0.0
      %v1023 = vmax.f32 %v999, 0.0
      %v1024 = vmax.f32 %v1000, 0.0
      %v1025 = vmax.f32 %v1001, 0.0
      %v1026 = vmax.f32 %v1002, 0.0
      %v1027 = vmax.f32 %v1003, 0.0
      %v1028 = vmax.f32 %v1004, 0.0
      %v1029 = vmax.f32 %v1005, 0.0
      %v1030 = vmax.f32 %v1006, 0.0
      %v1031 = vmax.f32 %v1007, 0.0
      %v1032 = vmax.f32 %v1008, 0.0
      %v1033 = vmax.f32 %v1009, 0.0
      %v1034 = vmax.f32 %v1010, 0.0
      %v1035 = vmax.f32 %v1011, 0.0
      %v1036 = vmax.f32 %v1012, 0.0
      %v1037 = vmax.f32 %v1013, 0.0
      %v1038 = vmax.f32 %v1014, 0.0
      %v1039 = vmax.f32 %v1015, 0.0
      %v1040 = vmax.f32 %v1016, 0.0
      %v1041 = vmax.f32 %v1017, 0.0
      %v1042 = vmax.f32 %v1018, 0.0
      %v1043 = vmax.f32 %v1019, 0.0
      %v1044 = vld [vmem:[%s7] sm:$0xff]
      %v1045 = vld [vmem:[%s7 + $0x8] sm:$0xff]
      %v1070 = vcombine.low %v1020, %v1021
      %v1071 = vcombine.low %v1022, %v1023
      %v1072 = vcombine.low %v1024, %v1025
      %v1073 = vcombine.low %v1026, %v1027
      %v1075 = vunpack.c.l.s4 1966171168
      %v1076 = vunpack.c.0.s8 %v1075
      %v1077 = vlaneseq
      %v1078 = vshrl.u32 %v1077, 7
      %v1079 = vsub.s32 %v1076, %v1078
      %v1080 = vrot.slane %v1070, %v1079
      %v1082 = vunpack.c.l.s4 1966171168
      %v1083 = vunpack.c.0.s8 %v1082
      %v1084 = vlaneseq
      %v1085 = vshrl.u32 %v1084, 7
      %v1086 = vsub.s32 %v1083, %v1085
      %v1087 = vrot.slane %v1071, %v1086
      %v1089 = vunpack.c.l.s4 1966171168
      %v1090 = vunpack.c.0.s8 %v1089
      %v1091 = vlaneseq
      %v1092 = vshrl.u32 %v1091, 7
      %v1093 = vsub.s32 %v1090, %v1092
      %v1094 = vrot.slane %v1072, %v1093
      %v1096 = vunpack.c.l.s4 1966171168
      %v1097 = vunpack.c.0.s8 %v1096
      %v1098 = vlaneseq
      %v1099 = vshrl.u32 %v1098, 7
      %v1100 = vsub.s32 %v1097, %v1099
      %v1101 = vrot.slane %v1073, %v1100
      %v1102 = vcombine.low %v1080, %v1087
      %v1103 = vcombine.low %v1094, %v1101
      %v1105 = vunpack.c.l.s4 1966171168
      %v1106 = vunpack.c.0.s8 %v1105
      %v1107 = vlaneseq
      %v1108 = vshrl.u32 %v1107, 7
      %v1109 = vsub.s32 %v1106, %v1108
      %v1110 = vrot.slane %v1102, %v1109
      %v1112 = vunpack.c.l.s4 1966171168
      %v1113 = vunpack.c.0.s8 %v1112
      %v1114 = vlaneseq
      %v1115 = vshrl.u32 %v1114, 7
      %v1116 = vsub.s32 %v1113, %v1115
      %v1117 = vrot.slane %v1103, %v1116
      %v1118 = vcombine.low %v1110, %v1117
      %v1119 = vcombine.low %v1028, %v1029
      %v1120 = vcombine.low %v1030, %v1031
      %v1121 = vcombine.low %v1032, %v1033
      %v1122 = vcombine.low %v1034, %v1035
      %v1124 = vunpack.c.l.s4 1966171168
      %v1125 = vunpack.c.0.s8 %v1124
      %v1126 = vlaneseq
      %v1127 = vshrl.u32 %v1126, 7
      %v1128 = vsub.s32 %v1125, %v1127
      %v1129 = vrot.slane %v1119, %v1128
      %v1131 = vunpack.c.l.s4 1966171168
      %v1132 = vunpack.c.0.s8 %v1131
      %v1133 = vlaneseq
      %v1134 = vshrl.u32 %v1133, 7
      %v1135 = vsub.s32 %v1132, %v1134
      %v1136 = vrot.slane %v1120, %v1135
      %v1138 = vunpack.c.l.s4 1966171168
      %v1139 = vunpack.c.0.s8 %v1138
      %v1140 = vlaneseq
      %v1141 = vshrl.u32 %v1140, 7
      %v1142 = vsub.s32 %v1139, %v1141
      %v1143 = vrot.slane %v1121, %v1142
      %v1145 = vunpack.c.l.s4 1966171168
      %v1146 = vunpack.c.0.s8 %v1145
      %v1147 = vlaneseq
      %v1148 = vshrl.u32 %v1147, 7
      %v1149 = vsub.s32 %v1146, %v1148
      %v1150 = vrot.slane %v1122, %v1149
      %v1151 = vcombine.low %v1129, %v1136
      %v1152 = vcombine.low %v1143, %v1150
      %v1154 = vunpack.c.l.s4 1966171168
      %v1155 = vunpack.c.0.s8 %v1154
      %v1156 = vlaneseq
      %v1157 = vshrl.u32 %v1156, 7
      %v1158 = vsub.s32 %v1155, %v1157
      %v1159 = vrot.slane %v1151, %v1158
      %v1161 = vunpack.c.l.s4 1966171168
      %v1162 = vunpack.c.0.s8 %v1161
      %v1163 = vlaneseq
      %v1164 = vshrl.u32 %v1163, 7
      %v1165 = vsub.s32 %v1162, %v1164
      %v1166 = vrot.slane %v1152, %v1165
      %v1167 = vcombine.low %v1159, %v1166
      %v1168 = vcombine.low %v1036, %v1037
      %v1169 = vcombine.low %v1038, %v1039
      %v1170 = vcombine.low %v1040, %v1041
      %v1171 = vcombine.low %v1042, %v1043
      %v1173 = vunpack.c.l.s4 1966171168
      %v1174 = vunpack.c.0.s8 %v1173
      %v1175 = vlaneseq
      %v1176 = vshrl.u32 %v1175, 7
      %v1177 = vsub.s32 %v1174, %v1176
      %v1178 = vrot.slane %v1168, %v1177
      %v1180 = vunpack.c.l.s4 1966171168
      %v1181 = vunpack.c.0.s8 %v1180
      %v1182 = vlaneseq
      %v1183 = vshrl.u32 %v1182, 7
      %v1184 = vsub.s32 %v1181, %v1183
      %v1185 = vrot.slane %v1169, %v1184
      %v1187 = vunpack.c.l.s4 1966171168
      %v1188 = vunpack.c.0.s8 %v1187
      %v1189 = vlaneseq
      %v1190 = vshrl.u32 %v1189, 7
      %v1191 = vsub.s32 %v1188, %v1190
      %v1192 = vrot.slane %v1170, %v1191
      %v1194 = vunpack.c.l.s4 1966171168
      %v1195 = vunpack.c.0.s8 %v1194
      %v1196 = vlaneseq
      %v1197 = vshrl.u32 %v1196, 7
      %v1198 = vsub.s32 %v1195, %v1197
      %v1199 = vrot.slane %v1171, %v1198
      %v1200 = vcombine.low %v1178, %v1185
      %v1201 = vcombine.low %v1192, %v1199
      %v1203 = vunpack.c.l.s4 1966171168
      %v1204 = vunpack.c.0.s8 %v1203
      %v1205 = vlaneseq
      %v1206 = vshrl.u32 %v1205, 7
      %v1207 = vsub.s32 %v1204, %v1206
      %v1208 = vrot.slane %v1200, %v1207
      %v1210 = vunpack.c.l.s4 1966171168
      %v1211 = vunpack.c.0.s8 %v1210
      %v1212 = vlaneseq
      %v1213 = vshrl.u32 %v1212, 7
      %v1214 = vsub.s32 %v1211, %v1213
      %v1215 = vrot.slane %v1201, %v1214
      %v1216 = vcombine.low %v1208, %v1215
      %v1217 = vsel %vm343, %v1118, 0
      %v1219 = vsel %vm343, %v1167, 0
      %v1221 = vsel %vm343, %v1216, 0
      %1223 = vmatprep.subr.mxu0 0.0
      %1224 = vmatpush1.msra.mxu0 %v1044
      %1225 = vmatprep.subr.mxu0 0.0
      %1226 = vmatpush1.msra.mxu0 %v1045
      %1227 = vmatprep.subr.mxu0 0.0
      %1228 = vmatpush1.msra.mxu0 0.0
      %1229 = vmatprep.subr.mxu0 0.0
      %1230 = vmatpush1.msra.mxu0 0.0
      %1231 = vmatprep.subr.mxu0 0.0
      %1232 = vmatpush1.msra.mxu0 0.0
      %1233 = vmatprep.subr.mxu0 0.0
      %1234 = vmatpush1.msra.mxu0 0.0
      %1235 = vmatprep.subr.mxu0 0.0
      %1236 = vmatpush1.msra.mxu0 0.0
      %1237 = vmatprep.subr.mxu0 0.0
      %1238 = vmatpush1.msra.mxu0 0.0
      %1239 = vmatprep.subr.mxu0 0.0
      %1240 = vmatpush1.msra.mxu0 0.0
      %1241 = vmatprep.subr.mxu0 0.0
      %1242 = vmatpush1.msra.mxu0 0.0
      %1243 = vmatprep.subr.mxu0 0.0
      %1244 = vmatpush1.msra.mxu0 0.0
      %1245 = vmatprep.subr.mxu0 0.0
      %1246 = vmatpush1.msra.mxu0 0.0
      %1247 = vmatprep.subr.mxu0 0.0
      %1248 = vmatpush1.msra.mxu0 0.0
      %1249 = vmatprep.subr.mxu0 0.0
      %1250 = vmatpush1.msra.mxu0 0.0
      %1251 = vmatprep.subr.mxu0 0.0
      %1252 = vmatpush1.msra.mxu0 0.0
      %1253 = vmatprep.subr.mxu0 0.0
      %1254 = vmatpush1.msra.mxu0 0.0
      %1255 = vmatprep.subr.mxu0 0.0
      %1256 = vmatpush1.msra.mxu0 0.0
      %1257 = vmatprep.subr.mxu0 0.0
      %1258 = vmatpush1.msra.mxu0 0.0
      %1259 = vmatprep.subr.mxu0 0.0
      %1260 = vmatpush1.msra.mxu0 0.0
      %1261 = vmatprep.subr.mxu0 0.0
      %1262 = vmatpush1.msra.mxu0 0.0
      %1263 = vmatprep.subr.mxu0 0.0
      %1264 = vmatpush1.msra.mxu0 0.0
      %1265 = vmatprep.subr.mxu0 0.0
      %1266 = vmatpush1.msra.mxu0 0.0
      %1267 = vmatprep.subr.mxu0 0.0
      %1268 = vmatpush1.msra.mxu0 0.0
      %1269 = vmatprep.subr.mxu0 0.0
      %1270 = vmatpush1.msra.mxu0 0.0
      %1271 = vmatprep.subr.mxu0 0.0
      %1272 = vmatpush1.msra.mxu0 0.0
      %1273 = vmatprep.subr.mxu0 0.0
      %1274 = vmatpush1.msra.mxu0 0.0
      %1275 = vmatprep.subr.mxu0 0.0
      %1276 = vmatpush1.msra.mxu0 0.0
      %1277 = vmatprep.subr.mxu0 0.0
      %1278 = vmatpush1.msra.mxu0 0.0
      %1279 = vmatprep.subr.mxu0 0.0
      %1280 = vmatpush1.msra.mxu0 0.0
      %1281 = vmatprep.subr.mxu0 0.0
      %1282 = vmatpush1.msra.mxu0 0.0
      %1283 = vmatprep.subr.mxu0 0.0
      %1284 = vmatpush1.msra.mxu0 0.0
      %1285 = vmatprep.subr.mxu0 0.0
      %1286 = vmatpush1.msra.mxu0 0.0
      %1287 = vmatprep.mubr.f32.mxu0 0.0
      %1288 = vmatmul.mubr.f32.gmra.mrb[0].mxu0 %v1217
      %v1289 = vpop.f32.mrb[0].mxu0
      %v1290 = vadd.f32 0.0, %v1289
      %v1291 = vpop.f32.mrb[0].mxu0
      %1292 = vmatprep.mubr.f32.mxu0 0.0
      %1293 = vmatmul.mubr.f32.gmra.mrb[0].mxu0 %v1219
      %v1294 = vpop.f32.mrb[0].mxu0
      %v1295 = vadd.f32 0.0, %v1294
      %v1296 = vpop.f32.mrb[0].mxu0
      %1297 = vmatprep.mubr.f32.mxu0 0.0
      %1298 = vmatmul.mubr.f32.gmra.mrb[0].mxu0 %v1221
      %v1299 = vpop.f32.mrb[0].mxu0
      %v1300 = vadd.f32 0.0, %v1299
      %v1301 = vpop.f32.mrb[0].mxu0
      %1302 = vdwg.mxu0
      %v1306 = vcombine.high %v1290, %v1290
      %v1308 = vunpack.c.l.s4 1966171168
      %v1309 = vunpack.c.0.s8 %v1308
      %v1310 = vlaneseq
      %v1311 = vshrl.u32 %v1310, 7
      %v1312 = vsub.s32 %v1309, %v1311
      %v1313 = vrot.slane %v1290, %v1312
      %v1315 = vunpack.c.l.s4 1966171168
      %v1316 = vunpack.c.0.s8 %v1315
      %v1317 = vlaneseq
      %v1318 = vshrl.u32 %v1317, 7
      %v1319 = vsub.s32 %v1316, %v1318
      %v1320 = vrot.slane %v1306, %v1319
      %v1321 = vcombine.high %v1313, %v1313
      %v1322 = vcombine.high %v1320, %v1320
      %v1324 = vunpack.c.l.s4 1966171168
      %v1325 = vunpack.c.0.s8 %v1324
      %v1326 = vlaneseq
      %v1327 = vshrl.u32 %v1326, 7
      %v1328 = vsub.s32 %v1325, %v1327
      %v1329 = vrot.slane %v1313, %v1328
      %v1331 = vunpack.c.l.s4 1966171168
      %v1332 = vunpack.c.0.s8 %v1331
      %v1333 = vlaneseq
      %v1334 = vshrl.u32 %v1333, 7
      %v1335 = vsub.s32 %v1332, %v1334
      %v1336 = vrot.slane %v1320, %v1335
      %v1338 = vunpack.c.l.s4 1966171168
      %v1339 = vunpack.c.0.s8 %v1338
      %v1340 = vlaneseq
      %v1341 = vshrl.u32 %v1340, 7
      %v1342 = vsub.s32 %v1339, %v1341
      %v1343 = vrot.slane %v1321, %v1342
      %v1345 = vunpack.c.l.s4 1966171168
      %v1346 = vunpack.c.0.s8 %v1345
      %v1347 = vlaneseq
      %v1348 = vshrl.u32 %v1347, 7
      %v1349 = vsub.s32 %v1346, %v1348
      %v1350 = vrot.slane %v1322, %v1349
      %v1351 = vcombine.high %v1329, %v1329
      %v1352 = vcombine.high %v1336, %v1336
      %v1353 = vcombine.high %v1343, %v1343
      %v1354 = vcombine.high %v1350, %v1350
      %v1355 = vcombine.high %v1295, %v1295
      %v1357 = vunpack.c.l.s4 1966171168
      %v1358 = vunpack.c.0.s8 %v1357
      %v1359 = vlaneseq
      %v1360 = vshrl.u32 %v1359, 7
      %v1361 = vsub.s32 %v1358, %v1360
      %v1362 = vrot.slane %v1295, %v1361
      %v1364 = vunpack.c.l.s4 1966171168
      %v1365 = vunpack.c.0.s8 %v1364
      %v1366 = vlaneseq
      %v1367 = vshrl.u32 %v1366, 7
      %v1368 = vsub.s32 %v1365, %v1367
      %v1369 = vrot.slane %v1355, %v1368
      %v1370 = vcombine.high %v1362, %v1362
      %v1371 = vcombine.high %v1369, %v1369
      %v1373 = vunpack.c.l.s4 1966171168
      %v1374 = vunpack.c.0.s8 %v1373
      %v1375 = vlaneseq
      %v1376 = vshrl.u32 %v1375, 7
      %v1377 = vsub.s32 %v1374, %v1376
      %v1378 = vrot.slane %v1362, %v1377
      %v1380 = vunpack.c.l.s4 1966171168
      %v1381 = vunpack.c.0.s8 %v1380
      %v1382 = vlaneseq
      %v1383 = vshrl.u32 %v1382, 7
      %v1384 = vsub.s32 %v1381, %v1383
      %v1385 = vrot.slane %v1369, %v1384
      %v1387 = vunpack.c.l.s4 1966171168
      %v1388 = vunpack.c.0.s8 %v1387
      %v1389 = vlaneseq
      %v1390 = vshrl.u32 %v1389, 7
      %v1391 = vsub.s32 %v1388, %v1390
      %v1392 = vrot.slane %v1370, %v1391
      %v1394 = vunpack.c.l.s4 1966171168
      %v1395 = vunpack.c.0.s8 %v1394
      %v1396 = vlaneseq
      %v1397 = vshrl.u32 %v1396, 7
      %v1398 = vsub.s32 %v1395, %v1397
      %v1399 = vrot.slane %v1371, %v1398
      %v1400 = vcombine.high %v1378, %v1378
      %v1401 = vcombine.high %v1385, %v1385
      %v1402 = vcombine.high %v1392, %v1392
      %v1403 = vcombine.high %v1399, %v1399
      %v1404 = vcombine.high %v1300, %v1300
      %v1406 = vunpack.c.l.s4 1966171168
      %v1407 = vunpack.c.0.s8 %v1406
      %v1408 = vlaneseq
      %v1409 = vshrl.u32 %v1408, 7
      %v1410 = vsub.s32 %v1407, %v1409
      %v1411 = vrot.slane %v1300, %v1410
      %v1413 = vunpack.c.l.s4 1966171168
      %v1414 = vunpack.c.0.s8 %v1413
      %v1415 = vlaneseq
      %v1416 = vshrl.u32 %v1415, 7
      %v1417 = vsub.s32 %v1414, %v1416
      %v1418 = vrot.slane %v1404, %v1417
      %v1419 = vcombine.high %v1411, %v1411
      %v1420 = vcombine.high %v1418, %v1418
      %v1422 = vunpack.c.l.s4 1966171168
      %v1423 = vunpack.c.0.s8 %v1422
      %v1424 = vlaneseq
      %v1425 = vshrl.u32 %v1424, 7
      %v1426 = vsub.s32 %v1423, %v1425
      %v1427 = vrot.slane %v1411, %v1426
      %v1429 = vunpack.c.l.s4 1966171168
      %v1430 = vunpack.c.0.s8 %v1429
      %v1431 = vlaneseq
      %v1432 = vshrl.u32 %v1431, 7
      %v1433 = vsub.s32 %v1430, %v1432
      %v1434 = vrot.slane %v1418, %v1433
      %v1436 = vunpack.c.l.s4 1966171168
      %v1437 = vunpack.c.0.s8 %v1436
      %v1438 = vlaneseq
      %v1439 = vshrl.u32 %v1438, 7
      %v1440 = vsub.s32 %v1437, %v1439
      %v1441 = vrot.slane %v1419, %v1440
      %v1443 = vunpack.c.l.s4 1966171168
      %v1444 = vunpack.c.0.s8 %v1443
      %v1445 = vlaneseq
      %v1446 = vshrl.u32 %v1445, 7
      %v1447 = vsub.s32 %v1444, %v1446
      %v1448 = vrot.slane %v1420, %v1447
      %v1449 = vcombine.high %v1427, %v1427
      %v1450 = vcombine.high %v1434, %v1434
      %v1451 = vcombine.high %v1441, %v1441
      %v1452 = vcombine.high %v1448, %v1448
      %v1453 = vcombine.low %v1329, %v1343
      %v1455 = vunpack.c.l.s4 1966171168
      %v1456 = vunpack.c.0.s8 %v1455
      %v1457 = vlaneseq
      %v1458 = vshrl.u32 %v1457, 7
      %v1459 = vsub.s32 %v1456, %v1458
      %v1460 = vrot.slane %v1453, %v1459
      %v1462 = vunpack.c.l.s4 1966171168
      %v1463 = vunpack.c.0.s8 %v1462
      %v1464 = vlaneseq
      %v1465 = vshrl.u32 %v1464, 7
      %v1466 = vsub.s32 %v1463, %v1465
      %v1467 = vrot.slane %v1351, %v1466
      %v1468 = vcombine.low %v1460, %v1467
      %v1470 = vunpack.c.l.s4 1966171168
      %v1471 = vunpack.c.0.s8 %v1470
      %v1472 = vlaneseq
      %v1473 = vshrl.u32 %v1472, 7
      %v1474 = vsub.s32 %v1471, %v1473
      %v1475 = vrot.slane %v1468, %v1474
      %v1476 = vcombine.low %v1353, %v1336
      %v1478 = vunpack.c.l.s4 1966171168
      %v1479 = vunpack.c.0.s8 %v1478
      %v1480 = vlaneseq
      %v1481 = vshrl.u32 %v1480, 7
      %v1482 = vsub.s32 %v1479, %v1481
      %v1483 = vrot.slane %v1476, %v1482
      %v1485 = vunpack.c.l.s4 1966171168
      %v1486 = vunpack.c.0.s8 %v1485
      %v1487 = vlaneseq
      %v1488 = vshrl.u32 %v1487, 7
      %v1489 = vsub.s32 %v1486, %v1488
      %v1490 = vrot.slane %v1350, %v1489
      %v1491 = vcombine.low %v1483, %v1490
      %v1493 = vunpack.c.l.s4 1966171168
      %v1494 = vunpack.c.0.s8 %v1493
      %v1495 = vlaneseq
      %v1496 = vshrl.u32 %v1495, 7
      %v1497 = vsub.s32 %v1494, %v1496
      %v1498 = vrot.slane %v1491, %v1497
      %v1499 = vcombine.low %v1352, %v1354
      %v1501 = vunpack.c.l.s4 1966171168
      %v1502 = vunpack.c.0.s8 %v1501
      %v1503 = vlaneseq
      %v1504 = vshrl.u32 %v1503, 7
      %v1505 = vsub.s32 %v1502, %v1504
      %v1506 = vrot.slane %v1499, %v1505
      %v1508 = vunpack.c.l.s4 1966171168
      %v1509 = vunpack.c.0.s8 %v1508
      %v1510 = vlaneseq
      %v1511 = vshrl.u32 %v1510, 7
      %v1512 = vsub.s32 %v1509, %v1511
      %v1513 = vrot.slane %v1378, %v1512
      %v1514 = vcombine.low %v1506, %v1513
      %v1516 = vunpack.c.l.s4 1966171168
      %v1517 = vunpack.c.0.s8 %v1516
      %v1518 = vlaneseq
      %v1519 = vshrl.u32 %v1518, 7
      %v1520 = vsub.s32 %v1517, %v1519
      %v1521 = vrot.slane %v1514, %v1520
      %v1522 = vcombine.low %v1392, %v1400
      %v1524 = vunpack.c.l.s4 1966171168
      %v1525 = vunpack.c.0.s8 %v1524
      %v1526 = vlaneseq
      %v1527 = vshrl.u32 %v1526, 7
      %v1528 = vsub.s32 %v1525, %v1527
      %v1529 = vrot.slane %v1522, %v1528
      %v1531 = vunpack.c.l.s4 1966171168
      %v1532 = vunpack.c.0.s8 %v1531
      %v1533 = vlaneseq
      %v1534 = vshrl.u32 %v1533, 7
      %v1535 = vsub.s32 %v1532, %v1534
      %v1536 = vrot.slane %v1402, %v1535
      %v1537 = vcombine.low %v1529, %v1536
      %v1539 = vunpack.c.l.s4 1966171168
      %v1540 = vunpack.c.0.s8 %v1539
      %v1541 = vlaneseq
      %v1542 = vshrl.u32 %v1541, 7
      %v1543 = vsub.s32 %v1540, %v1542
      %v1544 = vrot.slane %v1537, %v1543
      %v1545 = vcombine.low %v1385, %v1399
      %v1547 = vunpack.c.l.s4 1966171168
      %v1548 = vunpack.c.0.s8 %v1547
      %v1549 = vlaneseq
      %v1550 = vshrl.u32 %v1549, 7
      %v1551 = vsub.s32 %v1548, %v1550
      %v1552 = vrot.slane %v1545, %v1551
      %v1554 = vunpack.c.l.s4 1966171168
      %v1555 = vunpack.c.0.s8 %v1554
      %v1556 = vlaneseq
      %v1557 = vshrl.u32 %v1556, 7
      %v1558 = vsub.s32 %v1555, %v1557
      %v1559 = vrot.slane %v1401, %v1558
      %v1560 = vcombine.low %v1552, %v1559
      %v1562 = vunpack.c.l.s4 1966171168
      %v1563 = vunpack.c.0.s8 %v1562
      %v1564 = vlaneseq
      %v1565 = vshrl.u32 %v1564, 7
      %v1566 = vsub.s32 %v1563, %v1565
      %v1567 = vrot.slane %v1560, %v1566
      %v1568 = vcombine.low %v1403, %v1427
      %v1570 = vunpack.c.l.s4 1966171168
      %v1571 = vunpack.c.0.s8 %v1570
      %v1572 = vlaneseq
      %v1573 = vshrl.u32 %v1572, 7
      %v1574 = vsub.s32 %v1571, %v1573
      %v1575 = vrot.slane %v1568, %v1574
      %v1577 = vunpack.c.l.s4 1966171168
      %v1578 = vunpack.c.0.s8 %v1577
      %v1579 = vlaneseq
      %v1580 = vshrl.u32 %v1579, 7
      %v1581 = vsub.s32 %v1578, %v1580
      %v1582 = vrot.slane %v1441, %v1581
      %v1583 = vcombine.low %v1575, %v1582
      %v1585 = vunpack.c.l.s4 1966171168
      %v1586 = vunpack.c.0.s8 %v1585
      %v1587 = vlaneseq
      %v1588 = vshrl.u32 %v1587, 7
      %v1589 = vsub.s32 %v1586, %v1588
      %v1590 = vrot.slane %v1583, %v1589
      %v1591 = vcombine.low %v1449, %v1451
      %v1593 = vunpack.c.l.s4 1966171168
      %v1594 = vunpack.c.0.s8 %v1593
      %v1595 = vlaneseq
      %v1596 = vshrl.u32 %v1595, 7
      %v1597 = vsub.s32 %v1594, %v1596
      %v1598 = vrot.slane %v1591, %v1597
      %v1600 = vunpack.c.l.s4 1966171168
      %v1601 = vunpack.c.0.s8 %v1600
      %v1602 = vlaneseq
      %v1603 = vshrl.u32 %v1602, 7
      %v1604 = vsub.s32 %v1601, %v1603
      %v1605 = vrot.slane %v1434, %v1604
      %v1606 = vcombine.low %v1598, %v1605
      %v1608 = vunpack.c.l.s4 1966171168
      %v1609 = vunpack.c.0.s8 %v1608
      %v1610 = vlaneseq
      %v1611 = vshrl.u32 %v1610, 7
      %v1612 = vsub.s32 %v1609, %v1611
      %v1613 = vrot.slane %v1606, %v1612
      %v1614 = vcombine.low %v1448, %v1450
      %v1616 = vunpack.c.l.s4 1966171168
      %v1617 = vunpack.c.0.s8 %v1616
      %v1618 = vlaneseq
      %v1619 = vshrl.u32 %v1618, 7
      %v1620 = vsub.s32 %v1617, %v1619
      %v1621 = vrot.slane %v1614, %v1620
      %v1623 = vunpack.c.l.s4 1966171168
      %v1624 = vunpack.c.0.s8 %v1623
      %v1625 = vlaneseq
      %v1626 = vshrl.u32 %v1625, 7
      %v1627 = vsub.s32 %v1624, %v1626
      %v1628 = vrot.slane %v1452, %v1627
      %v1629 = vcombine.low %v1621, %v1628
      %v1631 = vunpack.c.l.s4 1966171168
      %v1632 = vunpack.c.0.s8 %v1631
      %v1633 = vlaneseq
      %v1634 = vshrl.u32 %v1633, 7
      %v1635 = vsub.s32 %v1632, %v1634
      %v1636 = vrot.slane %v1629, %v1635
      %vm1645 = vcmask 124928
      %v1646 = vsel %vm1645, %v1475, -inf
      %v1647 = vrot.slane %v1646, 4
      %v1648 = vmax.f32 %v1646, %v1647
      %v1649 = vrot.slane %v1648, 2
      %v1650 = vmax.f32 %v1648, %v1649
      %v1651 = vrot.slane %v1650, 1
      %v1652 = vmax.f32 %v1650, %v1651
      %v1653 = vsel %vm1645, %v1498, -inf
      %v1654 = vrot.slane %v1653, 4
      %v1655 = vmax.f32 %v1653, %v1654
      %v1656 = vrot.slane %v1655, 2
      %v1657 = vmax.f32 %v1655, %v1656
      %v1658 = vrot.slane %v1657, 1
      %v1659 = vmax.f32 %v1657, %v1658
      %v1660 = vsel %vm1645, %v1521, -inf
      %v1661 = vrot.slane %v1660, 4
      %v1662 = vmax.f32 %v1660, %v1661
      %v1663 = vrot.slane %v1662, 2
      %v1664 = vmax.f32 %v1662, %v1663
      %v1665 = vrot.slane %v1664, 1
      %v1666 = vmax.f32 %v1664, %v1665
      %v1667 = vsel %vm1645, %v1544, -inf
      %v1668 = vrot.slane %v1667, 4
      %v1669 = vmax.f32 %v1667, %v1668
      %v1670 = vrot.slane %v1669, 2
      %v1671 = vmax.f32 %v1669, %v1670
      %v1672 = vrot.slane %v1671, 1
      %v1673 = vmax.f32 %v1671, %v1672
      %v1674 = vsel %vm1645, %v1567, -inf
      %v1675 = vrot.slane %v1674, 4
      %v1676 = vmax.f32 %v1674, %v1675
      %v1677 = vrot.slane %v1676, 2
      %v1678 = vmax.f32 %v1676, %v1677
      %v1679 = vrot.slane %v1678, 1
      %v1680 = vmax.f32 %v1678, %v1679
      %v1681 = vsel %vm1645, %v1590, -inf
      %v1682 = vrot.slane %v1681, 4
      %v1683 = vmax.f32 %v1681, %v1682
      %v1684 = vrot.slane %v1683, 2
      %v1685 = vmax.f32 %v1683, %v1684
      %v1686 = vrot.slane %v1685, 1
      %v1687 = vmax.f32 %v1685, %v1686
      %v1688 = vsel %vm1645, %v1613, -inf
      %v1689 = vrot.slane %v1688, 4
      %v1690 = vmax.f32 %v1688, %v1689
      %v1691 = vrot.slane %v1690, 2
      %v1692 = vmax.f32 %v1690, %v1691
      %v1693 = vrot.slane %v1692, 1
      %v1694 = vmax.f32 %v1692, %v1693
      %v1695 = vsel %vm1645, %v1636, -inf
      %v1696 = vrot.slane %v1695, 4
      %v1697 = vmax.f32 %v1695, %v1696
      %v1698 = vrot.slane %v1697, 2
      %v1699 = vmax.f32 %v1697, %v1698
      %v1700 = vrot.slane %v1699, 1
      %v1701 = vmax.f32 %v1699, %v1700
      %v1703 = vrot.slane %v414, 1
      %v1704 = vrot.slane %v414, 2
      %v1705 = vrot.slane %v414, 3
      %v1706 = vrot.slane %v414, 4
      %v1707 = vrot.slane %v414, 5
      %v1708 = vrot.slane %v414, 6
      %v1709 = vrot.slane %v414, 7
      %v1718 = vadd.f32 %v1652, %v414
      %v1719 = vadd.f32 %v1659, %v1703
      %v1720 = vadd.f32 %v1666, %v1704
      %v1721 = vadd.f32 %v1673, %v1705
      %v1722 = vadd.f32 %v1680, %v1706
      %v1723 = vadd.f32 %v1687, %v1707
      %v1724 = vadd.f32 %v1694, %v1708
      %v1725 = vadd.f32 %v1701, %v1709
      %v1734 = vrot.slane %v1719, 7
      %vm1735 = vcmask 1041409
      %v1736 = vsel %vm1735, %v1734, %v1718
      %v1737 = vrot.slane %v1720, 6
      %vm1738 = vcmask 1042434
      %v1739 = vsel %vm1738, %v1737, %v1736
      %v1740 = vrot.slane %v1721, 5
      %vm1741 = vcmask 1043459
      %v1742 = vsel %vm1741, %v1740, %v1739
      %v1743 = vrot.slane %v1722, 4
      %vm1744 = vcmask 1044484
      %v1745 = vsel %vm1744, %v1743, %v1742
      %v1746 = vrot.slane %v1723, 3
      %vm1747 = vcmask 1045509
      %v1748 = vsel %vm1747, %v1746, %v1745
      %v1749 = vrot.slane %v1724, 2
      %vm1750 = vcmask 1046534
      %v1751 = vsel %vm1750, %v1749, %v1748
      %v1752 = vrot.slane %v1725, 1
      %vm1753 = vcmask 1047559
      %v1754 = vsel %vm1753, %v1752, %v1751
      %1756 = vst.msk [vmem:[%s322] sm:$0xff] %vm343, %v1754
      %p1757 = scmp.lt.s32.totalorder %s19, 1
      %s1758 = scalar_select %p1757, %s19, 1
      %s1759 = smul.addr %s1758, 8
      %s1760 = scalar_lea.vmem %s8, %s1759
      // Predicated region
      $region53: #{maas_forward.15} parent=51 // pred_check
        %p1761 = pneg %p215
      $region54: #{maas_forward.15} parent=51 // pred_check_branch
        %1763 = sbr.rel (%p1761) target = $region56
      $region55: #{maas_forward.15} parent=51 // pred_region
        _
      $region56: #{maas_forward.15} parent=51 // pred_fallthru
        _
    $region52: #{maas_forward.15} parent=5 // pred_fallthru
      _
    %p1764 = scmp.le.s32.totalorder 2, %s14
    // Predicated region
    $region57: #{maas_forward.15} parent=5 // pred_check
      %p1765 = pneg %p1764
    $region58: #{maas_forward.15} parent=5 // pred_check_branch
      %1767 = sbr.rel (%p1765) target = $region60
    $region59: #{maas_forward.15} parent=5 // pred_region
      %s1768 = ssub.s32 %s14, 2
      // Predicated region
      $region61: #{maas_forward.15} parent=59 // pred_check
        %p1769 = pneg %p221
      $region62: #{maas_forward.15} parent=59 // pred_check_branch
        %1771 = sbr.rel (%p1769) target = $region64
      $region63: #{maas_forward.15} parent=59 // pred_region
        %p1772 = scmp.lt.s32.totalorder %s20, 1
        %s1773 = scalar_select %p1772, %s20, 1
        %s1774 = smul.addr %s1773, 8
        %s1775 = scalar_lea.vmem %s8, %s1774
      $region64: #{maas_forward.15} parent=59 // pred_fallthru
        _
    $region60: #{maas_forward.15} parent=5 // pred_fallthru
      _
  $region6: #{maas_forward.15} parent=0 // loop_footer
    %s18 = sadd.s32 1, %s14
  $region7: #{maas_forward.15} parent=0 // loop_footer_branch
    %13 = sbr.rel target = $region3
  $region8: #{maas_forward.15} parent=0 // loop_exit
    _

// kernel: maas_forward.22
$region0: #{maas_forward.22}
  #allocation0 [shape = 'u32[]', space=smem, size = 0x4, offset = 0x4, fixed_abs, tag = 'smem constant byte address 0x4 - core index']
  #allocation1 [shape = 'u32[144,128]{1,0:T(1,128)}', space=vmem, size = 0x12000, scoped, tag = 'internal scratch']
  %s0 = inlined_call_operand.vmem [shape: f32[16,16], index: 0, kind: input, shape index: {}, may-alias: {0,2}]
  %s1 = inlined_call_operand.vmem [shape: f32[16,16], index: 1, kind: input, shape index: {}]
  %s2 = inlined_call_operand.vmem [shape: f32[16,16], index: 2, kind: input, shape index: {}, may-alias: {0,2}]
  %s3 = inlined_call_operand.vmem [shape: f32[16,16], index: 3, kind: input, shape index: {}]
  %s4 = inlined_call_operand.vmem [shape: f32[1,16], index: 4, kind: input, shape index: {}]
  %s5 = inlined_call_operand.vmem [shape: f32[1,16], index: 5, kind: input, shape index: {}]
  %s6 = inlined_call_operand.vmem [shape: f32[1,16], index: 6, kind: input, shape index: {}]
  %s7 = inlined_call_operand.vmem [shape: f32[1,16], index: 7, kind: input, shape index: {}]
  %s8 = inlined_call_operand.vmem [shape: f32[16,16], index: 8, kind: input, shape index: {}]
  %s9 = inlined_call_operand.vmem [shape: f32[16,16], index: 9, kind: input, shape index: {}]
  %s10 = inlined_call_operand.vmem [shape: f32[16,32], index: 10, kind: output, shape index: {}]
  %s11 = sld [smem:[#allocation0]]
  $region73: #{maas_forward.22} parent=0
    _
  %s13 = ssub.s32 1, %s11
  %s14 = scalar_select 0, %s13, %s11
  loop: start=0, step=1, limit=4
  $region2: #{maas_forward.22} parent=0 // loop_pre_header
    _
  $region3: #{maas_forward.22} parent=0 // loop_header
    %s16 = sphi 0, %s20
    %p17 = scmp.ge.s32.totalorder %s16, 4
    %s26 = sphi 0, %s28
    %s29 = sphi 0, %s26
    %s30 = sphi 0, %s29
    %s46 = sphi 0, %s30
    %s52 = sphi 0, %s54
    %s55 = sphi 0, %s52
    %s56 = sphi 0, %s55
    %s72 = sphi 0, %s56
    %s76 = sphi 0, %s76
    %s78 = sphi 0, %s76
    %s79 = sphi 0, %s78
    %s93 = sphi 0, %s79
    %s99 = sphi 0, %s101
    %s102 = sphi 0, %s99
    %s103 = sphi 0, %s102
    %s119 = sphi 0, %s103
    %s123 = sphi 0, %s123
    %s125 = sphi 0, %s123
    %s126 = sphi 0, %s125
    %s140 = sphi 0, %s126
    %s144 = sphi 0, %s144
    %s146 = sphi 0, %s144
    %s147 = sphi 0, %s146
    %s161 = sphi 0, %s147
    %s165 = sphi 0, %s165
    %s167 = sphi 0, %s165
    %s168 = sphi 0, %s167
    %s182 = sphi 0, %s168
    %s186 = sphi 0, %s186
    %s188 = sphi 0, %s186
    %s189 = sphi 0, %s188
    %s203 = sphi 0, %s189
    %s207 = sphi 0, %s207
    %s209 = sphi 0, %s207
    %s210 = sphi 0, %s209
    %s224 = sphi 0, %s210
    %s228 = sphi 0, %s228
    %s230 = sphi 0, %s228
    %s231 = sphi 0, %s230
    %s245 = sphi 0, %s231
    %s251 = sphi 0, %s253
    %s254 = sphi 0, %s251
    %s255 = sphi 0, %s254
    %s271 = sphi 0, %s255
  $region4: #{maas_forward.22} parent=0 // loop_header_branch
    %19 = sbr.rel (%p17) target = $region8
  $region5: #{maas_forward.22} parent=0 // loop_body
    %s21 = ssub.s32 %s16, 1
    %s22 = ssub.s32 %s16, 2
    %s23 = sadd.s32 %s16, 1
    %s24 = ssub.s32 %s16, %s23
    %p25 = scmp.eq.s32.totalorder %s24, 0
    %s27 = sadd.s32 %s26, 1
    %s28 = scalar_select %p25, %s26, %s27
    %p31 = pneg %p25
    %p32 = scmp.eq.s32.totalorder %s16, 1
    %p33 = por %p31, %p32
    %p34 = scmp.ne.s32.totalorder %s26, %s29
    %p35 = scmp.eq.s32.totalorder %s16, 0
    %p36 = por %p34, %p35
    %p37 = scmp.ne.s32.totalorder %s26, %s29
    %p38 = scmp.eq.s32.totalorder %s21, 1
    %p39 = por %p37, %p38
    %p40 = scmp.ne.s32.totalorder %s29, %s30
    %p41 = scmp.eq.s32.totalorder %s21, 0
    %p42 = por %p40, %p41
    %p43 = scmp.ne.s32.totalorder %s29, %s30
    %p44 = scmp.eq.s32.totalorder %s22, 1
    %p45 = por %p43, %p44
    %p47 = scmp.ne.s32.totalorder %s30, %s46
    %p48 = scmp.eq.s32.totalorder %s22, 0
    %p49 = por %p47, %p48
    %s50 = ssub.s32 %s16, %s23
    %p51 = scmp.eq.s32.totalorder %s50, 0
    %s53 = sadd.s32 %s52, 1
    %s54 = scalar_select %p51, %s52, %s53
    %p57 = pneg %p51
    %p58 = scmp.eq.s32.totalorder %s16, 1
    %p59 = por %p57, %p58
    %p60 = scmp.ne.s32.totalorder %s52, %s55
    %p61 = scmp.eq.s32.totalorder %s16, 0
    %p62 = por %p60, %p61
    %p63 = scmp.ne.s32.totalorder %s52, %s55
    %p64 = scmp.eq.s32.totalorder %s21, 1
    %p65 = por %p63, %p64
    %p66 = scmp.ne.s32.totalorder %s55, %s56
    %p67 = scmp.eq.s32.totalorder %s21, 0
    %p68 = por %p66, %p67
    %p69 = scmp.ne.s32.totalorder %s55, %s56
    %p70 = scmp.eq.s32.totalorder %s22, 1
    %p71 = por %p69, %p70
    %p73 = scmp.ne.s32.totalorder %s56, %s72
    %p74 = scmp.eq.s32.totalorder %s22, 0
    %p75 = por %p73, %p74
    %s77 = sadd.s32 %s76, 1
    %p80 = scmp.eq.s32.totalorder %s16, 1
    %p81 = scmp.ne.s32.totalorder %s76, %s78
    %p82 = scmp.eq.s32.totalorder %s16, 0
    %p83 = por %p81, %p82
    %p84 = scmp.ne.s32.totalorder %s76, %s78
    %p85 = scmp.eq.s32.totalorder %s21, 1
    %p86 = por %p84, %p85
    %p87 = scmp.ne.s32.totalorder %s78, %s79
    %p88 = scmp.eq.s32.totalorder %s21, 0
    %p89 = por %p87, %p88
    %p90 = scmp.ne.s32.totalorder %s78, %s79
    %p91 = scmp.eq.s32.totalorder %s22, 1
    %p92 = por %p90, %p91
    %p94 = scmp.ne.s32.totalorder %s79, %s93
    %p95 = scmp.eq.s32.totalorder %s22, 0
    %p96 = por %p94, %p95
    %s97 = ssub.s32 %s16, %s23
    %p98 = scmp.eq.s32.totalorder %s97, 0
    %s100 = sadd.s32 %s99, 1
    %s101 = scalar_select %p98, %s99, %s100
    %p104 = pneg %p98
    %p105 = scmp.eq.s32.totalorder %s16, 1
    %p106 = por %p104, %p105
    %p107 = scmp.ne.s32.totalorder %s99, %s102
    %p108 = scmp.eq.s32.totalorder %s16, 0
    %p109 = por %p107, %p108
    %p110 = scmp.ne.s32.totalorder %s99, %s102
    %p111 = scmp.eq.s32.totalorder %s21, 1
    %p112 = por %p110, %p111
    %p113 = scmp.ne.s32.totalorder %s102, %s103
    %p114 = scmp.eq.s32.totalorder %s21, 0
    %p115 = por %p113, %p114
    %p116 = scmp.ne.s32.totalorder %s102, %s103
    %p117 = scmp.eq.s32.totalorder %s22, 1
    %p118 = por %p116, %p117
    %p120 = scmp.ne.s32.totalorder %s103, %s119
    %p121 = scmp.eq.s32.totalorder %s22, 0
    %p122 = por %p120, %p121
    %s124 = sadd.s32 %s123, 1
    %p127 = scmp.eq.s32.totalorder %s16, 1
    %p128 = scmp.ne.s32.totalorder %s123, %s125
    %p129 = scmp.eq.s32.totalorder %s16, 0
    %p130 = por %p128, %p129
    %p131 = scmp.ne.s32.totalorder %s123, %s125
    %p132 = scmp.eq.s32.totalorder %s21, 1
    %p133 = por %p131, %p132
    %p134 = scmp.ne.s32.totalorder %s125, %s126
    %p135 = scmp.eq.s32.totalorder %s21, 0
    %p136 = por %p134, %p135
    %p137 = scmp.ne.s32.totalorder %s125, %s126
    %p138 = scmp.eq.s32.totalorder %s22, 1
    %p139 = por %p137, %p138
    %p141 = scmp.ne.s32.totalorder %s126, %s140
    %p142 = scmp.eq.s32.totalorder %s22, 0
    %p143 = por %p141, %p142
    %s145 = sadd.s32 %s144, 1
    %p148 = scmp.eq.s32.totalorder %s16, 1
    %p149 = scmp.ne.s32.totalorder %s144, %s146
    %p150 = scmp.eq.s32.totalorder %s16, 0
    %p151 = por %p149, %p150
    %p152 = scmp.ne.s32.totalorder %s144, %s146
    %p153 = scmp.eq.s32.totalorder %s21, 1
    %p154 = por %p152, %p153
    %p155 = scmp.ne.s32.totalorder %s146, %s147
    %p156 = scmp.eq.s32.totalorder %s21, 0
    %p157 = por %p155, %p156
    %p158 = scmp.ne.s32.totalorder %s146, %s147
    %p159 = scmp.eq.s32.totalorder %s22, 1
    %p160 = por %p158, %p159
    %p162 = scmp.ne.s32.totalorder %s147, %s161
    %p163 = scmp.eq.s32.totalorder %s22, 0
    %p164 = por %p162, %p163
    %s166 = sadd.s32 %s165, 1
    %p169 = scmp.eq.s32.totalorder %s16, 1
    %p170 = scmp.ne.s32.totalorder %s165, %s167
    %p171 = scmp.eq.s32.totalorder %s16, 0
    %p172 = por %p170, %p171
    %p173 = scmp.ne.s32.totalorder %s165, %s167
    %p174 = scmp.eq.s32.totalorder %s21, 1
    %p175 = por %p173, %p174
    %p176 = scmp.ne.s32.totalorder %s167, %s168
    %p177 = scmp.eq.s32.totalorder %s21, 0
    %p178 = por %p176, %p177
    %p179 = scmp.ne.s32.totalorder %s167, %s168
    %p180 = scmp.eq.s32.totalorder %s22, 1
    %p181 = por %p179, %p180
    %p183 = scmp.ne.s32.totalorder %s168, %s182
    %p184 = scmp.eq.s32.totalorder %s22, 0
    %p185 = por %p183, %p184
    %s187 = sadd.s32 %s186, 1
    %p190 = scmp.eq.s32.totalorder %s16, 1
    %p191 = scmp.ne.s32.totalorder %s186, %s188
    %p192 = scmp.eq.s32.totalorder %s16, 0
    %p193 = por %p191, %p192
    %p194 = scmp.ne.s32.totalorder %s186, %s188
    %p195 = scmp.eq.s32.totalorder %s21, 1
    %p196 = por %p194, %p195
    %p197 = scmp.ne.s32.totalorder %s188, %s189
    %p198 = scmp.eq.s32.totalorder %s21, 0
    %p199 = por %p197, %p198
    %p200 = scmp.ne.s32.totalorder %s188, %s189
    %p201 = scmp.eq.s32.totalorder %s22, 1
    %p202 = por %p200, %p201
    %p204 = scmp.ne.s32.totalorder %s189, %s203
    %p205 = scmp.eq.s32.totalorder %s22, 0
    %p206 = por %p204, %p205
    %s208 = sadd.s32 %s207, 1
    %p211 = scmp.eq.s32.totalorder %s16, 1
    %p212 = scmp.ne.s32.totalorder %s207, %s209
    %p213 = scmp.eq.s32.totalorder %s16, 0
    %p214 = por %p212, %p213
    %p215 = scmp.ne.s32.totalorder %s207, %s209
    %p216 = scmp.eq.s32.totalorder %s21, 1
    %p217 = por %p215, %p216
    %p218 = scmp.ne.s32.totalorder %s209, %s210
    %p219 = scmp.eq.s32.totalorder %s21, 0
    %p220 = por %p218, %p219
    %p221 = scmp.ne.s32.totalorder %s209, %s210
    %p222 = scmp.eq.s32.totalorder %s22, 1
    %p223 = por %p221, %p222
    %p225 = scmp.ne.s32.totalorder %s210, %s224
    %p226 = scmp.eq.s32.totalorder %s22, 0
    %p227 = por %p225, %p226
    %s229 = sadd.s32 %s228, 1
    %p232 = scmp.eq.s32.totalorder %s16, 1
    %p233 = scmp.ne.s32.totalorder %s228, %s230
    %p234 = scmp.eq.s32.totalorder %s16, 0
    %p235 = por %p233, %p234
    %p236 = scmp.ne.s32.totalorder %s228, %s230
    %p237 = scmp.eq.s32.totalorder %s21, 1
    %p238 = por %p236, %p237
    %p239 = scmp.ne.s32.totalorder %s230, %s231
    %p240 = scmp.eq.s32.totalorder %s21, 0
    %p241 = por %p239, %p240
    %p242 = scmp.ne.s32.totalorder %s230, %s231
    %p243 = scmp.eq.s32.totalorder %s22, 1
    %p244 = por %p242, %p243
    %p246 = scmp.ne.s32.totalorder %s231, %s245
    %p247 = scmp.eq.s32.totalorder %s22, 0
    %p248 = por %p246, %p247
    %s249 = ssub.s32 %s16, %s23
    %p250 = scmp.eq.s32.totalorder %s249, 0
    %s252 = sadd.s32 %s251, 1
    %s253 = scalar_select %p250, %s251, %s252
    %p256 = pneg %p250
    %p257 = scmp.eq.s32.totalorder %s16, 1
    %p258 = por %p256, %p257
    %p259 = scmp.ne.s32.totalorder %s251, %s254
    %p260 = scmp.eq.s32.totalorder %s16, 0
    %p261 = por %p259, %p260
    %p262 = scmp.ne.s32.totalorder %s251, %s254
    %p263 = scmp.eq.s32.totalorder %s21, 1
    %p264 = por %p262, %p263
    %p265 = scmp.ne.s32.totalorder %s254, %s255
    %p266 = scmp.eq.s32.totalorder %s21, 0
    %p267 = por %p265, %p266
    %p268 = scmp.ne.s32.totalorder %s254, %s255
    %p269 = scmp.eq.s32.totalorder %s22, 1
    %p270 = por %p268, %p269
    %p272 = scmp.ne.s32.totalorder %s255, %s271
    %p273 = scmp.eq.s32.totalorder %s22, 0
    %p274 = por %p272, %p273
    %p275 = scmp.le.s32.totalorder 1, %s16
    %p276 = scmp.lt.s32.totalorder %s16, 3
    %p277 = pnand %p275, %p276
    %p278 = pneg %p277
    // Predicated region
    $region9: #{maas_forward.22} parent=5 // pred_check
      _
    $region10: #{maas_forward.22} parent=5 // pred_check_branch
      %280 = sbr.rel (%p277) target = $region12
    $region11: #{maas_forward.22} parent=5 // pred_region
      %s281 = ssub.s32 %s16, 1
      // Predicated region
      $region13: #{maas_forward.22} parent=11 // pred_check
        %p282 = pneg %p89
      $region14: #{maas_forward.22} parent=11 // pred_check_branch
        %284 = sbr.rel (%p282) target = $region16
      $region15: #{maas_forward.22} parent=11 // pred_region
        _
      $region16: #{maas_forward.22} parent=11 // pred_fallthru
        _
      // Predicated region
      $region17: #{maas_forward.22} parent=11 // pred_check
        %p285 = pneg %p136
      $region18: #{maas_forward.22} parent=11 // pred_check_branch
        %287 = sbr.rel (%p285) target = $region20
      $region19: #{maas_forward.22} parent=11 // pred_region
        _
      $region20: #{maas_forward.22} parent=11 // pred_fallthru
        _
      // Predicated region
      $region21: #{maas_forward.22} parent=11 // pred_check
        %p288 = pneg %p157
      $region22: #{maas_forward.22} parent=11 // pred_check_branch
        %290 = sbr.rel (%p288) target = $region24
      $region23: #{maas_forward.22} parent=11 // pred_region
        _
      $region24: #{maas_forward.22} parent=11 // pred_fallthru
        _
      // Predicated region
      $region25: #{maas_forward.22} parent=11 // pred_check
        %p291 = pneg %p178
      $region26: #{maas_forward.22} parent=11 // pred_check_branch
        %293 = sbr.rel (%p291) target = $region28
      $region27: #{maas_forward.22} parent=11 // pred_region
        _
      $region28: #{maas_forward.22} parent=11 // pred_fallthru
        _
      // Predicated region
      $region29: #{maas_forward.22} parent=11 // pred_check
        %p294 = pneg %p199
      $region30: #{maas_forward.22} parent=11 // pred_check_branch
        %296 = sbr.rel (%p294) target = $region32
      $region31: #{maas_forward.22} parent=11 // pred_region
        _
      $region32: #{maas_forward.22} parent=11 // pred_fallthru
        _
      // Predicated region
      $region33: #{maas_forward.22} parent=11 // pred_check
        %p297 = pneg %p220
      $region34: #{maas_forward.22} parent=11 // pred_check_branch
        %299 = sbr.rel (%p297) target = $region36
      $region35: #{maas_forward.22} parent=11 // pred_region
        _
      $region36: #{maas_forward.22} parent=11 // pred_fallthru
        _
      // Predicated region
      $region37: #{maas_forward.22} parent=11 // pred_check
        %p300 = pneg %p241
      $region38: #{maas_forward.22} parent=11 // pred_check_branch
        %302 = sbr.rel (%p300) target = $region40
      $region39: #{maas_forward.22} parent=11 // pred_region
        _
      $region40: #{maas_forward.22} parent=11 // pred_fallthru
        _
    $region12: #{maas_forward.22} parent=5 // pred_fallthru
      _
    %p303 = scmp.lt.s32.totalorder %s16, 2
    // Predicated region
    $region41: #{maas_forward.22} parent=5 // pred_check
      %p304 = pneg %p303
    $region42: #{maas_forward.22} parent=5 // pred_check_branch
      %306 = sbr.rel (%p304) target = $region44
    $region43: #{maas_forward.22} parent=5 // pred_region
      // Predicated region
      $region45: #{maas_forward.22} parent=43 // pred_check
        %p307 = pneg %p36
      $region46: #{maas_forward.22} parent=43 // pred_check_branch
        %309 = sbr.rel (%p307) target = $region48
      $region47: #{maas_forward.22} parent=43 // pred_region
        %p310 = scmp.lt.s32.totalorder %s16, 1
        %s311 = scalar_select %p310, %s16, 1
        %s312 = smul.addr %s311, 8
        %s313 = scalar_lea.vmem %s0, %s312
      $region48: #{maas_forward.22} parent=43 // pred_fallthru
        _
      // Predicated region
      $region49: #{maas_forward.22} parent=43 // pred_check
        %p314 = pneg %p62
      $region50: #{maas_forward.22} parent=43 // pred_check_branch
        %316 = sbr.rel (%p314) target = $region52
      $region51: #{maas_forward.22} parent=43 // pred_region
        %p317 = scmp.lt.s32.totalorder %s16, 1
        %s318 = scalar_select %p317, %s16, 1
        %s319 = smul.addr %s318, 8
        %s320 = scalar_lea.vmem %s1, %s319
      $region52: #{maas_forward.22} parent=43 // pred_fallthru
        _
      // Predicated region
      $region53: #{maas_forward.22} parent=43 // pred_check
        %p321 = pneg %p109
      $region54: #{maas_forward.22} parent=43 // pred_check_branch
        %323 = sbr.rel (%p321) target = $region56
      $region55: #{maas_forward.22} parent=43 // pred_region
        %p324 = scmp.lt.s32.totalorder %s16, 1
        %s325 = scalar_select %p324, %s16, 1
        %s326 = smul.addr %s325, 8
        %s327 = scalar_lea.vmem %s3, %s326
      $region56: #{maas_forward.22} parent=43 // pred_fallthru
        _
    $region44: #{maas_forward.22} parent=5 // pred_fallthru
      _
    %p328 = scmp.le.s32.totalorder 1, %s16
    %p329 = scmp.lt.s32.totalorder %s16, 3
    %p330 = pnand %p328, %p329
    %p331 = pneg %p330
    // Predicated region
    $region57: #{maas_forward.22} parent=5 // pred_check
      _
    $region58: #{maas_forward.22} parent=5 // pred_check_branch
      %333 = sbr.rel (%p330) target = $region60
    $region59: #{maas_forward.22} parent=5 // pred_region
      %s334 = ssub.s32 %s16, 1
      %p335 = scmp.lt.s32.totalorder %s21, 1
      %s336 = scalar_select %p335, %s21, 1
      %s337 = smul.addr %s336, 8
      %s338 = scalar_lea.vmem %s0, %s337
      %p339 = pneg %p42
      %p340 = pneg %p39
      %p341 = scmp.lt.s32.totalorder %s21, 1
      %s342 = scalar_select %p341, %s21, 1
      %s343 = smul.addr %s342, 8
      %s344 = scalar_lea.vmem %s1, %s343
      %p345 = pneg %p68
      %p346 = pneg %p65
      %p347 = pneg %p89
      %p348 = pneg %p86
      %p349 = scmp.lt.s32.totalorder %s21, 1
      %s350 = scalar_select %p349, %s21, 1
      %s351 = smul.addr %s350, 8
      %s352 = scalar_lea.vmem %s3, %s351
      %p353 = pneg %p115
      %p354 = pneg %p112
      %p355 = pneg %p136
      %p356 = pneg %p133
      %p357 = pneg %p157
      %p358 = pneg %p154
      %p359 = pneg %p178
      %p360 = pneg %p175
      %p361 = pneg %p199
      %p362 = pneg %p196
      %p363 = pneg %p220
      %p364 = pneg %p217
      %p365 = pneg %p241
      %p366 = pneg %p238
      %p367 = pneg %p267
      %p368 = pneg %p264
      %p369 = scmp.lt.s32.totalorder %s21, 1
      %s370 = scalar_select %p369, %s21, 1
      %s371 = smul.addr %s370, 8
      %s372 = scalar_lea.vmem %s10, %s371
      %p373 = scmp.lt.s32.totalorder %s21, 1
      %s374 = scalar_select %p373, %s21, 1
      %s375 = smul.addr %s374, 8
      %s376 = scalar_lea.vmem %s0, %s375
      %p377 = scmp.lt.s32.totalorder %s21, 1
      %s378 = scalar_select %p377, %s21, 1
      %s379 = smul.addr %s378, 8
      %s380 = scalar_lea.vmem %s1, %s379
      %p381 = scmp.lt.s32.totalorder %s21, 1
      %s382 = scalar_select %p381, %s21, 1
      %s383 = smul.addr %s382, 8
      %s384 = scalar_lea.vmem %s3, %s383
      %p385 = scmp.lt.s32.totalorder %s21, 1
      %s386 = scalar_select %p385, %s21, 1
      %s387 = smul.addr %s386, 8
      %s388 = scalar_lea.vmem %s10, %s387
      %v389 = vld [vmem:[%s376] sm:$0xff]
      %v390 = vld [vmem:[%s2] sm:$0xff]
      %v391 = vld [vmem:[%s2 + $0x8] sm:$0xff]
      %v392 = vld [vmem:[%s4] sm:$0x1]
      %v394 = vlaneseq
      %v395 = vshrl.u32 %v394, 7
      %v396 = vsub.s32 0, %v395
      %v397 = vrot.slane %v392, %v396
      %v399 = vmul.f32 %v389, %v397
      %v400 = vld [vmem:[%s5] sm:$0x1]
      %v402 = vlaneseq
      %v403 = vshrl.u32 %v402, 7
      %v404 = vsub.s32 0, %v403
      %v405 = vrot.slane %v400, %v404
      %v407 = vadd.f32 %v399, %v405
      %v408 = vmax.f32 %v407, 0.0
      %v409 = vld [vmem:[%s8] sm:$0xff]
      %v410 = vld [vmem:[%s8 + $0x8] sm:$0xff]
      %vm411 = vcmask 130048
      %v413 = vsel %vm411, %v408, 0
      %415 = vmatprep.subr.mxu0 0.0
      %416 = vmatpush1.msra.mxu0 %v409
      %417 = vmatprep.subr.mxu0 0.0
      %418 = vmatpush1.msra.mxu0 %v410
      %419 = vmatprep.subr.mxu0 0.0
      %420 = vmatpush1.msra.mxu0 0.0
      %421 = vmatprep.subr.mxu0 0.0
      %422 = vmatpush1.msra.mxu0 0.0
      %423 = vmatprep.subr.mxu0 0.0
      %424 = vmatpush1.msra.mxu0 0.0
      %425 = vmatprep.subr.mxu0 0.0
      %426 = vmatpush1.msra.mxu0 0.0
      %427 = vmatprep.subr.mxu0 0.0
      %428 = vmatpush1.msra.mxu0 0.0
      %429 = vmatprep.subr.mxu0 0.0
      %430 = vmatpush1.msra.mxu0 0.0
      %431 = vmatprep.subr.mxu0 0.0
      %432 = vmatpush1.msra.mxu0 0.0
      %433 = vmatprep.subr.mxu0 0.0
      %434 = vmatpush1.msra.mxu0 0.0
      %435 = vmatprep.subr.mxu0 0.0
      %436 = vmatpush1.msra.mxu0 0.0
      %437 = vmatprep.subr.mxu0 0.0
      %438 = vmatpush1.msra.mxu0 0.0
      %439 = vmatprep.subr.mxu0 0.0
      %440 = vmatpush1.msra.mxu0 0.0
      %441 = vmatprep.subr.mxu0 0.0
      %442 = vmatpush1.msra.mxu0 0.0
      %443 = vmatprep.subr.mxu0 0.0
      %444 = vmatpush1.msra.mxu0 0.0
      %445 = vmatprep.subr.mxu0 0.0
      %446 = vmatpush1.msra.mxu0 0.0
      %447 = vmatprep.subr.mxu0 0.0
      %448 = vmatpush1.msra.mxu0 0.0
      %449 = vmatprep.subr.mxu0 0.0
      %450 = vmatpush1.msra.mxu0 0.0
      %451 = vmatprep.subr.mxu0 0.0
      %452 = vmatpush1.msra.mxu0 0.0
      %453 = vmatprep.subr.mxu0 0.0
      %454 = vmatpush1.msra.mxu0 0.0
      %455 = vmatprep.subr.mxu0 0.0
      %456 = vmatpush1.msra.mxu0 0.0
      %457 = vmatprep.subr.mxu0 0.0
      %458 = vmatpush1.msra.mxu0 0.0
      %459 = vmatprep.subr.mxu0 0.0
      %460 = vmatpush1.msra.mxu0 0.0
      %461 = vmatprep.subr.mxu0 0.0
      %462 = vmatpush1.msra.mxu0 0.0
      %463 = vmatprep.subr.mxu0 0.0
      %464 = vmatpush1.msra.mxu0 0.0
      %465 = vmatprep.subr.mxu0 0.0
      %466 = vmatpush1.msra.mxu0 0.0
      %467 = vmatprep.subr.mxu0 0.0
      %468 = vmatpush1.msra.mxu0 0.0
      %469 = vmatprep.subr.mxu0 0.0
      %470 = vmatpush1.msra.mxu0 0.0
      %471 = vmatprep.subr.mxu0 0.0
      %472 = vmatpush1.msra.mxu0 0.0
      %473 = vmatprep.subr.mxu0 0.0
      %474 = vmatpush1.msra.mxu0 0.0
      %475 = vmatprep.subr.mxu0 0.0
      %476 = vmatpush1.msra.mxu0 0.0
      %477 = vmatprep.subr.mxu0 0.0
      %478 = vmatpush1.msra.mxu0 0.0
      %479 = vmatprep.mubr.f32.mxu0 0.0
      %480 = vmatmul.mubr.f32.gmra.mrb[0].mxu0 %v413
      %v481 = vpop.f32.mrb[0].mxu0
      %v482 = vadd.f32 0.0, %v481
      %v483 = vpop.f32.mrb[0].mxu0
      %484 = vdwg.mxu0
      %v486 = vcombine.high %v389, %v389
      %v488 = vunpack.c.l.s4 1966171168
      %v489 = vunpack.c.0.s8 %v488
      %v490 = vlaneseq
      %v491 = vshrl.u32 %v490, 7
      %v492 = vsub.s32 %v489, %v491
      %v493 = vrot.slane %v389, %v492
      %v495 = vunpack.c.l.s4 1966171168
      %v496 = vunpack.c.0.s8 %v495
      %v497 = vlaneseq
      %v498 = vshrl.u32 %v497, 7
      %v499 = vsub.s32 %v496, %v498
      %v500 = vrot.slane %v486, %v499
      %v501 = vcombine.high %v493, %v493
      %v502 = vcombine.high %v500, %v500
      %v504 = vunpack.c.l.s4 1966171168
      %v505 = vunpack.c.0.s8 %v504
      %v506 = vlaneseq
      %v507 = vshrl.u32 %v506, 7
      %v508 = vsub.s32 %v505, %v507
      %v509 = vrot.slane %v493, %v508
      %v511 = vunpack.c.l.s4 1966171168
      %v512 = vunpack.c.0.s8 %v511
      %v513 = vlaneseq
      %v514 = vshrl.u32 %v513, 7
      %v515 = vsub.s32 %v512, %v514
      %v516 = vrot.slane %v500, %v515
      %v518 = vunpack.c.l.s4 1966171168
      %v519 = vunpack.c.0.s8 %v518
      %v520 = vlaneseq
      %v521 = vshrl.u32 %v520, 7
      %v522 = vsub.s32 %v519, %v521
      %v523 = vrot.slane %v501, %v522
      %v525 = vunpack.c.l.s4 1966171168
      %v526 = vunpack.c.0.s8 %v525
      %v527 = vlaneseq
      %v528 = vshrl.u32 %v527, 7
      %v529 = vsub.s32 %v526, %v528
      %v530 = vrot.slane %v502, %v529
      %v531 = vcombine.high %v509, %v509
      %v532 = vcombine.high %v516, %v516
      %v533 = vcombine.high %v523, %v523
      %v534 = vcombine.high %v530, %v530
      %v535 = vlaneseq
      %v536 = vshrl.u32 %v535, 7
      %v537 = vsub.s32 0, %v536
      %v538 = vrot.slane %v509, %v537
      %v539 = vlaneseq
      %v540 = vshrl.u32 %v539, 7
      %v541 = vsub.s32 0, %v540
      %v542 = vrot.slane %v523, %v541
      %v543 = vlaneseq
      %v544 = vshrl.u32 %v543, 7
      %v545 = vsub.s32 0, %v544
      %v546 = vrot.slane %v531, %v545
      %v547 = vlaneseq
      %v548 = vshrl.u32 %v547, 7
      %v549 = vsub.s32 0, %v548
      %v550 = vrot.slane %v533, %v549
      %v551 = vlaneseq
      %v552 = vshrl.u32 %v551, 7
      %v553 = vsub.s32 0, %v552
      %v554 = vrot.slane %v516, %v553
      %v555 = vlaneseq
      %v556 = vshrl.u32 %v555, 7
      %v557 = vsub.s32 0, %v556
      %v558 = vrot.slane %v530, %v557
      %v559 = vlaneseq
      %v560 = vshrl.u32 %v559, 7
      %v561 = vsub.s32 0, %v560
      %v562 = vrot.slane %v532, %v561
      %v563 = vlaneseq
      %v564 = vshrl.u32 %v563, 7
      %v565 = vsub.s32 0, %v564
      %v566 = vrot.slane %v534, %v565
      %v575 = vsub.f32 %v390, %v538
      %v576 = vsub.f32 %v391, %v538
      %v577 = vsub.f32 %v390, %v542
      %v578 = vsub.f32 %v391, %v542
      %v579 = vsub.f32 %v390, %v546
      %v580 = vsub.f32 %v391, %v546
      %v581 = vsub.f32 %v390, %v550
      %v582 = vsub.f32 %v391, %v550
      %v583 = vsub.f32 %v390, %v554
      %v584 = vsub.f32 %v391, %v554
      %v585 = vsub.f32 %v390, %v558
      %v586 = vsub.f32 %v391, %v558
      %v587 = vsub.f32 %v390, %v562
      %v588 = vsub.f32 %v391, %v562
      %v589 = vsub.f32 %v390, %v566
      %v590 = vsub.f32 %v391, %v566
      %v591 = vld [vmem:[%s6] sm:$0x1]
      %v593 = vlaneseq
      %v594 = vshrl.u32 %v593, 7
      %v595 = vsub.s32 0, %v594
      %v596 = vrot.slane %v591, %v595
      %v598 = vmul.f32 %v575, %v596
      %v599 = vmul.f32 %v576, %v596
      %v600 = vmul.f32 %v577, %v596
      %v601 = vmul.f32 %v578, %v596
      %v602 = vmul.f32 %v579, %v596
      %v603 = vmul.f32 %v580, %v596
      %v604 = vmul.f32 %v581, %v596
      %v605 = vmul.f32 %v582, %v596
      %v606 = vmul.f32 %v583, %v596
      %v607 = vmul.f32 %v584, %v596
      %v608 = vmul.f32 %v585, %v596
      %v609 = vmul.f32 %v586, %v596
      %v610 = vmul.f32 %v587, %v596
      %v611 = vmul.f32 %v588, %v596
      %v612 = vmul.f32 %v589, %v596
      %v613 = vmul.f32 %v590, %v596
      %v614 = vld [vmem:[%s7] sm:$0x1]
      %v616 = vlaneseq
      %v617 = vshrl.u32 %v616, 7
      %v618 = vsub.s32 0, %v617
      %v619 = vrot.slane %v614, %v618
      %v621 = vadd.f32 %v598, %v619
      %v622 = vadd.f32 %v599, %v619
      %v623 = vadd.f32 %v600, %v619
      %v624 = vadd.f32 %v601, %v619
      %v625 = vadd.f32 %v602, %v619
      %v626 = vadd.f32 %v603, %v619
      %v627 = vadd.f32 %v604, %v619
      %v628 = vadd.f32 %v605, %v619
      %v629 = vadd.f32 %v606, %v619
      %v630 = vadd.f32 %v607, %v619
      %v631 = vadd.f32 %v608, %v619
      %v632 = vadd.f32 %v609, %v619
      %v633 = vadd.f32 %v610, %v619
      %v634 = vadd.f32 %v611, %v619
      %v635 = vadd.f32 %v612, %v619
      %v636 = vadd.f32 %v613, %v619
      %v637 = vmax.f32 %v621, 0.0
      %v638 = vmax.f32 %v622, 0.0
      %v639 = vmax.f32 %v623, 0.0
      %v640 = vmax.f32 %v624, 0.0
      %v641 = vmax.f32 %v625, 0.0
      %v642 = vmax.f32 %v626, 0.0
      %v643 = vmax.f32 %v627, 0.0
      %v644 = vmax.f32 %v628, 0.0
      %v645 = vmax.f32 %v629, 0.0
      %v646 = vmax.f32 %v630, 0.0
      %v647 = vmax.f32 %v631, 0.0
      %v648 = vmax.f32 %v632, 0.0
      %v649 = vmax.f32 %v633, 0.0
      %v650 = vmax.f32 %v634, 0.0
      %v651 = vmax.f32 %v635, 0.0
      %v652 = vmax.f32 %v636, 0.0
      %v653 = vld [vmem:[%s9] sm:$0xff]
      %v654 = vld [vmem:[%s9 + $0x8] sm:$0xff]
      %v656 = vsel %vm411, %v637, 0
      %v659 = vsel %vm411, %v638, 0
      %v662 = vsel %vm411, %v639, 0
      %v665 = vsel %vm411, %v640, 0
      %v668 = vsel %vm411, %v641, 0
      %v671 = vsel %vm411, %v642, 0
      %v674 = vsel %vm411, %v643, 0
      %v677 = vsel %vm411, %v644, 0
      %v680 = vsel %vm411, %v645, 0
      %v683 = vsel %vm411, %v646, 0
      %v686 = vsel %vm411, %v647, 0
      %v689 = vsel %vm411, %v648, 0
      %v692 = vsel %vm411, %v649, 0
      %v695 = vsel %vm411, %v650, 0
      %v698 = vsel %vm411, %v651, 0
      %v701 = vsel %vm411, %v652, 0
      %703 = vmatprep.subr.mxu0 0.0
      %704 = vmatpush1.msra.mxu0 %v653
      %705 = vmatprep.subr.mxu0 0.0
      %706 = vmatpush1.msra.mxu0 %v654
      %707 = vmatprep.subr.mxu0 0.0
      %708 = vmatpush1.msra.mxu0 0.0
      %709 = vmatprep.subr.mxu0 0.0
      %710 = vmatpush1.msra.mxu0 0.0
      %711 = vmatprep.subr.mxu0 0.0
      %712 = vmatpush1.msra.mxu0 0.0
      %713 = vmatprep.subr.mxu0 0.0
      %714 = vmatpush1.msra.mxu0 0.0
      %715 = vmatprep.subr.mxu0 0.0
      %716 = vmatpush1.msra.mxu0 0.0
      %717 = vmatprep.subr.mxu0 0.0
      %718 = vmatpush1.msra.mxu0 0.0
      %719 = vmatprep.subr.mxu0 0.0
      %720 = vmatpush1.msra.mxu0 0.0
      %721 = vmatprep.subr.mxu0 0.0
      %722 = vmatpush1.msra.mxu0 0.0
      %723 = vmatprep.subr.mxu0 0.0
      %724 = vmatpush1.msra.mxu0 0.0
      %725 = vmatprep.subr.mxu0 0.0
      %726 = vmatpush1.msra.mxu0 0.0
      %727 = vmatprep.subr.mxu0 0.0
      %728 = vmatpush1.msra.mxu0 0.0
      %729 = vmatprep.subr.mxu0 0.0
      %730 = vmatpush1.msra.mxu0 0.0
      %731 = vmatprep.subr.mxu0 0.0
      %732 = vmatpush1.msra.mxu0 0.0
      %733 = vmatprep.subr.mxu0 0.0
      %734 = vmatpush1.msra.mxu0 0.0
      %735 = vmatprep.subr.mxu0 0.0
      %736 = vmatpush1.msra.mxu0 0.0
      %737 = vmatprep.subr.mxu0 0.0
      %738 = vmatpush1.msra.mxu0 0.0
      %739 = vmatprep.subr.mxu0 0.0
      %740 = vmatpush1.msra.mxu0 0.0
      %741 = vmatprep.subr.mxu0 0.0
      %742 = vmatpush1.msra.mxu0 0.0
      %743 = vmatprep.subr.mxu0 0.0
      %744 = vmatpush1.msra.mxu0 0.0
      %745 = vmatprep.subr.mxu0 0.0
      %746 = vmatpush1.msra.mxu0 0.0
      %747 = vmatprep.subr.mxu0 0.0
      %748 = vmatpush1.msra.mxu0 0.0
      %749 = vmatprep.subr.mxu0 0.0
      %750 = vmatpush1.msra.mxu0 0.0
      %751 = vmatprep.subr.mxu0 0.0
      %752 = vmatpush1.msra.mxu0 0.0
      %753 = vmatprep.subr.mxu0 0.0
      %754 = vmatpush1.msra.mxu0 0.0
      %755 = vmatprep.subr.mxu0 0.0
      %756 = vmatpush1.msra.mxu0 0.0
      %757 = vmatprep.subr.mxu0 0.0
      %758 = vmatpush1.msra.mxu0 0.0
      %759 = vmatprep.subr.mxu0 0.0
      %760 = vmatpush1.msra.mxu0 0.0
      %761 = vmatprep.subr.mxu0 0.0
      %762 = vmatpush1.msra.mxu0 0.0
      %763 = vmatprep.subr.mxu0 0.0
      %764 = vmatpush1.msra.mxu0 0.0
      %765 = vmatprep.subr.mxu0 0.0
      %766 = vmatpush1.msra.mxu0 0.0
      %767 = vmatprep.mubr.f32.mxu0 0.0
      %768 = vmatmul.mubr.f32.gmra.mrb[0].mxu0 %v656
      %v769 = vpop.f32.mrb[0].mxu0
      %v770 = vadd.f32 0.0, %v769
      %v771 = vpop.f32.mrb[0].mxu0
      %772 = vmatprep.mubr.f32.mxu0 0.0
      %773 = vmatmul.mubr.f32.gmra.mrb[0].mxu0 %v659
      %v774 = vpop.f32.mrb[0].mxu0
      %v775 = vadd.f32 0.0, %v774
      %v776 = vpop.f32.mrb[0].mxu0
      %777 = vmatprep.mubr.f32.mxu0 0.0
      %778 = vmatmul.mubr.f32.gmra.mrb[0].mxu0 %v662
      %v779 = vpop.f32.mrb[0].mxu0
      %v780 = vadd.f32 0.0, %v779
      %v781 = vpop.f32.mrb[0].mxu0
      %782 = vmatprep.mubr.f32.mxu0 0.0
      %783 = vmatmul.mubr.f32.gmra.mrb[0].mxu0 %v665
      %v784 = vpop.f32.mrb[0].mxu0
      %v785 = vadd.f32 0.0, %v784
      %v786 = vpop.f32.mrb[0].mxu0
      %787 = vmatprep.mubr.f32.mxu0 0.0
      %788 = vmatmul.mubr.f32.gmra.mrb[0].mxu0 %v668
      %v789 = vpop.f32.mrb[0].mxu0
      %v790 = vadd.f32 0.0, %v789
      %v791 = vpop.f32.mrb[0].mxu0
      %792 = vmatprep.mubr.f32.mxu0 0.0
      %793 = vmatmul.mubr.f32.gmra.mrb[0].mxu0 %v671
      %v794 = vpop.f32.mrb[0].mxu0
      %v795 = vadd.f32 0.0, %v794
      %v796 = vpop.f32.mrb[0].mxu0
      %797 = vmatprep.mubr.f32.mxu0 0.0
      %798 = vmatmul.mubr.f32.gmra.mrb[0].mxu0 %v674
      %v799 = vpop.f32.mrb[0].mxu0
      %v800 = vadd.f32 0.0, %v799
      %v801 = vpop.f32.mrb[0].mxu0
      %802 = vmatprep.mubr.f32.mxu0 0.0
      %803 = vmatmul.mubr.f32.gmra.mrb[0].mxu0 %v677
      %v804 = vpop.f32.mrb[0].mxu0
      %v805 = vadd.f32 0.0, %v804
      %v806 = vpop.f32.mrb[0].mxu0
      %807 = vmatprep.mubr.f32.mxu0 0.0
      %808 = vmatmul.mubr.f32.gmra.mrb[0].mxu0 %v680
      %v809 = vpop.f32.mrb[0].mxu0
      %v810 = vadd.f32 0.0, %v809
      %v811 = vpop.f32.mrb[0].mxu0
      %812 = vmatprep.mubr.f32.mxu0 0.0
      %813 = vmatmul.mubr.f32.gmra.mrb[0].mxu0 %v683
      %v814 = vpop.f32.mrb[0].mxu0
      %v815 = vadd.f32 0.0, %v814
      %v816 = vpop.f32.mrb[0].mxu0
      %817 = vmatprep.mubr.f32.mxu0 0.0
      %818 = vmatmul.mubr.f32.gmra.mrb[0].mxu0 %v686
      %v819 = vpop.f32.mrb[0].mxu0
      %v820 = vadd.f32 0.0, %v819
      %v821 = vpop.f32.mrb[0].mxu0
      %822 = vmatprep.mubr.f32.mxu0 0.0
      %823 = vmatmul.mubr.f32.gmra.mrb[0].mxu0 %v689
      %v824 = vpop.f32.mrb[0].mxu0
      %v825 = vadd.f32 0.0, %v824
      %v826 = vpop.f32.mrb[0].mxu0
      %827 = vmatprep.mubr.f32.mxu0 0.0
      %828 = vmatmul.mubr.f32.gmra.mrb[0].mxu0 %v692
      %v829 = vpop.f32.mrb[0].mxu0
      %v830 = vadd.f32 0.0, %v829
      %v831 = vpop.f32.mrb[0].mxu0
      %832 = vmatprep.mubr.f32.mxu0 0.0
      %833 = vmatmul.mubr.f32.gmra.mrb[0].mxu0 %v695
      %v834 = vpop.f32.mrb[0].mxu0
      %v835 = vadd.f32 0.0, %v834
      %v836 = vpop.f32.mrb[0].mxu0
      %837 = vmatprep.mubr.f32.mxu0 0.0
      %838 = vmatmul.mubr.f32.gmra.mrb[0].mxu0 %v698
      %v839 = vpop.f32.mrb[0].mxu0
      %v840 = vadd.f32 0.0, %v839
      %v841 = vpop.f32.mrb[0].mxu0
      %842 = vmatprep.mubr.f32.mxu0 0.0
      %843 = vmatmul.mubr.f32.gmra.mrb[0].mxu0 %v701
      %v844 = vpop.f32.mrb[0].mxu0
      %v845 = vadd.f32 0.0, %v844
      %v846 = vpop.f32.mrb[0].mxu0
      %847 = vdwg.mxu0
      %v848 = vld [vmem:[%s380] sm:$0xff]
      %v849 = vlaneseq
      %v850 = vshrl.u32 %v849, 7
      %v851 = vsub.s32 0, %v850
      %v852 = vrot.slane %v848, %v851
      %854 = vbcast.lane.b32.xlu0 %v852, 256
      %v855 = vpop.permute.xlu0 %854
      %s857 = sor.u32 256, 8
      %858 = vbcast.lane.b32.xlu0 %v852, %s857
      %v859 = vpop.permute.xlu0 %858
      %v860 = vlaneseq
      %v861 = vshrl.u32 %v860, 7
      %v862 = vsub.s32 1, %v861
      %v863 = vrot.slane %v848, %v862
      %865 = vbcast.lane.b32.xlu0 %v863, 256
      %v866 = vpop.permute.xlu0 %865
      %s868 = sor.u32 256, 8
      %869 = vbcast.lane.b32.xlu0 %v863, %s868
      %v870 = vpop.permute.xlu0 %869
      %v871 = vlaneseq
      %v872 = vshrl.u32 %v871, 7
      %v873 = vsub.s32 2, %v872
      %v874 = vrot.slane %v848, %v873
      %876 = vbcast.lane.b32.xlu0 %v874, 256
      %v877 = vpop.permute.xlu0 %876
      %s879 = sor.u32 256, 8
      %880 = vbcast.lane.b32.xlu0 %v874, %s879
      %v881 = vpop.permute.xlu0 %880
      %v882 = vlaneseq
      %v883 = vshrl.u32 %v882, 7
      %v884 = vsub.s32 3, %v883
      %v885 = vrot.slane %v848, %v884
      %887 = vbcast.lane.b32.xlu0 %v885, 256
      %v888 = vpop.permute.xlu0 %887
      %s890 = sor.u32 256, 8
      %891 = vbcast.lane.b32.xlu0 %v885, %s890
      %v892 = vpop.permute.xlu0 %891
      %v893 = vlaneseq
      %v894 = vshrl.u32 %v893, 7
      %v895 = vsub.s32 4, %v894
      %v896 = vrot.slane %v848, %v895
      %898 = vbcast.lane.b32.xlu0 %v896, 256
      %v899 = vpop.permute.xlu0 %898
      %s901 = sor.u32 256, 8
      %902 = vbcast.lane.b32.xlu0 %v896, %s901
      %v903 = vpop.permute.xlu0 %902
      %v904 = vlaneseq
      %v905 = vshrl.u32 %v904, 7
      %v906 = vsub.s32 5, %v905
      %v907 = vrot.slane %v848, %v906
      %909 = vbcast.lane.b32.xlu0 %v907, 256
      %v910 = vpop.permute.xlu0 %909
      %s912 = sor.u32 256, 8
      %913 = vbcast.lane.b32.xlu0 %v907, %s912
      %v914 = vpop.permute.xlu0 %913
      %v915 = vlaneseq
      %v916 = vshrl.u32 %v915, 7
      %v917 = vsub.s32 6, %v916
      %v918 = vrot.slane %v848, %v917
      %920 = vbcast.lane.b32.xlu0 %v918, 256
      %v921 = vpop.permute.xlu0 %920
      %s923 = sor.u32 256, 8
      %924 = vbcast.lane.b32.xlu0 %v918, %s923
      %v925 = vpop.permute.xlu0 %924
      %v926 = vlaneseq
      %v927 = vshrl.u32 %v926, 7
      %v928 = vsub.s32 7, %v927
      %v929 = vrot.slane %v848, %v928
      %931 = vbcast.lane.b32.xlu0 %v929, 256
      %v932 = vpop.permute.xlu0 %931
      %s934 = sor.u32 256, 8
      %935 = vbcast.lane.b32.xlu0 %v929, %s934
      %v936 = vpop.permute.xlu0 %935
      %vm937 = vcmp.gt.f32.partialorder %v855, 0.0
      %vm938 = vcmp.gt.f32.partialorder %v859, 0.0
      %vm939 = vcmp.gt.f32.partialorder %v866, 0.0
      %vm940 = vcmp.gt.f32.partialorder %v870, 0.0
      %vm941 = vcmp.gt.f32.partialorder %v877, 0.0
      %vm942 = vcmp.gt.f32.partialorder %v881, 0.0
      %vm943 = vcmp.gt.f32.partialorder %v888, 0.0
      %vm944 = vcmp.gt.f32.partialorder %v892, 0.0
      %vm945 = vcmp.gt.f32.partialorder %v899, 0.0
      %vm946 = vcmp.gt.f32.partialorder %v903, 0.0
      %vm947 = vcmp.gt.f32.partialorder %v910, 0.0
      %vm948 = vcmp.gt.f32.partialorder %v914, 0.0
      %vm949 = vcmp.gt.f32.partialorder %v921, 0.0
      %vm950 = vcmp.gt.f32.partialorder %v925, 0.0
      %vm951 = vcmp.gt.f32.partialorder %v932, 0.0
      %vm952 = vcmp.gt.f32.partialorder %v936, 0.0
      %v953 = vsel %vm937, 1, 0
      %v954 = vsel %vm938, 1, 0
      %v955 = vsel %vm939, 1, 0
      %v956 = vsel %vm940, 1, 0
      %v957 = vsel %vm941, 1, 0
      %v958 = vsel %vm942, 1, 0
      %v959 = vsel %vm943, 1, 0
      %v960 = vsel %vm944, 1, 0
      %v961 = vsel %vm945, 1, 0
      %v962 = vsel %vm946, 1, 0
      %v963 = vsel %vm947, 1, 0
      %v964 = vsel %vm948, 1, 0
      %v965 = vsel %vm949, 1, 0
      %v966 = vsel %vm950, 1, 0
      %v967 = vsel %vm951, 1, 0
      %v968 = vsel %vm952, 1, 0
      %vm969 = vcmp.eq.s32.totalorder %v953, 1
      %vm970 = vcmp.eq.s32.totalorder %v954, 1
      %vm971 = vcmp.eq.s32.totalorder %v955, 1
      %vm972 = vcmp.eq.s32.totalorder %v956, 1
      %vm973 = vcmp.eq.s32.totalorder %v957, 1
      %vm974 = vcmp.eq.s32.totalorder %v958, 1
      %vm975 = vcmp.eq.s32.totalorder %v959, 1
      %vm976 = vcmp.eq.s32.totalorder %v960, 1
      %vm977 = vcmp.eq.s32.totalorder %v961, 1
      %vm978 = vcmp.eq.s32.totalorder %v962, 1
      %vm979 = vcmp.eq.s32.totalorder %v963, 1
      %vm980 = vcmp.eq.s32.totalorder %v964, 1
      %vm981 = vcmp.eq.s32.totalorder %v965, 1
      %vm982 = vcmp.eq.s32.totalorder %v966, 1
      %vm983 = vcmp.eq.s32.totalorder %v967, 1
      %vm984 = vcmp.eq.s32.totalorder %v968, 1
      %v985 = vsel %vm969, %v770, -1e+30
      %v986 = vsel %vm970, %v775, -1e+30
      %v987 = vsel %vm971, %v780, -1e+30
      %v988 = vsel %vm972, %v785, -1e+30
      %v989 = vsel %vm973, %v790, -1e+30
      %v990 = vsel %vm974, %v795, -1e+30
      %v991 = vsel %vm975, %v800, -1e+30
      %v992 = vsel %vm976, %v805, -1e+30
      %v993 = vsel %vm977, %v810, -1e+30
      %v994 = vsel %vm978, %v815, -1e+30
      %v995 = vsel %vm979, %v820, -1e+30
      %v996 = vsel %vm980, %v825, -1e+30
      %v997 = vsel %vm981, %v830, -1e+30
      %v998 = vsel %vm982, %v835, -1e+30
      %v999 = vsel %vm983, %v840, -1e+30
      %v1000 = vsel %vm984, %v845, -1e+30
      %v1001 = vsel %vm411, %v985, -inf
      %v1002 = vsel %vm411, %v986, -inf
      %v1003 = vmax.f32 %v1001, %v1002
      %v1004 = vrot.slane %v1003, 4
      %v1005 = vmax.f32 %v1003, %v1004
      %v1006 = vrot.slane %v1005, 2
      %v1007 = vmax.f32 %v1005, %v1006
      %v1008 = vrot.slane %v1007, 1
      %v1009 = vmax.f32 %v1007, %v1008
      %v1010 = vsel %vm411, %v987, -inf
      %v1011 = vsel %vm411, %v988, -inf
      %v1012 = vmax.f32 %v1010, %v1011
      %v1013 = vrot.slane %v1012, 4
      %v1014 = vmax.f32 %v1012, %v1013
      %v1015 = vrot.slane %v1014, 2
      %v1016 = vmax.f32 %v1014, %v1015
      %v1017 = vrot.slane %v1016, 1
      %v1018 = vmax.f32 %v1016, %v1017
      %v1019 = vsel %vm411, %v989, -inf
      %v1020 = vsel %vm411, %v990, -inf
      %v1021 = vmax.f32 %v1019, %v1020
      %v1022 = vrot.slane %v1021, 4
      %v1023 = vmax.f32 %v1021, %v1022
      %v1024 = vrot.slane %v1023, 2
      %v1025 = vmax.f32 %v1023, %v1024
      %v1026 = vrot.slane %v1025, 1
      %v1027 = vmax.f32 %v1025, %v1026
      %v1028 = vsel %vm411, %v991, -inf
      %v1029 = vsel %vm411, %v992, -inf
      %v1030 = vmax.f32 %v1028, %v1029
      %v1031 = vrot.slane %v1030, 4
      %v1032 = vmax.f32 %v1030, %v1031
      %v1033 = vrot.slane %v1032, 2
      %v1034 = vmax.f32 %v1032, %v1033
      %v1035 = vrot.slane %v1034, 1
      %v1036 = vmax.f32 %v1034, %v1035
      %v1037 = vsel %vm411, %v993, -inf
      %v1038 = vsel %vm411, %v994, -inf
      %v1039 = vmax.f32 %v1037, %v1038
      %v1040 = vrot.slane %v1039, 4
      %v1041 = vmax.f32 %v1039, %v1040
      %v1042 = vrot.slane %v1041, 2
      %v1043 = vmax.f32 %v1041, %v1042
      %v1044 = vrot.slane %v1043, 1
      %v1045 = vmax.f32 %v1043, %v1044
      %v1046 = vsel %vm411, %v995, -inf
      %v1047 = vsel %vm411, %v996, -inf
      %v1048 = vmax.f32 %v1046, %v1047
      %v1049 = vrot.slane %v1048, 4
      %v1050 = vmax.f32 %v1048, %v1049
      %v1051 = vrot.slane %v1050, 2
      %v1052 = vmax.f32 %v1050, %v1051
      %v1053 = vrot.slane %v1052, 1
      %v1054 = vmax.f32 %v1052, %v1053
      %v1055 = vsel %vm411, %v997, -inf
      %v1056 = vsel %vm411, %v998, -inf
      %v1057 = vmax.f32 %v1055, %v1056
      %v1058 = vrot.slane %v1057, 4
      %v1059 = vmax.f32 %v1057, %v1058
      %v1060 = vrot.slane %v1059, 2
      %v1061 = vmax.f32 %v1059, %v1060
      %v1062 = vrot.slane %v1061, 1
      %v1063 = vmax.f32 %v1061, %v1062
      %v1064 = vsel %vm411, %v999, -inf
      %v1065 = vsel %vm411, %v1000, -inf
      %v1066 = vmax.f32 %v1064, %v1065
      %v1067 = vrot.slane %v1066, 4
      %v1068 = vmax.f32 %v1066, %v1067
      %v1069 = vrot.slane %v1068, 2
      %v1070 = vmax.f32 %v1068, %v1069
      %v1071 = vrot.slane %v1070, 1
      %v1072 = vmax.f32 %v1070, %v1071
      %v1073 = vsel %vm411, %v848, -inf
      %1074 = vmax.xlane.f32.xlu0 %v1073
      %v1075 = vpop.xlane.xlu0 %1074
      %vm1076 = vcmp.gt.f32.partialorder %v1075, 0.0
      %v1078 = vrot.slane %v482, 1
      %v1079 = vrot.slane %v482, 2
      %v1080 = vrot.slane %v482, 3
      %v1081 = vrot.slane %v482, 4
      %v1082 = vrot.slane %v482, 5
      %v1083 = vrot.slane %v482, 6
      %v1084 = vrot.slane %v482, 7
      %v1093 = vadd.f32 %v1009, %v482
      %v1094 = vadd.f32 %v1018, %v1078
      %v1095 = vadd.f32 %v1027, %v1079
      %v1096 = vadd.f32 %v1036, %v1080
      %v1097 = vadd.f32 %v1045, %v1081
      %v1098 = vadd.f32 %v1054, %v1082
      %v1099 = vadd.f32 %v1063, %v1083
      %v1100 = vadd.f32 %v1072, %v1084
      %v1101 = vsel %vm1076, 1, 0
      %vm1102 = vcmp.eq.s32.totalorder %v1101, 1
      %v1111 = vrot.slane %v1094, 7
      %vm1112 = vcmask 1041409
      %v1113 = vsel %vm1112, %v1111, %v1093
      %v1114 = vrot.slane %v1095, 6
      %vm1115 = vcmask 1042434
      %v1116 = vsel %vm1115, %v1114, %v1113
      %v1117 = vrot.slane %v1096, 5
      %vm1118 = vcmask 1043459
      %v1119 = vsel %vm1118, %v1117, %v1116
      %v1120 = vrot.slane %v1097, 4
      %vm1121 = vcmask 1044484
      %v1122 = vsel %vm1121, %v1120, %v1119
      %v1123 = vrot.slane %v1098, 3
      %vm1124 = vcmask 1045509
      %v1125 = vsel %vm1124, %v1123, %v1122
      %v1126 = vrot.slane %v1099, 2
      %vm1127 = vcmask 1046534
      %v1128 = vsel %vm1127, %v1126, %v1125
      %v1129 = vrot.slane %v1100, 1
      %vm1130 = vcmask 1047559
      %v1131 = vsel %vm1130, %v1129, %v1128
      %v1133 = vsel %vm1102, %v1131, 0.0
      %v1134 = vld [vmem:[%s384] sm:$0xff]
      %1136 = vrot.lane.b32.xlu0 %v1133, 16
      %v1137 = vpop.permute.xlu0 %1136
      %v1139 = vsel %vm411, %v1134, %v1137
      %vm1140 = vcmask 261120
      %1141 = vst.msk [vmem:[%s388] sm:$0xff] %vm1140, %v1139
      %p1142 = scmp.lt.s32.totalorder %s21, 1
      %s1143 = scalar_select %p1142, %s21, 1
      %s1144 = smul.addr %s1143, 8
      %s1145 = scalar_lea.vmem %s10, %s1144
      // Predicated region
      $region61: #{maas_forward.22} parent=59 // pred_check
        %p1146 = pneg %p264
      $region62: #{maas_forward.22} parent=59 // pred_check_branch
        %1148 = sbr.rel (%p1146) target = $region64
      $region63: #{maas_forward.22} parent=59 // pred_region
        _
      $region64: #{maas_forward.22} parent=59 // pred_fallthru
        _
    $region60: #{maas_forward.22} parent=5 // pred_fallthru
      _
    %p1149 = scmp.le.s32.totalorder 2, %s16
    // Predicated region
    $region65: #{maas_forward.22} parent=5 // pred_check
      %p1150 = pneg %p1149
    $region66: #{maas_forward.22} parent=5 // pred_check_branch
      %1152 = sbr.rel (%p1150) target = $region68
    $region67: #{maas_forward.22} parent=5 // pred_region
      %s1153 = ssub.s32 %s16, 2
      // Predicated region
      $region69: #{maas_forward.22} parent=67 // pred_check
        %p1154 = pneg %p270
      $region70: #{maas_forward.22} parent=67 // pred_check_branch
        %1156 = sbr.rel (%p1154) target = $region72
      $region71: #{maas_forward.22} parent=67 // pred_region
        %p1157 = scmp.lt.s32.totalorder %s22, 1
        %s1158 = scalar_select %p1157, %s22, 1
        %s1159 = smul.addr %s1158, 8
        %s1160 = scalar_lea.vmem %s10, %s1159
      $region72: #{maas_forward.22} parent=67 // pred_fallthru
        _
    $region68: #{maas_forward.22} parent=5 // pred_fallthru
      _
  $region6: #{maas_forward.22} parent=0 // loop_footer
    %s20 = sadd.s32 1, %s16
  $region7: #{maas_forward.22} parent=0 // loop_footer_branch
    %15 = sbr.rel target = $region3
  $region8: #{maas_forward.22} parent=0 // loop_exit
    _

// kernel: maas_forward.23
$region0: #{maas_forward.23}
  #allocation0 [shape = 'u32[]', space=smem, size = 0x4, offset = 0x4, fixed_abs, tag = 'smem constant byte address 0x4 - core index']
  #allocation1 [shape = 'u32[144,128]{1,0:T(1,128)}', space=vmem, size = 0x12000, scoped, tag = 'internal scratch']
  %s0 = inlined_call_operand.vmem [shape: f32[16,32], index: 0, kind: input, shape index: {}, may-alias: {0,2}]
  %s1 = inlined_call_operand.vmem [shape: f32[16,16], index: 1, kind: input, shape index: {}]
  %s2 = inlined_call_operand.vmem [shape: f32[16,32], index: 2, kind: input, shape index: {}, may-alias: {0,2}]
  %s3 = inlined_call_operand.vmem [shape: f32[16,16], index: 3, kind: input, shape index: {}]
  %s4 = inlined_call_operand.vmem [shape: f32[1,32], index: 4, kind: input, shape index: {}]
  %s5 = inlined_call_operand.vmem [shape: f32[1,32], index: 5, kind: input, shape index: {}]
  %s6 = inlined_call_operand.vmem [shape: f32[1,32], index: 6, kind: input, shape index: {}]
  %s7 = inlined_call_operand.vmem [shape: f32[1,32], index: 7, kind: input, shape index: {}]
  %s8 = inlined_call_operand.vmem [shape: f32[32,16], index: 8, kind: input, shape index: {}]
  %s9 = inlined_call_operand.vmem [shape: f32[32,16], index: 9, kind: input, shape index: {}]
  %s10 = inlined_call_operand.vmem [shape: f32[16,32], index: 10, kind: output, shape index: {}]
  %s11 = sld [smem:[#allocation0]]
  $region73: #{maas_forward.23} parent=0
    _
  %s13 = ssub.s32 1, %s11
  %s14 = scalar_select 0, %s13, %s11
  loop: start=0, step=1, limit=4
  $region2: #{maas_forward.23} parent=0 // loop_pre_header
    _
  $region3: #{maas_forward.23} parent=0 // loop_header
    %s16 = sphi 0, %s20
    %p17 = scmp.ge.s32.totalorder %s16, 4
    %s26 = sphi 0, %s28
    %s29 = sphi 0, %s26
    %s30 = sphi 0, %s29
    %s46 = sphi 0, %s30
    %s52 = sphi 0, %s54
    %s55 = sphi 0, %s52
    %s56 = sphi 0, %s55
    %s72 = sphi 0, %s56
    %s76 = sphi 0, %s76
    %s78 = sphi 0, %s76
    %s79 = sphi 0, %s78
    %s93 = sphi 0, %s79
    %s99 = sphi 0, %s101
    %s102 = sphi 0, %s99
    %s103 = sphi 0, %s102
    %s119 = sphi 0, %s103
    %s123 = sphi 0, %s123
    %s125 = sphi 0, %s123
    %s126 = sphi 0, %s125
    %s140 = sphi 0, %s126
    %s144 = sphi 0, %s144
    %s146 = sphi 0, %s144
    %s147 = sphi 0, %s146
    %s161 = sphi 0, %s147
    %s165 = sphi 0, %s165
    %s167 = sphi 0, %s165
    %s168 = sphi 0, %s167
    %s182 = sphi 0, %s168
    %s186 = sphi 0, %s186
    %s188 = sphi 0, %s186
    %s189 = sphi 0, %s188
    %s203 = sphi 0, %s189
    %s207 = sphi 0, %s207
    %s209 = sphi 0, %s207
    %s210 = sphi 0, %s209
    %s224 = sphi 0, %s210
    %s228 = sphi 0, %s228
    %s230 = sphi 0, %s228
    %s231 = sphi 0, %s230
    %s245 = sphi 0, %s231
    %s251 = sphi 0, %s253
    %s254 = sphi 0, %s251
    %s255 = sphi 0, %s254
    %s271 = sphi 0, %s255
  $region4: #{maas_forward.23} parent=0 // loop_header_branch
    %19 = sbr.rel (%p17) target = $region8
  $region5: #{maas_forward.23} parent=0 // loop_body
    %s21 = ssub.s32 %s16, 1
    %s22 = ssub.s32 %s16, 2
    %s23 = sadd.s32 %s16, 1
    %s24 = ssub.s32 %s16, %s23
    %p25 = scmp.eq.s32.totalorder %s24, 0
    %s27 = sadd.s32 %s26, 1
    %s28 = scalar_select %p25, %s26, %s27
    %p31 = pneg %p25
    %p32 = scmp.eq.s32.totalorder %s16, 1
    %p33 = por %p31, %p32
    %p34 = scmp.ne.s32.totalorder %s26, %s29
    %p35 = scmp.eq.s32.totalorder %s16, 0
    %p36 = por %p34, %p35
    %p37 = scmp.ne.s32.totalorder %s26, %s29
    %p38 = scmp.eq.s32.totalorder %s21, 1
    %p39 = por %p37, %p38
    %p40 = scmp.ne.s32.totalorder %s29, %s30
    %p41 = scmp.eq.s32.totalorder %s21, 0
    %p42 = por %p40, %p41
    %p43 = scmp.ne.s32.totalorder %s29, %s30
    %p44 = scmp.eq.s32.totalorder %s22, 1
    %p45 = por %p43, %p44
    %p47 = scmp.ne.s32.totalorder %s30, %s46
    %p48 = scmp.eq.s32.totalorder %s22, 0
    %p49 = por %p47, %p48
    %s50 = ssub.s32 %s16, %s23
    %p51 = scmp.eq.s32.totalorder %s50, 0
    %s53 = sadd.s32 %s52, 1
    %s54 = scalar_select %p51, %s52, %s53
    %p57 = pneg %p51
    %p58 = scmp.eq.s32.totalorder %s16, 1
    %p59 = por %p57, %p58
    %p60 = scmp.ne.s32.totalorder %s52, %s55
    %p61 = scmp.eq.s32.totalorder %s16, 0
    %p62 = por %p60, %p61
    %p63 = scmp.ne.s32.totalorder %s52, %s55
    %p64 = scmp.eq.s32.totalorder %s21, 1
    %p65 = por %p63, %p64
    %p66 = scmp.ne.s32.totalorder %s55, %s56
    %p67 = scmp.eq.s32.totalorder %s21, 0
    %p68 = por %p66, %p67
    %p69 = scmp.ne.s32.totalorder %s55, %s56
    %p70 = scmp.eq.s32.totalorder %s22, 1
    %p71 = por %p69, %p70
    %p73 = scmp.ne.s32.totalorder %s56, %s72
    %p74 = scmp.eq.s32.totalorder %s22, 0
    %p75 = por %p73, %p74
    %s77 = sadd.s32 %s76, 1
    %p80 = scmp.eq.s32.totalorder %s16, 1
    %p81 = scmp.ne.s32.totalorder %s76, %s78
    %p82 = scmp.eq.s32.totalorder %s16, 0
    %p83 = por %p81, %p82
    %p84 = scmp.ne.s32.totalorder %s76, %s78
    %p85 = scmp.eq.s32.totalorder %s21, 1
    %p86 = por %p84, %p85
    %p87 = scmp.ne.s32.totalorder %s78, %s79
    %p88 = scmp.eq.s32.totalorder %s21, 0
    %p89 = por %p87, %p88
    %p90 = scmp.ne.s32.totalorder %s78, %s79
    %p91 = scmp.eq.s32.totalorder %s22, 1
    %p92 = por %p90, %p91
    %p94 = scmp.ne.s32.totalorder %s79, %s93
    %p95 = scmp.eq.s32.totalorder %s22, 0
    %p96 = por %p94, %p95
    %s97 = ssub.s32 %s16, %s23
    %p98 = scmp.eq.s32.totalorder %s97, 0
    %s100 = sadd.s32 %s99, 1
    %s101 = scalar_select %p98, %s99, %s100
    %p104 = pneg %p98
    %p105 = scmp.eq.s32.totalorder %s16, 1
    %p106 = por %p104, %p105
    %p107 = scmp.ne.s32.totalorder %s99, %s102
    %p108 = scmp.eq.s32.totalorder %s16, 0
    %p109 = por %p107, %p108
    %p110 = scmp.ne.s32.totalorder %s99, %s102
    %p111 = scmp.eq.s32.totalorder %s21, 1
    %p112 = por %p110, %p111
    %p113 = scmp.ne.s32.totalorder %s102, %s103
    %p114 = scmp.eq.s32.totalorder %s21, 0
    %p115 = por %p113, %p114
    %p116 = scmp.ne.s32.totalorder %s102, %s103
    %p117 = scmp.eq.s32.totalorder %s22, 1
    %p118 = por %p116, %p117
    %p120 = scmp.ne.s32.totalorder %s103, %s119
    %p121 = scmp.eq.s32.totalorder %s22, 0
    %p122 = por %p120, %p121
    %s124 = sadd.s32 %s123, 1
    %p127 = scmp.eq.s32.totalorder %s16, 1
    %p128 = scmp.ne.s32.totalorder %s123, %s125
    %p129 = scmp.eq.s32.totalorder %s16, 0
    %p130 = por %p128, %p129
    %p131 = scmp.ne.s32.totalorder %s123, %s125
    %p132 = scmp.eq.s32.totalorder %s21, 1
    %p133 = por %p131, %p132
    %p134 = scmp.ne.s32.totalorder %s125, %s126
    %p135 = scmp.eq.s32.totalorder %s21, 0
    %p136 = por %p134, %p135
    %p137 = scmp.ne.s32.totalorder %s125, %s126
    %p138 = scmp.eq.s32.totalorder %s22, 1
    %p139 = por %p137, %p138
    %p141 = scmp.ne.s32.totalorder %s126, %s140
    %p142 = scmp.eq.s32.totalorder %s22, 0
    %p143 = por %p141, %p142
    %s145 = sadd.s32 %s144, 1
    %p148 = scmp.eq.s32.totalorder %s16, 1
    %p149 = scmp.ne.s32.totalorder %s144, %s146
    %p150 = scmp.eq.s32.totalorder %s16, 0
    %p151 = por %p149, %p150
    %p152 = scmp.ne.s32.totalorder %s144, %s146
    %p153 = scmp.eq.s32.totalorder %s21, 1
    %p154 = por %p152, %p153
    %p155 = scmp.ne.s32.totalorder %s146, %s147
    %p156 = scmp.eq.s32.totalorder %s21, 0
    %p157 = por %p155, %p156
    %p158 = scmp.ne.s32.totalorder %s146, %s147
    %p159 = scmp.eq.s32.totalorder %s22, 1
    %p160 = por %p158, %p159
    %p162 = scmp.ne.s32.totalorder %s147, %s161
    %p163 = scmp.eq.s32.totalorder %s22, 0
    %p164 = por %p162, %p163
    %s166 = sadd.s32 %s165, 1
    %p169 = scmp.eq.s32.totalorder %s16, 1
    %p170 = scmp.ne.s32.totalorder %s165, %s167
    %p171 = scmp.eq.s32.totalorder %s16, 0
    %p172 = por %p170, %p171
    %p173 = scmp.ne.s32.totalorder %s165, %s167
    %p174 = scmp.eq.s32.totalorder %s21, 1
    %p175 = por %p173, %p174
    %p176 = scmp.ne.s32.totalorder %s167, %s168
    %p177 = scmp.eq.s32.totalorder %s21, 0
    %p178 = por %p176, %p177
    %p179 = scmp.ne.s32.totalorder %s167, %s168
    %p180 = scmp.eq.s32.totalorder %s22, 1
    %p181 = por %p179, %p180
    %p183 = scmp.ne.s32.totalorder %s168, %s182
    %p184 = scmp.eq.s32.totalorder %s22, 0
    %p185 = por %p183, %p184
    %s187 = sadd.s32 %s186, 1
    %p190 = scmp.eq.s32.totalorder %s16, 1
    %p191 = scmp.ne.s32.totalorder %s186, %s188
    %p192 = scmp.eq.s32.totalorder %s16, 0
    %p193 = por %p191, %p192
    %p194 = scmp.ne.s32.totalorder %s186, %s188
    %p195 = scmp.eq.s32.totalorder %s21, 1
    %p196 = por %p194, %p195
    %p197 = scmp.ne.s32.totalorder %s188, %s189
    %p198 = scmp.eq.s32.totalorder %s21, 0
    %p199 = por %p197, %p198
    %p200 = scmp.ne.s32.totalorder %s188, %s189
    %p201 = scmp.eq.s32.totalorder %s22, 1
    %p202 = por %p200, %p201
    %p204 = scmp.ne.s32.totalorder %s189, %s203
    %p205 = scmp.eq.s32.totalorder %s22, 0
    %p206 = por %p204, %p205
    %s208 = sadd.s32 %s207, 1
    %p211 = scmp.eq.s32.totalorder %s16, 1
    %p212 = scmp.ne.s32.totalorder %s207, %s209
    %p213 = scmp.eq.s32.totalorder %s16, 0
    %p214 = por %p212, %p213
    %p215 = scmp.ne.s32.totalorder %s207, %s209
    %p216 = scmp.eq.s32.totalorder %s21, 1
    %p217 = por %p215, %p216
    %p218 = scmp.ne.s32.totalorder %s209, %s210
    %p219 = scmp.eq.s32.totalorder %s21, 0
    %p220 = por %p218, %p219
    %p221 = scmp.ne.s32.totalorder %s209, %s210
    %p222 = scmp.eq.s32.totalorder %s22, 1
    %p223 = por %p221, %p222
    %p225 = scmp.ne.s32.totalorder %s210, %s224
    %p226 = scmp.eq.s32.totalorder %s22, 0
    %p227 = por %p225, %p226
    %s229 = sadd.s32 %s228, 1
    %p232 = scmp.eq.s32.totalorder %s16, 1
    %p233 = scmp.ne.s32.totalorder %s228, %s230
    %p234 = scmp.eq.s32.totalorder %s16, 0
    %p235 = por %p233, %p234
    %p236 = scmp.ne.s32.totalorder %s228, %s230
    %p237 = scmp.eq.s32.totalorder %s21, 1
    %p238 = por %p236, %p237
    %p239 = scmp.ne.s32.totalorder %s230, %s231
    %p240 = scmp.eq.s32.totalorder %s21, 0
    %p241 = por %p239, %p240
    %p242 = scmp.ne.s32.totalorder %s230, %s231
    %p243 = scmp.eq.s32.totalorder %s22, 1
    %p244 = por %p242, %p243
    %p246 = scmp.ne.s32.totalorder %s231, %s245
    %p247 = scmp.eq.s32.totalorder %s22, 0
    %p248 = por %p246, %p247
    %s249 = ssub.s32 %s16, %s23
    %p250 = scmp.eq.s32.totalorder %s249, 0
    %s252 = sadd.s32 %s251, 1
    %s253 = scalar_select %p250, %s251, %s252
    %p256 = pneg %p250
    %p257 = scmp.eq.s32.totalorder %s16, 1
    %p258 = por %p256, %p257
    %p259 = scmp.ne.s32.totalorder %s251, %s254
    %p260 = scmp.eq.s32.totalorder %s16, 0
    %p261 = por %p259, %p260
    %p262 = scmp.ne.s32.totalorder %s251, %s254
    %p263 = scmp.eq.s32.totalorder %s21, 1
    %p264 = por %p262, %p263
    %p265 = scmp.ne.s32.totalorder %s254, %s255
    %p266 = scmp.eq.s32.totalorder %s21, 0
    %p267 = por %p265, %p266
    %p268 = scmp.ne.s32.totalorder %s254, %s255
    %p269 = scmp.eq.s32.totalorder %s22, 1
    %p270 = por %p268, %p269
    %p272 = scmp.ne.s32.totalorder %s255, %s271
    %p273 = scmp.eq.s32.totalorder %s22, 0
    %p274 = por %p272, %p273
    %p275 = scmp.le.s32.totalorder 1, %s16
    %p276 = scmp.lt.s32.totalorder %s16, 3
    %p277 = pnand %p275, %p276
    %p278 = pneg %p277
    // Predicated region
    $region9: #{maas_forward.23} parent=5 // pred_check
      _
    $region10: #{maas_forward.23} parent=5 // pred_check_branch
      %280 = sbr.rel (%p277) target = $region12
    $region11: #{maas_forward.23} parent=5 // pred_region
      %s281 = ssub.s32 %s16, 1
      // Predicated region
      $region13: #{maas_forward.23} parent=11 // pred_check
        %p282 = pneg %p89
      $region14: #{maas_forward.23} parent=11 // pred_check_branch
        %284 = sbr.rel (%p282) target = $region16
      $region15: #{maas_forward.23} parent=11 // pred_region
        _
      $region16: #{maas_forward.23} parent=11 // pred_fallthru
        _
      // Predicated region
      $region17: #{maas_forward.23} parent=11 // pred_check
        %p285 = pneg %p136
      $region18: #{maas_forward.23} parent=11 // pred_check_branch
        %287 = sbr.rel (%p285) target = $region20
      $region19: #{maas_forward.23} parent=11 // pred_region
        _
      $region20: #{maas_forward.23} parent=11 // pred_fallthru
        _
      // Predicated region
      $region21: #{maas_forward.23} parent=11 // pred_check
        %p288 = pneg %p157
      $region22: #{maas_forward.23} parent=11 // pred_check_branch
        %290 = sbr.rel (%p288) target = $region24
      $region23: #{maas_forward.23} parent=11 // pred_region
        _
      $region24: #{maas_forward.23} parent=11 // pred_fallthru
        _
      // Predicated region
      $region25: #{maas_forward.23} parent=11 // pred_check
        %p291 = pneg %p178
      $region26: #{maas_forward.23} parent=11 // pred_check_branch
        %293 = sbr.rel (%p291) target = $region28
      $region27: #{maas_forward.23} parent=11 // pred_region
        _
      $region28: #{maas_forward.23} parent=11 // pred_fallthru
        _
      // Predicated region
      $region29: #{maas_forward.23} parent=11 // pred_check
        %p294 = pneg %p199
      $region30: #{maas_forward.23} parent=11 // pred_check_branch
        %296 = sbr.rel (%p294) target = $region32
      $region31: #{maas_forward.23} parent=11 // pred_region
        _
      $region32: #{maas_forward.23} parent=11 // pred_fallthru
        _
      // Predicated region
      $region33: #{maas_forward.23} parent=11 // pred_check
        %p297 = pneg %p220
      $region34: #{maas_forward.23} parent=11 // pred_check_branch
        %299 = sbr.rel (%p297) target = $region36
      $region35: #{maas_forward.23} parent=11 // pred_region
        _
      $region36: #{maas_forward.23} parent=11 // pred_fallthru
        _
      // Predicated region
      $region37: #{maas_forward.23} parent=11 // pred_check
        %p300 = pneg %p241
      $region38: #{maas_forward.23} parent=11 // pred_check_branch
        %302 = sbr.rel (%p300) target = $region40
      $region39: #{maas_forward.23} parent=11 // pred_region
        _
      $region40: #{maas_forward.23} parent=11 // pred_fallthru
        _
    $region12: #{maas_forward.23} parent=5 // pred_fallthru
      _
    %p303 = scmp.lt.s32.totalorder %s16, 2
    // Predicated region
    $region41: #{maas_forward.23} parent=5 // pred_check
      %p304 = pneg %p303
    $region42: #{maas_forward.23} parent=5 // pred_check_branch
      %306 = sbr.rel (%p304) target = $region44
    $region43: #{maas_forward.23} parent=5 // pred_region
      // Predicated region
      $region45: #{maas_forward.23} parent=43 // pred_check
        %p307 = pneg %p36
      $region46: #{maas_forward.23} parent=43 // pred_check_branch
        %309 = sbr.rel (%p307) target = $region48
      $region47: #{maas_forward.23} parent=43 // pred_region
        %p310 = scmp.lt.s32.totalorder %s16, 1
        %s311 = scalar_select %p310, %s16, 1
        %s312 = smul.addr %s311, 8
        %s313 = scalar_lea.vmem %s0, %s312
      $region48: #{maas_forward.23} parent=43 // pred_fallthru
        _
      // Predicated region
      $region49: #{maas_forward.23} parent=43 // pred_check
        %p314 = pneg %p62
      $region50: #{maas_forward.23} parent=43 // pred_check_branch
        %316 = sbr.rel (%p314) target = $region52
      $region51: #{maas_forward.23} parent=43 // pred_region
        %p317 = scmp.lt.s32.totalorder %s16, 1
        %s318 = scalar_select %p317, %s16, 1
        %s319 = smul.addr %s318, 8
        %s320 = scalar_lea.vmem %s1, %s319
      $region52: #{maas_forward.23} parent=43 // pred_fallthru
        _
      // Predicated region
      $region53: #{maas_forward.23} parent=43 // pred_check
        %p321 = pneg %p109
      $region54: #{maas_forward.23} parent=43 // pred_check_branch
        %323 = sbr.rel (%p321) target = $region56
      $region55: #{maas_forward.23} parent=43 // pred_region
        %p324 = scmp.lt.s32.totalorder %s16, 1
        %s325 = scalar_select %p324, %s16, 1
        %s326 = smul.addr %s325, 8
        %s327 = scalar_lea.vmem %s3, %s326
      $region56: #{maas_forward.23} parent=43 // pred_fallthru
        _
    $region44: #{maas_forward.23} parent=5 // pred_fallthru
      _
    %p328 = scmp.le.s32.totalorder 1, %s16
    %p329 = scmp.lt.s32.totalorder %s16, 3
    %p330 = pnand %p328, %p329
    %p331 = pneg %p330
    // Predicated region
    $region57: #{maas_forward.23} parent=5 // pred_check
      _
    $region58: #{maas_forward.23} parent=5 // pred_check_branch
      %333 = sbr.rel (%p330) target = $region60
    $region59: #{maas_forward.23} parent=5 // pred_region
      %s334 = ssub.s32 %s16, 1
      %p335 = scmp.lt.s32.totalorder %s21, 1
      %s336 = scalar_select %p335, %s21, 1
      %s337 = smul.addr %s336, 8
      %s338 = scalar_lea.vmem %s0, %s337
      %p339 = pneg %p42
      %p340 = pneg %p39
      %p341 = scmp.lt.s32.totalorder %s21, 1
      %s342 = scalar_select %p341, %s21, 1
      %s343 = smul.addr %s342, 8
      %s344 = scalar_lea.vmem %s1, %s343
      %p345 = pneg %p68
      %p346 = pneg %p65
      %p347 = pneg %p89
      %p348 = pneg %p86
      %p349 = scmp.lt.s32.totalorder %s21, 1
      %s350 = scalar_select %p349, %s21, 1
      %s351 = smul.addr %s350, 8
      %s352 = scalar_lea.vmem %s3, %s351
      %p353 = pneg %p115
      %p354 = pneg %p112
      %p355 = pneg %p136
      %p356 = pneg %p133
      %p357 = pneg %p157
      %p358 = pneg %p154
      %p359 = pneg %p178
      %p360 = pneg %p175
      %p361 = pneg %p199
      %p362 = pneg %p196
      %p363 = pneg %p220
      %p364 = pneg %p217
      %p365 = pneg %p241
      %p366 = pneg %p238
      %p367 = pneg %p267
      %p368 = pneg %p264
      %p369 = scmp.lt.s32.totalorder %s21, 1
      %s370 = scalar_select %p369, %s21, 1
      %s371 = smul.addr %s370, 8
      %s372 = scalar_lea.vmem %s10, %s371
      %p373 = scmp.lt.s32.totalorder %s21, 1
      %s374 = scalar_select %p373, %s21, 1
      %s375 = smul.addr %s374, 8
      %s376 = scalar_lea.vmem %s0, %s375
      %p377 = scmp.lt.s32.totalorder %s21, 1
      %s378 = scalar_select %p377, %s21, 1
      %s379 = smul.addr %s378, 8
      %s380 = scalar_lea.vmem %s1, %s379
      %p381 = scmp.lt.s32.totalorder %s21, 1
      %s382 = scalar_select %p381, %s21, 1
      %s383 = smul.addr %s382, 8
      %s384 = scalar_lea.vmem %s3, %s383
      %p385 = scmp.lt.s32.totalorder %s21, 1
      %s386 = scalar_select %p385, %s21, 1
      %s387 = smul.addr %s386, 8
      %s388 = scalar_lea.vmem %s10, %s387
      %v389 = vld [vmem:[%s376] sm:$0xff]
      %v390 = vld [vmem:[%s2] sm:$0xff]
      %v391 = vld [vmem:[%s2 + $0x8] sm:$0xff]
      %v392 = vld [vmem:[%s4] sm:$0x1]
      %v394 = vlaneseq
      %v395 = vshrl.u32 %v394, 7
      %v396 = vsub.s32 0, %v395
      %v397 = vrot.slane %v392, %v396
      %v399 = vmul.f32 %v389, %v397
      %v400 = vld [vmem:[%s5] sm:$0x1]
      %v402 = vlaneseq
      %v403 = vshrl.u32 %v402, 7
      %v404 = vsub.s32 0, %v403
      %v405 = vrot.slane %v400, %v404
      %v407 = vadd.f32 %v399, %v405
      %v408 = vmax.f32 %v407, 0.0
      %v409 = vld [vmem:[%s8] sm:$0xff]
      %v410 = vld [vmem:[%s8 + $0x8] sm:$0xff]
      %v411 = vld [vmem:[%s8 + $0x10] sm:$0xff]
      %v412 = vld [vmem:[%s8 + $0x18] sm:$0xff]
      %vm413 = vcmask 261120
      %v415 = vsel %vm413, %v408, 0
      %417 = vmatprep.subr.mxu0 0.0
      %418 = vmatpush1.msra.mxu0 %v409
      %419 = vmatprep.subr.mxu0 0.0
      %420 = vmatpush1.msra.mxu0 %v410
      %421 = vmatprep.subr.mxu0 0.0
      %422 = vmatpush1.msra.mxu0 %v411
      %423 = vmatprep.subr.mxu0 0.0
      %424 = vmatpush1.msra.mxu0 %v412
      %425 = vmatprep.subr.mxu0 0.0
      %426 = vmatpush1.msra.mxu0 0.0
      %427 = vmatprep.subr.mxu0 0.0
      %428 = vmatpush1.msra.mxu0 0.0
      %429 = vmatprep.subr.mxu0 0.0
      %430 = vmatpush1.msra.mxu0 0.0
      %431 = vmatprep.subr.mxu0 0.0
      %432 = vmatpush1.msra.mxu0 0.0
      %433 = vmatprep.subr.mxu0 0.0
      %434 = vmatpush1.msra.mxu0 0.0
      %435 = vmatprep.subr.mxu0 0.0
      %436 = vmatpush1.msra.mxu0 0.0
      %437 = vmatprep.subr.mxu0 0.0
      %438 = vmatpush1.msra.mxu0 0.0
      %439 = vmatprep.subr.mxu0 0.0
      %440 = vmatpush1.msra.mxu0 0.0
      %441 = vmatprep.subr.mxu0 0.0
      %442 = vmatpush1.msra.mxu0 0.0
      %443 = vmatprep.subr.mxu0 0.0
      %444 = vmatpush1.msra.mxu0 0.0
      %445 = vmatprep.subr.mxu0 0.0
      %446 = vmatpush1.msra.mxu0 0.0
      %447 = vmatprep.subr.mxu0 0.0
      %448 = vmatpush1.msra.mxu0 0.0
      %449 = vmatprep.subr.mxu0 0.0
      %450 = vmatpush1.msra.mxu0 0.0
      %451 = vmatprep.subr.mxu0 0.0
      %452 = vmatpush1.msra.mxu0 0.0
      %453 = vmatprep.subr.mxu0 0.0
      %454 = vmatpush1.msra.mxu0 0.0
      %455 = vmatprep.subr.mxu0 0.0
      %456 = vmatpush1.msra.mxu0 0.0
      %457 = vmatprep.subr.mxu0 0.0
      %458 = vmatpush1.msra.mxu0 0.0
      %459 = vmatprep.subr.mxu0 0.0
      %460 = vmatpush1.msra.mxu0 0.0
      %461 = vmatprep.subr.mxu0 0.0
      %462 = vmatpush1.msra.mxu0 0.0
      %463 = vmatprep.subr.mxu0 0.0
      %464 = vmatpush1.msra.mxu0 0.0
      %465 = vmatprep.subr.mxu0 0.0
      %466 = vmatpush1.msra.mxu0 0.0
      %467 = vmatprep.subr.mxu0 0.0
      %468 = vmatpush1.msra.mxu0 0.0
      %469 = vmatprep.subr.mxu0 0.0
      %470 = vmatpush1.msra.mxu0 0.0
      %471 = vmatprep.subr.mxu0 0.0
      %472 = vmatpush1.msra.mxu0 0.0
      %473 = vmatprep.subr.mxu0 0.0
      %474 = vmatpush1.msra.mxu0 0.0
      %475 = vmatprep.subr.mxu0 0.0
      %476 = vmatpush1.msra.mxu0 0.0
      %477 = vmatprep.subr.mxu0 0.0
      %478 = vmatpush1.msra.mxu0 0.0
      %479 = vmatprep.subr.mxu0 0.0
      %480 = vmatpush1.msra.mxu0 0.0
      %481 = vmatprep.mubr.f32.mxu0 0.0
      %482 = vmatmul.mubr.f32.gmra.mrb[0].mxu0 %v415
      %v483 = vpop.f32.mrb[0].mxu0
      %v484 = vadd.f32 0.0, %v483
      %v485 = vpop.f32.mrb[0].mxu0
      %486 = vdwg.mxu0
      %v488 = vcombine.high %v389, %v389
      %v490 = vunpack.c.l.s4 1966171168
      %v491 = vunpack.c.0.s8 %v490
      %v492 = vlaneseq
      %v493 = vshrl.u32 %v492, 7
      %v494 = vsub.s32 %v491, %v493
      %v495 = vrot.slane %v389, %v494
      %v497 = vunpack.c.l.s4 1966171168
      %v498 = vunpack.c.0.s8 %v497
      %v499 = vlaneseq
      %v500 = vshrl.u32 %v499, 7
      %v501 = vsub.s32 %v498, %v500
      %v502 = vrot.slane %v488, %v501
      %v503 = vcombine.high %v495, %v495
      %v504 = vcombine.high %v502, %v502
      %v506 = vunpack.c.l.s4 1966171168
      %v507 = vunpack.c.0.s8 %v506
      %v508 = vlaneseq
      %v509 = vshrl.u32 %v508, 7
      %v510 = vsub.s32 %v507, %v509
      %v511 = vrot.slane %v495, %v510
      %v513 = vunpack.c.l.s4 1966171168
      %v514 = vunpack.c.0.s8 %v513
      %v515 = vlaneseq
      %v516 = vshrl.u32 %v515, 7
      %v517 = vsub.s32 %v514, %v516
      %v518 = vrot.slane %v502, %v517
      %v520 = vunpack.c.l.s4 1966171168
      %v521 = vunpack.c.0.s8 %v520
      %v522 = vlaneseq
      %v523 = vshrl.u32 %v522, 7
      %v524 = vsub.s32 %v521, %v523
      %v525 = vrot.slane %v503, %v524
      %v527 = vunpack.c.l.s4 1966171168
      %v528 = vunpack.c.0.s8 %v527
      %v529 = vlaneseq
      %v530 = vshrl.u32 %v529, 7
      %v531 = vsub.s32 %v528, %v530
      %v532 = vrot.slane %v504, %v531
      %v533 = vcombine.high %v511, %v511
      %v534 = vcombine.high %v518, %v518
      %v535 = vcombine.high %v525, %v525
      %v536 = vcombine.high %v532, %v532
      %v537 = vlaneseq
      %v538 = vshrl.u32 %v537, 7
      %v539 = vsub.s32 0, %v538
      %v540 = vrot.slane %v511, %v539
      %v541 = vlaneseq
      %v542 = vshrl.u32 %v541, 7
      %v543 = vsub.s32 0, %v542
      %v544 = vrot.slane %v525, %v543
      %v545 = vlaneseq
      %v546 = vshrl.u32 %v545, 7
      %v547 = vsub.s32 0, %v546
      %v548 = vrot.slane %v533, %v547
      %v549 = vlaneseq
      %v550 = vshrl.u32 %v549, 7
      %v551 = vsub.s32 0, %v550
      %v552 = vrot.slane %v535, %v551
      %v553 = vlaneseq
      %v554 = vshrl.u32 %v553, 7
      %v555 = vsub.s32 0, %v554
      %v556 = vrot.slane %v518, %v555
      %v557 = vlaneseq
      %v558 = vshrl.u32 %v557, 7
      %v559 = vsub.s32 0, %v558
      %v560 = vrot.slane %v532, %v559
      %v561 = vlaneseq
      %v562 = vshrl.u32 %v561, 7
      %v563 = vsub.s32 0, %v562
      %v564 = vrot.slane %v534, %v563
      %v565 = vlaneseq
      %v566 = vshrl.u32 %v565, 7
      %v567 = vsub.s32 0, %v566
      %v568 = vrot.slane %v536, %v567
      %v577 = vsub.f32 %v390, %v540
      %v578 = vsub.f32 %v391, %v540
      %v579 = vsub.f32 %v390, %v544
      %v580 = vsub.f32 %v391, %v544
      %v581 = vsub.f32 %v390, %v548
      %v582 = vsub.f32 %v391, %v548
      %v583 = vsub.f32 %v390, %v552
      %v584 = vsub.f32 %v391, %v552
      %v585 = vsub.f32 %v390, %v556
      %v586 = vsub.f32 %v391, %v556
      %v587 = vsub.f32 %v390, %v560
      %v588 = vsub.f32 %v391, %v560
      %v589 = vsub.f32 %v390, %v564
      %v590 = vsub.f32 %v391, %v564
      %v591 = vsub.f32 %v390, %v568
      %v592 = vsub.f32 %v391, %v568
      %v593 = vld [vmem:[%s6] sm:$0x1]
      %v595 = vlaneseq
      %v596 = vshrl.u32 %v595, 7
      %v597 = vsub.s32 0, %v596
      %v598 = vrot.slane %v593, %v597
      %v600 = vmul.f32 %v577, %v598
      %v601 = vmul.f32 %v578, %v598
      %v602 = vmul.f32 %v579, %v598
      %v603 = vmul.f32 %v580, %v598
      %v604 = vmul.f32 %v581, %v598
      %v605 = vmul.f32 %v582, %v598
      %v606 = vmul.f32 %v583, %v598
      %v607 = vmul.f32 %v584, %v598
      %v608 = vmul.f32 %v585, %v598
      %v609 = vmul.f32 %v586, %v598
      %v610 = vmul.f32 %v587, %v598
      %v611 = vmul.f32 %v588, %v598
      %v612 = vmul.f32 %v589, %v598
      %v613 = vmul.f32 %v590, %v598
      %v614 = vmul.f32 %v591, %v598
      %v615 = vmul.f32 %v592, %v598
      %v616 = vld [vmem:[%s7] sm:$0x1]
      %v618 = vlaneseq
      %v619 = vshrl.u32 %v618, 7
      %v620 = vsub.s32 0, %v619
      %v621 = vrot.slane %v616, %v620
      %v623 = vadd.f32 %v600, %v621
      %v624 = vadd.f32 %v601, %v621
      %v625 = vadd.f32 %v602, %v621
      %v626 = vadd.f32 %v603, %v621
      %v627 = vadd.f32 %v604, %v621
      %v628 = vadd.f32 %v605, %v621
      %v629 = vadd.f32 %v606, %v621
      %v630 = vadd.f32 %v607, %v621
      %v631 = vadd.f32 %v608, %v621
      %v632 = vadd.f32 %v609, %v621
      %v633 = vadd.f32 %v610, %v621
      %v634 = vadd.f32 %v611, %v621
      %v635 = vadd.f32 %v612, %v621
      %v636 = vadd.f32 %v613, %v621
      %v637 = vadd.f32 %v614, %v621
      %v638 = vadd.f32 %v615, %v621
      %v639 = vmax.f32 %v623, 0.0
      %v640 = vmax.f32 %v624, 0.0
      %v641 = vmax.f32 %v625, 0.0
      %v642 = vmax.f32 %v626, 0.0
      %v643 = vmax.f32 %v627, 0.0
      %v644 = vmax.f32 %v628, 0.0
      %v645 = vmax.f32 %v629, 0.0
      %v646 = vmax.f32 %v630, 0.0
      %v647 = vmax.f32 %v631, 0.0
      %v648 = vmax.f32 %v632, 0.0
      %v649 = vmax.f32 %v633, 0.0
      %v650 = vmax.f32 %v634, 0.0
      %v651 = vmax.f32 %v635, 0.0
      %v652 = vmax.f32 %v636, 0.0
      %v653 = vmax.f32 %v637, 0.0
      %v654 = vmax.f32 %v638, 0.0
      %v655 = vld [vmem:[%s9] sm:$0xff]
      %v656 = vld [vmem:[%s9 + $0x8] sm:$0xff]
      %v657 = vld [vmem:[%s9 + $0x10] sm:$0xff]
      %v658 = vld [vmem:[%s9 + $0x18] sm:$0xff]
      %v660 = vsel %vm413, %v639, 0
      %v663 = vsel %vm413, %v640, 0
      %v666 = vsel %vm413, %v641, 0
      %v669 = vsel %vm413, %v642, 0
      %v672 = vsel %vm413, %v643, 0
      %v675 = vsel %vm413, %v644, 0
      %v678 = vsel %vm413, %v645, 0
      %v681 = vsel %vm413, %v646, 0
      %v684 = vsel %vm413, %v647, 0
      %v687 = vsel %vm413, %v648, 0
      %v690 = vsel %vm413, %v649, 0
      %v693 = vsel %vm413, %v650, 0
      %v696 = vsel %vm413, %v651, 0
      %v699 = vsel %vm413, %v652, 0
      %v702 = vsel %vm413, %v653, 0
      %v705 = vsel %vm413, %v654, 0
      %707 = vmatprep.subr.mxu0 0.0
      %708 = vmatpush1.msra.mxu0 %v655
      %709 = vmatprep.subr.mxu0 0.0
      %710 = vmatpush1.msra.mxu0 %v656
      %711 = vmatprep.subr.mxu0 0.0
      %712 = vmatpush1.msra.mxu0 %v657
      %713 = vmatprep.subr.mxu0 0.0
      %714 = vmatpush1.msra.mxu0 %v658
      %715 = vmatprep.subr.mxu0 0.0
      %716 = vmatpush1.msra.mxu0 0.0
      %717 = vmatprep.subr.mxu0 0.0
      %718 = vmatpush1.msra.mxu0 0.0
      %719 = vmatprep.subr.mxu0 0.0
      %720 = vmatpush1.msra.mxu0 0.0
      %721 = vmatprep.subr.mxu0 0.0
      %722 = vmatpush1.msra.mxu0 0.0
      %723 = vmatprep.subr.mxu0 0.0
      %724 = vmatpush1.msra.mxu0 0.0
      %725 = vmatprep.subr.mxu0 0.0
      %726 = vmatpush1.msra.mxu0 0.0
      %727 = vmatprep.subr.mxu0 0.0
      %728 = vmatpush1.msra.mxu0 0.0
      %729 = vmatprep.subr.mxu0 0.0
      %730 = vmatpush1.msra.mxu0 0.0
      %731 = vmatprep.subr.mxu0 0.0
      %732 = vmatpush1.msra.mxu0 0.0
      %733 = vmatprep.subr.mxu0 0.0
      %734 = vmatpush1.msra.mxu0 0.0
      %735 = vmatprep.subr.mxu0 0.0
      %736 = vmatpush1.msra.mxu0 0.0
      %737 = vmatprep.subr.mxu0 0.0
      %738 = vmatpush1.msra.mxu0 0.0
      %739 = vmatprep.subr.mxu0 0.0
      %740 = vmatpush1.msra.mxu0 0.0
      %741 = vmatprep.subr.mxu0 0.0
      %742 = vmatpush1.msra.mxu0 0.0
      %743 = vmatprep.subr.mxu0 0.0
      %744 = vmatpush1.msra.mxu0 0.0
      %745 = vmatprep.subr.mxu0 0.0
      %746 = vmatpush1.msra.mxu0 0.0
      %747 = vmatprep.subr.mxu0 0.0
      %748 = vmatpush1.msra.mxu0 0.0
      %749 = vmatprep.subr.mxu0 0.0
      %750 = vmatpush1.msra.mxu0 0.0
      %751 = vmatprep.subr.mxu0 0.0
      %752 = vmatpush1.msra.mxu0 0.0
      %753 = vmatprep.subr.mxu0 0.0
      %754 = vmatpush1.msra.mxu0 0.0
      %755 = vmatprep.subr.mxu0 0.0
      %756 = vmatpush1.msra.mxu0 0.0
      %757 = vmatprep.subr.mxu0 0.0
      %758 = vmatpush1.msra.mxu0 0.0
      %759 = vmatprep.subr.mxu0 0.0
      %760 = vmatpush1.msra.mxu0 0.0
      %761 = vmatprep.subr.mxu0 0.0
      %762 = vmatpush1.msra.mxu0 0.0
      %763 = vmatprep.subr.mxu0 0.0
      %764 = vmatpush1.msra.mxu0 0.0
      %765 = vmatprep.subr.mxu0 0.0
      %766 = vmatpush1.msra.mxu0 0.0
      %767 = vmatprep.subr.mxu0 0.0
      %768 = vmatpush1.msra.mxu0 0.0
      %769 = vmatprep.subr.mxu0 0.0
      %770 = vmatpush1.msra.mxu0 0.0
      %771 = vmatprep.mubr.f32.mxu0 0.0
      %772 = vmatmul.mubr.f32.gmra.mrb[0].mxu0 %v660
      %v773 = vpop.f32.mrb[0].mxu0
      %v774 = vadd.f32 0.0, %v773
      %v775 = vpop.f32.mrb[0].mxu0
      %776 = vmatprep.mubr.f32.mxu0 0.0
      %777 = vmatmul.mubr.f32.gmra.mrb[0].mxu0 %v663
      %v778 = vpop.f32.mrb[0].mxu0
      %v779 = vadd.f32 0.0, %v778
      %v780 = vpop.f32.mrb[0].mxu0
      %781 = vmatprep.mubr.f32.mxu0 0.0
      %782 = vmatmul.mubr.f32.gmra.mrb[0].mxu0 %v666
      %v783 = vpop.f32.mrb[0].mxu0
      %v784 = vadd.f32 0.0, %v783
      %v785 = vpop.f32.mrb[0].mxu0
      %786 = vmatprep.mubr.f32.mxu0 0.0
      %787 = vmatmul.mubr.f32.gmra.mrb[0].mxu0 %v669
      %v788 = vpop.f32.mrb[0].mxu0
      %v789 = vadd.f32 0.0, %v788
      %v790 = vpop.f32.mrb[0].mxu0
      %791 = vmatprep.mubr.f32.mxu0 0.0
      %792 = vmatmul.mubr.f32.gmra.mrb[0].mxu0 %v672
      %v793 = vpop.f32.mrb[0].mxu0
      %v794 = vadd.f32 0.0, %v793
      %v795 = vpop.f32.mrb[0].mxu0
      %796 = vmatprep.mubr.f32.mxu0 0.0
      %797 = vmatmul.mubr.f32.gmra.mrb[0].mxu0 %v675
      %v798 = vpop.f32.mrb[0].mxu0
      %v799 = vadd.f32 0.0, %v798
      %v800 = vpop.f32.mrb[0].mxu0
      %801 = vmatprep.mubr.f32.mxu0 0.0
      %802 = vmatmul.mubr.f32.gmra.mrb[0].mxu0 %v678
      %v803 = vpop.f32.mrb[0].mxu0
      %v804 = vadd.f32 0.0, %v803
      %v805 = vpop.f32.mrb[0].mxu0
      %806 = vmatprep.mubr.f32.mxu0 0.0
      %807 = vmatmul.mubr.f32.gmra.mrb[0].mxu0 %v681
      %v808 = vpop.f32.mrb[0].mxu0
      %v809 = vadd.f32 0.0, %v808
      %v810 = vpop.f32.mrb[0].mxu0
      %811 = vmatprep.mubr.f32.mxu0 0.0
      %812 = vmatmul.mubr.f32.gmra.mrb[0].mxu0 %v684
      %v813 = vpop.f32.mrb[0].mxu0
      %v814 = vadd.f32 0.0, %v813
      %v815 = vpop.f32.mrb[0].mxu0
      %816 = vmatprep.mubr.f32.mxu0 0.0
      %817 = vmatmul.mubr.f32.gmra.mrb[0].mxu0 %v687
      %v818 = vpop.f32.mrb[0].mxu0
      %v819 = vadd.f32 0.0, %v818
      %v820 = vpop.f32.mrb[0].mxu0
      %821 = vmatprep.mubr.f32.mxu0 0.0
      %822 = vmatmul.mubr.f32.gmra.mrb[0].mxu0 %v690
      %v823 = vpop.f32.mrb[0].mxu0
      %v824 = vadd.f32 0.0, %v823
      %v825 = vpop.f32.mrb[0].mxu0
      %826 = vmatprep.mubr.f32.mxu0 0.0
      %827 = vmatmul.mubr.f32.gmra.mrb[0].mxu0 %v693
      %v828 = vpop.f32.mrb[0].mxu0
      %v829 = vadd.f32 0.0, %v828
      %v830 = vpop.f32.mrb[0].mxu0
      %831 = vmatprep.mubr.f32.mxu0 0.0
      %832 = vmatmul.mubr.f32.gmra.mrb[0].mxu0 %v696
      %v833 = vpop.f32.mrb[0].mxu0
      %v834 = vadd.f32 0.0, %v833
      %v835 = vpop.f32.mrb[0].mxu0
      %836 = vmatprep.mubr.f32.mxu0 0.0
      %837 = vmatmul.mubr.f32.gmra.mrb[0].mxu0 %v699
      %v838 = vpop.f32.mrb[0].mxu0
      %v839 = vadd.f32 0.0, %v838
      %v840 = vpop.f32.mrb[0].mxu0
      %841 = vmatprep.mubr.f32.mxu0 0.0
      %842 = vmatmul.mubr.f32.gmra.mrb[0].mxu0 %v702
      %v843 = vpop.f32.mrb[0].mxu0
      %v844 = vadd.f32 0.0, %v843
      %v845 = vpop.f32.mrb[0].mxu0
      %846 = vmatprep.mubr.f32.mxu0 0.0
      %847 = vmatmul.mubr.f32.gmra.mrb[0].mxu0 %v705
      %v848 = vpop.f32.mrb[0].mxu0
      %v849 = vadd.f32 0.0, %v848
      %v850 = vpop.f32.mrb[0].mxu0
      %851 = vdwg.mxu0
      %v852 = vld [vmem:[%s380] sm:$0xff]
      %v853 = vlaneseq
      %v854 = vshrl.u32 %v853, 7
      %v855 = vsub.s32 0, %v854
      %v856 = vrot.slane %v852, %v855
      %858 = vbcast.lane.b32.xlu0 %v856, 256
      %v859 = vpop.permute.xlu0 %858
      %s861 = sor.u32 256, 8
      %862 = vbcast.lane.b32.xlu0 %v856, %s861
      %v863 = vpop.permute.xlu0 %862
      %v864 = vlaneseq
      %v865 = vshrl.u32 %v864, 7
      %v866 = vsub.s32 1, %v865
      %v867 = vrot.slane %v852, %v866
      %869 = vbcast.lane.b32.xlu0 %v867, 256
      %v870 = vpop.permute.xlu0 %869
      %s872 = sor.u32 256, 8
      %873 = vbcast.lane.b32.xlu0 %v867, %s872
      %v874 = vpop.permute.xlu0 %873
      %v875 = vlaneseq
      %v876 = vshrl.u32 %v875, 7
      %v877 = vsub.s32 2, %v876
      %v878 = vrot.slane %v852, %v877
      %880 = vbcast.lane.b32.xlu0 %v878, 256
      %v881 = vpop.permute.xlu0 %880
      %s883 = sor.u32 256, 8
      %884 = vbcast.lane.b32.xlu0 %v878, %s883
      %v885 = vpop.permute.xlu0 %884
      %v886 = vlaneseq
      %v887 = vshrl.u32 %v886, 7
      %v888 = vsub.s32 3, %v887
      %v889 = vrot.slane %v852, %v888
      %891 = vbcast.lane.b32.xlu0 %v889, 256
      %v892 = vpop.permute.xlu0 %891
      %s894 = sor.u32 256, 8
      %895 = vbcast.lane.b32.xlu0 %v889, %s894
      %v896 = vpop.permute.xlu0 %895
      %v897 = vlaneseq
      %v898 = vshrl.u32 %v897, 7
      %v899 = vsub.s32 4, %v898
      %v900 = vrot.slane %v852, %v899
      %902 = vbcast.lane.b32.xlu0 %v900, 256
      %v903 = vpop.permute.xlu0 %902
      %s905 = sor.u32 256, 8
      %906 = vbcast.lane.b32.xlu0 %v900, %s905
      %v907 = vpop.permute.xlu0 %906
      %v908 = vlaneseq
      %v909 = vshrl.u32 %v908, 7
      %v910 = vsub.s32 5, %v909
      %v911 = vrot.slane %v852, %v910
      %913 = vbcast.lane.b32.xlu0 %v911, 256
      %v914 = vpop.permute.xlu0 %913
      %s916 = sor.u32 256, 8
      %917 = vbcast.lane.b32.xlu0 %v911, %s916
      %v918 = vpop.permute.xlu0 %917
      %v919 = vlaneseq
      %v920 = vshrl.u32 %v919, 7
      %v921 = vsub.s32 6, %v920
      %v922 = vrot.slane %v852, %v921
      %924 = vbcast.lane.b32.xlu0 %v922, 256
      %v925 = vpop.permute.xlu0 %924
      %s927 = sor.u32 256, 8
      %928 = vbcast.lane.b32.xlu0 %v922, %s927
      %v929 = vpop.permute.xlu0 %928
      %v930 = vlaneseq
      %v931 = vshrl.u32 %v930, 7
      %v932 = vsub.s32 7, %v931
      %v933 = vrot.slane %v852, %v932
      %935 = vbcast.lane.b32.xlu0 %v933, 256
      %v936 = vpop.permute.xlu0 %935
      %s938 = sor.u32 256, 8
      %939 = vbcast.lane.b32.xlu0 %v933, %s938
      %v940 = vpop.permute.xlu0 %939
      %vm941 = vcmp.gt.f32.partialorder %v859, 0.0
      %vm942 = vcmp.gt.f32.partialorder %v863, 0.0
      %vm943 = vcmp.gt.f32.partialorder %v870, 0.0
      %vm944 = vcmp.gt.f32.partialorder %v874, 0.0
      %vm945 = vcmp.gt.f32.partialorder %v881, 0.0
      %vm946 = vcmp.gt.f32.partialorder %v885, 0.0
      %vm947 = vcmp.gt.f32.partialorder %v892, 0.0
      %vm948 = vcmp.gt.f32.partialorder %v896, 0.0
      %vm949 = vcmp.gt.f32.partialorder %v903, 0.0
      %vm950 = vcmp.gt.f32.partialorder %v907, 0.0
      %vm951 = vcmp.gt.f32.partialorder %v914, 0.0
      %vm952 = vcmp.gt.f32.partialorder %v918, 0.0
      %vm953 = vcmp.gt.f32.partialorder %v925, 0.0
      %vm954 = vcmp.gt.f32.partialorder %v929, 0.0
      %vm955 = vcmp.gt.f32.partialorder %v936, 0.0
      %vm956 = vcmp.gt.f32.partialorder %v940, 0.0
      %v957 = vsel %vm941, 1, 0
      %v958 = vsel %vm942, 1, 0
      %v959 = vsel %vm943, 1, 0
      %v960 = vsel %vm944, 1, 0
      %v961 = vsel %vm945, 1, 0
      %v962 = vsel %vm946, 1, 0
      %v963 = vsel %vm947, 1, 0
      %v964 = vsel %vm948, 1, 0
      %v965 = vsel %vm949, 1, 0
      %v966 = vsel %vm950, 1, 0
      %v967 = vsel %vm951, 1, 0
      %v968 = vsel %vm952, 1, 0
      %v969 = vsel %vm953, 1, 0
      %v970 = vsel %vm954, 1, 0
      %v971 = vsel %vm955, 1, 0
      %v972 = vsel %vm956, 1, 0
      %vm973 = vcmp.eq.s32.totalorder %v957, 1
      %vm974 = vcmp.eq.s32.totalorder %v958, 1
      %vm975 = vcmp.eq.s32.totalorder %v959, 1
      %vm976 = vcmp.eq.s32.totalorder %v960, 1
      %vm977 = vcmp.eq.s32.totalorder %v961, 1
      %vm978 = vcmp.eq.s32.totalorder %v962, 1
      %vm979 = vcmp.eq.s32.totalorder %v963, 1
      %vm980 = vcmp.eq.s32.totalorder %v964, 1
      %vm981 = vcmp.eq.s32.totalorder %v965, 1
      %vm982 = vcmp.eq.s32.totalorder %v966, 1
      %vm983 = vcmp.eq.s32.totalorder %v967, 1
      %vm984 = vcmp.eq.s32.totalorder %v968, 1
      %vm985 = vcmp.eq.s32.totalorder %v969, 1
      %vm986 = vcmp.eq.s32.totalorder %v970, 1
      %vm987 = vcmp.eq.s32.totalorder %v971, 1
      %vm988 = vcmp.eq.s32.totalorder %v972, 1
      %v989 = vsel %vm973, %v774, -1e+30
      %v990 = vsel %vm974, %v779, -1e+30
      %v991 = vsel %vm975, %v784, -1e+30
      %v992 = vsel %vm976, %v789, -1e+30
      %v993 = vsel %vm977, %v794, -1e+30
      %v994 = vsel %vm978, %v799, -1e+30
      %v995 = vsel %vm979, %v804, -1e+30
      %v996 = vsel %vm980, %v809, -1e+30
      %v997 = vsel %vm981, %v814, -1e+30
      %v998 = vsel %vm982, %v819, -1e+30
      %v999 = vsel %vm983, %v824, -1e+30
      %v1000 = vsel %vm984, %v829, -1e+30
      %v1001 = vsel %vm985, %v834, -1e+30
      %v1002 = vsel %vm986, %v839, -1e+30
      %v1003 = vsel %vm987, %v844, -1e+30
      %v1004 = vsel %vm988, %v849, -1e+30
      %vm1005 = vcmask 130048
      %v1006 = vsel %vm1005, %v989, -inf
      %v1007 = vsel %vm1005, %v990, -inf
      %v1008 = vmax.f32 %v1006, %v1007
      %v1009 = vrot.slane %v1008, 4
      %v1010 = vmax.f32 %v1008, %v1009
      %v1011 = vrot.slane %v1010, 2
      %v1012 = vmax.f32 %v1010, %v1011
      %v1013 = vrot.slane %v1012, 1
      %v1014 = vmax.f32 %v1012, %v1013
      %v1015 = vsel %vm1005, %v991, -inf
      %v1016 = vsel %vm1005, %v992, -inf
      %v1017 = vmax.f32 %v1015, %v1016
      %v1018 = vrot.slane %v1017, 4
      %v1019 = vmax.f32 %v1017, %v1018
      %v1020 = vrot.slane %v1019, 2
      %v1021 = vmax.f32 %v1019, %v1020
      %v1022 = vrot.slane %v1021, 1
      %v1023 = vmax.f32 %v1021, %v1022
      %v1024 = vsel %vm1005, %v993, -inf
      %v1025 = vsel %vm1005, %v994, -inf
      %v1026 = vmax.f32 %v1024, %v1025
      %v1027 = vrot.slane %v1026, 4
      %v1028 = vmax.f32 %v1026, %v1027
      %v1029 = vrot.slane %v1028, 2
      %v1030 = vmax.f32 %v1028, %v1029
      %v1031 = vrot.slane %v1030, 1
      %v1032 = vmax.f32 %v1030, %v1031
      %v1033 = vsel %vm1005, %v995, -inf
      %v1034 = vsel %vm1005, %v996, -inf
      %v1035 = vmax.f32 %v1033, %v1034
      %v1036 = vrot.slane %v1035, 4
      %v1037 = vmax.f32 %v1035, %v1036
      %v1038 = vrot.slane %v1037, 2
      %v1039 = vmax.f32 %v1037, %v1038
      %v1040 = vrot.slane %v1039, 1
      %v1041 = vmax.f32 %v1039, %v1040
      %v1042 = vsel %vm1005, %v997, -inf
      %v1043 = vsel %vm1005, %v998, -inf
      %v1044 = vmax.f32 %v1042, %v1043
      %v1045 = vrot.slane %v1044, 4
      %v1046 = vmax.f32 %v1044, %v1045
      %v1047 = vrot.slane %v1046, 2
      %v1048 = vmax.f32 %v1046, %v1047
      %v1049 = vrot.slane %v1048, 1
      %v1050 = vmax.f32 %v1048, %v1049
      %v1051 = vsel %vm1005, %v999, -inf
      %v1052 = vsel %vm1005, %v1000, -inf
      %v1053 = vmax.f32 %v1051, %v1052
      %v1054 = vrot.slane %v1053, 4
      %v1055 = vmax.f32 %v1053, %v1054
      %v1056 = vrot.slane %v1055, 2
      %v1057 = vmax.f32 %v1055, %v1056
      %v1058 = vrot.slane %v1057, 1
      %v1059 = vmax.f32 %v1057, %v1058
      %v1060 = vsel %vm1005, %v1001, -inf
      %v1061 = vsel %vm1005, %v1002, -inf
      %v1062 = vmax.f32 %v1060, %v1061
      %v1063 = vrot.slane %v1062, 4
      %v1064 = vmax.f32 %v1062, %v1063
      %v1065 = vrot.slane %v1064, 2
      %v1066 = vmax.f32 %v1064, %v1065
      %v1067 = vrot.slane %v1066, 1
      %v1068 = vmax.f32 %v1066, %v1067
      %v1069 = vsel %vm1005, %v1003, -inf
      %v1070 = vsel %vm1005, %v1004, -inf
      %v1071 = vmax.f32 %v1069, %v1070
      %v1072 = vrot.slane %v1071, 4
      %v1073 = vmax.f32 %v1071, %v1072
      %v1074 = vrot.slane %v1073, 2
      %v1075 = vmax.f32 %v1073, %v1074
      %v1076 = vrot.slane %v1075, 1
      %v1077 = vmax.f32 %v1075, %v1076
      %v1078 = vsel %vm1005, %v852, -inf
      %1079 = vmax.xlane.f32.xlu0 %v1078
      %v1080 = vpop.xlane.xlu0 %1079
      %vm1081 = vcmp.gt.f32.partialorder %v1080, 0.0
      %v1083 = vrot.slane %v484, 1
      %v1084 = vrot.slane %v484, 2
      %v1085 = vrot.slane %v484, 3
      %v1086 = vrot.slane %v484, 4
      %v1087 = vrot.slane %v484, 5
      %v1088 = vrot.slane %v484, 6
      %v1089 = vrot.slane %v484, 7
      %v1098 = vadd.f32 %v1014, %v484
      %v1099 = vadd.f32 %v1023, %v1083
      %v1100 = vadd.f32 %v1032, %v1084
      %v1101 = vadd.f32 %v1041, %v1085
      %v1102 = vadd.f32 %v1050, %v1086
      %v1103 = vadd.f32 %v1059, %v1087
      %v1104 = vadd.f32 %v1068, %v1088
      %v1105 = vadd.f32 %v1077, %v1089
      %v1106 = vsel %vm1081, 1, 0
      %vm1107 = vcmp.eq.s32.totalorder %v1106, 1
      %v1116 = vrot.slane %v1099, 7
      %vm1117 = vcmask 1041409
      %v1118 = vsel %vm1117, %v1116, %v1098
      %v1119 = vrot.slane %v1100, 6
      %vm1120 = vcmask 1042434
      %v1121 = vsel %vm1120, %v1119, %v1118
      %v1122 = vrot.slane %v1101, 5
      %vm1123 = vcmask 1043459
      %v1124 = vsel %vm1123, %v1122, %v1121
      %v1125 = vrot.slane %v1102, 4
      %vm1126 = vcmask 1044484
      %v1127 = vsel %vm1126, %v1125, %v1124
      %v1128 = vrot.slane %v1103, 3
      %vm1129 = vcmask 1045509
      %v1130 = vsel %vm1129, %v1128, %v1127
      %v1131 = vrot.slane %v1104, 2
      %vm1132 = vcmask 1046534
      %v1133 = vsel %vm1132, %v1131, %v1130
      %v1134 = vrot.slane %v1105, 1
      %vm1135 = vcmask 1047559
      %v1136 = vsel %vm1135, %v1134, %v1133
      %v1138 = vsel %vm1107, %v1136, 0.0
      %v1139 = vld [vmem:[%s384] sm:$0xff]
      %1141 = vrot.lane.b32.xlu0 %v1138, 16
      %v1142 = vpop.permute.xlu0 %1141
      %v1144 = vsel %vm1005, %v1139, %v1142
      %1145 = vst.msk [vmem:[%s388] sm:$0xff] %vm413, %v1144
      %p1146 = scmp.lt.s32.totalorder %s21, 1
      %s1147 = scalar_select %p1146, %s21, 1
      %s1148 = smul.addr %s1147, 8
      %s1149 = scalar_lea.vmem %s10, %s1148
      // Predicated region
      $region61: #{maas_forward.23} parent=59 // pred_check
        %p1150 = pneg %p264
      $region62: #{maas_forward.23} parent=59 // pred_check_branch
        %1152 = sbr.rel (%p1150) target = $region64
      $region63: #{maas_forward.23} parent=59 // pred_region
        _
      $region64: #{maas_forward.23} parent=59 // pred_fallthru
        _
    $region60: #{maas_forward.23} parent=5 // pred_fallthru
      _
    %p1153 = scmp.le.s32.totalorder 2, %s16
    // Predicated region
    $region65: #{maas_forward.23} parent=5 // pred_check
      %p1154 = pneg %p1153
    $region66: #{maas_forward.23} parent=5 // pred_check_branch
      %1156 = sbr.rel (%p1154) target = $region68
    $region67: #{maas_forward.23} parent=5 // pred_region
      %s1157 = ssub.s32 %s16, 2
      // Predicated region
      $region69: #{maas_forward.23} parent=67 // pred_check
        %p1158 = pneg %p270
      $region70: #{maas_forward.23} parent=67 // pred_check_branch
        %1160 = sbr.rel (%p1158) target = $region72
      $region71: #{maas_forward.23} parent=67 // pred_region
        %p1161 = scmp.lt.s32.totalorder %s22, 1
        %s1162 = scalar_select %p1161, %s22, 1
        %s1163 = smul.addr %s1162, 8
        %s1164 = scalar_lea.vmem %s10, %s1163
      $region72: #{maas_forward.23} parent=67 // pred_fallthru
        _
    $region68: #{maas_forward.23} parent=5 // pred_fallthru
      _
  $region6: #{maas_forward.23} parent=0 // loop_footer
    %s20 = sadd.s32 1, %s16
  $region7: #{maas_forward.23} parent=0 // loop_footer_branch
    %15 = sbr.rel target = $region3
  $region8: #{maas_forward.23} parent=0 // loop_exit
    _

// kernel: maas_forward.25
$region0: #{maas_forward.25}
  #allocation0 [shape = 'u32[]', space=smem, size = 0x4, offset = 0x4, fixed_abs, tag = 'smem constant byte address 0x4 - core index']
  #allocation1 [shape = 'u32[144,128]{1,0:T(1,128)}', space=vmem, size = 0x12000, scoped, tag = 'internal scratch']
  %s0 = inlined_call_operand.vmem [shape: f32[16,32], index: 0, kind: input, shape index: {}, may-alias: {0,2}]
  %s1 = inlined_call_operand.vmem [shape: f32[16,16], index: 1, kind: input, shape index: {}]
  %s2 = inlined_call_operand.vmem [shape: f32[16,32], index: 2, kind: input, shape index: {}, may-alias: {0,2}]
  %s3 = inlined_call_operand.vmem [shape: f32[16,16], index: 3, kind: input, shape index: {}]
  %s4 = inlined_call_operand.vmem [shape: f32[1,32], index: 4, kind: input, shape index: {}]
  %s5 = inlined_call_operand.vmem [shape: f32[1,32], index: 5, kind: input, shape index: {}]
  %s6 = inlined_call_operand.vmem [shape: f32[1,32], index: 6, kind: input, shape index: {}]
  %s7 = inlined_call_operand.vmem [shape: f32[1,32], index: 7, kind: input, shape index: {}]
  %s8 = inlined_call_operand.vmem [shape: f32[32,16], index: 8, kind: input, shape index: {}]
  %s9 = inlined_call_operand.vmem [shape: f32[32,16], index: 9, kind: input, shape index: {}]
  %s10 = inlined_call_operand.vmem [shape: f32[32,2], index: 10, kind: input, shape index: {}]
  %s11 = inlined_call_operand.vmem [shape: f32[1,2], index: 11, kind: input, shape index: {}]
  %s12 = inlined_call_operand.vmem [shape: f32[16,2], index: 12, kind: output, shape index: {}]
  %s13 = sld [smem:[#allocation0]]
  $region81: #{maas_forward.25} parent=0
    _
  %s15 = ssub.s32 1, %s13
  %s16 = scalar_select 0, %s15, %s13
  loop: start=0, step=1, limit=4
  $region2: #{maas_forward.25} parent=0 // loop_pre_header
    _
  $region3: #{maas_forward.25} parent=0 // loop_header
    %s18 = sphi 0, %s22
    %p19 = scmp.ge.s32.totalorder %s18, 4
    %s28 = sphi 0, %s30
    %s31 = sphi 0, %s28
    %s32 = sphi 0, %s31
    %s48 = sphi 0, %s32
    %s54 = sphi 0, %s56
    %s57 = sphi 0, %s54
    %s58 = sphi 0, %s57
    %s74 = sphi 0, %s58
    %s78 = sphi 0, %s78
    %s80 = sphi 0, %s78
    %s81 = sphi 0, %s80
    %s95 = sphi 0, %s81
    %s101 = sphi 0, %s103
    %s104 = sphi 0, %s101
    %s105 = sphi 0, %s104
    %s121 = sphi 0, %s105
    %s125 = sphi 0, %s125
    %s127 = sphi 0, %s125
    %s128 = sphi 0, %s127
    %s142 = sphi 0, %s128
    %s146 = sphi 0, %s146
    %s148 = sphi 0, %s146
    %s149 = sphi 0, %s148
    %s163 = sphi 0, %s149
    %s167 = sphi 0, %s167
    %s169 = sphi 0, %s167
    %s170 = sphi 0, %s169
    %s184 = sphi 0, %s170
    %s188 = sphi 0, %s188
    %s190 = sphi 0, %s188
    %s191 = sphi 0, %s190
    %s205 = sphi 0, %s191
    %s209 = sphi 0, %s209
    %s211 = sphi 0, %s209
    %s212 = sphi 0, %s211
    %s226 = sphi 0, %s212
    %s230 = sphi 0, %s230
    %s232 = sphi 0, %s230
    %s233 = sphi 0, %s232
    %s247 = sphi 0, %s233
    %s251 = sphi 0, %s251
    %s253 = sphi 0, %s251
    %s254 = sphi 0, %s253
    %s268 = sphi 0, %s254
    %s272 = sphi 0, %s272
    %s274 = sphi 0, %s272
    %s275 = sphi 0, %s274
    %s289 = sphi 0, %s275
    %s295 = sphi 0, %s297
    %s298 = sphi 0, %s295
    %s299 = sphi 0, %s298
    %s315 = sphi 0, %s299
  $region4: #{maas_forward.25} parent=0 // loop_header_branch
    %21 = sbr.rel (%p19) target = $region8
  $region5: #{maas_forward.25} parent=0 // loop_body
    %s23 = ssub.s32 %s18, 1
    %s24 = ssub.s32 %s18, 2
    %s25 = sadd.s32 %s18, 1
    %s26 = ssub.s32 %s18, %s25
    %p27 = scmp.eq.s32.totalorder %s26, 0
    %s29 = sadd.s32 %s28, 1
    %s30 = scalar_select %p27, %s28, %s29
    %p33 = pneg %p27
    %p34 = scmp.eq.s32.totalorder %s18, 1
    %p35 = por %p33, %p34
    %p36 = scmp.ne.s32.totalorder %s28, %s31
    %p37 = scmp.eq.s32.totalorder %s18, 0
    %p38 = por %p36, %p37
    %p39 = scmp.ne.s32.totalorder %s28, %s31
    %p40 = scmp.eq.s32.totalorder %s23, 1
    %p41 = por %p39, %p40
    %p42 = scmp.ne.s32.totalorder %s31, %s32
    %p43 = scmp.eq.s32.totalorder %s23, 0
    %p44 = por %p42, %p43
    %p45 = scmp.ne.s32.totalorder %s31, %s32
    %p46 = scmp.eq.s32.totalorder %s24, 1
    %p47 = por %p45, %p46
    %p49 = scmp.ne.s32.totalorder %s32, %s48
    %p50 = scmp.eq.s32.totalorder %s24, 0
    %p51 = por %p49, %p50
    %s52 = ssub.s32 %s18, %s25
    %p53 = scmp.eq.s32.totalorder %s52, 0
    %s55 = sadd.s32 %s54, 1
    %s56 = scalar_select %p53, %s54, %s55
    %p59 = pneg %p53
    %p60 = scmp.eq.s32.totalorder %s18, 1
    %p61 = por %p59, %p60
    %p62 = scmp.ne.s32.totalorder %s54, %s57
    %p63 = scmp.eq.s32.totalorder %s18, 0
    %p64 = por %p62, %p63
    %p65 = scmp.ne.s32.totalorder %s54, %s57
    %p66 = scmp.eq.s32.totalorder %s23, 1
    %p67 = por %p65, %p66
    %p68 = scmp.ne.s32.totalorder %s57, %s58
    %p69 = scmp.eq.s32.totalorder %s23, 0
    %p70 = por %p68, %p69
    %p71 = scmp.ne.s32.totalorder %s57, %s58
    %p72 = scmp.eq.s32.totalorder %s24, 1
    %p73 = por %p71, %p72
    %p75 = scmp.ne.s32.totalorder %s58, %s74
    %p76 = scmp.eq.s32.totalorder %s24, 0
    %p77 = por %p75, %p76
    %s79 = sadd.s32 %s78, 1
    %p82 = scmp.eq.s32.totalorder %s18, 1
    %p83 = scmp.ne.s32.totalorder %s78, %s80
    %p84 = scmp.eq.s32.totalorder %s18, 0
    %p85 = por %p83, %p84
    %p86 = scmp.ne.s32.totalorder %s78, %s80
    %p87 = scmp.eq.s32.totalorder %s23, 1
    %p88 = por %p86, %p87
    %p89 = scmp.ne.s32.totalorder %s80, %s81
    %p90 = scmp.eq.s32.totalorder %s23, 0
    %p91 = por %p89, %p90
    %p92 = scmp.ne.s32.totalorder %s80, %s81
    %p93 = scmp.eq.s32.totalorder %s24, 1
    %p94 = por %p92, %p93
    %p96 = scmp.ne.s32.totalorder %s81, %s95
    %p97 = scmp.eq.s32.totalorder %s24, 0
    %p98 = por %p96, %p97
    %s99 = ssub.s32 %s18, %s25
    %p100 = scmp.eq.s32.totalorder %s99, 0
    %s102 = sadd.s32 %s101, 1
    %s103 = scalar_select %p100, %s101, %s102
    %p106 = pneg %p100
    %p107 = scmp.eq.s32.totalorder %s18, 1
    %p108 = por %p106, %p107
    %p109 = scmp.ne.s32.totalorder %s101, %s104
    %p110 = scmp.eq.s32.totalorder %s18, 0
    %p111 = por %p109, %p110
    %p112 = scmp.ne.s32.totalorder %s101, %s104
    %p113 = scmp.eq.s32.totalorder %s23, 1
    %p114 = por %p112, %p113
    %p115 = scmp.ne.s32.totalorder %s104, %s105
    %p116 = scmp.eq.s32.totalorder %s23, 0
    %p117 = por %p115, %p116
    %p118 = scmp.ne.s32.totalorder %s104, %s105
    %p119 = scmp.eq.s32.totalorder %s24, 1
    %p120 = por %p118, %p119
    %p122 = scmp.ne.s32.totalorder %s105, %s121
    %p123 = scmp.eq.s32.totalorder %s24, 0
    %p124 = por %p122, %p123
    %s126 = sadd.s32 %s125, 1
    %p129 = scmp.eq.s32.totalorder %s18, 1
    %p130 = scmp.ne.s32.totalorder %s125, %s127
    %p131 = scmp.eq.s32.totalorder %s18, 0
    %p132 = por %p130, %p131
    %p133 = scmp.ne.s32.totalorder %s125, %s127
    %p134 = scmp.eq.s32.totalorder %s23, 1
    %p135 = por %p133, %p134
    %p136 = scmp.ne.s32.totalorder %s127, %s128
    %p137 = scmp.eq.s32.totalorder %s23, 0
    %p138 = por %p136, %p137
    %p139 = scmp.ne.s32.totalorder %s127, %s128
    %p140 = scmp.eq.s32.totalorder %s24, 1
    %p141 = por %p139, %p140
    %p143 = scmp.ne.s32.totalorder %s128, %s142
    %p144 = scmp.eq.s32.totalorder %s24, 0
    %p145 = por %p143, %p144
    %s147 = sadd.s32 %s146, 1
    %p150 = scmp.eq.s32.totalorder %s18, 1
    %p151 = scmp.ne.s32.totalorder %s146, %s148
    %p152 = scmp.eq.s32.totalorder %s18, 0
    %p153 = por %p151, %p152
    %p154 = scmp.ne.s32.totalorder %s146, %s148
    %p155 = scmp.eq.s32.totalorder %s23, 1
    %p156 = por %p154, %p155
    %p157 = scmp.ne.s32.totalorder %s148, %s149
    %p158 = scmp.eq.s32.totalorder %s23, 0
    %p159 = por %p157, %p158
    %p160 = scmp.ne.s32.totalorder %s148, %s149
    %p161 = scmp.eq.s32.totalorder %s24, 1
    %p162 = por %p160, %p161
    %p164 = scmp.ne.s32.totalorder %s149, %s163
    %p165 = scmp.eq.s32.totalorder %s24, 0
    %p166 = por %p164, %p165
    %s168 = sadd.s32 %s167, 1
    %p171 = scmp.eq.s32.totalorder %s18, 1
    %p172 = scmp.ne.s32.totalorder %s167, %s169
    %p173 = scmp.eq.s32.totalorder %s18, 0
    %p174 = por %p172, %p173
    %p175 = scmp.ne.s32.totalorder %s167, %s169
    %p176 = scmp.eq.s32.totalorder %s23, 1
    %p177 = por %p175, %p176
    %p178 = scmp.ne.s32.totalorder %s169, %s170
    %p179 = scmp.eq.s32.totalorder %s23, 0
    %p180 = por %p178, %p179
    %p181 = scmp.ne.s32.totalorder %s169, %s170
    %p182 = scmp.eq.s32.totalorder %s24, 1
    %p183 = por %p181, %p182
    %p185 = scmp.ne.s32.totalorder %s170, %s184
    %p186 = scmp.eq.s32.totalorder %s24, 0
    %p187 = por %p185, %p186
    %s189 = sadd.s32 %s188, 1
    %p192 = scmp.eq.s32.totalorder %s18, 1
    %p193 = scmp.ne.s32.totalorder %s188, %s190
    %p194 = scmp.eq.s32.totalorder %s18, 0
    %p195 = por %p193, %p194
    %p196 = scmp.ne.s32.totalorder %s188, %s190
    %p197 = scmp.eq.s32.totalorder %s23, 1
    %p198 = por %p196, %p197
    %p199 = scmp.ne.s32.totalorder %s190, %s191
    %p200 = scmp.eq.s32.totalorder %s23, 0
    %p201 = por %p199, %p200
    %p202 = scmp.ne.s32.totalorder %s190, %s191
    %p203 = scmp.eq.s32.totalorder %s24, 1
    %p204 = por %p202, %p203
    %p206 = scmp.ne.s32.totalorder %s191, %s205
    %p207 = scmp.eq.s32.totalorder %s24, 0
    %p208 = por %p206, %p207
    %s210 = sadd.s32 %s209, 1
    %p213 = scmp.eq.s32.totalorder %s18, 1
    %p214 = scmp.ne.s32.totalorder %s209, %s211
    %p215 = scmp.eq.s32.totalorder %s18, 0
    %p216 = por %p214, %p215
    %p217 = scmp.ne.s32.totalorder %s209, %s211
    %p218 = scmp.eq.s32.totalorder %s23, 1
    %p219 = por %p217, %p218
    %p220 = scmp.ne.s32.totalorder %s211, %s212
    %p221 = scmp.eq.s32.totalorder %s23, 0
    %p222 = por %p220, %p221
    %p223 = scmp.ne.s32.totalorder %s211, %s212
    %p224 = scmp.eq.s32.totalorder %s24, 1
    %p225 = por %p223, %p224
    %p227 = scmp.ne.s32.totalorder %s212, %s226
    %p228 = scmp.eq.s32.totalorder %s24, 0
    %p229 = por %p227, %p228
    %s231 = sadd.s32 %s230, 1
    %p234 = scmp.eq.s32.totalorder %s18, 1
    %p235 = scmp.ne.s32.totalorder %s230, %s232
    %p236 = scmp.eq.s32.totalorder %s18, 0
    %p237 = por %p235, %p236
    %p238 = scmp.ne.s32.totalorder %s230, %s232
    %p239 = scmp.eq.s32.totalorder %s23, 1
    %p240 = por %p238, %p239
    %p241 = scmp.ne.s32.totalorder %s232, %s233
    %p242 = scmp.eq.s32.totalorder %s23, 0
    %p243 = por %p241, %p242
    %p244 = scmp.ne.s32.totalorder %s232, %s233
    %p245 = scmp.eq.s32.totalorder %s24, 1
    %p246 = por %p244, %p245
    %p248 = scmp.ne.s32.totalorder %s233, %s247
    %p249 = scmp.eq.s32.totalorder %s24, 0
    %p250 = por %p248, %p249
    %s252 = sadd.s32 %s251, 1
    %p255 = scmp.eq.s32.totalorder %s18, 1
    %p256 = scmp.ne.s32.totalorder %s251, %s253
    %p257 = scmp.eq.s32.totalorder %s18, 0
    %p258 = por %p256, %p257
    %p259 = scmp.ne.s32.totalorder %s251, %s253
    %p260 = scmp.eq.s32.totalorder %s23, 1
    %p261 = por %p259, %p260
    %p262 = scmp.ne.s32.totalorder %s253, %s254
    %p263 = scmp.eq.s32.totalorder %s23, 0
    %p264 = por %p262, %p263
    %p265 = scmp.ne.s32.totalorder %s253, %s254
    %p266 = scmp.eq.s32.totalorder %s24, 1
    %p267 = por %p265, %p266
    %p269 = scmp.ne.s32.totalorder %s254, %s268
    %p270 = scmp.eq.s32.totalorder %s24, 0
    %p271 = por %p269, %p270
    %s273 = sadd.s32 %s272, 1
    %p276 = scmp.eq.s32.totalorder %s18, 1
    %p277 = scmp.ne.s32.totalorder %s272, %s274
    %p278 = scmp.eq.s32.totalorder %s18, 0
    %p279 = por %p277, %p278
    %p280 = scmp.ne.s32.totalorder %s272, %s274
    %p281 = scmp.eq.s32.totalorder %s23, 1
    %p282 = por %p280, %p281
    %p283 = scmp.ne.s32.totalorder %s274, %s275
    %p284 = scmp.eq.s32.totalorder %s23, 0
    %p285 = por %p283, %p284
    %p286 = scmp.ne.s32.totalorder %s274, %s275
    %p287 = scmp.eq.s32.totalorder %s24, 1
    %p288 = por %p286, %p287
    %p290 = scmp.ne.s32.totalorder %s275, %s289
    %p291 = scmp.eq.s32.totalorder %s24, 0
    %p292 = por %p290, %p291
    %s293 = ssub.s32 %s18, %s25
    %p294 = scmp.eq.s32.totalorder %s293, 0
    %s296 = sadd.s32 %s295, 1
    %s297 = scalar_select %p294, %s295, %s296
    %p300 = pneg %p294
    %p301 = scmp.eq.s32.totalorder %s18, 1
    %p302 = por %p300, %p301
    %p303 = scmp.ne.s32.totalorder %s295, %s298
    %p304 = scmp.eq.s32.totalorder %s18, 0
    %p305 = por %p303, %p304
    %p306 = scmp.ne.s32.totalorder %s295, %s298
    %p307 = scmp.eq.s32.totalorder %s23, 1
    %p308 = por %p306, %p307
    %p309 = scmp.ne.s32.totalorder %s298, %s299
    %p310 = scmp.eq.s32.totalorder %s23, 0
    %p311 = por %p309, %p310
    %p312 = scmp.ne.s32.totalorder %s298, %s299
    %p313 = scmp.eq.s32.totalorder %s24, 1
    %p314 = por %p312, %p313
    %p316 = scmp.ne.s32.totalorder %s299, %s315
    %p317 = scmp.eq.s32.totalorder %s24, 0
    %p318 = por %p316, %p317
    %p319 = scmp.le.s32.totalorder 1, %s18
    %p320 = scmp.lt.s32.totalorder %s18, 3
    %p321 = pnand %p319, %p320
    %p322 = pneg %p321
    // Predicated region
    $region9: #{maas_forward.25} parent=5 // pred_check
      _
    $region10: #{maas_forward.25} parent=5 // pred_check_branch
      %324 = sbr.rel (%p321) target = $region12
    $region11: #{maas_forward.25} parent=5 // pred_region
      %s325 = ssub.s32 %s18, 1
      // Predicated region
      $region13: #{maas_forward.25} parent=11 // pred_check
        %p326 = pneg %p91
      $region14: #{maas_forward.25} parent=11 // pred_check_branch
        %328 = sbr.rel (%p326) target = $region16
      $region15: #{maas_forward.25} parent=11 // pred_region
        _
      $region16: #{maas_forward.25} parent=11 // pred_fallthru
        _
      // Predicated region
      $region17: #{maas_forward.25} parent=11 // pred_check
        %p329 = pneg %p138
      $region18: #{maas_forward.25} parent=11 // pred_check_branch
        %331 = sbr.rel (%p329) target = $region20
      $region19: #{maas_forward.25} parent=11 // pred_region
        _
      $region20: #{maas_forward.25} parent=11 // pred_fallthru
        _
      // Predicated region
      $region21: #{maas_forward.25} parent=11 // pred_check
        %p332 = pneg %p159
      $region22: #{maas_forward.25} parent=11 // pred_check_branch
        %334 = sbr.rel (%p332) target = $region24
      $region23: #{maas_forward.25} parent=11 // pred_region
        _
      $region24: #{maas_forward.25} parent=11 // pred_fallthru
        _
      // Predicated region
      $region25: #{maas_forward.25} parent=11 // pred_check
        %p335 = pneg %p180
      $region26: #{maas_forward.25} parent=11 // pred_check_branch
        %337 = sbr.rel (%p335) target = $region28
      $region27: #{maas_forward.25} parent=11 // pred_region
        _
      $region28: #{maas_forward.25} parent=11 // pred_fallthru
        _
      // Predicated region
      $region29: #{maas_forward.25} parent=11 // pred_check
        %p338 = pneg %p201
      $region30: #{maas_forward.25} parent=11 // pred_check_branch
        %340 = sbr.rel (%p338) target = $region32
      $region31: #{maas_forward.25} parent=11 // pred_region
        _
      $region32: #{maas_forward.25} parent=11 // pred_fallthru
        _
      // Predicated region
      $region33: #{maas_forward.25} parent=11 // pred_check
        %p341 = pneg %p222
      $region34: #{maas_forward.25} parent=11 // pred_check_branch
        %343 = sbr.rel (%p341) target = $region36
      $region35: #{maas_forward.25} parent=11 // pred_region
        _
      $region36: #{maas_forward.25} parent=11 // pred_fallthru
        _
      // Predicated region
      $region37: #{maas_forward.25} parent=11 // pred_check
        %p344 = pneg %p243
      $region38: #{maas_forward.25} parent=11 // pred_check_branch
        %346 = sbr.rel (%p344) target = $region40
      $region39: #{maas_forward.25} parent=11 // pred_region
        _
      $region40: #{maas_forward.25} parent=11 // pred_fallthru
        _
      // Predicated region
      $region41: #{maas_forward.25} parent=11 // pred_check
        %p347 = pneg %p264
      $region42: #{maas_forward.25} parent=11 // pred_check_branch
        %349 = sbr.rel (%p347) target = $region44
      $region43: #{maas_forward.25} parent=11 // pred_region
        _
      $region44: #{maas_forward.25} parent=11 // pred_fallthru
        _
      // Predicated region
      $region45: #{maas_forward.25} parent=11 // pred_check
        %p350 = pneg %p285
      $region46: #{maas_forward.25} parent=11 // pred_check_branch
        %352 = sbr.rel (%p350) target = $region48
      $region47: #{maas_forward.25} parent=11 // pred_region
        _
      $region48: #{maas_forward.25} parent=11 // pred_fallthru
        _
    $region12: #{maas_forward.25} parent=5 // pred_fallthru
      _
    %p353 = scmp.lt.s32.totalorder %s18, 2
    // Predicated region
    $region49: #{maas_forward.25} parent=5 // pred_check
      %p354 = pneg %p353
    $region50: #{maas_forward.25} parent=5 // pred_check_branch
      %356 = sbr.rel (%p354) target = $region52
    $region51: #{maas_forward.25} parent=5 // pred_region
      // Predicated region
      $region53: #{maas_forward.25} parent=51 // pred_check
        %p357 = pneg %p38
      $region54: #{maas_forward.25} parent=51 // pred_check_branch
        %359 = sbr.rel (%p357) target = $region56
      $region55: #{maas_forward.25} parent=51 // pred_region
        %p360 = scmp.lt.s32.totalorder %s18, 1
        %s361 = scalar_select %p360, %s18, 1
        %s362 = smul.addr %s361, 8
        %s363 = scalar_lea.vmem %s0, %s362
      $region56: #{maas_forward.25} parent=51 // pred_fallthru
        _
      // Predicated region
      $region57: #{maas_forward.25} parent=51 // pred_check
        %p364 = pneg %p64
      $region58: #{maas_forward.25} parent=51 // pred_check_branch
        %366 = sbr.rel (%p364) target = $region60
      $region59: #{maas_forward.25} parent=51 // pred_region
        %p367 = scmp.lt.s32.totalorder %s18, 1
        %s368 = scalar_select %p367, %s18, 1
        %s369 = smul.addr %s368, 8
        %s370 = scalar_lea.vmem %s1, %s369
      $region60: #{maas_forward.25} parent=51 // pred_fallthru
        _
      // Predicated region
      $region61: #{maas_forward.25} parent=51 // pred_check
        %p371 = pneg %p111
      $region62: #{maas_forward.25} parent=51 // pred_check_branch
        %373 = sbr.rel (%p371) target = $region64
      $region63: #{maas_forward.25} parent=51 // pred_region
        %p374 = scmp.lt.s32.totalorder %s18, 1
        %s375 = scalar_select %p374, %s18, 1
        %s376 = smul.addr %s375, 8
        %s377 = scalar_lea.vmem %s3, %s376
      $region64: #{maas_forward.25} parent=51 // pred_fallthru
        _
    $region52: #{maas_forward.25} parent=5 // pred_fallthru
      _
    %p378 = scmp.le.s32.totalorder 1, %s18
    %p379 = scmp.lt.s32.totalorder %s18, 3
    %p380 = pnand %p378, %p379
    %p381 = pneg %p380
    // Predicated region
    $region65: #{maas_forward.25} parent=5 // pred_check
      _
    $region66: #{maas_forward.25} parent=5 // pred_check_branch
      %383 = sbr.rel (%p380) target = $region68
    $region67: #{maas_forward.25} parent=5 // pred_region
      %s384 = ssub.s32 %s18, 1
      %p385 = scmp.lt.s32.totalorder %s23, 1
      %s386 = scalar_select %p385, %s23, 1
      %s387 = smul.addr %s386, 8
      %s388 = scalar_lea.vmem %s0, %s387
      %p389 = pneg %p44
      %p390 = pneg %p41
      %p391 = scmp.lt.s32.totalorder %s23, 1
      %s392 = scalar_select %p391, %s23, 1
      %s393 = smul.addr %s392, 8
      %s394 = scalar_lea.vmem %s1, %s393
      %p395 = pneg %p70
      %p396 = pneg %p67
      %p397 = pneg %p91
      %p398 = pneg %p88
      %p399 = scmp.lt.s32.totalorder %s23, 1
      %s400 = scalar_select %p399, %s23, 1
      %s401 = smul.addr %s400, 8
      %s402 = scalar_lea.vmem %s3, %s401
      %p403 = pneg %p117
      %p404 = pneg %p114
      %p405 = pneg %p138
      %p406 = pneg %p135
      %p407 = pneg %p159
      %p408 = pneg %p156
      %p409 = pneg %p180
      %p410 = pneg %p177
      %p411 = pneg %p201
      %p412 = pneg %p198
      %p413 = pneg %p222
      %p414 = pneg %p219
      %p415 = pneg %p243
      %p416 = pneg %p240
      %p417 = pneg %p264
      %p418 = pneg %p261
      %p419 = pneg %p285
      %p420 = pneg %p282
      %p421 = pneg %p311
      %p422 = pneg %p308
      %p423 = scmp.lt.s32.totalorder %s23, 1
      %s424 = scalar_select %p423, %s23, 1
      %s425 = smul.addr %s424, 8
      %s426 = scalar_lea.vmem %s12, %s425
      %p427 = scmp.lt.s32.totalorder %s23, 1
      %s428 = scalar_select %p427, %s23, 1
      %s429 = smul.addr %s428, 8
      %s430 = scalar_lea.vmem %s0, %s429
      %p431 = scmp.lt.s32.totalorder %s23, 1
      %s432 = scalar_select %p431, %s23, 1
      %s433 = smul.addr %s432, 8
      %s434 = scalar_lea.vmem %s1, %s433
      %p435 = scmp.lt.s32.totalorder %s23, 1
      %s436 = scalar_select %p435, %s23, 1
      %s437 = smul.addr %s436, 8
      %s438 = scalar_lea.vmem %s3, %s437
      %p439 = scmp.lt.s32.totalorder %s23, 1
      %s440 = scalar_select %p439, %s23, 1
      %s441 = smul.addr %s440, 8
      %s442 = scalar_lea.vmem %s12, %s441
      %v443 = vld [vmem:[%s430] sm:$0xff]
      %v444 = vld [vmem:[%s2] sm:$0xff]
      %v445 = vld [vmem:[%s2 + $0x8] sm:$0xff]
      %v446 = vld [vmem:[%s4] sm:$0x1]
      %v448 = vlaneseq
      %v449 = vshrl.u32 %v448, 7
      %v450 = vsub.s32 0, %v449
      %v451 = vrot.slane %v446, %v450
      %v453 = vmul.f32 %v443, %v451
      %v454 = vld [vmem:[%s5] sm:$0x1]
      %v456 = vlaneseq
      %v457 = vshrl.u32 %v456, 7
      %v458 = vsub.s32 0, %v457
      %v459 = vrot.slane %v454, %v458
      %v461 = vadd.f32 %v453, %v459
      %v462 = vmax.f32 %v461, 0.0
      %v463 = vld [vmem:[%s8] sm:$0xff]
      %v464 = vld [vmem:[%s8 + $0x8] sm:$0xff]
      %v465 = vld [vmem:[%s8 + $0x10] sm:$0xff]
      %v466 = vld [vmem:[%s8 + $0x18] sm:$0xff]
      %vm467 = vcmask 261120
      %v469 = vsel %vm467, %v462, 0
      %471 = vmatprep.subr.mxu0 0.0
      %472 = vmatpush1.msra.mxu0 %v463
      %473 = vmatprep.subr.mxu0 0.0
      %474 = vmatpush1.msra.mxu0 %v464
      %475 = vmatprep.subr.mxu0 0.0
      %476 = vmatpush1.msra.mxu0 %v465
      %477 = vmatprep.subr.mxu0 0.0
      %478 = vmatpush1.msra.mxu0 %v466
      %479 = vmatprep.subr.mxu0 0.0
      %480 = vmatpush1.msra.mxu0 0.0
      %481 = vmatprep.subr.mxu0 0.0
      %482 = vmatpush1.msra.mxu0 0.0
      %483 = vmatprep.subr.mxu0 0.0
      %484 = vmatpush1.msra.mxu0 0.0
      %485 = vmatprep.subr.mxu0 0.0
      %486 = vmatpush1.msra.mxu0 0.0
      %487 = vmatprep.subr.mxu0 0.0
      %488 = vmatpush1.msra.mxu0 0.0
      %489 = vmatprep.subr.mxu0 0.0
      %490 = vmatpush1.msra.mxu0 0.0
      %491 = vmatprep.subr.mxu0 0.0
      %492 = vmatpush1.msra.mxu0 0.0
      %493 = vmatprep.subr.mxu0 0.0
      %494 = vmatpush1.msra.mxu0 0.0
      %495 = vmatprep.subr.mxu0 0.0
      %496 = vmatpush1.msra.mxu0 0.0
      %497 = vmatprep.subr.mxu0 0.0
      %498 = vmatpush1.msra.mxu0 0.0
      %499 = vmatprep.subr.mxu0 0.0
      %500 = vmatpush1.msra.mxu0 0.0
      %501 = vmatprep.subr.mxu0 0.0
      %502 = vmatpush1.msra.mxu0 0.0
      %503 = vmatprep.subr.mxu0 0.0
      %504 = vmatpush1.msra.mxu0 0.0
      %505 = vmatprep.subr.mxu0 0.0
      %506 = vmatpush1.msra.mxu0 0.0
      %507 = vmatprep.subr.mxu0 0.0
      %508 = vmatpush1.msra.mxu0 0.0
      %509 = vmatprep.subr.mxu0 0.0
      %510 = vmatpush1.msra.mxu0 0.0
      %511 = vmatprep.subr.mxu0 0.0
      %512 = vmatpush1.msra.mxu0 0.0
      %513 = vmatprep.subr.mxu0 0.0
      %514 = vmatpush1.msra.mxu0 0.0
      %515 = vmatprep.subr.mxu0 0.0
      %516 = vmatpush1.msra.mxu0 0.0
      %517 = vmatprep.subr.mxu0 0.0
      %518 = vmatpush1.msra.mxu0 0.0
      %519 = vmatprep.subr.mxu0 0.0
      %520 = vmatpush1.msra.mxu0 0.0
      %521 = vmatprep.subr.mxu0 0.0
      %522 = vmatpush1.msra.mxu0 0.0
      %523 = vmatprep.subr.mxu0 0.0
      %524 = vmatpush1.msra.mxu0 0.0
      %525 = vmatprep.subr.mxu0 0.0
      %526 = vmatpush1.msra.mxu0 0.0
      %527 = vmatprep.subr.mxu0 0.0
      %528 = vmatpush1.msra.mxu0 0.0
      %529 = vmatprep.subr.mxu0 0.0
      %530 = vmatpush1.msra.mxu0 0.0
      %531 = vmatprep.subr.mxu0 0.0
      %532 = vmatpush1.msra.mxu0 0.0
      %533 = vmatprep.subr.mxu0 0.0
      %534 = vmatpush1.msra.mxu0 0.0
      %535 = vmatprep.mubr.f32.mxu0 0.0
      %536 = vmatmul.mubr.f32.gmra.mrb[0].mxu0 %v469
      %v537 = vpop.f32.mrb[0].mxu0
      %v538 = vadd.f32 0.0, %v537
      %v539 = vpop.f32.mrb[0].mxu0
      %540 = vdwg.mxu0
      %v542 = vcombine.high %v443, %v443
      %v544 = vunpack.c.l.s4 1966171168
      %v545 = vunpack.c.0.s8 %v544
      %v546 = vlaneseq
      %v547 = vshrl.u32 %v546, 7
      %v548 = vsub.s32 %v545, %v547
      %v549 = vrot.slane %v443, %v548
      %v551 = vunpack.c.l.s4 1966171168
      %v552 = vunpack.c.0.s8 %v551
      %v553 = vlaneseq
      %v554 = vshrl.u32 %v553, 7
      %v555 = vsub.s32 %v552, %v554
      %v556 = vrot.slane %v542, %v555
      %v557 = vcombine.high %v549, %v549
      %v558 = vcombine.high %v556, %v556
      %v560 = vunpack.c.l.s4 1966171168
      %v561 = vunpack.c.0.s8 %v560
      %v562 = vlaneseq
      %v563 = vshrl.u32 %v562, 7
      %v564 = vsub.s32 %v561, %v563
      %v565 = vrot.slane %v549, %v564
      %v567 = vunpack.c.l.s4 1966171168
      %v568 = vunpack.c.0.s8 %v567
      %v569 = vlaneseq
      %v570 = vshrl.u32 %v569, 7
      %v571 = vsub.s32 %v568, %v570
      %v572 = vrot.slane %v556, %v571
      %v574 = vunpack.c.l.s4 1966171168
      %v575 = vunpack.c.0.s8 %v574
      %v576 = vlaneseq
      %v577 = vshrl.u32 %v576, 7
      %v578 = vsub.s32 %v575, %v577
      %v579 = vrot.slane %v557, %v578
      %v581 = vunpack.c.l.s4 1966171168
      %v582 = vunpack.c.0.s8 %v581
      %v583 = vlaneseq
      %v584 = vshrl.u32 %v583, 7
      %v585 = vsub.s32 %v582, %v584
      %v586 = vrot.slane %v558, %v585
      %v587 = vcombine.high %v565, %v565
      %v588 = vcombine.high %v572, %v572
      %v589 = vcombine.high %v579, %v579
      %v590 = vcombine.high %v586, %v586
      %v591 = vlaneseq
      %v592 = vshrl.u32 %v591, 7
      %v593 = vsub.s32 0, %v592
      %v594 = vrot.slane %v565, %v593
      %v595 = vlaneseq
      %v596 = vshrl.u32 %v595, 7
      %v597 = vsub.s32 0, %v596
      %v598 = vrot.slane %v579, %v597
      %v599 = vlaneseq
      %v600 = vshrl.u32 %v599, 7
      %v601 = vsub.s32 0, %v600
      %v602 = vrot.slane %v587, %v601
      %v603 = vlaneseq
      %v604 = vshrl.u32 %v603, 7
      %v605 = vsub.s32 0, %v604
      %v606 = vrot.slane %v589, %v605
      %v607 = vlaneseq
      %v608 = vshrl.u32 %v607, 7
      %v609 = vsub.s32 0, %v608
      %v610 = vrot.slane %v572, %v609
      %v611 = vlaneseq
      %v612 = vshrl.u32 %v611, 7
      %v613 = vsub.s32 0, %v612
      %v614 = vrot.slane %v586, %v613
      %v615 = vlaneseq
      %v616 = vshrl.u32 %v615, 7
      %v617 = vsub.s32 0, %v616
      %v618 = vrot.slane %v588, %v617
      %v619 = vlaneseq
      %v620 = vshrl.u32 %v619, 7
      %v621 = vsub.s32 0, %v620
      %v622 = vrot.slane %v590, %v621
      %v631 = vsub.f32 %v444, %v594
      %v632 = vsub.f32 %v445, %v594
      %v633 = vsub.f32 %v444, %v598
      %v634 = vsub.f32 %v445, %v598
      %v635 = vsub.f32 %v444, %v602
      %v636 = vsub.f32 %v445, %v602
      %v637 = vsub.f32 %v444, %v606
      %v638 = vsub.f32 %v445, %v606
      %v639 = vsub.f32 %v444, %v610
      %v640 = vsub.f32 %v445, %v610
      %v641 = vsub.f32 %v444, %v614
      %v642 = vsub.f32 %v445, %v614
      %v643 = vsub.f32 %v444, %v618
      %v644 = vsub.f32 %v445, %v618
      %v645 = vsub.f32 %v444, %v622
      %v646 = vsub.f32 %v445, %v622
      %v647 = vld [vmem:[%s6] sm:$0x1]
      %v649 = vlaneseq
      %v650 = vshrl.u32 %v649, 7
      %v651 = vsub.s32 0, %v650
      %v652 = vrot.slane %v647, %v651
      %v654 = vmul.f32 %v631, %v652
      %v655 = vmul.f32 %v632, %v652
      %v656 = vmul.f32 %v633, %v652
      %v657 = vmul.f32 %v634, %v652
      %v658 = vmul.f32 %v635, %v652
      %v659 = vmul.f32 %v636, %v652
      %v660 = vmul.f32 %v637, %v652
      %v661 = vmul.f32 %v638, %v652
      %v662 = vmul.f32 %v639, %v652
      %v663 = vmul.f32 %v640, %v652
      %v664 = vmul.f32 %v641, %v652
      %v665 = vmul.f32 %v642, %v652
      %v666 = vmul.f32 %v643, %v652
      %v667 = vmul.f32 %v644, %v652
      %v668 = vmul.f32 %v645, %v652
      %v669 = vmul.f32 %v646, %v652
      %v670 = vld [vmem:[%s7] sm:$0x1]
      %v672 = vlaneseq
      %v673 = vshrl.u32 %v672, 7
      %v674 = vsub.s32 0, %v673
      %v675 = vrot.slane %v670, %v674
      %v677 = vadd.f32 %v654, %v675
      %v678 = vadd.f32 %v655, %v675
      %v679 = vadd.f32 %v656, %v675
      %v680 = vadd.f32 %v657, %v675
      %v681 = vadd.f32 %v658, %v675
      %v682 = vadd.f32 %v659, %v675
      %v683 = vadd.f32 %v660, %v675
      %v684 = vadd.f32 %v661, %v675
      %v685 = vadd.f32 %v662, %v675
      %v686 = vadd.f32 %v663, %v675
      %v687 = vadd.f32 %v664, %v675
      %v688 = vadd.f32 %v665, %v675
      %v689 = vadd.f32 %v666, %v675
      %v690 = vadd.f32 %v667, %v675
      %v691 = vadd.f32 %v668, %v675
      %v692 = vadd.f32 %v669, %v675
      %v693 = vmax.f32 %v677, 0.0
      %v694 = vmax.f32 %v678, 0.0
      %v695 = vmax.f32 %v679, 0.0
      %v696 = vmax.f32 %v680, 0.0
      %v697 = vmax.f32 %v681, 0.0
      %v698 = vmax.f32 %v682, 0.0
      %v699 = vmax.f32 %v683, 0.0
      %v700 = vmax.f32 %v684, 0.0
      %v701 = vmax.f32 %v685, 0.0
      %v702 = vmax.f32 %v686, 0.0
      %v703 = vmax.f32 %v687, 0.0
      %v704 = vmax.f32 %v688, 0.0
      %v705 = vmax.f32 %v689, 0.0
      %v706 = vmax.f32 %v690, 0.0
      %v707 = vmax.f32 %v691, 0.0
      %v708 = vmax.f32 %v692, 0.0
      %v709 = vld [vmem:[%s9] sm:$0xff]
      %v710 = vld [vmem:[%s9 + $0x8] sm:$0xff]
      %v711 = vld [vmem:[%s9 + $0x10] sm:$0xff]
      %v712 = vld [vmem:[%s9 + $0x18] sm:$0xff]
      %v714 = vsel %vm467, %v693, 0
      %v717 = vsel %vm467, %v694, 0
      %v720 = vsel %vm467, %v695, 0
      %v723 = vsel %vm467, %v696, 0
      %v726 = vsel %vm467, %v697, 0
      %v729 = vsel %vm467, %v698, 0
      %v732 = vsel %vm467, %v699, 0
      %v735 = vsel %vm467, %v700, 0
      %v738 = vsel %vm467, %v701, 0
      %v741 = vsel %vm467, %v702, 0
      %v744 = vsel %vm467, %v703, 0
      %v747 = vsel %vm467, %v704, 0
      %v750 = vsel %vm467, %v705, 0
      %v753 = vsel %vm467, %v706, 0
      %v756 = vsel %vm467, %v707, 0
      %v759 = vsel %vm467, %v708, 0
      %761 = vmatprep.subr.mxu0 0.0
      %762 = vmatpush1.msra.mxu0 %v709
      %763 = vmatprep.subr.mxu0 0.0
      %764 = vmatpush1.msra.mxu0 %v710
      %765 = vmatprep.subr.mxu0 0.0
      %766 = vmatpush1.msra.mxu0 %v711
      %767 = vmatprep.subr.mxu0 0.0
      %768 = vmatpush1.msra.mxu0 %v712
      %769 = vmatprep.subr.mxu0 0.0
      %770 = vmatpush1.msra.mxu0 0.0
      %771 = vmatprep.subr.mxu0 0.0
      %772 = vmatpush1.msra.mxu0 0.0
      %773 = vmatprep.subr.mxu0 0.0
      %774 = vmatpush1.msra.mxu0 0.0
      %775 = vmatprep.subr.mxu0 0.0
      %776 = vmatpush1.msra.mxu0 0.0
      %777 = vmatprep.subr.mxu0 0.0
      %778 = vmatpush1.msra.mxu0 0.0
      %779 = vmatprep.subr.mxu0 0.0
      %780 = vmatpush1.msra.mxu0 0.0
      %781 = vmatprep.subr.mxu0 0.0
      %782 = vmatpush1.msra.mxu0 0.0
      %783 = vmatprep.subr.mxu0 0.0
      %784 = vmatpush1.msra.mxu0 0.0
      %785 = vmatprep.subr.mxu0 0.0
      %786 = vmatpush1.msra.mxu0 0.0
      %787 = vmatprep.subr.mxu0 0.0
      %788 = vmatpush1.msra.mxu0 0.0
      %789 = vmatprep.subr.mxu0 0.0
      %790 = vmatpush1.msra.mxu0 0.0
      %791 = vmatprep.subr.mxu0 0.0
      %792 = vmatpush1.msra.mxu0 0.0
      %793 = vmatprep.subr.mxu0 0.0
      %794 = vmatpush1.msra.mxu0 0.0
      %795 = vmatprep.subr.mxu0 0.0
      %796 = vmatpush1.msra.mxu0 0.0
      %797 = vmatprep.subr.mxu0 0.0
      %798 = vmatpush1.msra.mxu0 0.0
      %799 = vmatprep.subr.mxu0 0.0
      %800 = vmatpush1.msra.mxu0 0.0
      %801 = vmatprep.subr.mxu0 0.0
      %802 = vmatpush1.msra.mxu0 0.0
      %803 = vmatprep.subr.mxu0 0.0
      %804 = vmatpush1.msra.mxu0 0.0
      %805 = vmatprep.subr.mxu0 0.0
      %806 = vmatpush1.msra.mxu0 0.0
      %807 = vmatprep.subr.mxu0 0.0
      %808 = vmatpush1.msra.mxu0 0.0
      %809 = vmatprep.subr.mxu0 0.0
      %810 = vmatpush1.msra.mxu0 0.0
      %811 = vmatprep.subr.mxu0 0.0
      %812 = vmatpush1.msra.mxu0 0.0
      %813 = vmatprep.subr.mxu0 0.0
      %814 = vmatpush1.msra.mxu0 0.0
      %815 = vmatprep.subr.mxu0 0.0
      %816 = vmatpush1.msra.mxu0 0.0
      %817 = vmatprep.subr.mxu0 0.0
      %818 = vmatpush1.msra.mxu0 0.0
      %819 = vmatprep.subr.mxu0 0.0
      %820 = vmatpush1.msra.mxu0 0.0
      %821 = vmatprep.subr.mxu0 0.0
      %822 = vmatpush1.msra.mxu0 0.0
      %823 = vmatprep.subr.mxu0 0.0
      %824 = vmatpush1.msra.mxu0 0.0
      %825 = vmatprep.mubr.f32.mxu0 0.0
      %826 = vmatmul.mubr.f32.gmra.mrb[0].mxu0 %v714
      %v827 = vpop.f32.mrb[0].mxu0
      %v828 = vadd.f32 0.0, %v827
      %v829 = vpop.f32.mrb[0].mxu0
      %830 = vmatprep.mubr.f32.mxu0 0.0
      %831 = vmatmul.mubr.f32.gmra.mrb[0].mxu0 %v717
      %v832 = vpop.f32.mrb[0].mxu0
      %v833 = vadd.f32 0.0, %v832
      %v834 = vpop.f32.mrb[0].mxu0
      %835 = vmatprep.mubr.f32.mxu0 0.0
      %836 = vmatmul.mubr.f32.gmra.mrb[0].mxu0 %v720
      %v837 = vpop.f32.mrb[0].mxu0
      %v838 = vadd.f32 0.0, %v837
      %v839 = vpop.f32.mrb[0].mxu0
      %840 = vmatprep.mubr.f32.mxu0 0.0
      %841 = vmatmul.mubr.f32.gmra.mrb[0].mxu0 %v723
      %v842 = vpop.f32.mrb[0].mxu0
      %v843 = vadd.f32 0.0, %v842
      %v844 = vpop.f32.mrb[0].mxu0
      %845 = vmatprep.mubr.f32.mxu0 0.0
      %846 = vmatmul.mubr.f32.gmra.mrb[0].mxu0 %v726
      %v847 = vpop.f32.mrb[0].mxu0
      %v848 = vadd.f32 0.0, %v847
      %v849 = vpop.f32.mrb[0].mxu0
      %850 = vmatprep.mubr.f32.mxu0 0.0
      %851 = vmatmul.mubr.f32.gmra.mrb[0].mxu0 %v729
      %v852 = vpop.f32.mrb[0].mxu0
      %v853 = vadd.f32 0.0, %v852
      %v854 = vpop.f32.mrb[0].mxu0
      %855 = vmatprep.mubr.f32.mxu0 0.0
      %856 = vmatmul.mubr.f32.gmra.mrb[0].mxu0 %v732
      %v857 = vpop.f32.mrb[0].mxu0
      %v858 = vadd.f32 0.0, %v857
      %v859 = vpop.f32.mrb[0].mxu0
      %860 = vmatprep.mubr.f32.mxu0 0.0
      %861 = vmatmul.mubr.f32.gmra.mrb[0].mxu0 %v735
      %v862 = vpop.f32.mrb[0].mxu0
      %v863 = vadd.f32 0.0, %v862
      %v864 = vpop.f32.mrb[0].mxu0
      %865 = vmatprep.mubr.f32.mxu0 0.0
      %866 = vmatmul.mubr.f32.gmra.mrb[0].mxu0 %v738
      %v867 = vpop.f32.mrb[0].mxu0
      %v868 = vadd.f32 0.0, %v867
      %v869 = vpop.f32.mrb[0].mxu0
      %870 = vmatprep.mubr.f32.mxu0 0.0
      %871 = vmatmul.mubr.f32.gmra.mrb[0].mxu0 %v741
      %v872 = vpop.f32.mrb[0].mxu0
      %v873 = vadd.f32 0.0, %v872
      %v874 = vpop.f32.mrb[0].mxu0
      %875 = vmatprep.mubr.f32.mxu0 0.0
      %876 = vmatmul.mubr.f32.gmra.mrb[0].mxu0 %v744
      %v877 = vpop.f32.mrb[0].mxu0
      %v878 = vadd.f32 0.0, %v877
      %v879 = vpop.f32.mrb[0].mxu0
      %880 = vmatprep.mubr.f32.mxu0 0.0
      %881 = vmatmul.mubr.f32.gmra.mrb[0].mxu0 %v747
      %v882 = vpop.f32.mrb[0].mxu0
      %v883 = vadd.f32 0.0, %v882
      %v884 = vpop.f32.mrb[0].mxu0
      %885 = vmatprep.mubr.f32.mxu0 0.0
      %886 = vmatmul.mubr.f32.gmra.mrb[0].mxu0 %v750
      %v887 = vpop.f32.mrb[0].mxu0
      %v888 = vadd.f32 0.0, %v887
      %v889 = vpop.f32.mrb[0].mxu0
      %890 = vmatprep.mubr.f32.mxu0 0.0
      %891 = vmatmul.mubr.f32.gmra.mrb[0].mxu0 %v753
      %v892 = vpop.f32.mrb[0].mxu0
      %v893 = vadd.f32 0.0, %v892
      %v894 = vpop.f32.mrb[0].mxu0
      %895 = vmatprep.mubr.f32.mxu0 0.0
      %896 = vmatmul.mubr.f32.gmra.mrb[0].mxu0 %v756
      %v897 = vpop.f32.mrb[0].mxu0
      %v898 = vadd.f32 0.0, %v897
      %v899 = vpop.f32.mrb[0].mxu0
      %900 = vmatprep.mubr.f32.mxu0 0.0
      %901 = vmatmul.mubr.f32.gmra.mrb[0].mxu0 %v759
      %v902 = vpop.f32.mrb[0].mxu0
      %v903 = vadd.f32 0.0, %v902
      %v904 = vpop.f32.mrb[0].mxu0
      %905 = vdwg.mxu0
      %v906 = vld [vmem:[%s434] sm:$0xff]
      %v907 = vlaneseq
      %v908 = vshrl.u32 %v907, 7
      %v909 = vsub.s32 0, %v908
      %v910 = vrot.slane %v906, %v909
      %912 = vbcast.lane.b32.xlu0 %v910, 256
      %v913 = vpop.permute.xlu0 %912
      %s915 = sor.u32 256, 8
      %916 = vbcast.lane.b32.xlu0 %v910, %s915
      %v917 = vpop.permute.xlu0 %916
      %v918 = vlaneseq
      %v919 = vshrl.u32 %v918, 7
      %v920 = vsub.s32 1, %v919
      %v921 = vrot.slane %v906, %v920
      %923 = vbcast.lane.b32.xlu0 %v921, 256
      %v924 = vpop.permute.xlu0 %923
      %s926 = sor.u32 256, 8
      %927 = vbcast.lane.b32.xlu0 %v921, %s926
      %v928 = vpop.permute.xlu0 %927
      %v929 = vlaneseq
      %v930 = vshrl.u32 %v929, 7
      %v931 = vsub.s32 2, %v930
      %v932 = vrot.slane %v906, %v931
      %934 = vbcast.lane.b32.xlu0 %v932, 256
      %v935 = vpop.permute.xlu0 %934
      %s937 = sor.u32 256, 8
      %938 = vbcast.lane.b32.xlu0 %v932, %s937
      %v939 = vpop.permute.xlu0 %938
      %v940 = vlaneseq
      %v941 = vshrl.u32 %v940, 7
      %v942 = vsub.s32 3, %v941
      %v943 = vrot.slane %v906, %v942
      %945 = vbcast.lane.b32.xlu0 %v943, 256
      %v946 = vpop.permute.xlu0 %945
      %s948 = sor.u32 256, 8
      %949 = vbcast.lane.b32.xlu0 %v943, %s948
      %v950 = vpop.permute.xlu0 %949
      %v951 = vlaneseq
      %v952 = vshrl.u32 %v951, 7
      %v953 = vsub.s32 4, %v952
      %v954 = vrot.slane %v906, %v953
      %956 = vbcast.lane.b32.xlu0 %v954, 256
      %v957 = vpop.permute.xlu0 %956
      %s959 = sor.u32 256, 8
      %960 = vbcast.lane.b32.xlu0 %v954, %s959
      %v961 = vpop.permute.xlu0 %960
      %v962 = vlaneseq
      %v963 = vshrl.u32 %v962, 7
      %v964 = vsub.s32 5, %v963
      %v965 = vrot.slane %v906, %v964
      %967 = vbcast.lane.b32.xlu0 %v965, 256
      %v968 = vpop.permute.xlu0 %967
      %s970 = sor.u32 256, 8
      %971 = vbcast.lane.b32.xlu0 %v965, %s970
      %v972 = vpop.permute.xlu0 %971
      %v973 = vlaneseq
      %v974 = vshrl.u32 %v973, 7
      %v975 = vsub.s32 6, %v974
      %v976 = vrot.slane %v906, %v975
      %978 = vbcast.lane.b32.xlu0 %v976, 256
      %v979 = vpop.permute.xlu0 %978
      %s981 = sor.u32 256, 8
      %982 = vbcast.lane.b32.xlu0 %v976, %s981
      %v983 = vpop.permute.xlu0 %982
      %v984 = vlaneseq
      %v985 = vshrl.u32 %v984, 7
      %v986 = vsub.s32 7, %v985
      %v987 = vrot.slane %v906, %v986
      %989 = vbcast.lane.b32.xlu0 %v987, 256
      %v990 = vpop.permute.xlu0 %989
      %s992 = sor.u32 256, 8
      %993 = vbcast.lane.b32.xlu0 %v987, %s992
      %v994 = vpop.permute.xlu0 %993
      %vm995 = vcmp.gt.f32.partialorder %v913, 0.0
      %vm996 = vcmp.gt.f32.partialorder %v917, 0.0
      %vm997 = vcmp.gt.f32.partialorder %v924, 0.0
      %vm998 = vcmp.gt.f32.partialorder %v928, 0.0
      %vm999 = vcmp.gt.f32.partialorder %v935, 0.0
      %vm1000 = vcmp.gt.f32.partialorder %v939, 0.0
      %vm1001 = vcmp.gt.f32.partialorder %v946, 0.0
      %vm1002 = vcmp.gt.f32.partialorder %v950, 0.0
      %vm1003 = vcmp.gt.f32.partialorder %v957, 0.0
      %vm1004 = vcmp.gt.f32.partialorder %v961, 0.0
      %vm1005 = vcmp.gt.f32.partialorder %v968, 0.0
      %vm1006 = vcmp.gt.f32.partialorder %v972, 0.0
      %vm1007 = vcmp.gt.f32.partialorder %v979, 0.0
      %vm1008 = vcmp.gt.f32.partialorder %v983, 0.0
      %vm1009 = vcmp.gt.f32.partialorder %v990, 0.0
      %vm1010 = vcmp.gt.f32.partialorder %v994, 0.0
      %v1011 = vsel %vm995, 1, 0
      %v1012 = vsel %vm996, 1, 0
      %v1013 = vsel %vm997, 1, 0
      %v1014 = vsel %vm998, 1, 0
      %v1015 = vsel %vm999, 1, 0
      %v1016 = vsel %vm1000, 1, 0
      %v1017 = vsel %vm1001, 1, 0
      %v1018 = vsel %vm1002, 1, 0
      %v1019 = vsel %vm1003, 1, 0
      %v1020 = vsel %vm1004, 1, 0
      %v1021 = vsel %vm1005, 1, 0
      %v1022 = vsel %vm1006, 1, 0
      %v1023 = vsel %vm1007, 1, 0
      %v1024 = vsel %vm1008, 1, 0
      %v1025 = vsel %vm1009, 1, 0
      %v1026 = vsel %vm1010, 1, 0
      %vm1027 = vcmp.eq.s32.totalorder %v1011, 1
      %vm1028 = vcmp.eq.s32.totalorder %v1012, 1
      %vm1029 = vcmp.eq.s32.totalorder %v1013, 1
      %vm1030 = vcmp.eq.s32.totalorder %v1014, 1
      %vm1031 = vcmp.eq.s32.totalorder %v1015, 1
      %vm1032 = vcmp.eq.s32.totalorder %v1016, 1
      %vm1033 = vcmp.eq.s32.totalorder %v1017, 1
      %vm1034 = vcmp.eq.s32.totalorder %v1018, 1
      %vm1035 = vcmp.eq.s32.totalorder %v1019, 1
      %vm1036 = vcmp.eq.s32.totalorder %v1020, 1
      %vm1037 = vcmp.eq.s32.totalorder %v1021, 1
      %vm1038 = vcmp.eq.s32.totalorder %v1022, 1
      %vm1039 = vcmp.eq.s32.totalorder %v1023, 1
      %vm1040 = vcmp.eq.s32.totalorder %v1024, 1
      %vm1041 = vcmp.eq.s32.totalorder %v1025, 1
      %vm1042 = vcmp.eq.s32.totalorder %v1026, 1
      %v1043 = vsel %vm1027, %v828, -1e+30
      %v1044 = vsel %vm1028, %v833, -1e+30
      %v1045 = vsel %vm1029, %v838, -1e+30
      %v1046 = vsel %vm1030, %v843, -1e+30
      %v1047 = vsel %vm1031, %v848, -1e+30
      %v1048 = vsel %vm1032, %v853, -1e+30
      %v1049 = vsel %vm1033, %v858, -1e+30
      %v1050 = vsel %vm1034, %v863, -1e+30
      %v1051 = vsel %vm1035, %v868, -1e+30
      %v1052 = vsel %vm1036, %v873, -1e+30
      %v1053 = vsel %vm1037, %v878, -1e+30
      %v1054 = vsel %vm1038, %v883, -1e+30
      %v1055 = vsel %vm1039, %v888, -1e+30
      %v1056 = vsel %vm1040, %v893, -1e+30
      %v1057 = vsel %vm1041, %v898, -1e+30
      %v1058 = vsel %vm1042, %v903, -1e+30
      %vm1059 = vcmask 130048
      %v1060 = vsel %vm1059, %v1043, -inf
      %v1061 = vsel %vm1059, %v1044, -inf
      %v1062 = vmax.f32 %v1060, %v1061
      %v1063 = vrot.slane %v1062, 4
      %v1064 = vmax.f32 %v1062, %v1063
      %v1065 = vrot.slane %v1064, 2
      %v1066 = vmax.f32 %v1064, %v1065
      %v1067 = vrot.slane %v1066, 1
      %v1068 = vmax.f32 %v1066, %v1067
      %v1069 = vsel %vm1059, %v1045, -inf
      %v1070 = vsel %vm1059, %v1046, -inf
      %v1071 = vmax.f32 %v1069, %v1070
      %v1072 = vrot.slane %v1071, 4
      %v1073 = vmax.f32 %v1071, %v1072
      %v1074 = vrot.slane %v1073, 2
      %v1075 = vmax.f32 %v1073, %v1074
      %v1076 = vrot.slane %v1075, 1
      %v1077 = vmax.f32 %v1075, %v1076
      %v1078 = vsel %vm1059, %v1047, -inf
      %v1079 = vsel %vm1059, %v1048, -inf
      %v1080 = vmax.f32 %v1078, %v1079
      %v1081 = vrot.slane %v1080, 4
      %v1082 = vmax.f32 %v1080, %v1081
      %v1083 = vrot.slane %v1082, 2
      %v1084 = vmax.f32 %v1082, %v1083
      %v1085 = vrot.slane %v1084, 1
      %v1086 = vmax.f32 %v1084, %v1085
      %v1087 = vsel %vm1059, %v1049, -inf
      %v1088 = vsel %vm1059, %v1050, -inf
      %v1089 = vmax.f32 %v1087, %v1088
      %v1090 = vrot.slane %v1089, 4
      %v1091 = vmax.f32 %v1089, %v1090
      %v1092 = vrot.slane %v1091, 2
      %v1093 = vmax.f32 %v1091, %v1092
      %v1094 = vrot.slane %v1093, 1
      %v1095 = vmax.f32 %v1093, %v1094
      %v1096 = vsel %vm1059, %v1051, -inf
      %v1097 = vsel %vm1059, %v1052, -inf
      %v1098 = vmax.f32 %v1096, %v1097
      %v1099 = vrot.slane %v1098, 4
      %v1100 = vmax.f32 %v1098, %v1099
      %v1101 = vrot.slane %v1100, 2
      %v1102 = vmax.f32 %v1100, %v1101
      %v1103 = vrot.slane %v1102, 1
      %v1104 = vmax.f32 %v1102, %v1103
      %v1105 = vsel %vm1059, %v1053, -inf
      %v1106 = vsel %vm1059, %v1054, -inf
      %v1107 = vmax.f32 %v1105, %v1106
      %v1108 = vrot.slane %v1107, 4
      %v1109 = vmax.f32 %v1107, %v1108
      %v1110 = vrot.slane %v1109, 2
      %v1111 = vmax.f32 %v1109, %v1110
      %v1112 = vrot.slane %v1111, 1
      %v1113 = vmax.f32 %v1111, %v1112
      %v1114 = vsel %vm1059, %v1055, -inf
      %v1115 = vsel %vm1059, %v1056, -inf
      %v1116 = vmax.f32 %v1114, %v1115
      %v1117 = vrot.slane %v1116, 4
      %v1118 = vmax.f32 %v1116, %v1117
      %v1119 = vrot.slane %v1118, 2
      %v1120 = vmax.f32 %v1118, %v1119
      %v1121 = vrot.slane %v1120, 1
      %v1122 = vmax.f32 %v1120, %v1121
      %v1123 = vsel %vm1059, %v1057, -inf
      %v1124 = vsel %vm1059, %v1058, -inf
      %v1125 = vmax.f32 %v1123, %v1124
      %v1126 = vrot.slane %v1125, 4
      %v1127 = vmax.f32 %v1125, %v1126
      %v1128 = vrot.slane %v1127, 2
      %v1129 = vmax.f32 %v1127, %v1128
      %v1130 = vrot.slane %v1129, 1
      %v1131 = vmax.f32 %v1129, %v1130
      %v1132 = vsel %vm1059, %v906, -inf
      %1133 = vmax.xlane.f32.xlu0 %v1132
      %v1134 = vpop.xlane.xlu0 %1133
      %vm1135 = vcmp.gt.f32.partialorder %v1134, 0.0
      %v1137 = vrot.slane %v538, 1
      %v1138 = vrot.slane %v538, 2
      %v1139 = vrot.slane %v538, 3
      %v1140 = vrot.slane %v538, 4
      %v1141 = vrot.slane %v538, 5
      %v1142 = vrot.slane %v538, 6
      %v1143 = vrot.slane %v538, 7
      %v1152 = vadd.f32 %v1068, %v538
      %v1153 = vadd.f32 %v1077, %v1137
      %v1154 = vadd.f32 %v1086, %v1138
      %v1155 = vadd.f32 %v1095, %v1139
      %v1156 = vadd.f32 %v1104, %v1140
      %v1157 = vadd.f32 %v1113, %v1141
      %v1158 = vadd.f32 %v1122, %v1142
      %v1159 = vadd.f32 %v1131, %v1143
      %v1160 = vsel %vm1135, 1, 0
      %vm1161 = vcmp.eq.s32.totalorder %v1160, 1
      %v1170 = vrot.slane %v1153, 7
      %vm1171 = vcmask 1041409
      %v1172 = vsel %vm1171, %v1170, %v1152
      %v1173 = vrot.slane %v1154, 6
      %vm1174 = vcmask 1042434
      %v1175 = vsel %vm1174, %v1173, %v1172
      %v1176 = vrot.slane %v1155, 5
      %vm1177 = vcmask 1043459
      %v1178 = vsel %vm1177, %v1176, %v1175
      %v1179 = vrot.slane %v1156, 4
      %vm1180 = vcmask 1044484
      %v1181 = vsel %vm1180, %v1179, %v1178
      %v1182 = vrot.slane %v1157, 3
      %vm1183 = vcmask 1045509
      %v1184 = vsel %vm1183, %v1182, %v1181
      %v1185 = vrot.slane %v1158, 2
      %vm1186 = vcmask 1046534
      %v1187 = vsel %vm1186, %v1185, %v1184
      %v1188 = vrot.slane %v1159, 1
      %vm1189 = vcmask 1047559
      %v1190 = vsel %vm1189, %v1188, %v1187
      %v1192 = vsel %vm1161, %v1190, 0.0
      %v1193 = vld [vmem:[%s438] sm:$0xff]
      %1195 = vrot.lane.b32.xlu0 %v1192, 16
      %v1196 = vpop.permute.xlu0 %1195
      %v1198 = vsel %vm1059, %v1193, %v1196
      %v1199 = vld [vmem:[%s10] sm:$0xff]
      %v1200 = vld [vmem:[%s10 + $0x8] sm:$0xff]
      %v1201 = vld [vmem:[%s10 + $0x10] sm:$0xff]
      %v1202 = vld [vmem:[%s10 + $0x18] sm:$0xff]
      %v1203 = vld [vmem:[%s11] sm:$0x1]
      %v1205 = vlaneseq
      %v1206 = vshrl.u32 %v1205, 7
      %v1207 = vsub.s32 0, %v1206
      %v1208 = vrot.slane %v1203, %v1207
      %v1211 = vsel %vm467, %v1198, 0
      %1213 = vmatprep.subr.mxu0 0.0
      %1214 = vmatpush1.msra.mxu0 %v1199
      %1215 = vmatprep.subr.mxu0 0.0
      %1216 = vmatpush1.msra.mxu0 %v1200
      %1217 = vmatprep.subr.mxu0 0.0
      %1218 = vmatpush1.msra.mxu0 %v1201
      %1219 = vmatprep.subr.mxu0 0.0
      %1220 = vmatpush1.msra.mxu0 %v1202
      %1221 = vmatprep.subr.mxu0 0.0
      %1222 = vmatpush1.msra.mxu0 0.0
      %1223 = vmatprep.subr.mxu0 0.0
      %1224 = vmatpush1.msra.mxu0 0.0
      %1225 = vmatprep.subr.mxu0 0.0
      %1226 = vmatpush1.msra.mxu0 0.0
      %1227 = vmatprep.subr.mxu0 0.0
      %1228 = vmatpush1.msra.mxu0 0.0
      %1229 = vmatprep.subr.mxu0 0.0
      %1230 = vmatpush1.msra.mxu0 0.0
      %1231 = vmatprep.subr.mxu0 0.0
      %1232 = vmatpush1.msra.mxu0 0.0
      %1233 = vmatprep.subr.mxu0 0.0
      %1234 = vmatpush1.msra.mxu0 0.0
      %1235 = vmatprep.subr.mxu0 0.0
      %1236 = vmatpush1.msra.mxu0 0.0
      %1237 = vmatprep.subr.mxu0 0.0
      %1238 = vmatpush1.msra.mxu0 0.0
      %1239 = vmatprep.subr.mxu0 0.0
      %1240 = vmatpush1.msra.mxu0 0.0
      %1241 = vmatprep.subr.mxu0 0.0
      %1242 = vmatpush1.msra.mxu0 0.0
      %1243 = vmatprep.subr.mxu0 0.0
      %1244 = vmatpush1.msra.mxu0 0.0
      %1245 = vmatprep.subr.mxu0 0.0
      %1246 = vmatpush1.msra.mxu0 0.0
      %1247 = vmatprep.subr.mxu0 0.0
      %1248 = vmatpush1.msra.mxu0 0.0
      %1249 = vmatprep.subr.mxu0 0.0
      %1250 = vmatpush1.msra.mxu0 0.0
      %1251 = vmatprep.subr.mxu0 0.0
      %1252 = vmatpush1.msra.mxu0 0.0
      %1253 = vmatprep.subr.mxu0 0.0
      %1254 = vmatpush1.msra.mxu0 0.0
      %1255 = vmatprep.subr.mxu0 0.0
      %1256 = vmatpush1.msra.mxu0 0.0
      %1257 = vmatprep.subr.mxu0 0.0
      %1258 = vmatpush1.msra.mxu0 0.0
      %1259 = vmatprep.subr.mxu0 0.0
      %1260 = vmatpush1.msra.mxu0 0.0
      %1261 = vmatprep.subr.mxu0 0.0
      %1262 = vmatpush1.msra.mxu0 0.0
      %1263 = vmatprep.subr.mxu0 0.0
      %1264 = vmatpush1.msra.mxu0 0.0
      %1265 = vmatprep.subr.mxu0 0.0
      %1266 = vmatpush1.msra.mxu0 0.0
      %1267 = vmatprep.subr.mxu0 0.0
      %1268 = vmatpush1.msra.mxu0 0.0
      %1269 = vmatprep.subr.mxu0 0.0
      %1270 = vmatpush1.msra.mxu0 0.0
      %1271 = vmatprep.subr.mxu0 0.0
      %1272 = vmatpush1.msra.mxu0 0.0
      %1273 = vmatprep.subr.mxu0 0.0
      %1274 = vmatpush1.msra.mxu0 0.0
      %1275 = vmatprep.subr.mxu0 0.0
      %1276 = vmatpush1.msra.mxu0 0.0
      %1277 = vmatprep.mubr.f32.mxu0 0.0
      %1278 = vmatmul.mubr.f32.gmra.mrb[0].mxu0 %v1211
      %v1279 = vpop.f32.mrb[0].mxu0
      %v1280 = vadd.f32 %v1208, %v1279
      %v1281 = vpop.f32.mrb[0].mxu0
      %1282 = vdwg.mxu0
      %vm1283 = vcmask 15360
      %1284 = vst.msk [vmem:[%s442] sm:$0xff] %vm1283, %v1280
      %p1285 = scmp.lt.s32.totalorder %s23, 1
      %s1286 = scalar_select %p1285, %s23, 1
      %s1287 = smul.addr %s1286, 8
      %s1288 = scalar_lea.vmem %s12, %s1287
      // Predicated region
      $region69: #{maas_forward.25} parent=67 // pred_check
        %p1289 = pneg %p308
      $region70: #{maas_forward.25} parent=67 // pred_check_branch
        %1291 = sbr.rel (%p1289) target = $region72
      $region71: #{maas_forward.25} parent=67 // pred_region
        _
      $region72: #{maas_forward.25} parent=67 // pred_fallthru
        _
    $region68: #{maas_forward.25} parent=5 // pred_fallthru
      _
    %p1292 = scmp.le.s32.totalorder 2, %s18
    // Predicated region
    $region73: #{maas_forward.25} parent=5 // pred_check
      %p1293 = pneg %p1292
    $region74: #{maas_forward.25} parent=5 // pred_check_branch
      %1295 = sbr.rel (%p1293) target = $region76
    $region75: #{maas_forward.25} parent=5 // pred_region
      %s1296 = ssub.s32 %s18, 2
      // Predicated region
      $region77: #{maas_forward.25} parent=75 // pred_check
        %p1297 = pneg %p314
      $region78: #{maas_forward.25} parent=75 // pred_check_branch
        %1299 = sbr.rel (%p1297) target = $region80
      $region79: #{maas_forward.25} parent=75 // pred_region
        %p1300 = scmp.lt.s32.totalorder %s24, 1
        %s1301 = scalar_select %p1300, %s24, 1
        %s1302 = smul.addr %s1301, 8
        %s1303 = scalar_lea.vmem %s12, %s1302
      $region80: #{maas_forward.25} parent=75 // pred_fallthru
        _
    $region76: #{maas_forward.25} parent=5 // pred_fallthru
      _
  $region6: #{maas_forward.25} parent=0 // loop_footer
    %s22 = sadd.s32 1, %s18
  $region7: #{maas_forward.25} parent=0 // loop_footer_branch
    %17 = sbr.rel target = $region3
  $region8: #{maas_forward.25} parent=0 // loop_exit
    _

</llo_original>
